<compile_context>
chip_gen: v7x
topology: tpu7x:2x2x1
jax: 0.10.0
libtpu: 0.0.40
codegen_flags: <defaults>
</compile_context>

<pallas_src>
import functools
import math

import jax
import jax.numpy as jnp
from jax.experimental import pallas as pl
from jax.experimental.pallas import tpu as pltpu


# ---------------------------------------------------------------------------
# Weight folding (host side): a 3x3 conv over nearest-2x-upsampled x equals,
# per output parity (di, dj), a 2x2 conv over the ORIGINAL x with taps
# (a, b) in {0,1}^2:
#   y[2i+di, 2j+dj] = sum_{a,b} Weff[di,dj,a,b] . x_pad[i+a+di, j+b+dj]
#   Weff[di,dj,a,b] = sum_{kh in KSEL[di][a], kw in KSEL[dj][b]} w[kh,kw]
# ---------------------------------------------------------------------------
_KSEL = (((0,), (1, 2)),     # di == 0 : tap a=0 -> kh {0},   a=1 -> kh {1,2}
         ((0, 1), (2,)))     # di == 1 : tap a=0 -> kh {0,1}, a=1 -> kh {2}


def _fold_upsample_conv_weights(weight_oihw, cout_pad):
    """(Cout, Cin, 3, 3) -> (2, 2, 4, Cin, cout_pad), f32, tap index k = 2a+b."""
    w = jnp.transpose(weight_oihw, (2, 3, 1, 0)).astype(jnp.float32)  # (3,3,Cin,Cout)
    cin, cout = int(w.shape[2]), int(w.shape[3])
    parities = []
    for di in (0, 1):
        row = []
        for dj in (0, 1):
            taps = []
            for a in (0, 1):
                for b in (0, 1):
                    acc = jnp.zeros((cin, cout), jnp.float32)
                    for kh in _KSEL[di][a]:
                        for kw in _KSEL[dj][b]:
                            acc = acc + w[kh, kw]
                    taps.append(acc)
            row.append(jnp.stack(taps, axis=0))       # (4, Cin, Cout)
        parities.append(jnp.stack(row, axis=0))       # (2, 4, Cin, Cout)
    wf = jnp.stack(parities, axis=0)                  # (2, 2, 4, Cin, Cout)
    if cout_pad > cout:
        wf = jnp.pad(wf, ((0, 0), (0, 0), (0, 0), (0, 0), (0, cout_pad - cout)))
    return wf


# ---------------------------------------------------------------------------
# VMEM budgeting helpers (generation-aware)
# ---------------------------------------------------------------------------
def _round_up(v, m):
    return -(-v // m) * m


def _padded_bytes(shape, itemsize):
    """Approximate VMEM footprint: last two dims padded to (8, 128)."""
    shape = tuple(int(s) for s in shape)
    if len(shape) == 1:
        return _round_up(shape[0], 128) * 8 * itemsize
    lead = 1
    for s in shape[:-2]:
        lead *= s
    return lead * _round_up(shape[-2], 8) * _round_up(shape[-1], 128) * itemsize


def _vmem_limit_bytes():
    """Scoped-VMEM limit derived from the actual chip (fallback: v7x 64 MiB)."""
    cap = 64 << 20
    try:
        info = pltpu.get_tpu_info()
        for name in ("vmem_capacity_bytes", "vmem_size_bytes", "vmem_bytes"):
            v = getattr(info, name, None)
            if v:
                cap = int(v)
                break
    except Exception:
        pass
    return min(int(cap * 0.85), 96 << 20)


def _choose_tile(extent, batch, fits, min_steps=4):
    """Largest divisor of `extent` that fits VMEM, preferring >= min_steps grid
    steps along the parallel axes (keeps both v7x TensorCores busy)."""
    divs = [d for d in range(1, extent + 1) if extent % d == 0]
    ok = [d for d in divs if fits(d)] or [1]
    pref = [d for d in ok if batch * (extent // d) >= min_steps] or ok
    return max(pref)


def _conv_vmem_estimate(th, W, Cin, Cp, in_it, w_it, out_it, comp_it, tap_stacked):
    est = 0
    est += 2 * _padded_bytes((th, W, Cin), in_it)          # x block (double buffered)
    est += 4 * _padded_bytes((1, W, Cin), in_it)           # 2 halo rows x 2 buffers
    est += 2 * _padded_bytes((16, Cin, Cp), w_it)          # folded weights (2*2*4 planes) x 2 buffers
    est += 2 * _padded_bytes((8, Cp), 4)                   # bias
    est += 2 * _padded_bytes((2 * th, 2 * W, Cp), out_it)  # output block (double buffered)
    # in-kernel temporaries
    est += _padded_bytes((th + 2, W + 2, Cin), comp_it)    # padded input tile
    kdim = 4 * Cin if tap_stacked else Cin
    est += _padded_bytes((th * W, kdim), comp_it)          # patch matrix
    est += 2 * _padded_bytes((th * W, Cp), 4)              # f32 matmul results
    est += 2 * _padded_bytes((th, 2 * W, Cp), out_it)      # dj-interleaved halves
    return est


def _nearest_vmem_estimate(rh, W, C, it):
    return (2 * _padded_bytes((rh, W, C), it)
            + 2 * _padded_bytes((2 * rh, 2 * W, C), it)
            + 2 * _padded_bytes((rh, 2 * W, C), it))


# ---------------------------------------------------------------------------
# Kernels
# ---------------------------------------------------------------------------
def _upsample_conv_kernel(x_ref, top_ref, bot_ref, w_ref, b_ref, o_ref, *,
                          compute_dtype, tap_stacked):
    # x_ref:   (1, th, W, Cin)     main row tile
    # top_ref: (1, 1,  W, Cin)     row above tile (masked to 0 at the top edge)
    # bot_ref: (1, 1,  W, Cin)     row below tile (masked to 0 at the bottom)
    #   NOTE: the halo BlockSpecs return ELEMENT row offsets; that is only
    #   valid because their block height is 1 (block index == element index).
    # w_ref:   (2, 2, 4, Cin, Cp)  folded parity weights   b_ref: (1, Cp)
    # o_ref:   (1, th, 2, 2*W, Cp) explicit di-parity axis (caller reshapes to 2H rows)
    t = pl.program_id(1)
    n_t = pl.num_programs(1)

    x = x_ref[0]                                          # (th, W, Cin)
    th, W, Cin = x.shape
    Cp = o_ref.shape[-1]

    zero_row = jnp.zeros_like(top_ref[0])
    top = jnp.where(t > 0, top_ref[0], zero_row)          # SAME padding at edges
    bot = jnp.where(t < n_t - 1, bot_ref[0], zero_row)

    # small padded tile of the ORIGINAL x only: (th+2, W+2, Cin)
    xr = jnp.concatenate([top, x, bot], axis=0)           # (th+2, W, Cin)
    zcol = jnp.zeros((th + 2, 1, Cin), x.dtype)
    xp = jnp.concatenate([zcol, xr, zcol], axis=1)        # (th+2, W+2, Cin)
    if compute_dtype is not None:
        xp = xp.astype(compute_dtype)

    bias = b_ref[...].astype(jnp.float32)                 # (1, Cp)

    for di in (0, 1):
        cols = []
        for dj in (0, 1):
            if tap_stacked:
                # Cin % 128 == 0: lane-aligned tap concat, one K=4*Cin matmul.
                taps = [
                    xp[a + di:a + di + th, b + dj:b + dj + W, :].reshape(th * W, Cin)
                    for a in (0, 1) for b in (0, 1)
                ]
                patch = jnp.concatenate(taps, axis=-1)    # (th*W, 4*Cin)
                wmat = w_ref[di, dj].reshape(4 * Cin, Cp)
                r = jnp.dot(patch, wmat, preferred_element_type=jnp.float32)
            else:
                # Cin not lane-aligned: 4 accumulating K=Cin matmuls (no relayout).
                r = None
                for k, (a, b) in enumerate(((0, 0), (0, 1), (1, 0), (1, 1))):
                    patch = xp[a + di:a + di + th,
                               b + dj:b + dj + W, :].reshape(th * W, Cin)
                    part = jnp.dot(patch, w_ref[di, dj, k],
                                   preferred_element_type=jnp.float32)
                    r = part if r is None else r + part
            # bias add then IMMEDIATE cast to output dtype (shrinks the
            # interleave/store path and epilogue vreg pressure).
            r = (r + bias).astype(o_ref.dtype)
            cols.append(r.reshape(th, W, Cp))
        # interleave dj along the output-width axis (out dtype, in VMEM)
        half = jnp.stack(cols, axis=2).reshape(th, 2 * W, Cp)
        # direct store of this height-parity: no (2*th, 2*W, Cp) temporary
        o_ref[0, :, di] = half


def _upsample2x_kernel(x_ref, o_ref):
    # x_ref: (1, rh, W, C) -> o_ref: (1, rh, 2, 2*W, C)   (nearest, no conv)
    x = x_ref[0]
    rh, W, C = x.shape
    xw = jnp.broadcast_to(x[:, :, None, :], (rh, W, 2, C)).reshape(rh, 2 * W, C)
    o_ref[0, :, 0] = xw
    o_ref[0, :, 1] = xw


# ---------------------------------------------------------------------------
# Wrappers
# ---------------------------------------------------------------------------
def upsample_forward_nhwc(x_nhwc, weight_oihw=None, bias=None, *, use_conv=True,
                          row_tile=None, compute_dtype=None,
                          pad_out_channels=False):
    """Upsample(channels, use_conv, dims=2) forward.  x is NHWC (preferred API)."""
    N, H, W, C = map(int, x_nhwc.shape)
    in_it = x_nhwc.dtype.itemsize
    vmem_limit = _vmem_limit_bytes()
    tile_budget = max(vmem_limit - (4 << 20), 8 << 20)     # headroom for compiler scratch

    if not use_conv:
        def fits(rh):
            return _nearest_vmem_estimate(rh, W, C, in_it) <= tile_budget
        rh = row_tile if row_tile is not None else _choose_tile(H, N, fits)
        assert H % rh == 0, f"row tile {rh} must divide H={H}"
        y5 = pl.pallas_call(
            _upsample2x_kernel,
            out_shape=jax.ShapeDtypeStruct((N, H, 2, 2 * W, C), x_nhwc.dtype),
            grid=(N, H // rh),
            in_specs=[pl.BlockSpec((1, rh, W, C), lambda n, t: (n, t, 0, 0))],
            out_specs=pl.BlockSpec((1, rh, 2, 2 * W, C),
                                   lambda n, t: (n, t, 0, 0, 0)),
            compiler_params=pltpu.CompilerParams(
                dimension_semantics=("parallel", "parallel"),
                vmem_limit_bytes=vmem_limit),
        )(x_nhwc)
        return y5.reshape(N, 2 * H, 2 * W, C)               # free (contiguous) reshape

    assert weight_oihw is not None and bias is not None
    Cout, Cin = int(weight_oihw.shape[0]), int(weight_oihw.shape[1])
    assert Cin == C

    Cp = _round_up(Cout, 128) if pad_out_channels else Cout  # lane-dense store path
    tap_stacked = (Cin % 128 == 0)

    w_folded = _fold_upsample_conv_weights(weight_oihw, Cp)  # (2,2,4,Cin,Cp) f32
    if compute_dtype is not None:
        w_folded = w_folded.astype(compute_dtype)
    else:
        w_folded = w_folded.astype(weight_oihw.dtype)
    b2 = jnp.pad(bias.astype(jnp.float32), (0, Cp - Cout)).reshape(1, Cp)

    comp_it = jnp.dtype(compute_dtype).itemsize if compute_dtype is not None else in_it
    w_it = w_folded.dtype.itemsize
    out_it = in_it

    def fits(th):
        return _conv_vmem_estimate(th, W, C, Cp, in_it, w_it, out_it, comp_it,
                                   tap_stacked) <= tile_budget

    th = row_tile if row_tile is not None else _choose_tile(H, N, fits)
    assert H % th == 0, f"row tile {th} must divide H={H}"
    n_t = H // th

    kernel = functools.partial(_upsample_conv_kernel,
                               compute_dtype=compute_dtype,
                               tap_stacked=tap_stacked)

    y5 = pl.pallas_call(
        kernel,
        out_shape=jax.ShapeDtypeStruct((N, H, 2, 2 * W, Cp), x_nhwc.dtype),
        grid=(N, n_t),
        in_specs=[
            # main row slab of x
            pl.BlockSpec((1, th, W, C), lambda n, t: (n, t, 0, 0)),
            # 1-row halos (clamped; masked to zero at the image border).
            # Block height is 1, so the returned ELEMENT row offset is also a
            # valid block index -- do not change this block height.
            pl.BlockSpec((1, 1, W, C),
                         lambda n, t: (n, jnp.maximum(t * th - 1, 0), 0, 0)),
            pl.BlockSpec((1, 1, W, C),
                         lambda n, t: (n, jnp.minimum(t * th + th, H - 1), 0, 0)),
            # folded weights / bias: constant index -> DMA'd once, held resident
            pl.BlockSpec((2, 2, 4, C, Cp), lambda n, t: (0, 0, 0, 0, 0)),
            pl.BlockSpec((1, Cp), lambda n, t: (0, 0)),
        ],
        out_specs=pl.BlockSpec((1, th, 2, 2 * W, Cp),
                               lambda n, t: (n, t, 0, 0, 0)),
        compiler_params=pltpu.CompilerParams(
            dimension_semantics=("parallel", "parallel"),
            vmem_limit_bytes=vmem_limit),
    )(x_nhwc, x_nhwc, x_nhwc, w_folded, b2)

    y = y5.reshape(N, 2 * H, 2 * W, Cp)                      # free (contiguous) reshape
    if Cp != Cout:
        y = y[..., :Cout]
    return y


def upsample_forward(x_nchw, weight_oihw=None, bias=None, *, use_conv=True,
                     row_tile=None, compute_dtype=None, pad_out_channels=False):
    """NCHW drop-in adapter for the PyTorch module.  Prefer
    `upsample_forward_nhwc` inside an NHWC model: the two transposes here are
    full HBM read+write passes done purely for interface parity."""
    x_nhwc = jnp.transpose(x_nchw, (0, 2, 3, 1))
    y = upsample_forward_nhwc(x_nhwc, weight_oihw, bias, use_conv=use_conv,
                              row_tile=row_tile, compute_dtype=compute_dtype,
                              pad_out_channels=pad_out_channels)
    return jnp.transpose(y, (0, 3, 1, 2))


# ---------------------------------------------------------------------------
# Demo / correctness check
# ---------------------------------------------------------------------------
def _ref_conv_upsample(x, weight, bias):
    x_up = jnp.repeat(jnp.repeat(x, 2, axis=2), 2, axis=3)
    y = jax.lax.conv_general_dilated(
        x_up, weight, window_strides=(1, 1), padding=((1, 1), (1, 1)),
        dimension_numbers=("NCHW", "OIHW", "NCHW"),
        precision=jax.lax.Precision.HIGHEST,
    ) + bias[None, :, None, None]
    return x_up, y


if __name__ == "__main__":
    # Upsample(channels=4, use_conv=True, dims=2)
    N, C, H, W = 2, 4, 16, 16
    Cout = C

    key = jax.random.PRNGKey(0)
    kx, kw, kb = jax.random.split(key, 3)
    x = jax.random.normal(kx, (N, C, H, W), jnp.float32)

    # PyTorch Conv2d-style uniform(+-1/sqrt(fan_in)) init
    bound = 1.0 / math.sqrt(C * 9)
    weight = jax.random.uniform(kw, (Cout, C, 3, 3), jnp.float32, -bound, bound)
    bias = jax.random.uniform(kb, (Cout,), jnp.float32, -bound, bound)

    x_up, y_ref = _ref_conv_upsample(x, weight, bias)

    # conv path, explicit row tiling (exercises the halo-row logic)
    y = jax.block_until_ready(
        upsample_forward(x, weight, bias, use_conv=True, row_tile=8))
    assert y.shape == (N, Cout, 2 * H, 2 * W)
    assert jnp.allclose(y, y_ref, atol=1e-4, rtol=1e-4), "conv path mismatch"

    # conv path, auto-selected tile
    y_auto = jax.block_until_ready(
        upsample_forward(x, weight, bias, use_conv=True))
    assert jnp.allclose(y_auto, y_ref, atol=1e-4, rtol=1e-4), "auto-tile mismatch"

    # lane-dense (padded Cout) store path
    y_pad = jax.block_until_ready(
        upsample_forward(x, weight, bias, use_conv=True, pad_out_channels=True))
    assert jnp.allclose(y_pad, y_ref, atol=1e-4, rtol=1e-4), "padded-Cout mismatch"

    # tap-stacked path (Cin % 128 == 0)
    N2, C2, H2, W2 = 1, 128, 8, 8
    k2x, k2w, k2b = jax.random.split(jax.random.PRNGKey(1), 3)
    x2 = jax.random.normal(k2x, (N2, C2, H2, W2), jnp.float32)
    b2d = 1.0 / math.sqrt(C2 * 9)
    w2 = jax.random.uniform(k2w, (C2, C2, 3, 3), jnp.float32, -b2d, b2d)
    bb2 = jax.random.uniform(k2b, (C2,), jnp.float32, -b2d, b2d)
    _, y2_ref = _ref_conv_upsample(x2, w2, bb2)
    y2 = jax.block_until_ready(upsample_forward(x2, w2, bb2, use_conv=True))
    assert jnp.allclose(y2, y2_ref, atol=2e-3, rtol=2e-3), "tap-stacked mismatch"

    # upsample-only path (use_conv=False)
    y_nc = jax.block_until_ready(upsample_forward(x, use_conv=False))
    assert jnp.allclose(y_nc, x_up), "nearest-upsample path mismatch"

    print("KERNEL_OK")
</pallas_src>

<mosaic_0001>
module attributes {stable_mosaic.version = 11 : i64} {
  func.func @_upsample_conv_kernel(%arg0: i32, %arg1: i32, %arg2: memref<1x8x16x4xf32, #tpu.memory_space<vmem>>, %arg3: memref<1x1x16x4xf32, #tpu.memory_space<vmem>>, %arg4: memref<1x1x16x4xf32, #tpu.memory_space<vmem>>, %arg5: memref<2x2x4x4x4xf32, #tpu.memory_space<vmem>>, %arg6: memref<1x4xf32, #tpu.memory_space<vmem>>, %arg7: memref<1x8x2x32x4xf32, #tpu.memory_space<vmem>>) attributes {dimension_semantics = [#tpu.dimension_semantics<parallel>, #tpu.dimension_semantics<parallel>], iteration_bounds = array<i64: 2, 2>, scalar_prefetch = 0 : i64, scratch_operands = 0 : i64, tpu.core_type = #tpu.core_type<tc>, window_params = [{transform_indices = @transform_0, window_bounds = array<i64: 1, 8, 16, 4>}, {transform_indices = @transform_1, window_bounds = array<i64: 1, 1, 16, 4>}, {transform_indices = @transform_2, window_bounds = array<i64: 1, 1, 16, 4>}, {pipeline_mode = #tpu.pipeline_mode<synchronous>, transform_indices = @transform_3, window_bounds = array<i64: 2, 2, 4, 4, 4>}, {pipeline_mode = #tpu.pipeline_mode<synchronous>, transform_indices = @transform_4, window_bounds = array<i64: 1, 4>}, {transform_indices = @transform_5, window_bounds = array<i64: 1, 8, 2, 32, 4>}]} {
    %c0 = arith.constant 0 : index
    %c0_0 = arith.constant 0 : index
    %c0_1 = arith.constant 0 : index
    %c0_2 = arith.constant 0 : index
    %0 = vector.load %arg2[%c0, %c0_0, %c0_1, %c0_2] : memref<1x8x16x4xf32, #tpu.memory_space<vmem>>, vector<1x8x16x4xf32>
    %1 = vector.shape_cast %0 : vector<1x8x16x4xf32> to vector<8x16x4xf32>
    %cst = arith.constant 0.000000e+00 : f32
    %2 = vector.broadcast %cst : f32 to vector<1x16x4xf32>
    %c0_i32 = arith.constant 0 : i32
    %3 = arith.cmpi sgt, %arg1, %c0_i32 : i32
    %c0_3 = arith.constant 0 : index
    %c0_4 = arith.constant 0 : index
    %c0_5 = arith.constant 0 : index
    %c0_6 = arith.constant 0 : index
    %4 = vector.load %arg3[%c0_3, %c0_4, %c0_5, %c0_6] : memref<1x1x16x4xf32, #tpu.memory_space<vmem>>, vector<1x1x16x4xf32>
    %5 = vector.shape_cast %4 : vector<1x1x16x4xf32> to vector<1x16x4xf32>
    %6 = arith.select %3, %5, %2 : vector<1x16x4xf32>
    %c1_i32 = arith.constant 1 : i32
    %7 = arith.cmpi slt, %arg1, %c1_i32 : i32
    %c0_7 = arith.constant 0 : index
    %c0_8 = arith.constant 0 : index
    %c0_9 = arith.constant 0 : index
    %c0_10 = arith.constant 0 : index
    %8 = vector.load %arg4[%c0_7, %c0_8, %c0_9, %c0_10] : memref<1x1x16x4xf32, #tpu.memory_space<vmem>>, vector<1x1x16x4xf32>
    %9 = vector.shape_cast %8 : vector<1x1x16x4xf32> to vector<1x16x4xf32>
    %10 = arith.select %7, %9, %2 : vector<1x16x4xf32>
    %11 = tpu.concatenate %6, %1, %10 in 0 : vector<1x16x4xf32>, vector<8x16x4xf32>, vector<1x16x4xf32> -> vector<10x16x4xf32>
    %cst_11 = arith.constant 0.000000e+00 : f32
    %12 = vector.broadcast %cst_11 : f32 to vector<10x1x4xf32>
    %13 = tpu.concatenate %12, %11, %12 in 1 : vector<10x1x4xf32>, vector<10x16x4xf32>, vector<10x1x4xf32> -> vector<10x18x4xf32>
    %c0_12 = arith.constant 0 : index
    %c0_13 = arith.constant 0 : index
    %14 = vector.load %arg6[%c0_12, %c0_13] : memref<1x4xf32, #tpu.memory_space<vmem>>, vector<1x4xf32>
    %15 = vector.extract_strided_slice %13 {offsets = [0, 0, 0], sizes = [8, 16, 4], strides = [1, 1, 1]} : vector<10x18x4xf32> to vector<8x16x4xf32>
    %16 = vector.shape_cast %15 : vector<8x16x4xf32> to vector<128x4xf32>
    %c0_14 = arith.constant 0 : index
    %c0_15 = arith.constant 0 : index
    %c0_16 = arith.constant 0 : index
    %c0_17 = arith.constant 0 : index
    %c0_18 = arith.constant 0 : index
    %17 = vector.load %arg5[%c0_14, %c0_15, %c0_16, %c0_17, %c0_18] : memref<2x2x4x4x4xf32, #tpu.memory_space<vmem>>, vector<1x1x1x4x4xf32>
    %18 = vector.shape_cast %17 : vector<1x1x1x4x4xf32> to vector<4x4xf32>
    %cst_19 = arith.constant dense<0.000000e+00> : vector<128x4xf32>
    %19 = tpu.matmul %16, %18, %cst_19 {dimension_numbers = #tpu.dot_dimension_numbers<[1], [0], [0], [1], [0, 0, 1, 1], [], []>} : vector<128x4xf32>, vector<4x4xf32>, vector<128x4xf32> -> vector<128x4xf32>
    %20 = vector.extract_strided_slice %13 {offsets = [0, 1, 0], sizes = [8, 16, 4], strides = [1, 1, 1]} : vector<10x18x4xf32> to vector<8x16x4xf32>
    %21 = vector.shape_cast %20 : vector<8x16x4xf32> to vector<128x4xf32>
    %c0_20 = arith.constant 0 : index
    %c0_21 = arith.constant 0 : index
    %c1 = arith.constant 1 : index
    %c0_22 = arith.constant 0 : index
    %c0_23 = arith.constant 0 : index
    %22 = vector.load %arg5[%c0_20, %c0_21, %c1, %c0_22, %c0_23] : memref<2x2x4x4x4xf32, #tpu.memory_space<vmem>>, vector<1x1x1x4x4xf32>
    %23 = vector.shape_cast %22 : vector<1x1x1x4x4xf32> to vector<4x4xf32>
    %cst_24 = arith.constant dense<0.000000e+00> : vector<128x4xf32>
    %24 = tpu.matmul %21, %23, %cst_24 {dimension_numbers = #tpu.dot_dimension_numbers<[1], [0], [0], [1], [0, 0, 1, 1], [], []>} : vector<128x4xf32>, vector<4x4xf32>, vector<128x4xf32> -> vector<128x4xf32>
    %25 = arith.addf %19, %24 : vector<128x4xf32>
    %26 = vector.extract_strided_slice %13 {offsets = [1, 0, 0], sizes = [8, 16, 4], strides = [1, 1, 1]} : vector<10x18x4xf32> to vector<8x16x4xf32>
    %27 = vector.shape_cast %26 : vector<8x16x4xf32> to vector<128x4xf32>
    %c0_25 = arith.constant 0 : index
    %c0_26 = arith.constant 0 : index
    %c2 = arith.constant 2 : index
    %c0_27 = arith.constant 0 : index
    %c0_28 = arith.constant 0 : index
    %28 = vector.load %arg5[%c0_25, %c0_26, %c2, %c0_27, %c0_28] : memref<2x2x4x4x4xf32, #tpu.memory_space<vmem>>, vector<1x1x1x4x4xf32>
    %29 = vector.shape_cast %28 : vector<1x1x1x4x4xf32> to vector<4x4xf32>
    %cst_29 = arith.constant dense<0.000000e+00> : vector<128x4xf32>
    %30 = tpu.matmul %27, %29, %cst_29 {dimension_numbers = #tpu.dot_dimension_numbers<[1], [0], [0], [1], [0, 0, 1, 1], [], []>} : vector<128x4xf32>, vector<4x4xf32>, vector<128x4xf32> -> vector<128x4xf32>
    %31 = arith.addf %25, %30 : vector<128x4xf32>
    %32 = vector.extract_strided_slice %13 {offsets = [1, 1, 0], sizes = [8, 16, 4], strides = [1, 1, 1]} : vector<10x18x4xf32> to vector<8x16x4xf32>
    %33 = vector.shape_cast %32 : vector<8x16x4xf32> to vector<128x4xf32>
    %c0_30 = arith.constant 0 : index
    %c0_31 = arith.constant 0 : index
    %c3 = arith.constant 3 : index
    %c0_32 = arith.constant 0 : index
    %c0_33 = arith.constant 0 : index
    %34 = vector.load %arg5[%c0_30, %c0_31, %c3, %c0_32, %c0_33] : memref<2x2x4x4x4xf32, #tpu.memory_space<vmem>>, vector<1x1x1x4x4xf32>
    %35 = vector.shape_cast %34 : vector<1x1x1x4x4xf32> to vector<4x4xf32>
    %cst_34 = arith.constant dense<0.000000e+00> : vector<128x4xf32>
    %36 = tpu.matmul %33, %35, %cst_34 {dimension_numbers = #tpu.dot_dimension_numbers<[1], [0], [0], [1], [0, 0, 1, 1], [], []>} : vector<128x4xf32>, vector<4x4xf32>, vector<128x4xf32> -> vector<128x4xf32>
    %37 = arith.addf %31, %36 : vector<128x4xf32>
    %38 = vector.broadcast %14 : vector<1x4xf32> to vector<128x4xf32>
    %39 = arith.addf %37, %38 : vector<128x4xf32>
    %40 = vector.shape_cast %39 : vector<128x4xf32> to vector<8x16x4xf32>
    %41 = vector.extract_strided_slice %13 {offsets = [0, 1, 0], sizes = [8, 16, 4], strides = [1, 1, 1]} : vector<10x18x4xf32> to vector<8x16x4xf32>
    %42 = vector.shape_cast %41 : vector<8x16x4xf32> to vector<128x4xf32>
    %c0_35 = arith.constant 0 : index
    %c1_36 = arith.constant 1 : index
    %c0_37 = arith.constant 0 : index
    %c0_38 = arith.constant 0 : index
    %c0_39 = arith.constant 0 : index
    %43 = vector.load %arg5[%c0_35, %c1_36, %c0_37, %c0_38, %c0_39] : memref<2x2x4x4x4xf32, #tpu.memory_space<vmem>>, vector<1x1x1x4x4xf32>
    %44 = vector.shape_cast %43 : vector<1x1x1x4x4xf32> to vector<4x4xf32>
    %cst_40 = arith.constant dense<0.000000e+00> : vector<128x4xf32>
    %45 = tpu.matmul %42, %44, %cst_40 {dimension_numbers = #tpu.dot_dimension_numbers<[1], [0], [0], [1], [0, 0, 1, 1], [], []>} : vector<128x4xf32>, vector<4x4xf32>, vector<128x4xf32> -> vector<128x4xf32>
    %46 = vector.extract_strided_slice %13 {offsets = [0, 2, 0], sizes = [8, 16, 4], strides = [1, 1, 1]} : vector<10x18x4xf32> to vector<8x16x4xf32>
    %47 = vector.shape_cast %46 : vector<8x16x4xf32> to vector<128x4xf32>
    %c0_41 = arith.constant 0 : index
    %c1_42 = arith.constant 1 : index
    %c1_43 = arith.constant 1 : index
    %c0_44 = arith.constant 0 : index
    %c0_45 = arith.constant 0 : index
    %48 = vector.load %arg5[%c0_41, %c1_42, %c1_43, %c0_44, %c0_45] : memref<2x2x4x4x4xf32, #tpu.memory_space<vmem>>, vector<1x1x1x4x4xf32>
    %49 = vector.shape_cast %48 : vector<1x1x1x4x4xf32> to vector<4x4xf32>
    %cst_46 = arith.constant dense<0.000000e+00> : vector<128x4xf32>
    %50 = tpu.matmul %47, %49, %cst_46 {dimension_numbers = #tpu.dot_dimension_numbers<[1], [0], [0], [1], [0, 0, 1, 1], [], []>} : vector<128x4xf32>, vector<4x4xf32>, vector<128x4xf32> -> vector<128x4xf32>
    %51 = arith.addf %45, %50 : vector<128x4xf32>
    %52 = vector.extract_strided_slice %13 {offsets = [1, 1, 0], sizes = [8, 16, 4], strides = [1, 1, 1]} : vector<10x18x4xf32> to vector<8x16x4xf32>
    %53 = vector.shape_cast %52 : vector<8x16x4xf32> to vector<128x4xf32>
    %c0_47 = arith.constant 0 : index
    %c1_48 = arith.constant 1 : index
    %c2_49 = arith.constant 2 : index
    %c0_50 = arith.constant 0 : index
    %c0_51 = arith.constant 0 : index
    %54 = vector.load %arg5[%c0_47, %c1_48, %c2_49, %c0_50, %c0_51] : memref<2x2x4x4x4xf32, #tpu.memory_space<vmem>>, vector<1x1x1x4x4xf32>
    %55 = vector.shape_cast %54 : vector<1x1x1x4x4xf32> to vector<4x4xf32>
    %cst_52 = arith.constant dense<0.000000e+00> : vector<128x4xf32>
    %56 = tpu.matmul %53, %55, %cst_52 {dimension_numbers = #tpu.dot_dimension_numbers<[1], [0], [0], [1], [0, 0, 1, 1], [], []>} : vector<128x4xf32>, vector<4x4xf32>, vector<128x4xf32> -> vector<128x4xf32>
    %57 = arith.addf %51, %56 : vector<128x4xf32>
    %58 = vector.extract_strided_slice %13 {offsets = [1, 2, 0], sizes = [8, 16, 4], strides = [1, 1, 1]} : vector<10x18x4xf32> to vector<8x16x4xf32>
    %59 = vector.shape_cast %58 : vector<8x16x4xf32> to vector<128x4xf32>
    %c0_53 = arith.constant 0 : index
    %c1_54 = arith.constant 1 : index
    %c3_55 = arith.constant 3 : index
    %c0_56 = arith.constant 0 : index
    %c0_57 = arith.constant 0 : index
    %60 = vector.load %arg5[%c0_53, %c1_54, %c3_55, %c0_56, %c0_57] : memref<2x2x4x4x4xf32, #tpu.memory_space<vmem>>, vector<1x1x1x4x4xf32>
    %61 = vector.shape_cast %60 : vector<1x1x1x4x4xf32> to vector<4x4xf32>
    %cst_58 = arith.constant dense<0.000000e+00> : vector<128x4xf32>
    %62 = tpu.matmul %59, %61, %cst_58 {dimension_numbers = #tpu.dot_dimension_numbers<[1], [0], [0], [1], [0, 0, 1, 1], [], []>} : vector<128x4xf32>, vector<4x4xf32>, vector<128x4xf32> -> vector<128x4xf32>
    %63 = arith.addf %57, %62 : vector<128x4xf32>
    %64 = vector.broadcast %14 : vector<1x4xf32> to vector<128x4xf32>
    %65 = arith.addf %63, %64 : vector<128x4xf32>
    %66 = vector.shape_cast %65 : vector<128x4xf32> to vector<8x16x4xf32>
    %67 = vector.shape_cast %40 : vector<8x16x4xf32> to vector<8x16x1x4xf32>
    %68 = vector.shape_cast %66 : vector<8x16x4xf32> to vector<8x16x1x4xf32>
    %69 = tpu.concatenate %67, %68 in 2 : vector<8x16x1x4xf32>, vector<8x16x1x4xf32> -> vector<8x16x2x4xf32>
    %70 = vector.shape_cast %69 : vector<8x16x2x4xf32> to vector<8x32x4xf32>
    %c0_59 = arith.constant 0 : index
    %c0_60 = arith.constant 0 : index
    %c0_61 = arith.constant 0 : index
    %c0_62 = arith.constant 0 : index
    %c0_63 = arith.constant 0 : index
    %71 = vector.load %arg7[%c0_59, %c0_60, %c0_61, %c0_62, %c0_63] : memref<1x8x2x32x4xf32, #tpu.memory_space<vmem>>, vector<1x8x1x32x4xf32>
    %72 = vector.shape_cast %71 : vector<1x8x1x32x4xf32> to vector<8x32x4xf32>
    %73 = vector.shape_cast %70 : vector<8x32x4xf32> to vector<1x8x1x32x4xf32>
    tpu.vector_store %arg7[%c0_59, %c0_60, %c0_61, %c0_62, %c0_63], %73 {strides = array<i32>} : memref<1x8x2x32x4xf32, #tpu.memory_space<vmem>>, vector<1x8x1x32x4xf32>,
    %74 = vector.extract_strided_slice %13 {offsets = [1, 0, 0], sizes = [8, 16, 4], strides = [1, 1, 1]} : vector<10x18x4xf32> to vector<8x16x4xf32>
    %75 = vector.shape_cast %74 : vector<8x16x4xf32> to vector<128x4xf32>
    %c1_64 = arith.constant 1 : index
    %c0_65 = arith.constant 0 : index
    %c0_66 = arith.constant 0 : index
    %c0_67 = arith.constant 0 : index
    %c0_68 = arith.constant 0 : index
    %76 = vector.load %arg5[%c1_64, %c0_65, %c0_66, %c0_67, %c0_68] : memref<2x2x4x4x4xf32, #tpu.memory_space<vmem>>, vector<1x1x1x4x4xf32>
    %77 = vector.shape_cast %76 : vector<1x1x1x4x4xf32> to vector<4x4xf32>
    %cst_69 = arith.constant dense<0.000000e+00> : vector<128x4xf32>
    %78 = tpu.matmul %75, %77, %cst_69 {dimension_numbers = #tpu.dot_dimension_numbers<[1], [0], [0], [1], [0, 0, 1, 1], [], []>} : vector<128x4xf32>, vector<4x4xf32>, vector<128x4xf32> -> vector<128x4xf32>
    %79 = vector.extract_strided_slice %13 {offsets = [1, 1, 0], sizes = [8, 16, 4], strides = [1, 1, 1]} : vector<10x18x4xf32> to vector<8x16x4xf32>
    %80 = vector.shape_cast %79 : vector<8x16x4xf32> to vector<128x4xf32>
    %c1_70 = arith.constant 1 : index
    %c0_71 = arith.constant 0 : index
    %c1_72 = arith.constant 1 : index
    %c0_73 = arith.constant 0 : index
    %c0_74 = arith.constant 0 : index
    %81 = vector.load %arg5[%c1_70, %c0_71, %c1_72, %c0_73, %c0_74] : memref<2x2x4x4x4xf32, #tpu.memory_space<vmem>>, vector<1x1x1x4x4xf32>
    %82 = vector.shape_cast %81 : vector<1x1x1x4x4xf32> to vector<4x4xf32>
    %cst_75 = arith.constant dense<0.000000e+00> : vector<128x4xf32>
    %83 = tpu.matmul %80, %82, %cst_75 {dimension_numbers = #tpu.dot_dimension_numbers<[1], [0], [0], [1], [0, 0, 1, 1], [], []>} : vector<128x4xf32>, vector<4x4xf32>, vector<128x4xf32> -> vector<128x4xf32>
    %84 = arith.addf %78, %83 : vector<128x4xf32>
    %85 = vector.extract_strided_slice %13 {offsets = [2, 0, 0], sizes = [8, 16, 4], strides = [1, 1, 1]} : vector<10x18x4xf32> to vector<8x16x4xf32>
    %86 = vector.shape_cast %85 : vector<8x16x4xf32> to vector<128x4xf32>
    %c1_76 = arith.constant 1 : index
    %c0_77 = arith.constant 0 : index
    %c2_78 = arith.constant 2 : index
    %c0_79 = arith.constant 0 : index
    %c0_80 = arith.constant 0 : index
    %87 = vector.load %arg5[%c1_76, %c0_77, %c2_78, %c0_79, %c0_80] : memref<2x2x4x4x4xf32, #tpu.memory_space<vmem>>, vector<1x1x1x4x4xf32>
    %88 = vector.shape_cast %87 : vector<1x1x1x4x4xf32> to vector<4x4xf32>
    %cst_81 = arith.constant dense<0.000000e+00> : vector<128x4xf32>
    %89 = tpu.matmul %86, %88, %cst_81 {dimension_numbers = #tpu.dot_dimension_numbers<[1], [0], [0], [1], [0, 0, 1, 1], [], []>} : vector<128x4xf32>, vector<4x4xf32>, vector<128x4xf32> -> vector<128x4xf32>
    %90 = arith.addf %84, %89 : vector<128x4xf32>
    %91 = vector.extract_strided_slice %13 {offsets = [2, 1, 0], sizes = [8, 16, 4], strides = [1, 1, 1]} : vector<10x18x4xf32> to vector<8x16x4xf32>
    %92 = vector.shape_cast %91 : vector<8x16x4xf32> to vector<128x4xf32>
    %c1_82 = arith.constant 1 : index
    %c0_83 = arith.constant 0 : index
    %c3_84 = arith.constant 3 : index
    %c0_85 = arith.constant 0 : index
    %c0_86 = arith.constant 0 : index
    %93 = vector.load %arg5[%c1_82, %c0_83, %c3_84, %c0_85, %c0_86] : memref<2x2x4x4x4xf32, #tpu.memory_space<vmem>>, vector<1x1x1x4x4xf32>
    %94 = vector.shape_cast %93 : vector<1x1x1x4x4xf32> to vector<4x4xf32>
    %cst_87 = arith.constant dense<0.000000e+00> : vector<128x4xf32>
    %95 = tpu.matmul %92, %94, %cst_87 {dimension_numbers = #tpu.dot_dimension_numbers<[1], [0], [0], [1], [0, 0, 1, 1], [], []>} : vector<128x4xf32>, vector<4x4xf32>, vector<128x4xf32> -> vector<128x4xf32>
    %96 = arith.addf %90, %95 : vector<128x4xf32>
    %97 = vector.broadcast %14 : vector<1x4xf32> to vector<128x4xf32>
    %98 = arith.addf %96, %97 : vector<128x4xf32>
    %99 = vector.shape_cast %98 : vector<128x4xf32> to vector<8x16x4xf32>
    %100 = vector.extract_strided_slice %13 {offsets = [1, 1, 0], sizes = [8, 16, 4], strides = [1, 1, 1]} : vector<10x18x4xf32> to vector<8x16x4xf32>
    %101 = vector.shape_cast %100 : vector<8x16x4xf32> to vector<128x4xf32>
    %c1_88 = arith.constant 1 : index
    %c1_89 = arith.constant 1 : index
    %c0_90 = arith.constant 0 : index
    %c0_91 = arith.constant 0 : index
    %c0_92 = arith.constant 0 : index
    %102 = vector.load %arg5[%c1_88, %c1_89, %c0_90, %c0_91, %c0_92] : memref<2x2x4x4x4xf32, #tpu.memory_space<vmem>>, vector<1x1x1x4x4xf32>
    %103 = vector.shape_cast %102 : vector<1x1x1x4x4xf32> to vector<4x4xf32>
    %cst_93 = arith.constant dense<0.000000e+00> : vector<128x4xf32>
    %104 = tpu.matmul %101, %103, %cst_93 {dimension_numbers = #tpu.dot_dimension_numbers<[1], [0], [0], [1], [0, 0, 1, 1], [], []>} : vector<128x4xf32>, vector<4x4xf32>, vector<128x4xf32> -> vector<128x4xf32>
    %105 = vector.extract_strided_slice %13 {offsets = [1, 2, 0], sizes = [8, 16, 4], strides = [1, 1, 1]} : vector<10x18x4xf32> to vector<8x16x4xf32>
    %106 = vector.shape_cast %105 : vector<8x16x4xf32> to vector<128x4xf32>
    %c1_94 = arith.constant 1 : index
    %c1_95 = arith.constant 1 : index
    %c1_96 = arith.constant 1 : index
    %c0_97 = arith.constant 0 : index
    %c0_98 = arith.constant 0 : index
    %107 = vector.load %arg5[%c1_94, %c1_95, %c1_96, %c0_97, %c0_98] : memref<2x2x4x4x4xf32, #tpu.memory_space<vmem>>, vector<1x1x1x4x4xf32>
    %108 = vector.shape_cast %107 : vector<1x1x1x4x4xf32> to vector<4x4xf32>
    %cst_99 = arith.constant dense<0.000000e+00> : vector<128x4xf32>
    %109 = tpu.matmul %106, %108, %cst_99 {dimension_numbers = #tpu.dot_dimension_numbers<[1], [0], [0], [1], [0, 0, 1, 1], [], []>} : vector<128x4xf32>, vector<4x4xf32>, vector<128x4xf32> -> vector<128x4xf32>
    %110 = arith.addf %104, %109 : vector<128x4xf32>
    %111 = vector.extract_strided_slice %13 {offsets = [2, 1, 0], sizes = [8, 16, 4], strides = [1, 1, 1]} : vector<10x18x4xf32> to vector<8x16x4xf32>
    %112 = vector.shape_cast %111 : vector<8x16x4xf32> to vector<128x4xf32>
    %c1_100 = arith.constant 1 : index
    %c1_101 = arith.constant 1 : index
    %c2_102 = arith.constant 2 : index
    %c0_103 = arith.constant 0 : index
    %c0_104 = arith.constant 0 : index
    %113 = vector.load %arg5[%c1_100, %c1_101, %c2_102, %c0_103, %c0_104] : memref<2x2x4x4x4xf32, #tpu.memory_space<vmem>>, vector<1x1x1x4x4xf32>
    %114 = vector.shape_cast %113 : vector<1x1x1x4x4xf32> to vector<4x4xf32>
    %cst_105 = arith.constant dense<0.000000e+00> : vector<128x4xf32>
    %115 = tpu.matmul %112, %114, %cst_105 {dimension_numbers = #tpu.dot_dimension_numbers<[1], [0], [0], [1], [0, 0, 1, 1], [], []>} : vector<128x4xf32>, vector<4x4xf32>, vector<128x4xf32> -> vector<128x4xf32>
    %116 = arith.addf %110, %115 : vector<128x4xf32>
    %117 = vector.extract_strided_slice %13 {offsets = [2, 2, 0], sizes = [8, 16, 4], strides = [1, 1, 1]} : vector<10x18x4xf32> to vector<8x16x4xf32>
    %118 = vector.shape_cast %117 : vector<8x16x4xf32> to vector<128x4xf32>
    %c1_106 = arith.constant 1 : index
    %c1_107 = arith.constant 1 : index
    %c3_108 = arith.constant 3 : index
    %c0_109 = arith.constant 0 : index
    %c0_110 = arith.constant 0 : index
    %119 = vector.load %arg5[%c1_106, %c1_107, %c3_108, %c0_109, %c0_110] : memref<2x2x4x4x4xf32, #tpu.memory_space<vmem>>, vector<1x1x1x4x4xf32>
    %120 = vector.shape_cast %119 : vector<1x1x1x4x4xf32> to vector<4x4xf32>
    %cst_111 = arith.constant dense<0.000000e+00> : vector<128x4xf32>
    %121 = tpu.matmul %118, %120, %cst_111 {dimension_numbers = #tpu.dot_dimension_numbers<[1], [0], [0], [1], [0, 0, 1, 1], [], []>} : vector<128x4xf32>, vector<4x4xf32>, vector<128x4xf32> -> vector<128x4xf32>
    %122 = arith.addf %116, %121 : vector<128x4xf32>
    %123 = vector.broadcast %14 : vector<1x4xf32> to vector<128x4xf32>
    %124 = arith.addf %122, %123 : vector<128x4xf32>
    %125 = vector.shape_cast %124 : vector<128x4xf32> to vector<8x16x4xf32>
    %126 = vector.shape_cast %99 : vector<8x16x4xf32> to vector<8x16x1x4xf32>
    %127 = vector.shape_cast %125 : vector<8x16x4xf32> to vector<8x16x1x4xf32>
    %128 = tpu.concatenate %126, %127 in 2 : vector<8x16x1x4xf32>, vector<8x16x1x4xf32> -> vector<8x16x2x4xf32>
    %129 = vector.shape_cast %128 : vector<8x16x2x4xf32> to vector<8x32x4xf32>
    %c0_112 = arith.constant 0 : index
    %c0_113 = arith.constant 0 : index
    %c1_114 = arith.constant 1 : index
    %c0_115 = arith.constant 0 : index
    %c0_116 = arith.constant 0 : index
    %130 = vector.load %arg7[%c0_112, %c0_113, %c1_114, %c0_115, %c0_116] : memref<1x8x2x32x4xf32, #tpu.memory_space<vmem>>, vector<1x8x1x32x4xf32>
    %131 = vector.shape_cast %130 : vector<1x8x1x32x4xf32> to vector<8x32x4xf32>
    %132 = vector.shape_cast %129 : vector<8x32x4xf32> to vector<1x8x1x32x4xf32>
    tpu.vector_store %arg7[%c0_112, %c0_113, %c1_114, %c0_115, %c0_116], %132 {strides = array<i32>} : memref<1x8x2x32x4xf32, #tpu.memory_space<vmem>>, vector<1x8x1x32x4xf32>,
    return
  }
  func.func @transform_0(%arg0: i32, %arg1: i32) -> (i32, i32, i32, i32) {
    %c0_i32 = arith.constant 0 : i32
    %c0_i32_0 = arith.constant 0 : i32
    %c0_i32_1 = arith.constant 0 : i32
    return %arg0, %arg1, %c0_i32, %c0_i32_0 : i32, i32, i32, i32
  }
  func.func @transform_1(%arg0: i32, %arg1: i32) -> (i32, i32, i32, i32) {
    %c8_i32 = arith.constant 8 : i32
    %0 = arith.muli %arg1, %c8_i32 : i32
    %c1_i32 = arith.constant 1 : i32
    %1 = arith.subi %0, %c1_i32 : i32
    %c0_i32 = arith.constant 0 : i32
    %2 = arith.maxsi %1, %c0_i32 : i32
    %c0_i32_0 = arith.constant 0 : i32
    %c0_i32_1 = arith.constant 0 : i32
    %c0_i32_2 = arith.constant 0 : i32
    return %arg0, %2, %c0_i32_0, %c0_i32_1 : i32, i32, i32, i32
  }
  func.func @transform_2(%arg0: i32, %arg1: i32) -> (i32, i32, i32, i32) {
    %c8_i32 = arith.constant 8 : i32
    %0 = arith.muli %arg1, %c8_i32 : i32
    %c8_i32_0 = arith.constant 8 : i32
    %1 = arith.addi %0, %c8_i32_0 : i32
    %c15_i32 = arith.constant 15 : i32
    %2 = arith.minsi %1, %c15_i32 : i32
    %c0_i32 = arith.constant 0 : i32
    %c0_i32_1 = arith.constant 0 : i32
    %c0_i32_2 = arith.constant 0 : i32
    return %arg0, %2, %c0_i32, %c0_i32_1 : i32, i32, i32, i32
  }
  func.func @transform_3(%arg0: i32, %arg1: i32) -> (i32, i32, i32, i32, i32) {
    %c0_i32 = arith.constant 0 : i32
    %c0_i32_0 = arith.constant 0 : i32
    %c0_i32_1 = arith.constant 0 : i32
    %c0_i32_2 = arith.constant 0 : i32
    %c0_i32_3 = arith.constant 0 : i32
    %c0_i32_4 = arith.constant 0 : i32
    return %c0_i32, %c0_i32_0, %c0_i32_1, %c0_i32_2, %c0_i32_3 : i32, i32, i32, i32, i32
  }
  func.func @transform_4(%arg0: i32, %arg1: i32) -> (i32, i32) {
    %c0_i32 = arith.constant 0 : i32
    %c0_i32_0 = arith.constant 0 : i32
    %c0_i32_1 = arith.constant 0 : i32
    return %c0_i32, %c0_i32_0 : i32, i32
  }
  func.func @transform_5(%arg0: i32, %arg1: i32) -> (i32, i32, i32, i32, i32) {
    %c0_i32 = arith.constant 0 : i32
    %c0_i32_0 = arith.constant 0 : i32
    %c0_i32_1 = arith.constant 0 : i32
    %c0_i32_2 = arith.constant 0 : i32
    return %arg0, %arg1, %c0_i32, %c0_i32_0, %c0_i32_1 : i32, i32, i32, i32, i32
  }
}

</mosaic_0001>

<llo_original>
// kernel: tpu_custom_call.1
$region0: #{tpu_custom_call.1}
  #allocation0 [shape = 'u32[]', space=smem, size = 0x4, offset = 0x4, fixed_abs, tag = 'smem constant byte address 0x4 - core index']
  #allocation1 [shape = 'u32[144,128]{1,0:T(1,128)}', space=vmem, size = 0x12000, scoped, tag = 'internal scratch']
  %s0 = inlined_call_operand.vmem [shape: f32[2,16,16,4], index: 0, kind: input, shape index: {}]
  %s1 = inlined_call_operand.vmem [shape: f32[2,16,16,4], index: 1, kind: input, shape index: {}]
  %s2 = inlined_call_operand.vmem [shape: f32[2,16,16,4], index: 2, kind: input, shape index: {}]
  %s3 = inlined_call_operand.vmem [shape: f32[2,2,4,4,4], index: 3, kind: input, shape index: {}]
  %s4 = inlined_call_operand.vmem [shape: f32[1,4], index: 4, kind: input, shape index: {}]
  %s5 = inlined_call_operand.vmem [shape: f32[2,16,2,32,4], index: 5, kind: output, shape index: {}]
  %s6 = sld [smem:[#allocation0]]
  $region53: #{tpu_custom_call.1} parent=0
    _
  %s8 = ssub.s32 1, %s6
  %s9 = scalar_select 0, %s8, %s6
  loop: start=0, step=1, limit=6
  $region2: #{tpu_custom_call.1} parent=0 // loop_pre_header
    _
  $region3: #{tpu_custom_call.1} parent=0 // loop_header
    %s11 = sphi 0, %s15
    %p12 = scmp.ge.s32.totalorder %s11, 6
    %s18 = sphi 0, %s30
    %s19 = sphi 0, %s26
    %s20 = sphi 0, %s18
    %s21 = sphi 0, %s19
    %s22 = sphi 0, %s20
    %s23 = sphi 0, %s21
    %s35 = sphi 0, %s37
    %s38 = sphi 0, %s35
    %s39 = sphi 0, %s38
    %s55 = sphi 0, %s39
    %s71 = sphi 0, %s73
    %s74 = sphi 0, %s71
    %s75 = sphi 0, %s74
    %s91 = sphi 0, %s75
    %s107 = sphi 0, %s109
    %s110 = sphi 0, %s107
    %s111 = sphi 0, %s110
    %s127 = sphi 0, %s111
    %s131 = sphi 0, %s131
    %s133 = sphi 0, %s131
    %s134 = sphi 0, %s133
    %s148 = sphi 0, %s134
    %s152 = sphi 0, %s152
    %s154 = sphi 0, %s152
    %s155 = sphi 0, %s154
    %s169 = sphi 0, %s155
    %s177 = sphi 0, %s179
    %s180 = sphi 0, %s177
    %s181 = sphi 0, %s180
    %s197 = sphi 0, %s181
  $region4: #{tpu_custom_call.1} parent=0 // loop_header_branch
    %14 = sbr.rel (%p12) target = $region8
  $region5: #{tpu_custom_call.1} parent=0 // loop_body
    %s16 = ssub.s32 %s11, 1
    %s17 = ssub.s32 %s11, 2
    %s24 = sadd.s32 1, %s19
    %p25 = scmp.ge.s32.totalorder %s24, 2
    %s26 = scalar_select %p25, 0, %s24
    %s27 = sadd.s32 1, %s18
    %s28 = scalar_select %p25, %s27, %s18
    %p29 = scmp.ge.s32.totalorder %s28, 2
    %s30 = scalar_select %p29, 0, %s28
    %s31 = ssub.s32 %s18, %s30
    %s32 = ssub.s32 %s19, %s26
    %s33 = sor.u32 %s31, %s32
    %p34 = scmp.eq.s32.totalorder %s33, 0
    %s36 = sadd.s32 %s35, 1
    %s37 = scalar_select %p34, %s35, %s36
    %p40 = pneg %p34
    %p41 = scmp.eq.s32.totalorder %s11, 3
    %p42 = por %p40, %p41
    %p43 = scmp.ne.s32.totalorder %s35, %s38
    %p44 = scmp.eq.s32.totalorder %s11, 0
    %p45 = por %p43, %p44
    %p46 = scmp.ne.s32.totalorder %s35, %s38
    %p47 = scmp.eq.s32.totalorder %s16, 3
    %p48 = por %p46, %p47
    %p49 = scmp.ne.s32.totalorder %s38, %s39
    %p50 = scmp.eq.s32.totalorder %s16, 0
    %p51 = por %p49, %p50
    %p52 = scmp.ne.s32.totalorder %s38, %s39
    %p53 = scmp.eq.s32.totalorder %s17, 3
    %p54 = por %p52, %p53
    %p56 = scmp.ne.s32.totalorder %s39, %s55
    %p57 = scmp.eq.s32.totalorder %s17, 0
    %p58 = por %p56, %p57
    %s59 = smul.u32 %s19, 8
    %s60 = ssub.s32 %s59, 1
    %p61 = scmp.gt.s32.totalorder %s60, 0
    %s62 = scalar_select %p61, %s60, 0
    %s63 = smul.u32 %s26, 8
    %s64 = ssub.s32 %s63, 1
    %p65 = scmp.gt.s32.totalorder %s64, 0
    %s66 = scalar_select %p65, %s64, 0
    %s67 = ssub.s32 %s18, %s30
    %s68 = ssub.s32 %s62, %s66
    %s69 = sor.u32 %s67, %s68
    %p70 = scmp.eq.s32.totalorder %s69, 0
    %s72 = sadd.s32 %s71, 1
    %s73 = scalar_select %p70, %s71, %s72
    %p76 = pneg %p70
    %p77 = scmp.eq.s32.totalorder %s11, 3
    %p78 = por %p76, %p77
    %p79 = scmp.ne.s32.totalorder %s71, %s74
    %p80 = scmp.eq.s32.totalorder %s11, 0
    %p81 = por %p79, %p80
    %p82 = scmp.ne.s32.totalorder %s71, %s74
    %p83 = scmp.eq.s32.totalorder %s16, 3
    %p84 = por %p82, %p83
    %p85 = scmp.ne.s32.totalorder %s74, %s75
    %p86 = scmp.eq.s32.totalorder %s16, 0
    %p87 = por %p85, %p86
    %p88 = scmp.ne.s32.totalorder %s74, %s75
    %p89 = scmp.eq.s32.totalorder %s17, 3
    %p90 = por %p88, %p89
    %p92 = scmp.ne.s32.totalorder %s75, %s91
    %p93 = scmp.eq.s32.totalorder %s17, 0
    %p94 = por %p92, %p93
    %s95 = smul.u32 %s19, 8
    %s96 = sadd.s32 %s95, 8
    %p97 = scmp.lt.s32.totalorder %s96, 15
    %s98 = scalar_select %p97, %s96, 15
    %s99 = smul.u32 %s26, 8
    %s100 = sadd.s32 %s99, 8
    %p101 = scmp.lt.s32.totalorder %s100, 15
    %s102 = scalar_select %p101, %s100, 15
    %s103 = ssub.s32 %s18, %s30
    %s104 = ssub.s32 %s98, %s102
    %s105 = sor.u32 %s103, %s104
    %p106 = scmp.eq.s32.totalorder %s105, 0
    %s108 = sadd.s32 %s107, 1
    %s109 = scalar_select %p106, %s107, %s108
    %p112 = pneg %p106
    %p113 = scmp.eq.s32.totalorder %s11, 3
    %p114 = por %p112, %p113
    %p115 = scmp.ne.s32.totalorder %s107, %s110
    %p116 = scmp.eq.s32.totalorder %s11, 0
    %p117 = por %p115, %p116
    %p118 = scmp.ne.s32.totalorder %s107, %s110
    %p119 = scmp.eq.s32.totalorder %s16, 3
    %p120 = por %p118, %p119
    %p121 = scmp.ne.s32.totalorder %s110, %s111
    %p122 = scmp.eq.s32.totalorder %s16, 0
    %p123 = por %p121, %p122
    %p124 = scmp.ne.s32.totalorder %s110, %s111
    %p125 = scmp.eq.s32.totalorder %s17, 3
    %p126 = por %p124, %p125
    %p128 = scmp.ne.s32.totalorder %s111, %s127
    %p129 = scmp.eq.s32.totalorder %s17, 0
    %p130 = por %p128, %p129
    %s132 = sadd.s32 %s131, 1
    %p135 = scmp.eq.s32.totalorder %s11, 3
    %p136 = scmp.ne.s32.totalorder %s131, %s133
    %p137 = scmp.eq.s32.totalorder %s11, 0
    %p138 = por %p136, %p137
    %p139 = scmp.ne.s32.totalorder %s131, %s133
    %p140 = scmp.eq.s32.totalorder %s16, 3
    %p141 = por %p139, %p140
    %p142 = scmp.ne.s32.totalorder %s133, %s134
    %p143 = scmp.eq.s32.totalorder %s16, 0
    %p144 = por %p142, %p143
    %p145 = scmp.ne.s32.totalorder %s133, %s134
    %p146 = scmp.eq.s32.totalorder %s17, 3
    %p147 = por %p145, %p146
    %p149 = scmp.ne.s32.totalorder %s134, %s148
    %p150 = scmp.eq.s32.totalorder %s17, 0
    %p151 = por %p149, %p150
    %s153 = sadd.s32 %s152, 1
    %p156 = scmp.eq.s32.totalorder %s11, 3
    %p157 = scmp.ne.s32.totalorder %s152, %s154
    %p158 = scmp.eq.s32.totalorder %s11, 0
    %p159 = por %p157, %p158
    %p160 = scmp.ne.s32.totalorder %s152, %s154
    %p161 = scmp.eq.s32.totalorder %s16, 3
    %p162 = por %p160, %p161
    %p163 = scmp.ne.s32.totalorder %s154, %s155
    %p164 = scmp.eq.s32.totalorder %s16, 0
    %p165 = por %p163, %p164
    %p166 = scmp.ne.s32.totalorder %s154, %s155
    %p167 = scmp.eq.s32.totalorder %s17, 3
    %p168 = por %p166, %p167
    %p170 = scmp.ne.s32.totalorder %s155, %s169
    %p171 = scmp.eq.s32.totalorder %s17, 0
    %p172 = por %p170, %p171
    %s173 = ssub.s32 %s18, %s30
    %s174 = ssub.s32 %s19, %s26
    %s175 = sor.u32 %s173, %s174
    %p176 = scmp.eq.s32.totalorder %s175, 0
    %s178 = sadd.s32 %s177, 1
    %s179 = scalar_select %p176, %s177, %s178
    %p182 = pneg %p176
    %p183 = scmp.eq.s32.totalorder %s11, 3
    %p184 = por %p182, %p183
    %p185 = scmp.ne.s32.totalorder %s177, %s180
    %p186 = scmp.eq.s32.totalorder %s11, 0
    %p187 = por %p185, %p186
    %p188 = scmp.ne.s32.totalorder %s177, %s180
    %p189 = scmp.eq.s32.totalorder %s16, 3
    %p190 = por %p188, %p189
    %p191 = scmp.ne.s32.totalorder %s180, %s181
    %p192 = scmp.eq.s32.totalorder %s16, 0
    %p193 = por %p191, %p192
    %p194 = scmp.ne.s32.totalorder %s180, %s181
    %p195 = scmp.eq.s32.totalorder %s17, 3
    %p196 = por %p194, %p195
    %p198 = scmp.ne.s32.totalorder %s181, %s197
    %p199 = scmp.eq.s32.totalorder %s17, 0
    %p200 = por %p198, %p199
    %p201 = scmp.le.s32.totalorder 1, %s11
    %p202 = scmp.lt.s32.totalorder %s11, 5
    %p203 = pnand %p201, %p202
    %p204 = pneg %p203
    // Predicated region
    $region9: #{tpu_custom_call.1} parent=5 // pred_check
      _
    $region10: #{tpu_custom_call.1} parent=5 // pred_check_branch
      %206 = sbr.rel (%p203) target = $region12
    $region11: #{tpu_custom_call.1} parent=5 // pred_region
      %s207 = ssub.s32 %s11, 1
      // Predicated region
      $region13: #{tpu_custom_call.1} parent=11 // pred_check
        %p208 = pneg %p144
      $region14: #{tpu_custom_call.1} parent=11 // pred_check_branch
        %210 = sbr.rel (%p208) target = $region16
      $region15: #{tpu_custom_call.1} parent=11 // pred_region
        _
      $region16: #{tpu_custom_call.1} parent=11 // pred_fallthru
        _
      // Predicated region
      $region17: #{tpu_custom_call.1} parent=11 // pred_check
        %p211 = pneg %p165
      $region18: #{tpu_custom_call.1} parent=11 // pred_check_branch
        %213 = sbr.rel (%p211) target = $region20
      $region19: #{tpu_custom_call.1} parent=11 // pred_region
        _
      $region20: #{tpu_custom_call.1} parent=11 // pred_fallthru
        _
    $region12: #{tpu_custom_call.1} parent=5 // pred_fallthru
      _
    %p214 = scmp.lt.s32.totalorder %s11, 4
    // Predicated region
    $region21: #{tpu_custom_call.1} parent=5 // pred_check
      %p215 = pneg %p214
    $region22: #{tpu_custom_call.1} parent=5 // pred_check_branch
      %217 = sbr.rel (%p215) target = $region24
    $region23: #{tpu_custom_call.1} parent=5 // pred_region
      // Predicated region
      $region25: #{tpu_custom_call.1} parent=23 // pred_check
        %p218 = pneg %p45
      $region26: #{tpu_custom_call.1} parent=23 // pred_check_branch
        %220 = sbr.rel (%p218) target = $region28
      $region27: #{tpu_custom_call.1} parent=23 // pred_region
        %s221 = smul.u32 8, %s19
        %p222 = scmp.lt.s32.totalorder %s18, 1
        %s223 = scalar_select %p222, %s18, 1
        %p224 = scmp.lt.s32.totalorder %s221, 15
        %s225 = scalar_select %p224, %s221, 15
        %s226 = smul.addr %s225, 2
        %s227 = smul.addr %s223, 32
        %s228 = sadd.s32 %s226, %s227
        %s229 = smul.addr %s228, 8
        %s230 = scalar_lea.vmem %s0, %s229
        %s231 = smul.u32 8, %s19
      $region28: #{tpu_custom_call.1} parent=23 // pred_fallthru
        _
      // Predicated region
      $region29: #{tpu_custom_call.1} parent=23 // pred_check
        %p232 = pneg %p81
      $region30: #{tpu_custom_call.1} parent=23 // pred_check_branch
        %234 = sbr.rel (%p232) target = $region32
      $region31: #{tpu_custom_call.1} parent=23 // pred_region
        %s235 = smul.u32 %s19, 8
        %s236 = ssub.s32 %s235, 1
        %p237 = scmp.gt.s32.totalorder %s236, 0
        %s238 = scalar_select %p237, %s236, 0
        %p239 = scmp.lt.s32.totalorder %s18, 1
        %s240 = scalar_select %p239, %s18, 1
        %p241 = scmp.lt.s32.totalorder %s238, 15
        %s242 = scalar_select %p241, %s238, 15
        %s243 = smul.addr %s242, 2
        %s244 = smul.addr %s240, 32
        %s245 = sadd.s32 %s243, %s244
        %s246 = smul.addr %s245, 8
        %s247 = scalar_lea.vmem %s1, %s246
        %s248 = smul.u32 %s19, 8
        %s249 = ssub.s32 %s248, 1
        %p250 = scmp.gt.s32.totalorder %s249, 0
        %s251 = scalar_select %p250, %s249, 0
      $region32: #{tpu_custom_call.1} parent=23 // pred_fallthru
        _
      // Predicated region
      $region33: #{tpu_custom_call.1} parent=23 // pred_check
        %p252 = pneg %p117
      $region34: #{tpu_custom_call.1} parent=23 // pred_check_branch
        %254 = sbr.rel (%p252) target = $region36
      $region35: #{tpu_custom_call.1} parent=23 // pred_region
        %s255 = smul.u32 %s19, 8
        %s256 = sadd.s32 %s255, 8
        %p257 = scmp.lt.s32.totalorder %s256, 15
        %s258 = scalar_select %p257, %s256, 15
        %p259 = scmp.lt.s32.totalorder %s18, 1
        %s260 = scalar_select %p259, %s18, 1
        %p261 = scmp.lt.s32.totalorder %s258, 15
        %s262 = scalar_select %p261, %s258, 15
        %s263 = smul.addr %s262, 2
        %s264 = smul.addr %s260, 32
        %s265 = sadd.s32 %s263, %s264
        %s266 = smul.addr %s265, 8
        %s267 = scalar_lea.vmem %s2, %s266
        %s268 = smul.u32 %s19, 8
        %s269 = sadd.s32 %s268, 8
        %p270 = scmp.lt.s32.totalorder %s269, 15
        %s271 = scalar_select %p270, %s269, 15
      $region36: #{tpu_custom_call.1} parent=23 // pred_fallthru
        _
    $region24: #{tpu_custom_call.1} parent=5 // pred_fallthru
      _
    %p272 = scmp.le.s32.totalorder 1, %s11
    %p273 = scmp.lt.s32.totalorder %s11, 5
    %p274 = pnand %p272, %p273
    %p275 = pneg %p274
    // Predicated region
    $region37: #{tpu_custom_call.1} parent=5 // pred_check
      _
    $region38: #{tpu_custom_call.1} parent=5 // pred_check_branch
      %277 = sbr.rel (%p274) target = $region40
    $region39: #{tpu_custom_call.1} parent=5 // pred_region
      %s278 = ssub.s32 %s11, 1
      %s279 = smul.u32 8, %s21
      %p280 = scmp.lt.s32.totalorder %s20, 1
      %s281 = scalar_select %p280, %s20, 1
      %p282 = scmp.lt.s32.totalorder %s279, 15
      %s283 = scalar_select %p282, %s279, 15
      %s284 = smul.addr %s283, 2
      %s285 = smul.addr %s281, 32
      %s286 = sadd.s32 %s284, %s285
      %s287 = smul.addr %s286, 8
      %s288 = scalar_lea.vmem %s0, %s287
      %p289 = pneg %p51
      %p290 = pneg %p48
      %s291 = smul.u32 %s21, 8
      %s292 = ssub.s32 %s291, 1
      %p293 = scmp.gt.s32.totalorder %s292, 0
      %s294 = scalar_select %p293, %s292, 0
      %p295 = scmp.lt.s32.totalorder %s20, 1
      %s296 = scalar_select %p295, %s20, 1
      %p297 = scmp.lt.s32.totalorder %s294, 15
      %s298 = scalar_select %p297, %s294, 15
      %s299 = smul.addr %s298, 2
      %s300 = smul.addr %s296, 32
      %s301 = sadd.s32 %s299, %s300
      %s302 = smul.addr %s301, 8
      %s303 = scalar_lea.vmem %s1, %s302
      %p304 = pneg %p87
      %p305 = pneg %p84
      %s306 = smul.u32 %s21, 8
      %s307 = sadd.s32 %s306, 8
      %p308 = scmp.lt.s32.totalorder %s307, 15
      %s309 = scalar_select %p308, %s307, 15
      %p310 = scmp.lt.s32.totalorder %s20, 1
      %s311 = scalar_select %p310, %s20, 1
      %p312 = scmp.lt.s32.totalorder %s309, 15
      %s313 = scalar_select %p312, %s309, 15
      %s314 = smul.addr %s313, 2
      %s315 = smul.addr %s311, 32
      %s316 = sadd.s32 %s314, %s315
      %s317 = smul.addr %s316, 8
      %s318 = scalar_lea.vmem %s2, %s317
      %p319 = pneg %p123
      %p320 = pneg %p120
      %p321 = pneg %p144
      %p322 = pneg %p141
      %p323 = pneg %p165
      %p324 = pneg %p162
      %p325 = pneg %p193
      %p326 = pneg %p190
      %s327 = smul.u32 8, %s21
      %p328 = scmp.lt.s32.totalorder %s20, 1
      %s329 = scalar_select %p328, %s20, 1
      %p330 = scmp.lt.s32.totalorder %s327, 15
      %s331 = scalar_select %p330, %s327, 15
      %s332 = smul.addr %s331, 8
      %s333 = smul.addr %s329, 128
      %s334 = sadd.s32 %s332, %s333
      %s335 = smul.addr %s334, 8
      %s336 = scalar_lea.vmem %s5, %s335
      %s337 = smul.u32 8, %s21
      %p338 = scmp.lt.s32.totalorder %s20, 1
      %s339 = scalar_select %p338, %s20, 1
      %p340 = scmp.lt.s32.totalorder %s337, 15
      %s341 = scalar_select %p340, %s337, 15
      %s342 = smul.addr %s341, 2
      %s343 = smul.addr %s339, 32
      %s344 = sadd.s32 %s342, %s343
      %s345 = smul.addr %s344, 8
      %s346 = scalar_lea.vmem %s0, %s345
      %s347 = smul.u32 8, %s21
      %s348 = smul.u32 %s21, 8
      %s349 = ssub.s32 %s348, 1
      %p350 = scmp.gt.s32.totalorder %s349, 0
      %s351 = scalar_select %p350, %s349, 0
      %p352 = scmp.lt.s32.totalorder %s20, 1
      %s353 = scalar_select %p352, %s20, 1
      %p354 = scmp.lt.s32.totalorder %s351, 15
      %s355 = scalar_select %p354, %s351, 15
      %s356 = smul.addr %s355, 2
      %s357 = smul.addr %s353, 32
      %s358 = sadd.s32 %s356, %s357
      %s359 = smul.addr %s358, 8
      %s360 = scalar_lea.vmem %s1, %s359
      %s361 = smul.u32 %s21, 8
      %s362 = ssub.s32 %s361, 1
      %p363 = scmp.gt.s32.totalorder %s362, 0
      %s364 = scalar_select %p363, %s362, 0
      %s365 = smul.u32 %s21, 8
      %s366 = sadd.s32 %s365, 8
      %p367 = scmp.lt.s32.totalorder %s366, 15
      %s368 = scalar_select %p367, %s366, 15
      %p369 = scmp.lt.s32.totalorder %s20, 1
      %s370 = scalar_select %p369, %s20, 1
      %p371 = scmp.lt.s32.totalorder %s368, 15
      %s372 = scalar_select %p371, %s368, 15
      %s373 = smul.addr %s372, 2
      %s374 = smul.addr %s370, 32
      %s375 = sadd.s32 %s373, %s374
      %s376 = smul.addr %s375, 8
      %s377 = scalar_lea.vmem %s2, %s376
      %s378 = smul.u32 %s21, 8
      %s379 = sadd.s32 %s378, 8
      %p380 = scmp.lt.s32.totalorder %s379, 15
      %s381 = scalar_select %p380, %s379, 15
      %s382 = smul.u32 8, %s21
      %p383 = scmp.lt.s32.totalorder %s20, 1
      %s384 = scalar_select %p383, %s20, 1
      %p385 = scmp.lt.s32.totalorder %s382, 15
      %s386 = scalar_select %p385, %s382, 15
      %s387 = smul.addr %s386, 8
      %s388 = smul.addr %s384, 128
      %s389 = sadd.s32 %s387, %s388
      %s390 = smul.addr %s389, 8
      %s391 = scalar_lea.vmem %s5, %s390
      %s392 = smul.u32 8, %s21
      %v393 = vld [vmem:[%s346] sm:$0xff]
      %v394 = vld [vmem:[%s346 + $0x8] sm:$0xff]
      %v395 = vld [vmem:[%s346 + $0x10] sm:$0xff]
      %v396 = vld [vmem:[%s346 + $0x18] sm:$0xff]
      %v397 = vld [vmem:[%s346 + $0x20] sm:$0xff]
      %v398 = vld [vmem:[%s346 + $0x28] sm:$0xff]
      %v399 = vld [vmem:[%s346 + $0x30] sm:$0xff]
      %v400 = vld [vmem:[%s346 + $0x38] sm:$0xff]
      %v401 = vld [vmem:[%s346 + $0x40] sm:$0xff]
      %v402 = vld [vmem:[%s346 + $0x48] sm:$0xff]
      %v403 = vld [vmem:[%s346 + $0x50] sm:$0xff]
      %v404 = vld [vmem:[%s346 + $0x58] sm:$0xff]
      %v405 = vld [vmem:[%s346 + $0x60] sm:$0xff]
      %v406 = vld [vmem:[%s346 + $0x68] sm:$0xff]
      %v407 = vld [vmem:[%s346 + $0x70] sm:$0xff]
      %v408 = vld [vmem:[%s346 + $0x78] sm:$0xff]
      %p409 = scmp.gt.s32.totalorder %s21, 0
      %v410 = vld [vmem:[%s360] sm:$0xff]
      %v411 = vld [vmem:[%s360 + $0x8] sm:$0xff]
      %s412 = scalar_select %p409, 1, 0
      %v413 = vstv %s412
      %vm414 = vcmp.eq.s32.totalorder %v413, 1
      %v415 = vsel %vm414, %v410, 0.0
      %v416 = vsel %vm414, %v411, 0.0
      %p417 = scmp.lt.s32.totalorder %s21, 1
      %v418 = vld [vmem:[%s377] sm:$0xff]
      %v419 = vld [vmem:[%s377 + $0x8] sm:$0xff]
      %s420 = scalar_select %p417, 1, 0
      %v421 = vstv %s420
      %vm422 = vcmp.eq.s32.totalorder %v421, 1
      %v423 = vsel %vm422, %v418, 0.0
      %v424 = vsel %vm422, %v419, 0.0
      %vm445 = vcmask 1040384
      %v446 = vrot.slane %v415, 7
      %v447 = vrot.slane %v416, 7
      %v448 = vsel %vm445, %v446, %v447
      %v449 = vrot.slane %v393, 7
      %v450 = vrot.slane %v394, 7
      %v451 = vsel %vm445, %v449, %v450
      %v452 = vrot.slane %v395, 7
      %v453 = vrot.slane %v396, 7
      %v454 = vsel %vm445, %v452, %v453
      %v455 = vrot.slane %v397, 7
      %v456 = vrot.slane %v398, 7
      %v457 = vsel %vm445, %v455, %v456
      %v458 = vrot.slane %v399, 7
      %v459 = vrot.slane %v400, 7
      %v460 = vsel %vm445, %v458, %v459
      %v461 = vrot.slane %v401, 7
      %v462 = vrot.slane %v402, 7
      %v463 = vsel %vm445, %v461, %v462
      %v464 = vrot.slane %v403, 7
      %v465 = vrot.slane %v404, 7
      %v466 = vsel %vm445, %v464, %v465
      %v467 = vrot.slane %v405, 7
      %v468 = vrot.slane %v406, 7
      %v469 = vsel %vm445, %v467, %v468
      %v470 = vrot.slane %v407, 7
      %v471 = vrot.slane %v408, 7
      %v472 = vsel %vm445, %v470, %v471
      %v473 = vrot.slane %v423, 7
      %v474 = vrot.slane %v424, 7
      %v475 = vsel %vm445, %v473, %v474
      %v496 = vsel %vm445, 0.0, %v446
      %v497 = vsel %vm445, 0.0, %v449
      %v498 = vsel %vm445, 0.0, %v452
      %v499 = vsel %vm445, 0.0, %v455
      %v500 = vsel %vm445, 0.0, %v458
      %v501 = vsel %vm445, 0.0, %v461
      %v502 = vsel %vm445, 0.0, %v464
      %v503 = vsel %vm445, 0.0, %v467
      %v504 = vsel %vm445, 0.0, %v470
      %v505 = vsel %vm445, 0.0, %v473
      %v506 = vsel %vm445, %v447, 0.0
      %v507 = vsel %vm445, %v450, 0.0
      %v508 = vsel %vm445, %v453, 0.0
      %v509 = vsel %vm445, %v456, 0.0
      %v510 = vsel %vm445, %v459, 0.0
      %v511 = vsel %vm445, %v462, 0.0
      %v512 = vsel %vm445, %v465, 0.0
      %v513 = vsel %vm445, %v468, 0.0
      %v514 = vsel %vm445, %v471, 0.0
      %v515 = vsel %vm445, %v474, 0.0
      %v516 = vld [vmem:[%s4] sm:$0x1]
      %v517 = vld [vmem:[%s3] sm:$0xf]
      %vm534 = vcmask 1046528
      %v535 = vrot.slane %v496, 1
      %v536 = vrot.slane %v448, 1
      %v537 = vsel %vm534, %v535, %v536
      %v538 = vrot.slane %v506, 1
      %v539 = vsel %vm534, %v536, %v538
      %v540 = vrot.slane %v497, 1
      %v541 = vrot.slane %v451, 1
      %v542 = vsel %vm534, %v540, %v541
      %v543 = vrot.slane %v507, 1
      %v544 = vsel %vm534, %v541, %v543
      %v545 = vrot.slane %v498, 1
      %v546 = vrot.slane %v454, 1
      %v547 = vsel %vm534, %v545, %v546
      %v548 = vrot.slane %v508, 1
      %v549 = vsel %vm534, %v546, %v548
      %v550 = vrot.slane %v499, 1
      %v551 = vrot.slane %v457, 1
      %v552 = vsel %vm534, %v550, %v551
      %v553 = vrot.slane %v509, 1
      %v554 = vsel %vm534, %v551, %v553
      %v555 = vrot.slane %v500, 1
      %v556 = vrot.slane %v460, 1
      %v557 = vsel %vm534, %v555, %v556
      %v558 = vrot.slane %v510, 1
      %v559 = vsel %vm534, %v556, %v558
      %v560 = vrot.slane %v501, 1
      %v561 = vrot.slane %v463, 1
      %v562 = vsel %vm534, %v560, %v561
      %v563 = vrot.slane %v511, 1
      %v564 = vsel %vm534, %v561, %v563
      %v565 = vrot.slane %v502, 1
      %v566 = vrot.slane %v466, 1
      %v567 = vsel %vm534, %v565, %v566
      %v568 = vrot.slane %v512, 1
      %v569 = vsel %vm534, %v566, %v568
      %v570 = vrot.slane %v503, 1
      %v571 = vrot.slane %v469, 1
      %v572 = vsel %vm534, %v570, %v571
      %v573 = vrot.slane %v513, 1
      %v574 = vsel %vm534, %v571, %v573
      %s575 = scalar_lea.vmem %s3, 4
      %v576 = vld [vmem:[%s575] sm:$0xf]
      %vm577 = vcmask 31744
      %v578 = vsel %vm577, %v537, 0
      %v580 = vsel %vm577, %v539, 0
      %v582 = vsel %vm577, %v542, 0
      %v584 = vsel %vm577, %v544, 0
      %v586 = vsel %vm577, %v547, 0
      %v588 = vsel %vm577, %v549, 0
      %v590 = vsel %vm577, %v552, 0
      %v592 = vsel %vm577, %v554, 0
      %v594 = vsel %vm577, %v557, 0
      %v596 = vsel %vm577, %v559, 0
      %v598 = vsel %vm577, %v562, 0
      %v600 = vsel %vm577, %v564, 0
      %v602 = vsel %vm577, %v567, 0
      %v604 = vsel %vm577, %v569, 0
      %v606 = vsel %vm577, %v572, 0
      %v608 = vsel %vm577, %v574, 0
      %vm610 = vcmask 1043456
      %v612 = vsel %vm610, %v576, 0
      %614 = vmatprep.subr.mxu0 0.0
      %615 = vmatpush1.msra.mxu0 %v612
      %616 = vmatprep.subr.mxu0 0.0
      %617 = vmatpush1.msra.mxu0 0.0
      %618 = vmatprep.subr.mxu0 0.0
      %619 = vmatpush1.msra.mxu0 0.0
      %620 = vmatprep.subr.mxu0 0.0
      %621 = vmatpush1.msra.mxu0 0.0
      %622 = vmatprep.subr.mxu0 0.0
      %623 = vmatpush1.msra.mxu0 0.0
      %624 = vmatprep.subr.mxu0 0.0
      %625 = vmatpush1.msra.mxu0 0.0
      %626 = vmatprep.subr.mxu0 0.0
      %627 = vmatpush1.msra.mxu0 0.0
      %628 = vmatprep.subr.mxu0 0.0
      %629 = vmatpush1.msra.mxu0 0.0
      %630 = vmatprep.subr.mxu0 0.0
      %631 = vmatpush1.msra.mxu0 0.0
      %632 = vmatprep.subr.mxu0 0.0
      %633 = vmatpush1.msra.mxu0 0.0
      %634 = vmatprep.subr.mxu0 0.0
      %635 = vmatpush1.msra.mxu0 0.0
      %636 = vmatprep.subr.mxu0 0.0
      %637 = vmatpush1.msra.mxu0 0.0
      %638 = vmatprep.subr.mxu0 0.0
      %639 = vmatpush1.msra.mxu0 0.0
      %640 = vmatprep.subr.mxu0 0.0
      %641 = vmatpush1.msra.mxu0 0.0
      %642 = vmatprep.subr.mxu0 0.0
      %643 = vmatpush1.msra.mxu0 0.0
      %644 = vmatprep.subr.mxu0 0.0
      %645 = vmatpush1.msra.mxu0 0.0
      %646 = vmatprep.subr.mxu0 0.0
      %647 = vmatpush1.msra.mxu0 0.0
      %648 = vmatprep.subr.mxu0 0.0
      %649 = vmatpush1.msra.mxu0 0.0
      %650 = vmatprep.subr.mxu0 0.0
      %651 = vmatpush1.msra.mxu0 0.0
      %652 = vmatprep.subr.mxu0 0.0
      %653 = vmatpush1.msra.mxu0 0.0
      %654 = vmatprep.subr.mxu0 0.0
      %655 = vmatpush1.msra.mxu0 0.0
      %656 = vmatprep.subr.mxu0 0.0
      %657 = vmatpush1.msra.mxu0 0.0
      %658 = vmatprep.subr.mxu0 0.0
      %659 = vmatpush1.msra.mxu0 0.0
      %660 = vmatprep.subr.mxu0 0.0
      %661 = vmatpush1.msra.mxu0 0.0
      %662 = vmatprep.subr.mxu0 0.0
      %663 = vmatpush1.msra.mxu0 0.0
      %664 = vmatprep.subr.mxu0 0.0
      %665 = vmatpush1.msra.mxu0 0.0
      %666 = vmatprep.subr.mxu0 0.0
      %667 = vmatpush1.msra.mxu0 0.0
      %668 = vmatprep.subr.mxu0 0.0
      %669 = vmatpush1.msra.mxu0 0.0
      %670 = vmatprep.subr.mxu0 0.0
      %671 = vmatpush1.msra.mxu0 0.0
      %672 = vmatprep.subr.mxu0 0.0
      %673 = vmatpush1.msra.mxu0 0.0
      %674 = vmatprep.subr.mxu0 0.0
      %675 = vmatpush1.msra.mxu0 0.0
      %676 = vmatprep.subr.mxu0 0.0
      %677 = vmatpush1.msra.mxu0 0.0
      %678 = vmatprep.mubr.f32.mxu0 0.0
      %679 = vmatmul.mubr.f32.gmra.mrb[0].mxu0 %v578
      %v680 = vpop.f32.mrb[0].mxu0
      %v681 = vadd.f32 0.0, %v680
      %v682 = vpop.f32.mrb[0].mxu0
      %683 = vmatprep.mubr.f32.mxu0 0.0
      %684 = vmatmul.mubr.f32.gmra.mrb[0].mxu0 %v580
      %v685 = vpop.f32.mrb[0].mxu0
      %v686 = vadd.f32 0.0, %v685
      %v687 = vpop.f32.mrb[0].mxu0
      %688 = vmatprep.mubr.f32.mxu0 0.0
      %689 = vmatmul.mubr.f32.gmra.mrb[0].mxu0 %v582
      %v690 = vpop.f32.mrb[0].mxu0
      %v691 = vadd.f32 0.0, %v690
      %v692 = vpop.f32.mrb[0].mxu0
      %693 = vmatprep.mubr.f32.mxu0 0.0
      %694 = vmatmul.mubr.f32.gmra.mrb[0].mxu0 %v584
      %v695 = vpop.f32.mrb[0].mxu0
      %v696 = vadd.f32 0.0, %v695
      %v697 = vpop.f32.mrb[0].mxu0
      %698 = vmatprep.mubr.f32.mxu0 0.0
      %699 = vmatmul.mubr.f32.gmra.mrb[0].mxu0 %v586
      %v700 = vpop.f32.mrb[0].mxu0
      %v701 = vadd.f32 0.0, %v700
      %v702 = vpop.f32.mrb[0].mxu0
      %703 = vmatprep.mubr.f32.mxu0 0.0
      %704 = vmatmul.mubr.f32.gmra.mrb[0].mxu0 %v588
      %v705 = vpop.f32.mrb[0].mxu0
      %v706 = vadd.f32 0.0, %v705
      %v707 = vpop.f32.mrb[0].mxu0
      %708 = vmatprep.mubr.f32.mxu0 0.0
      %709 = vmatmul.mubr.f32.gmra.mrb[0].mxu0 %v590
      %v710 = vpop.f32.mrb[0].mxu0
      %v711 = vadd.f32 0.0, %v710
      %v712 = vpop.f32.mrb[0].mxu0
      %713 = vmatprep.mubr.f32.mxu0 0.0
      %714 = vmatmul.mubr.f32.gmra.mrb[0].mxu0 %v592
      %v715 = vpop.f32.mrb[0].mxu0
      %v716 = vadd.f32 0.0, %v715
      %v717 = vpop.f32.mrb[0].mxu0
      %718 = vmatprep.mubr.f32.mxu0 0.0
      %719 = vmatmul.mubr.f32.gmra.mrb[0].mxu0 %v594
      %v720 = vpop.f32.mrb[0].mxu0
      %v721 = vadd.f32 0.0, %v720
      %v722 = vpop.f32.mrb[0].mxu0
      %723 = vmatprep.mubr.f32.mxu0 0.0
      %724 = vmatmul.mubr.f32.gmra.mrb[0].mxu0 %v596
      %v725 = vpop.f32.mrb[0].mxu0
      %v726 = vadd.f32 0.0, %v725
      %v727 = vpop.f32.mrb[0].mxu0
      %728 = vmatprep.mubr.f32.mxu0 0.0
      %729 = vmatmul.mubr.f32.gmra.mrb[0].mxu0 %v598
      %v730 = vpop.f32.mrb[0].mxu0
      %v731 = vadd.f32 0.0, %v730
      %v732 = vpop.f32.mrb[0].mxu0
      %733 = vmatprep.mubr.f32.mxu0 0.0
      %734 = vmatmul.mubr.f32.gmra.mrb[0].mxu0 %v600
      %v735 = vpop.f32.mrb[0].mxu0
      %v736 = vadd.f32 0.0, %v735
      %v737 = vpop.f32.mrb[0].mxu0
      %738 = vmatprep.mubr.f32.mxu0 0.0
      %739 = vmatmul.mubr.f32.gmra.mrb[0].mxu0 %v602
      %v740 = vpop.f32.mrb[0].mxu0
      %v741 = vadd.f32 0.0, %v740
      %v742 = vpop.f32.mrb[0].mxu0
      %743 = vmatprep.mubr.f32.mxu0 0.0
      %744 = vmatmul.mubr.f32.gmra.mrb[0].mxu0 %v604
      %v745 = vpop.f32.mrb[0].mxu0
      %v746 = vadd.f32 0.0, %v745
      %v747 = vpop.f32.mrb[0].mxu0
      %748 = vmatprep.mubr.f32.mxu0 0.0
      %749 = vmatmul.mubr.f32.gmra.mrb[0].mxu0 %v606
      %v750 = vpop.f32.mrb[0].mxu0
      %v751 = vadd.f32 0.0, %v750
      %v752 = vpop.f32.mrb[0].mxu0
      %753 = vmatprep.mubr.f32.mxu0 0.0
      %754 = vmatmul.mubr.f32.gmra.mrb[0].mxu0 %v608
      %v755 = vpop.f32.mrb[0].mxu0
      %v756 = vadd.f32 0.0, %v755
      %v757 = vpop.f32.mrb[0].mxu0
      %758 = vdwg.mxu0
      %v759 = vsel %vm577, %v496, 0
      %v761 = vsel %vm577, %v448, 0
      %v763 = vsel %vm577, %v497, 0
      %v765 = vsel %vm577, %v451, 0
      %v767 = vsel %vm577, %v498, 0
      %v769 = vsel %vm577, %v454, 0
      %v771 = vsel %vm577, %v499, 0
      %v773 = vsel %vm577, %v457, 0
      %v775 = vsel %vm577, %v500, 0
      %v777 = vsel %vm577, %v460, 0
      %v779 = vsel %vm577, %v501, 0
      %v781 = vsel %vm577, %v463, 0
      %v783 = vsel %vm577, %v502, 0
      %v785 = vsel %vm577, %v466, 0
      %v787 = vsel %vm577, %v503, 0
      %v789 = vsel %vm577, %v469, 0
      %v792 = vsel %vm610, %v517, 0
      %794 = vmatprep.subr.mxu0 0.0
      %795 = vmatpush1.msra.mxu0 %v792
      %796 = vmatprep.subr.mxu0 0.0
      %797 = vmatpush1.msra.mxu0 0.0
      %798 = vmatprep.subr.mxu0 0.0
      %799 = vmatpush1.msra.mxu0 0.0
      %800 = vmatprep.subr.mxu0 0.0
      %801 = vmatpush1.msra.mxu0 0.0
      %802 = vmatprep.subr.mxu0 0.0
      %803 = vmatpush1.msra.mxu0 0.0
      %804 = vmatprep.subr.mxu0 0.0
      %805 = vmatpush1.msra.mxu0 0.0
      %806 = vmatprep.subr.mxu0 0.0
      %807 = vmatpush1.msra.mxu0 0.0
      %808 = vmatprep.subr.mxu0 0.0
      %809 = vmatpush1.msra.mxu0 0.0
      %810 = vmatprep.subr.mxu0 0.0
      %811 = vmatpush1.msra.mxu0 0.0
      %812 = vmatprep.subr.mxu0 0.0
      %813 = vmatpush1.msra.mxu0 0.0
      %814 = vmatprep.subr.mxu0 0.0
      %815 = vmatpush1.msra.mxu0 0.0
      %816 = vmatprep.subr.mxu0 0.0
      %817 = vmatpush1.msra.mxu0 0.0
      %818 = vmatprep.subr.mxu0 0.0
      %819 = vmatpush1.msra.mxu0 0.0
      %820 = vmatprep.subr.mxu0 0.0
      %821 = vmatpush1.msra.mxu0 0.0
      %822 = vmatprep.subr.mxu0 0.0
      %823 = vmatpush1.msra.mxu0 0.0
      %824 = vmatprep.subr.mxu0 0.0
      %825 = vmatpush1.msra.mxu0 0.0
      %826 = vmatprep.subr.mxu0 0.0
      %827 = vmatpush1.msra.mxu0 0.0
      %828 = vmatprep.subr.mxu0 0.0
      %829 = vmatpush1.msra.mxu0 0.0
      %830 = vmatprep.subr.mxu0 0.0
      %831 = vmatpush1.msra.mxu0 0.0
      %832 = vmatprep.subr.mxu0 0.0
      %833 = vmatpush1.msra.mxu0 0.0
      %834 = vmatprep.subr.mxu0 0.0
      %835 = vmatpush1.msra.mxu0 0.0
      %836 = vmatprep.subr.mxu0 0.0
      %837 = vmatpush1.msra.mxu0 0.0
      %838 = vmatprep.subr.mxu0 0.0
      %839 = vmatpush1.msra.mxu0 0.0
      %840 = vmatprep.subr.mxu0 0.0
      %841 = vmatpush1.msra.mxu0 0.0
      %842 = vmatprep.subr.mxu0 0.0
      %843 = vmatpush1.msra.mxu0 0.0
      %844 = vmatprep.subr.mxu0 0.0
      %845 = vmatpush1.msra.mxu0 0.0
      %846 = vmatprep.subr.mxu0 0.0
      %847 = vmatpush1.msra.mxu0 0.0
      %848 = vmatprep.subr.mxu0 0.0
      %849 = vmatpush1.msra.mxu0 0.0
      %850 = vmatprep.subr.mxu0 0.0
      %851 = vmatpush1.msra.mxu0 0.0
      %852 = vmatprep.subr.mxu0 0.0
      %853 = vmatpush1.msra.mxu0 0.0
      %854 = vmatprep.subr.mxu0 0.0
      %855 = vmatpush1.msra.mxu0 0.0
      %856 = vmatprep.subr.mxu0 0.0
      %857 = vmatpush1.msra.mxu0 0.0
      %858 = vmatprep.mubr.f32.mxu0 0.0
      %859 = vmatmul.mubr.f32.gmra.mrb[0].mxu0 %v759
      %v860 = vpop.f32.mrb[0].mxu0
      %v861 = vadd.f32 %v681, %v860
      %v862 = vpop.f32.mrb[0].mxu0
      %863 = vmatprep.mubr.f32.mxu0 0.0
      %864 = vmatmul.mubr.f32.gmra.mrb[0].mxu0 %v761
      %v865 = vpop.f32.mrb[0].mxu0
      %v866 = vadd.f32 %v686, %v865
      %v867 = vpop.f32.mrb[0].mxu0
      %868 = vmatprep.mubr.f32.mxu0 0.0
      %869 = vmatmul.mubr.f32.gmra.mrb[0].mxu0 %v763
      %v870 = vpop.f32.mrb[0].mxu0
      %v871 = vadd.f32 %v691, %v870
      %v872 = vpop.f32.mrb[0].mxu0
      %873 = vmatprep.mubr.f32.mxu0 0.0
      %874 = vmatmul.mubr.f32.gmra.mrb[0].mxu0 %v765
      %v875 = vpop.f32.mrb[0].mxu0
      %v876 = vadd.f32 %v696, %v875
      %v877 = vpop.f32.mrb[0].mxu0
      %878 = vmatprep.mubr.f32.mxu0 0.0
      %879 = vmatmul.mubr.f32.gmra.mrb[0].mxu0 %v767
      %v880 = vpop.f32.mrb[0].mxu0
      %v881 = vadd.f32 %v701, %v880
      %v882 = vpop.f32.mrb[0].mxu0
      %883 = vmatprep.mubr.f32.mxu0 0.0
      %884 = vmatmul.mubr.f32.gmra.mrb[0].mxu0 %v769
      %v885 = vpop.f32.mrb[0].mxu0
      %v886 = vadd.f32 %v706, %v885
      %v887 = vpop.f32.mrb[0].mxu0
      %888 = vmatprep.mubr.f32.mxu0 0.0
      %889 = vmatmul.mubr.f32.gmra.mrb[0].mxu0 %v771
      %v890 = vpop.f32.mrb[0].mxu0
      %v891 = vadd.f32 %v711, %v890
      %v892 = vpop.f32.mrb[0].mxu0
      %893 = vmatprep.mubr.f32.mxu0 0.0
      %894 = vmatmul.mubr.f32.gmra.mrb[0].mxu0 %v773
      %v895 = vpop.f32.mrb[0].mxu0
      %v896 = vadd.f32 %v716, %v895
      %v897 = vpop.f32.mrb[0].mxu0
      %898 = vmatprep.mubr.f32.mxu0 0.0
      %899 = vmatmul.mubr.f32.gmra.mrb[0].mxu0 %v775
      %v900 = vpop.f32.mrb[0].mxu0
      %v901 = vadd.f32 %v721, %v900
      %v902 = vpop.f32.mrb[0].mxu0
      %903 = vmatprep.mubr.f32.mxu0 0.0
      %904 = vmatmul.mubr.f32.gmra.mrb[0].mxu0 %v777
      %v905 = vpop.f32.mrb[0].mxu0
      %v906 = vadd.f32 %v726, %v905
      %v907 = vpop.f32.mrb[0].mxu0
      %908 = vmatprep.mubr.f32.mxu0 0.0
      %909 = vmatmul.mubr.f32.gmra.mrb[0].mxu0 %v779
      %v910 = vpop.f32.mrb[0].mxu0
      %v911 = vadd.f32 %v731, %v910
      %v912 = vpop.f32.mrb[0].mxu0
      %913 = vmatprep.mubr.f32.mxu0 0.0
      %914 = vmatmul.mubr.f32.gmra.mrb[0].mxu0 %v781
      %v915 = vpop.f32.mrb[0].mxu0
      %v916 = vadd.f32 %v736, %v915
      %v917 = vpop.f32.mrb[0].mxu0
      %918 = vmatprep.mubr.f32.mxu0 0.0
      %919 = vmatmul.mubr.f32.gmra.mrb[0].mxu0 %v783
      %v920 = vpop.f32.mrb[0].mxu0
      %v921 = vadd.f32 %v741, %v920
      %v922 = vpop.f32.mrb[0].mxu0
      %923 = vmatprep.mubr.f32.mxu0 0.0
      %924 = vmatmul.mubr.f32.gmra.mrb[0].mxu0 %v785
      %v925 = vpop.f32.mrb[0].mxu0
      %v926 = vadd.f32 %v746, %v925
      %v927 = vpop.f32.mrb[0].mxu0
      %928 = vmatprep.mubr.f32.mxu0 0.0
      %929 = vmatmul.mubr.f32.gmra.mrb[0].mxu0 %v787
      %v930 = vpop.f32.mrb[0].mxu0
      %v931 = vadd.f32 %v751, %v930
      %v932 = vpop.f32.mrb[0].mxu0
      %933 = vmatprep.mubr.f32.mxu0 0.0
      %934 = vmatmul.mubr.f32.gmra.mrb[0].mxu0 %v789
      %v935 = vpop.f32.mrb[0].mxu0
      %v936 = vadd.f32 %v756, %v935
      %v937 = vpop.f32.mrb[0].mxu0
      %938 = vdwg.mxu0
      %s939 = scalar_lea.vmem %s3, 8
      %v940 = vld [vmem:[%s939] sm:$0xf]
      %v942 = vsel %vm577, %v504, 0
      %v944 = vsel %vm577, %v472, 0
      %v947 = vsel %vm610, %v940, 0
      %949 = vmatprep.subr.mxu0 0.0
      %950 = vmatpush1.msra.mxu0 %v947
      %951 = vmatprep.subr.mxu0 0.0
      %952 = vmatpush1.msra.mxu0 0.0
      %953 = vmatprep.subr.mxu0 0.0
      %954 = vmatpush1.msra.mxu0 0.0
      %955 = vmatprep.subr.mxu0 0.0
      %956 = vmatpush1.msra.mxu0 0.0
      %957 = vmatprep.subr.mxu0 0.0
      %958 = vmatpush1.msra.mxu0 0.0
      %959 = vmatprep.subr.mxu0 0.0
      %960 = vmatpush1.msra.mxu0 0.0
      %961 = vmatprep.subr.mxu0 0.0
      %962 = vmatpush1.msra.mxu0 0.0
      %963 = vmatprep.subr.mxu0 0.0
      %964 = vmatpush1.msra.mxu0 0.0
      %965 = vmatprep.subr.mxu0 0.0
      %966 = vmatpush1.msra.mxu0 0.0
      %967 = vmatprep.subr.mxu0 0.0
      %968 = vmatpush1.msra.mxu0 0.0
      %969 = vmatprep.subr.mxu0 0.0
      %970 = vmatpush1.msra.mxu0 0.0
      %971 = vmatprep.subr.mxu0 0.0
      %972 = vmatpush1.msra.mxu0 0.0
      %973 = vmatprep.subr.mxu0 0.0
      %974 = vmatpush1.msra.mxu0 0.0
      %975 = vmatprep.subr.mxu0 0.0
      %976 = vmatpush1.msra.mxu0 0.0
      %977 = vmatprep.subr.mxu0 0.0
      %978 = vmatpush1.msra.mxu0 0.0
      %979 = vmatprep.subr.mxu0 0.0
      %980 = vmatpush1.msra.mxu0 0.0
      %981 = vmatprep.subr.mxu0 0.0
      %982 = vmatpush1.msra.mxu0 0.0
      %983 = vmatprep.subr.mxu0 0.0
      %984 = vmatpush1.msra.mxu0 0.0
      %985 = vmatprep.subr.mxu0 0.0
      %986 = vmatpush1.msra.mxu0 0.0
      %987 = vmatprep.subr.mxu0 0.0
      %988 = vmatpush1.msra.mxu0 0.0
      %989 = vmatprep.subr.mxu0 0.0
      %990 = vmatpush1.msra.mxu0 0.0
      %991 = vmatprep.subr.mxu0 0.0
      %992 = vmatpush1.msra.mxu0 0.0
      %993 = vmatprep.subr.mxu0 0.0
      %994 = vmatpush1.msra.mxu0 0.0
      %995 = vmatprep.subr.mxu0 0.0
      %996 = vmatpush1.msra.mxu0 0.0
      %997 = vmatprep.subr.mxu0 0.0
      %998 = vmatpush1.msra.mxu0 0.0
      %999 = vmatprep.subr.mxu0 0.0
      %1000 = vmatpush1.msra.mxu0 0.0
      %1001 = vmatprep.subr.mxu0 0.0
      %1002 = vmatpush1.msra.mxu0 0.0
      %1003 = vmatprep.subr.mxu0 0.0
      %1004 = vmatpush1.msra.mxu0 0.0
      %1005 = vmatprep.subr.mxu0 0.0
      %1006 = vmatpush1.msra.mxu0 0.0
      %1007 = vmatprep.subr.mxu0 0.0
      %1008 = vmatpush1.msra.mxu0 0.0
      %1009 = vmatprep.subr.mxu0 0.0
      %1010 = vmatpush1.msra.mxu0 0.0
      %1011 = vmatprep.subr.mxu0 0.0
      %1012 = vmatpush1.msra.mxu0 0.0
      %1013 = vmatprep.mubr.f32.mxu0 0.0
      %1014 = vmatmul.mubr.f32.gmra.mrb[0].mxu0 %v763
      %v1015 = vpop.f32.mrb[0].mxu0
      %v1016 = vadd.f32 0.0, %v1015
      %v1017 = vpop.f32.mrb[0].mxu0
      %1018 = vmatprep.mubr.f32.mxu0 0.0
      %1019 = vmatmul.mubr.f32.gmra.mrb[0].mxu0 %v765
      %v1020 = vpop.f32.mrb[0].mxu0
      %v1021 = vadd.f32 0.0, %v1020
      %v1022 = vpop.f32.mrb[0].mxu0
      %1023 = vmatprep.mubr.f32.mxu0 0.0
      %1024 = vmatmul.mubr.f32.gmra.mrb[0].mxu0 %v767
      %v1025 = vpop.f32.mrb[0].mxu0
      %v1026 = vadd.f32 0.0, %v1025
      %v1027 = vpop.f32.mrb[0].mxu0
      %1028 = vmatprep.mubr.f32.mxu0 0.0
      %1029 = vmatmul.mubr.f32.gmra.mrb[0].mxu0 %v769
      %v1030 = vpop.f32.mrb[0].mxu0
      %v1031 = vadd.f32 0.0, %v1030
      %v1032 = vpop.f32.mrb[0].mxu0
      %1033 = vmatprep.mubr.f32.mxu0 0.0
      %1034 = vmatmul.mubr.f32.gmra.mrb[0].mxu0 %v771
      %v1035 = vpop.f32.mrb[0].mxu0
      %v1036 = vadd.f32 0.0, %v1035
      %v1037 = vpop.f32.mrb[0].mxu0
      %1038 = vmatprep.mubr.f32.mxu0 0.0
      %1039 = vmatmul.mubr.f32.gmra.mrb[0].mxu0 %v773
      %v1040 = vpop.f32.mrb[0].mxu0
      %v1041 = vadd.f32 0.0, %v1040
      %v1042 = vpop.f32.mrb[0].mxu0
      %1043 = vmatprep.mubr.f32.mxu0 0.0
      %1044 = vmatmul.mubr.f32.gmra.mrb[0].mxu0 %v775
      %v1045 = vpop.f32.mrb[0].mxu0
      %v1046 = vadd.f32 0.0, %v1045
      %v1047 = vpop.f32.mrb[0].mxu0
      %1048 = vmatprep.mubr.f32.mxu0 0.0
      %1049 = vmatmul.mubr.f32.gmra.mrb[0].mxu0 %v777
      %v1050 = vpop.f32.mrb[0].mxu0
      %v1051 = vadd.f32 0.0, %v1050
      %v1052 = vpop.f32.mrb[0].mxu0
      %1053 = vmatprep.mubr.f32.mxu0 0.0
      %1054 = vmatmul.mubr.f32.gmra.mrb[0].mxu0 %v779
      %v1055 = vpop.f32.mrb[0].mxu0
      %v1056 = vadd.f32 0.0, %v1055
      %v1057 = vpop.f32.mrb[0].mxu0
      %1058 = vmatprep.mubr.f32.mxu0 0.0
      %1059 = vmatmul.mubr.f32.gmra.mrb[0].mxu0 %v781
      %v1060 = vpop.f32.mrb[0].mxu0
      %v1061 = vadd.f32 0.0, %v1060
      %v1062 = vpop.f32.mrb[0].mxu0
      %1063 = vmatprep.mubr.f32.mxu0 0.0
      %1064 = vmatmul.mubr.f32.gmra.mrb[0].mxu0 %v783
      %v1065 = vpop.f32.mrb[0].mxu0
      %v1066 = vadd.f32 0.0, %v1065
      %v1067 = vpop.f32.mrb[0].mxu0
      %1068 = vmatprep.mubr.f32.mxu0 0.0
      %1069 = vmatmul.mubr.f32.gmra.mrb[0].mxu0 %v785
      %v1070 = vpop.f32.mrb[0].mxu0
      %v1071 = vadd.f32 0.0, %v1070
      %v1072 = vpop.f32.mrb[0].mxu0
      %1073 = vmatprep.mubr.f32.mxu0 0.0
      %1074 = vmatmul.mubr.f32.gmra.mrb[0].mxu0 %v787
      %v1075 = vpop.f32.mrb[0].mxu0
      %v1076 = vadd.f32 0.0, %v1075
      %v1077 = vpop.f32.mrb[0].mxu0
      %1078 = vmatprep.mubr.f32.mxu0 0.0
      %1079 = vmatmul.mubr.f32.gmra.mrb[0].mxu0 %v789
      %v1080 = vpop.f32.mrb[0].mxu0
      %v1081 = vadd.f32 0.0, %v1080
      %v1082 = vpop.f32.mrb[0].mxu0
      %1083 = vmatprep.mubr.f32.mxu0 0.0
      %1084 = vmatmul.mubr.f32.gmra.mrb[0].mxu0 %v942
      %v1085 = vpop.f32.mrb[0].mxu0
      %v1086 = vadd.f32 0.0, %v1085
      %v1087 = vpop.f32.mrb[0].mxu0
      %1088 = vmatprep.mubr.f32.mxu0 0.0
      %1089 = vmatmul.mubr.f32.gmra.mrb[0].mxu0 %v944
      %v1090 = vpop.f32.mrb[0].mxu0
      %v1091 = vadd.f32 0.0, %v1090
      %v1092 = vpop.f32.mrb[0].mxu0
      %1093 = vdwg.mxu0
      %v1094 = vadd.f32 %v861, %v1016
      %v1095 = vadd.f32 %v866, %v1021
      %v1096 = vadd.f32 %v871, %v1026
      %v1097 = vadd.f32 %v876, %v1031
      %v1098 = vadd.f32 %v881, %v1036
      %v1099 = vadd.f32 %v886, %v1041
      %v1100 = vadd.f32 %v891, %v1046
      %v1101 = vadd.f32 %v896, %v1051
      %v1102 = vadd.f32 %v901, %v1056
      %v1103 = vadd.f32 %v906, %v1061
      %v1104 = vadd.f32 %v911, %v1066
      %v1105 = vadd.f32 %v916, %v1071
      %v1106 = vadd.f32 %v921, %v1076
      %v1107 = vadd.f32 %v926, %v1081
      %v1108 = vadd.f32 %v931, %v1086
      %v1109 = vadd.f32 %v936, %v1091
      %v1111 = vrot.slane %v504, 1
      %v1112 = vrot.slane %v472, 1
      %v1113 = vsel %vm534, %v1111, %v1112
      %v1114 = vrot.slane %v514, 1
      %v1115 = vsel %vm534, %v1112, %v1114
      %s1116 = scalar_lea.vmem %s3, 12
      %v1117 = vld [vmem:[%s1116] sm:$0xf]
      %v1118 = vsel %vm577, %v1113, 0
      %v1120 = vsel %vm577, %v1115, 0
      %v1123 = vsel %vm610, %v1117, 0
      %1125 = vmatprep.subr.mxu0 0.0
      %1126 = vmatpush1.msra.mxu0 %v1123
      %1127 = vmatprep.subr.mxu0 0.0
      %1128 = vmatpush1.msra.mxu0 0.0
      %1129 = vmatprep.subr.mxu0 0.0
      %1130 = vmatpush1.msra.mxu0 0.0
      %1131 = vmatprep.subr.mxu0 0.0
      %1132 = vmatpush1.msra.mxu0 0.0
      %1133 = vmatprep.subr.mxu0 0.0
      %1134 = vmatpush1.msra.mxu0 0.0
      %1135 = vmatprep.subr.mxu0 0.0
      %1136 = vmatpush1.msra.mxu0 0.0
      %1137 = vmatprep.subr.mxu0 0.0
      %1138 = vmatpush1.msra.mxu0 0.0
      %1139 = vmatprep.subr.mxu0 0.0
      %1140 = vmatpush1.msra.mxu0 0.0
      %1141 = vmatprep.subr.mxu0 0.0
      %1142 = vmatpush1.msra.mxu0 0.0
      %1143 = vmatprep.subr.mxu0 0.0
      %1144 = vmatpush1.msra.mxu0 0.0
      %1145 = vmatprep.subr.mxu0 0.0
      %1146 = vmatpush1.msra.mxu0 0.0
      %1147 = vmatprep.subr.mxu0 0.0
      %1148 = vmatpush1.msra.mxu0 0.0
      %1149 = vmatprep.subr.mxu0 0.0
      %1150 = vmatpush1.msra.mxu0 0.0
      %1151 = vmatprep.subr.mxu0 0.0
      %1152 = vmatpush1.msra.mxu0 0.0
      %1153 = vmatprep.subr.mxu0 0.0
      %1154 = vmatpush1.msra.mxu0 0.0
      %1155 = vmatprep.subr.mxu0 0.0
      %1156 = vmatpush1.msra.mxu0 0.0
      %1157 = vmatprep.subr.mxu0 0.0
      %1158 = vmatpush1.msra.mxu0 0.0
      %1159 = vmatprep.subr.mxu0 0.0
      %1160 = vmatpush1.msra.mxu0 0.0
      %1161 = vmatprep.subr.mxu0 0.0
      %1162 = vmatpush1.msra.mxu0 0.0
      %1163 = vmatprep.subr.mxu0 0.0
      %1164 = vmatpush1.msra.mxu0 0.0
      %1165 = vmatprep.subr.mxu0 0.0
      %1166 = vmatpush1.msra.mxu0 0.0
      %1167 = vmatprep.subr.mxu0 0.0
      %1168 = vmatpush1.msra.mxu0 0.0
      %1169 = vmatprep.subr.mxu0 0.0
      %1170 = vmatpush1.msra.mxu0 0.0
      %1171 = vmatprep.subr.mxu0 0.0
      %1172 = vmatpush1.msra.mxu0 0.0
      %1173 = vmatprep.subr.mxu0 0.0
      %1174 = vmatpush1.msra.mxu0 0.0
      %1175 = vmatprep.subr.mxu0 0.0
      %1176 = vmatpush1.msra.mxu0 0.0
      %1177 = vmatprep.subr.mxu0 0.0
      %1178 = vmatpush1.msra.mxu0 0.0
      %1179 = vmatprep.subr.mxu0 0.0
      %1180 = vmatpush1.msra.mxu0 0.0
      %1181 = vmatprep.subr.mxu0 0.0
      %1182 = vmatpush1.msra.mxu0 0.0
      %1183 = vmatprep.subr.mxu0 0.0
      %1184 = vmatpush1.msra.mxu0 0.0
      %1185 = vmatprep.subr.mxu0 0.0
      %1186 = vmatpush1.msra.mxu0 0.0
      %1187 = vmatprep.subr.mxu0 0.0
      %1188 = vmatpush1.msra.mxu0 0.0
      %1189 = vmatprep.mubr.f32.mxu0 0.0
      %1190 = vmatmul.mubr.f32.gmra.mrb[0].mxu0 %v582
      %v1191 = vpop.f32.mrb[0].mxu0
      %v1192 = vadd.f32 0.0, %v1191
      %v1193 = vpop.f32.mrb[0].mxu0
      %1194 = vmatprep.mubr.f32.mxu0 0.0
      %1195 = vmatmul.mubr.f32.gmra.mrb[0].mxu0 %v584
      %v1196 = vpop.f32.mrb[0].mxu0
      %v1197 = vadd.f32 0.0, %v1196
      %v1198 = vpop.f32.mrb[0].mxu0
      %1199 = vmatprep.mubr.f32.mxu0 0.0
      %1200 = vmatmul.mubr.f32.gmra.mrb[0].mxu0 %v586
      %v1201 = vpop.f32.mrb[0].mxu0
      %v1202 = vadd.f32 0.0, %v1201
      %v1203 = vpop.f32.mrb[0].mxu0
      %1204 = vmatprep.mubr.f32.mxu0 0.0
      %1205 = vmatmul.mubr.f32.gmra.mrb[0].mxu0 %v588
      %v1206 = vpop.f32.mrb[0].mxu0
      %v1207 = vadd.f32 0.0, %v1206
      %v1208 = vpop.f32.mrb[0].mxu0
      %1209 = vmatprep.mubr.f32.mxu0 0.0
      %1210 = vmatmul.mubr.f32.gmra.mrb[0].mxu0 %v590
      %v1211 = vpop.f32.mrb[0].mxu0
      %v1212 = vadd.f32 0.0, %v1211
      %v1213 = vpop.f32.mrb[0].mxu0
      %1214 = vmatprep.mubr.f32.mxu0 0.0
      %1215 = vmatmul.mubr.f32.gmra.mrb[0].mxu0 %v592
      %v1216 = vpop.f32.mrb[0].mxu0
      %v1217 = vadd.f32 0.0, %v1216
      %v1218 = vpop.f32.mrb[0].mxu0
      %1219 = vmatprep.mubr.f32.mxu0 0.0
      %1220 = vmatmul.mubr.f32.gmra.mrb[0].mxu0 %v594
      %v1221 = vpop.f32.mrb[0].mxu0
      %v1222 = vadd.f32 0.0, %v1221
      %v1223 = vpop.f32.mrb[0].mxu0
      %1224 = vmatprep.mubr.f32.mxu0 0.0
      %1225 = vmatmul.mubr.f32.gmra.mrb[0].mxu0 %v596
      %v1226 = vpop.f32.mrb[0].mxu0
      %v1227 = vadd.f32 0.0, %v1226
      %v1228 = vpop.f32.mrb[0].mxu0
      %1229 = vmatprep.mubr.f32.mxu0 0.0
      %1230 = vmatmul.mubr.f32.gmra.mrb[0].mxu0 %v598
      %v1231 = vpop.f32.mrb[0].mxu0
      %v1232 = vadd.f32 0.0, %v1231
      %v1233 = vpop.f32.mrb[0].mxu0
      %1234 = vmatprep.mubr.f32.mxu0 0.0
      %1235 = vmatmul.mubr.f32.gmra.mrb[0].mxu0 %v600
      %v1236 = vpop.f32.mrb[0].mxu0
      %v1237 = vadd.f32 0.0, %v1236
      %v1238 = vpop.f32.mrb[0].mxu0
      %1239 = vmatprep.mubr.f32.mxu0 0.0
      %1240 = vmatmul.mubr.f32.gmra.mrb[0].mxu0 %v602
      %v1241 = vpop.f32.mrb[0].mxu0
      %v1242 = vadd.f32 0.0, %v1241
      %v1243 = vpop.f32.mrb[0].mxu0
      %1244 = vmatprep.mubr.f32.mxu0 0.0
      %1245 = vmatmul.mubr.f32.gmra.mrb[0].mxu0 %v604
      %v1246 = vpop.f32.mrb[0].mxu0
      %v1247 = vadd.f32 0.0, %v1246
      %v1248 = vpop.f32.mrb[0].mxu0
      %1249 = vmatprep.mubr.f32.mxu0 0.0
      %1250 = vmatmul.mubr.f32.gmra.mrb[0].mxu0 %v606
      %v1251 = vpop.f32.mrb[0].mxu0
      %v1252 = vadd.f32 0.0, %v1251
      %v1253 = vpop.f32.mrb[0].mxu0
      %1254 = vmatprep.mubr.f32.mxu0 0.0
      %1255 = vmatmul.mubr.f32.gmra.mrb[0].mxu0 %v608
      %v1256 = vpop.f32.mrb[0].mxu0
      %v1257 = vadd.f32 0.0, %v1256
      %v1258 = vpop.f32.mrb[0].mxu0
      %1259 = vmatprep.mubr.f32.mxu0 0.0
      %1260 = vmatmul.mubr.f32.gmra.mrb[0].mxu0 %v1118
      %v1261 = vpop.f32.mrb[0].mxu0
      %v1262 = vadd.f32 0.0, %v1261
      %v1263 = vpop.f32.mrb[0].mxu0
      %1264 = vmatprep.mubr.f32.mxu0 0.0
      %1265 = vmatmul.mubr.f32.gmra.mrb[0].mxu0 %v1120
      %v1266 = vpop.f32.mrb[0].mxu0
      %v1267 = vadd.f32 0.0, %v1266
      %v1268 = vpop.f32.mrb[0].mxu0
      %1269 = vdwg.mxu0
      %v1270 = vadd.f32 %v1094, %v1192
      %v1271 = vadd.f32 %v1095, %v1197
      %v1272 = vadd.f32 %v1096, %v1202
      %v1273 = vadd.f32 %v1097, %v1207
      %v1274 = vadd.f32 %v1098, %v1212
      %v1275 = vadd.f32 %v1099, %v1217
      %v1276 = vadd.f32 %v1100, %v1222
      %v1277 = vadd.f32 %v1101, %v1227
      %v1278 = vadd.f32 %v1102, %v1232
      %v1279 = vadd.f32 %v1103, %v1237
      %v1280 = vadd.f32 %v1104, %v1242
      %v1281 = vadd.f32 %v1105, %v1247
      %v1282 = vadd.f32 %v1106, %v1252
      %v1283 = vadd.f32 %v1107, %v1257
      %v1284 = vadd.f32 %v1108, %v1262
      %v1285 = vadd.f32 %v1109, %v1267
      %v1287 = vlaneseq
      %v1288 = vshrl.u32 %v1287, 7
      %v1289 = vsub.s32 0, %v1288
      %v1290 = vrot.slane %v516, %v1289
      %v1292 = vadd.f32 %v1270, %v1290
      %v1293 = vadd.f32 %v1271, %v1290
      %v1294 = vadd.f32 %v1272, %v1290
      %v1295 = vadd.f32 %v1273, %v1290
      %v1296 = vadd.f32 %v1274, %v1290
      %v1297 = vadd.f32 %v1275, %v1290
      %v1298 = vadd.f32 %v1276, %v1290
      %v1299 = vadd.f32 %v1277, %v1290
      %v1300 = vadd.f32 %v1278, %v1290
      %v1301 = vadd.f32 %v1279, %v1290
      %v1302 = vadd.f32 %v1280, %v1290
      %v1303 = vadd.f32 %v1281, %v1290
      %v1304 = vadd.f32 %v1282, %v1290
      %v1305 = vadd.f32 %v1283, %v1290
      %v1306 = vadd.f32 %v1284, %v1290
      %v1307 = vadd.f32 %v1285, %v1290
      %s1308 = scalar_lea.vmem %s3, 16
      %v1309 = vld [vmem:[%s1308] sm:$0xf]
      %vm1310 = vcmask 1045504
      %v1311 = vrot.slane %v496, 2
      %v1312 = vrot.slane %v448, 2
      %v1313 = vsel %vm1310, %v1311, %v1312
      %v1314 = vrot.slane %v506, 2
      %v1315 = vsel %vm1310, %v1312, %v1314
      %v1316 = vrot.slane %v497, 2
      %v1317 = vrot.slane %v451, 2
      %v1318 = vsel %vm1310, %v1316, %v1317
      %v1319 = vrot.slane %v507, 2
      %v1320 = vsel %vm1310, %v1317, %v1319
      %v1321 = vrot.slane %v498, 2
      %v1322 = vrot.slane %v454, 2
      %v1323 = vsel %vm1310, %v1321, %v1322
      %v1324 = vrot.slane %v508, 2
      %v1325 = vsel %vm1310, %v1322, %v1324
      %v1326 = vrot.slane %v499, 2
      %v1327 = vrot.slane %v457, 2
      %v1328 = vsel %vm1310, %v1326, %v1327
      %v1329 = vrot.slane %v509, 2
      %v1330 = vsel %vm1310, %v1327, %v1329
      %v1331 = vrot.slane %v500, 2
      %v1332 = vrot.slane %v460, 2
      %v1333 = vsel %vm1310, %v1331, %v1332
      %v1334 = vrot.slane %v510, 2
      %v1335 = vsel %vm1310, %v1332, %v1334
      %v1336 = vrot.slane %v501, 2
      %v1337 = vrot.slane %v463, 2
      %v1338 = vsel %vm1310, %v1336, %v1337
      %v1339 = vrot.slane %v511, 2
      %v1340 = vsel %vm1310, %v1337, %v1339
      %v1341 = vrot.slane %v502, 2
      %v1342 = vrot.slane %v466, 2
      %v1343 = vsel %vm1310, %v1341, %v1342
      %v1344 = vrot.slane %v512, 2
      %v1345 = vsel %vm1310, %v1342, %v1344
      %v1346 = vrot.slane %v503, 2
      %v1347 = vrot.slane %v469, 2
      %v1348 = vsel %vm1310, %v1346, %v1347
      %v1349 = vrot.slane %v513, 2
      %v1350 = vsel %vm1310, %v1347, %v1349
      %s1351 = scalar_lea.vmem %s3, 20
      %v1352 = vld [vmem:[%s1351] sm:$0xf]
      %v1353 = vsel %vm577, %v1313, 0
      %v1355 = vsel %vm577, %v1315, 0
      %v1357 = vsel %vm577, %v1318, 0
      %v1359 = vsel %vm577, %v1320, 0
      %v1361 = vsel %vm577, %v1323, 0
      %v1363 = vsel %vm577, %v1325, 0
      %v1365 = vsel %vm577, %v1328, 0
      %v1367 = vsel %vm577, %v1330, 0
      %v1369 = vsel %vm577, %v1333, 0
      %v1371 = vsel %vm577, %v1335, 0
      %v1373 = vsel %vm577, %v1338, 0
      %v1375 = vsel %vm577, %v1340, 0
      %v1377 = vsel %vm577, %v1343, 0
      %v1379 = vsel %vm577, %v1345, 0
      %v1381 = vsel %vm577, %v1348, 0
      %v1383 = vsel %vm577, %v1350, 0
      %v1386 = vsel %vm610, %v1352, 0
      %1388 = vmatprep.subr.mxu0 0.0
      %1389 = vmatpush1.msra.mxu0 %v1386
      %1390 = vmatprep.subr.mxu0 0.0
      %1391 = vmatpush1.msra.mxu0 0.0
      %1392 = vmatprep.subr.mxu0 0.0
      %1393 = vmatpush1.msra.mxu0 0.0
      %1394 = vmatprep.subr.mxu0 0.0
      %1395 = vmatpush1.msra.mxu0 0.0
      %1396 = vmatprep.subr.mxu0 0.0
      %1397 = vmatpush1.msra.mxu0 0.0
      %1398 = vmatprep.subr.mxu0 0.0
      %1399 = vmatpush1.msra.mxu0 0.0
      %1400 = vmatprep.subr.mxu0 0.0
      %1401 = vmatpush1.msra.mxu0 0.0
      %1402 = vmatprep.subr.mxu0 0.0
      %1403 = vmatpush1.msra.mxu0 0.0
      %1404 = vmatprep.subr.mxu0 0.0
      %1405 = vmatpush1.msra.mxu0 0.0
      %1406 = vmatprep.subr.mxu0 0.0
      %1407 = vmatpush1.msra.mxu0 0.0
      %1408 = vmatprep.subr.mxu0 0.0
      %1409 = vmatpush1.msra.mxu0 0.0
      %1410 = vmatprep.subr.mxu0 0.0
      %1411 = vmatpush1.msra.mxu0 0.0
      %1412 = vmatprep.subr.mxu0 0.0
      %1413 = vmatpush1.msra.mxu0 0.0
      %1414 = vmatprep.subr.mxu0 0.0
      %1415 = vmatpush1.msra.mxu0 0.0
      %1416 = vmatprep.subr.mxu0 0.0
      %1417 = vmatpush1.msra.mxu0 0.0
      %1418 = vmatprep.subr.mxu0 0.0
      %1419 = vmatpush1.msra.mxu0 0.0
      %1420 = vmatprep.subr.mxu0 0.0
      %1421 = vmatpush1.msra.mxu0 0.0
      %1422 = vmatprep.subr.mxu0 0.0
      %1423 = vmatpush1.msra.mxu0 0.0
      %1424 = vmatprep.subr.mxu0 0.0
      %1425 = vmatpush1.msra.mxu0 0.0
      %1426 = vmatprep.subr.mxu0 0.0
      %1427 = vmatpush1.msra.mxu0 0.0
      %1428 = vmatprep.subr.mxu0 0.0
      %1429 = vmatpush1.msra.mxu0 0.0
      %1430 = vmatprep.subr.mxu0 0.0
      %1431 = vmatpush1.msra.mxu0 0.0
      %1432 = vmatprep.subr.mxu0 0.0
      %1433 = vmatpush1.msra.mxu0 0.0
      %1434 = vmatprep.subr.mxu0 0.0
      %1435 = vmatpush1.msra.mxu0 0.0
      %1436 = vmatprep.subr.mxu0 0.0
      %1437 = vmatpush1.msra.mxu0 0.0
      %1438 = vmatprep.subr.mxu0 0.0
      %1439 = vmatpush1.msra.mxu0 0.0
      %1440 = vmatprep.subr.mxu0 0.0
      %1441 = vmatpush1.msra.mxu0 0.0
      %1442 = vmatprep.subr.mxu0 0.0
      %1443 = vmatpush1.msra.mxu0 0.0
      %1444 = vmatprep.subr.mxu0 0.0
      %1445 = vmatpush1.msra.mxu0 0.0
      %1446 = vmatprep.subr.mxu0 0.0
      %1447 = vmatpush1.msra.mxu0 0.0
      %1448 = vmatprep.subr.mxu0 0.0
      %1449 = vmatpush1.msra.mxu0 0.0
      %1450 = vmatprep.subr.mxu0 0.0
      %1451 = vmatpush1.msra.mxu0 0.0
      %1452 = vmatprep.mubr.f32.mxu0 0.0
      %1453 = vmatmul.mubr.f32.gmra.mrb[0].mxu0 %v1353
      %v1454 = vpop.f32.mrb[0].mxu0
      %v1455 = vadd.f32 0.0, %v1454
      %v1456 = vpop.f32.mrb[0].mxu0
      %1457 = vmatprep.mubr.f32.mxu0 0.0
      %1458 = vmatmul.mubr.f32.gmra.mrb[0].mxu0 %v1355
      %v1459 = vpop.f32.mrb[0].mxu0
      %v1460 = vadd.f32 0.0, %v1459
      %v1461 = vpop.f32.mrb[0].mxu0
      %1462 = vmatprep.mubr.f32.mxu0 0.0
      %1463 = vmatmul.mubr.f32.gmra.mrb[0].mxu0 %v1357
      %v1464 = vpop.f32.mrb[0].mxu0
      %v1465 = vadd.f32 0.0, %v1464
      %v1466 = vpop.f32.mrb[0].mxu0
      %1467 = vmatprep.mubr.f32.mxu0 0.0
      %1468 = vmatmul.mubr.f32.gmra.mrb[0].mxu0 %v1359
      %v1469 = vpop.f32.mrb[0].mxu0
      %v1470 = vadd.f32 0.0, %v1469
      %v1471 = vpop.f32.mrb[0].mxu0
      %1472 = vmatprep.mubr.f32.mxu0 0.0
      %1473 = vmatmul.mubr.f32.gmra.mrb[0].mxu0 %v1361
      %v1474 = vpop.f32.mrb[0].mxu0
      %v1475 = vadd.f32 0.0, %v1474
      %v1476 = vpop.f32.mrb[0].mxu0
      %1477 = vmatprep.mubr.f32.mxu0 0.0
      %1478 = vmatmul.mubr.f32.gmra.mrb[0].mxu0 %v1363
      %v1479 = vpop.f32.mrb[0].mxu0
      %v1480 = vadd.f32 0.0, %v1479
      %v1481 = vpop.f32.mrb[0].mxu0
      %1482 = vmatprep.mubr.f32.mxu0 0.0
      %1483 = vmatmul.mubr.f32.gmra.mrb[0].mxu0 %v1365
      %v1484 = vpop.f32.mrb[0].mxu0
      %v1485 = vadd.f32 0.0, %v1484
      %v1486 = vpop.f32.mrb[0].mxu0
      %1487 = vmatprep.mubr.f32.mxu0 0.0
      %1488 = vmatmul.mubr.f32.gmra.mrb[0].mxu0 %v1367
      %v1489 = vpop.f32.mrb[0].mxu0
      %v1490 = vadd.f32 0.0, %v1489
      %v1491 = vpop.f32.mrb[0].mxu0
      %1492 = vmatprep.mubr.f32.mxu0 0.0
      %1493 = vmatmul.mubr.f32.gmra.mrb[0].mxu0 %v1369
      %v1494 = vpop.f32.mrb[0].mxu0
      %v1495 = vadd.f32 0.0, %v1494
      %v1496 = vpop.f32.mrb[0].mxu0
      %1497 = vmatprep.mubr.f32.mxu0 0.0
      %1498 = vmatmul.mubr.f32.gmra.mrb[0].mxu0 %v1371
      %v1499 = vpop.f32.mrb[0].mxu0
      %v1500 = vadd.f32 0.0, %v1499
      %v1501 = vpop.f32.mrb[0].mxu0
      %1502 = vmatprep.mubr.f32.mxu0 0.0
      %1503 = vmatmul.mubr.f32.gmra.mrb[0].mxu0 %v1373
      %v1504 = vpop.f32.mrb[0].mxu0
      %v1505 = vadd.f32 0.0, %v1504
      %v1506 = vpop.f32.mrb[0].mxu0
      %1507 = vmatprep.mubr.f32.mxu0 0.0
      %1508 = vmatmul.mubr.f32.gmra.mrb[0].mxu0 %v1375
      %v1509 = vpop.f32.mrb[0].mxu0
      %v1510 = vadd.f32 0.0, %v1509
      %v1511 = vpop.f32.mrb[0].mxu0
      %1512 = vmatprep.mubr.f32.mxu0 0.0
      %1513 = vmatmul.mubr.f32.gmra.mrb[0].mxu0 %v1377
      %v1514 = vpop.f32.mrb[0].mxu0
      %v1515 = vadd.f32 0.0, %v1514
      %v1516 = vpop.f32.mrb[0].mxu0
      %1517 = vmatprep.mubr.f32.mxu0 0.0
      %1518 = vmatmul.mubr.f32.gmra.mrb[0].mxu0 %v1379
      %v1519 = vpop.f32.mrb[0].mxu0
      %v1520 = vadd.f32 0.0, %v1519
      %v1521 = vpop.f32.mrb[0].mxu0
      %1522 = vmatprep.mubr.f32.mxu0 0.0
      %1523 = vmatmul.mubr.f32.gmra.mrb[0].mxu0 %v1381
      %v1524 = vpop.f32.mrb[0].mxu0
      %v1525 = vadd.f32 0.0, %v1524
      %v1526 = vpop.f32.mrb[0].mxu0
      %1527 = vmatprep.mubr.f32.mxu0 0.0
      %1528 = vmatmul.mubr.f32.gmra.mrb[0].mxu0 %v1383
      %v1529 = vpop.f32.mrb[0].mxu0
      %v1530 = vadd.f32 0.0, %v1529
      %v1531 = vpop.f32.mrb[0].mxu0
      %1532 = vdwg.mxu0
      %v1534 = vsel %vm610, %v1309, 0
      %1536 = vmatprep.subr.mxu0 0.0
      %1537 = vmatpush1.msra.mxu0 %v1534
      %1538 = vmatprep.subr.mxu0 0.0
      %1539 = vmatpush1.msra.mxu0 0.0
      %1540 = vmatprep.subr.mxu0 0.0
      %1541 = vmatpush1.msra.mxu0 0.0
      %1542 = vmatprep.subr.mxu0 0.0
      %1543 = vmatpush1.msra.mxu0 0.0
      %1544 = vmatprep.subr.mxu0 0.0
      %1545 = vmatpush1.msra.mxu0 0.0
      %1546 = vmatprep.subr.mxu0 0.0
      %1547 = vmatpush1.msra.mxu0 0.0
      %1548 = vmatprep.subr.mxu0 0.0
      %1549 = vmatpush1.msra.mxu0 0.0
      %1550 = vmatprep.subr.mxu0 0.0
      %1551 = vmatpush1.msra.mxu0 0.0
      %1552 = vmatprep.subr.mxu0 0.0
      %1553 = vmatpush1.msra.mxu0 0.0
      %1554 = vmatprep.subr.mxu0 0.0
      %1555 = vmatpush1.msra.mxu0 0.0
      %1556 = vmatprep.subr.mxu0 0.0
      %1557 = vmatpush1.msra.mxu0 0.0
      %1558 = vmatprep.subr.mxu0 0.0
      %1559 = vmatpush1.msra.mxu0 0.0
      %1560 = vmatprep.subr.mxu0 0.0
      %1561 = vmatpush1.msra.mxu0 0.0
      %1562 = vmatprep.subr.mxu0 0.0
      %1563 = vmatpush1.msra.mxu0 0.0
      %1564 = vmatprep.subr.mxu0 0.0
      %1565 = vmatpush1.msra.mxu0 0.0
      %1566 = vmatprep.subr.mxu0 0.0
      %1567 = vmatpush1.msra.mxu0 0.0
      %1568 = vmatprep.subr.mxu0 0.0
      %1569 = vmatpush1.msra.mxu0 0.0
      %1570 = vmatprep.subr.mxu0 0.0
      %1571 = vmatpush1.msra.mxu0 0.0
      %1572 = vmatprep.subr.mxu0 0.0
      %1573 = vmatpush1.msra.mxu0 0.0
      %1574 = vmatprep.subr.mxu0 0.0
      %1575 = vmatpush1.msra.mxu0 0.0
      %1576 = vmatprep.subr.mxu0 0.0
      %1577 = vmatpush1.msra.mxu0 0.0
      %1578 = vmatprep.subr.mxu0 0.0
      %1579 = vmatpush1.msra.mxu0 0.0
      %1580 = vmatprep.subr.mxu0 0.0
      %1581 = vmatpush1.msra.mxu0 0.0
      %1582 = vmatprep.subr.mxu0 0.0
      %1583 = vmatpush1.msra.mxu0 0.0
      %1584 = vmatprep.subr.mxu0 0.0
      %1585 = vmatpush1.msra.mxu0 0.0
      %1586 = vmatprep.subr.mxu0 0.0
      %1587 = vmatpush1.msra.mxu0 0.0
      %1588 = vmatprep.subr.mxu0 0.0
      %1589 = vmatpush1.msra.mxu0 0.0
      %1590 = vmatprep.subr.mxu0 0.0
      %1591 = vmatpush1.msra.mxu0 0.0
      %1592 = vmatprep.subr.mxu0 0.0
      %1593 = vmatpush1.msra.mxu0 0.0
      %1594 = vmatprep.subr.mxu0 0.0
      %1595 = vmatpush1.msra.mxu0 0.0
      %1596 = vmatprep.subr.mxu0 0.0
      %1597 = vmatpush1.msra.mxu0 0.0
      %1598 = vmatprep.subr.mxu0 0.0
      %1599 = vmatpush1.msra.mxu0 0.0
      %1600 = vmatprep.mubr.f32.mxu0 0.0
      %1601 = vmatmul.mubr.f32.gmra.mrb[0].mxu0 %v578
      %v1602 = vpop.f32.mrb[0].mxu0
      %v1603 = vadd.f32 %v1455, %v1602
      %v1604 = vpop.f32.mrb[0].mxu0
      %1605 = vmatprep.mubr.f32.mxu0 0.0
      %1606 = vmatmul.mubr.f32.gmra.mrb[0].mxu0 %v580
      %v1607 = vpop.f32.mrb[0].mxu0
      %v1608 = vadd.f32 %v1460, %v1607
      %v1609 = vpop.f32.mrb[0].mxu0
      %1610 = vmatprep.mubr.f32.mxu0 0.0
      %1611 = vmatmul.mubr.f32.gmra.mrb[0].mxu0 %v582
      %v1612 = vpop.f32.mrb[0].mxu0
      %v1613 = vadd.f32 %v1465, %v1612
      %v1614 = vpop.f32.mrb[0].mxu0
      %1615 = vmatprep.mubr.f32.mxu0 0.0
      %1616 = vmatmul.mubr.f32.gmra.mrb[0].mxu0 %v584
      %v1617 = vpop.f32.mrb[0].mxu0
      %v1618 = vadd.f32 %v1470, %v1617
      %v1619 = vpop.f32.mrb[0].mxu0
      %1620 = vmatprep.mubr.f32.mxu0 0.0
      %1621 = vmatmul.mubr.f32.gmra.mrb[0].mxu0 %v586
      %v1622 = vpop.f32.mrb[0].mxu0
      %v1623 = vadd.f32 %v1475, %v1622
      %v1624 = vpop.f32.mrb[0].mxu0
      %1625 = vmatprep.mubr.f32.mxu0 0.0
      %1626 = vmatmul.mubr.f32.gmra.mrb[0].mxu0 %v588
      %v1627 = vpop.f32.mrb[0].mxu0
      %v1628 = vadd.f32 %v1480, %v1627
      %v1629 = vpop.f32.mrb[0].mxu0
      %1630 = vmatprep.mubr.f32.mxu0 0.0
      %1631 = vmatmul.mubr.f32.gmra.mrb[0].mxu0 %v590
      %v1632 = vpop.f32.mrb[0].mxu0
      %v1633 = vadd.f32 %v1485, %v1632
      %v1634 = vpop.f32.mrb[0].mxu0
      %1635 = vmatprep.mubr.f32.mxu0 0.0
      %1636 = vmatmul.mubr.f32.gmra.mrb[0].mxu0 %v592
      %v1637 = vpop.f32.mrb[0].mxu0
      %v1638 = vadd.f32 %v1490, %v1637
      %v1639 = vpop.f32.mrb[0].mxu0
      %1640 = vmatprep.mubr.f32.mxu0 0.0
      %1641 = vmatmul.mubr.f32.gmra.mrb[0].mxu0 %v594
      %v1642 = vpop.f32.mrb[0].mxu0
      %v1643 = vadd.f32 %v1495, %v1642
      %v1644 = vpop.f32.mrb[0].mxu0
      %1645 = vmatprep.mubr.f32.mxu0 0.0
      %1646 = vmatmul.mubr.f32.gmra.mrb[0].mxu0 %v596
      %v1647 = vpop.f32.mrb[0].mxu0
      %v1648 = vadd.f32 %v1500, %v1647
      %v1649 = vpop.f32.mrb[0].mxu0
      %1650 = vmatprep.mubr.f32.mxu0 0.0
      %1651 = vmatmul.mubr.f32.gmra.mrb[0].mxu0 %v598
      %v1652 = vpop.f32.mrb[0].mxu0
      %v1653 = vadd.f32 %v1505, %v1652
      %v1654 = vpop.f32.mrb[0].mxu0
      %1655 = vmatprep.mubr.f32.mxu0 0.0
      %1656 = vmatmul.mubr.f32.gmra.mrb[0].mxu0 %v600
      %v1657 = vpop.f32.mrb[0].mxu0
      %v1658 = vadd.f32 %v1510, %v1657
      %v1659 = vpop.f32.mrb[0].mxu0
      %1660 = vmatprep.mubr.f32.mxu0 0.0
      %1661 = vmatmul.mubr.f32.gmra.mrb[0].mxu0 %v602
      %v1662 = vpop.f32.mrb[0].mxu0
      %v1663 = vadd.f32 %v1515, %v1662
      %v1664 = vpop.f32.mrb[0].mxu0
      %1665 = vmatprep.mubr.f32.mxu0 0.0
      %1666 = vmatmul.mubr.f32.gmra.mrb[0].mxu0 %v604
      %v1667 = vpop.f32.mrb[0].mxu0
      %v1668 = vadd.f32 %v1520, %v1667
      %v1669 = vpop.f32.mrb[0].mxu0
      %1670 = vmatprep.mubr.f32.mxu0 0.0
      %1671 = vmatmul.mubr.f32.gmra.mrb[0].mxu0 %v606
      %v1672 = vpop.f32.mrb[0].mxu0
      %v1673 = vadd.f32 %v1525, %v1672
      %v1674 = vpop.f32.mrb[0].mxu0
      %1675 = vmatprep.mubr.f32.mxu0 0.0
      %1676 = vmatmul.mubr.f32.gmra.mrb[0].mxu0 %v608
      %v1677 = vpop.f32.mrb[0].mxu0
      %v1678 = vadd.f32 %v1530, %v1677
      %v1679 = vpop.f32.mrb[0].mxu0
      %1680 = vdwg.mxu0
      %s1681 = scalar_lea.vmem %s3, 24
      %v1682 = vld [vmem:[%s1681] sm:$0xf]
      %v1684 = vsel %vm610, %v1682, 0
      %1686 = vmatprep.subr.mxu0 0.0
      %1687 = vmatpush1.msra.mxu0 %v1684
      %1688 = vmatprep.subr.mxu0 0.0
      %1689 = vmatpush1.msra.mxu0 0.0
      %1690 = vmatprep.subr.mxu0 0.0
      %1691 = vmatpush1.msra.mxu0 0.0
      %1692 = vmatprep.subr.mxu0 0.0
      %1693 = vmatpush1.msra.mxu0 0.0
      %1694 = vmatprep.subr.mxu0 0.0
      %1695 = vmatpush1.msra.mxu0 0.0
      %1696 = vmatprep.subr.mxu0 0.0
      %1697 = vmatpush1.msra.mxu0 0.0
      %1698 = vmatprep.subr.mxu0 0.0
      %1699 = vmatpush1.msra.mxu0 0.0
      %1700 = vmatprep.subr.mxu0 0.0
      %1701 = vmatpush1.msra.mxu0 0.0
      %1702 = vmatprep.subr.mxu0 0.0
      %1703 = vmatpush1.msra.mxu0 0.0
      %1704 = vmatprep.subr.mxu0 0.0
      %1705 = vmatpush1.msra.mxu0 0.0
      %1706 = vmatprep.subr.mxu0 0.0
      %1707 = vmatpush1.msra.mxu0 0.0
      %1708 = vmatprep.subr.mxu0 0.0
      %1709 = vmatpush1.msra.mxu0 0.0
      %1710 = vmatprep.subr.mxu0 0.0
      %1711 = vmatpush1.msra.mxu0 0.0
      %1712 = vmatprep.subr.mxu0 0.0
      %1713 = vmatpush1.msra.mxu0 0.0
      %1714 = vmatprep.subr.mxu0 0.0
      %1715 = vmatpush1.msra.mxu0 0.0
      %1716 = vmatprep.subr.mxu0 0.0
      %1717 = vmatpush1.msra.mxu0 0.0
      %1718 = vmatprep.subr.mxu0 0.0
      %1719 = vmatpush1.msra.mxu0 0.0
      %1720 = vmatprep.subr.mxu0 0.0
      %1721 = vmatpush1.msra.mxu0 0.0
      %1722 = vmatprep.subr.mxu0 0.0
      %1723 = vmatpush1.msra.mxu0 0.0
      %1724 = vmatprep.subr.mxu0 0.0
      %1725 = vmatpush1.msra.mxu0 0.0
      %1726 = vmatprep.subr.mxu0 0.0
      %1727 = vmatpush1.msra.mxu0 0.0
      %1728 = vmatprep.subr.mxu0 0.0
      %1729 = vmatpush1.msra.mxu0 0.0
      %1730 = vmatprep.subr.mxu0 0.0
      %1731 = vmatpush1.msra.mxu0 0.0
      %1732 = vmatprep.subr.mxu0 0.0
      %1733 = vmatpush1.msra.mxu0 0.0
      %1734 = vmatprep.subr.mxu0 0.0
      %1735 = vmatpush1.msra.mxu0 0.0
      %1736 = vmatprep.subr.mxu0 0.0
      %1737 = vmatpush1.msra.mxu0 0.0
      %1738 = vmatprep.subr.mxu0 0.0
      %1739 = vmatpush1.msra.mxu0 0.0
      %1740 = vmatprep.subr.mxu0 0.0
      %1741 = vmatpush1.msra.mxu0 0.0
      %1742 = vmatprep.subr.mxu0 0.0
      %1743 = vmatpush1.msra.mxu0 0.0
      %1744 = vmatprep.subr.mxu0 0.0
      %1745 = vmatpush1.msra.mxu0 0.0
      %1746 = vmatprep.subr.mxu0 0.0
      %1747 = vmatpush1.msra.mxu0 0.0
      %1748 = vmatprep.subr.mxu0 0.0
      %1749 = vmatpush1.msra.mxu0 0.0
      %1750 = vmatprep.mubr.f32.mxu0 0.0
      %1751 = vmatmul.mubr.f32.gmra.mrb[0].mxu0 %v582
      %v1752 = vpop.f32.mrb[0].mxu0
      %v1753 = vadd.f32 0.0, %v1752
      %v1754 = vpop.f32.mrb[0].mxu0
      %1755 = vmatprep.mubr.f32.mxu0 0.0
      %1756 = vmatmul.mubr.f32.gmra.mrb[0].mxu0 %v584
      %v1757 = vpop.f32.mrb[0].mxu0
      %v1758 = vadd.f32 0.0, %v1757
      %v1759 = vpop.f32.mrb[0].mxu0
      %1760 = vmatprep.mubr.f32.mxu0 0.0
      %1761 = vmatmul.mubr.f32.gmra.mrb[0].mxu0 %v586
      %v1762 = vpop.f32.mrb[0].mxu0
      %v1763 = vadd.f32 0.0, %v1762
      %v1764 = vpop.f32.mrb[0].mxu0
      %1765 = vmatprep.mubr.f32.mxu0 0.0
      %1766 = vmatmul.mubr.f32.gmra.mrb[0].mxu0 %v588
      %v1767 = vpop.f32.mrb[0].mxu0
      %v1768 = vadd.f32 0.0, %v1767
      %v1769 = vpop.f32.mrb[0].mxu0
      %1770 = vmatprep.mubr.f32.mxu0 0.0
      %1771 = vmatmul.mubr.f32.gmra.mrb[0].mxu0 %v590
      %v1772 = vpop.f32.mrb[0].mxu0
      %v1773 = vadd.f32 0.0, %v1772
      %v1774 = vpop.f32.mrb[0].mxu0
      %1775 = vmatprep.mubr.f32.mxu0 0.0
      %1776 = vmatmul.mubr.f32.gmra.mrb[0].mxu0 %v592
      %v1777 = vpop.f32.mrb[0].mxu0
      %v1778 = vadd.f32 0.0, %v1777
      %v1779 = vpop.f32.mrb[0].mxu0
      %1780 = vmatprep.mubr.f32.mxu0 0.0
      %1781 = vmatmul.mubr.f32.gmra.mrb[0].mxu0 %v594
      %v1782 = vpop.f32.mrb[0].mxu0
      %v1783 = vadd.f32 0.0, %v1782
      %v1784 = vpop.f32.mrb[0].mxu0
      %1785 = vmatprep.mubr.f32.mxu0 0.0
      %1786 = vmatmul.mubr.f32.gmra.mrb[0].mxu0 %v596
      %v1787 = vpop.f32.mrb[0].mxu0
      %v1788 = vadd.f32 0.0, %v1787
      %v1789 = vpop.f32.mrb[0].mxu0
      %1790 = vmatprep.mubr.f32.mxu0 0.0
      %1791 = vmatmul.mubr.f32.gmra.mrb[0].mxu0 %v598
      %v1792 = vpop.f32.mrb[0].mxu0
      %v1793 = vadd.f32 0.0, %v1792
      %v1794 = vpop.f32.mrb[0].mxu0
      %1795 = vmatprep.mubr.f32.mxu0 0.0
      %1796 = vmatmul.mubr.f32.gmra.mrb[0].mxu0 %v600
      %v1797 = vpop.f32.mrb[0].mxu0
      %v1798 = vadd.f32 0.0, %v1797
      %v1799 = vpop.f32.mrb[0].mxu0
      %1800 = vmatprep.mubr.f32.mxu0 0.0
      %1801 = vmatmul.mubr.f32.gmra.mrb[0].mxu0 %v602
      %v1802 = vpop.f32.mrb[0].mxu0
      %v1803 = vadd.f32 0.0, %v1802
      %v1804 = vpop.f32.mrb[0].mxu0
      %1805 = vmatprep.mubr.f32.mxu0 0.0
      %1806 = vmatmul.mubr.f32.gmra.mrb[0].mxu0 %v604
      %v1807 = vpop.f32.mrb[0].mxu0
      %v1808 = vadd.f32 0.0, %v1807
      %v1809 = vpop.f32.mrb[0].mxu0
      %1810 = vmatprep.mubr.f32.mxu0 0.0
      %1811 = vmatmul.mubr.f32.gmra.mrb[0].mxu0 %v606
      %v1812 = vpop.f32.mrb[0].mxu0
      %v1813 = vadd.f32 0.0, %v1812
      %v1814 = vpop.f32.mrb[0].mxu0
      %1815 = vmatprep.mubr.f32.mxu0 0.0
      %1816 = vmatmul.mubr.f32.gmra.mrb[0].mxu0 %v608
      %v1817 = vpop.f32.mrb[0].mxu0
      %v1818 = vadd.f32 0.0, %v1817
      %v1819 = vpop.f32.mrb[0].mxu0
      %1820 = vmatprep.mubr.f32.mxu0 0.0
      %1821 = vmatmul.mubr.f32.gmra.mrb[0].mxu0 %v1118
      %v1822 = vpop.f32.mrb[0].mxu0
      %v1823 = vadd.f32 0.0, %v1822
      %v1824 = vpop.f32.mrb[0].mxu0
      %1825 = vmatprep.mubr.f32.mxu0 0.0
      %1826 = vmatmul.mubr.f32.gmra.mrb[0].mxu0 %v1120
      %v1827 = vpop.f32.mrb[0].mxu0
      %v1828 = vadd.f32 0.0, %v1827
      %v1829 = vpop.f32.mrb[0].mxu0
      %1830 = vdwg.mxu0
      %v1831 = vadd.f32 %v1603, %v1753
      %v1832 = vadd.f32 %v1608, %v1758
      %v1833 = vadd.f32 %v1613, %v1763
      %v1834 = vadd.f32 %v1618, %v1768
      %v1835 = vadd.f32 %v1623, %v1773
      %v1836 = vadd.f32 %v1628, %v1778
      %v1837 = vadd.f32 %v1633, %v1783
      %v1838 = vadd.f32 %v1638, %v1788
      %v1839 = vadd.f32 %v1643, %v1793
      %v1840 = vadd.f32 %v1648, %v1798
      %v1841 = vadd.f32 %v1653, %v1803
      %v1842 = vadd.f32 %v1658, %v1808
      %v1843 = vadd.f32 %v1663, %v1813
      %v1844 = vadd.f32 %v1668, %v1818
      %v1845 = vadd.f32 %v1673, %v1823
      %v1846 = vadd.f32 %v1678, %v1828
      %v1847 = vrot.slane %v504, 2
      %v1848 = vrot.slane %v472, 2
      %v1849 = vsel %vm1310, %v1847, %v1848
      %v1850 = vrot.slane %v514, 2
      %v1851 = vsel %vm1310, %v1848, %v1850
      %s1852 = scalar_lea.vmem %s3, 28
      %v1853 = vld [vmem:[%s1852] sm:$0xf]
      %v1854 = vsel %vm577, %v1849, 0
      %v1856 = vsel %vm577, %v1851, 0
      %v1859 = vsel %vm610, %v1853, 0
      %1861 = vmatprep.subr.mxu0 0.0
      %1862 = vmatpush1.msra.mxu0 %v1859
      %1863 = vmatprep.subr.mxu0 0.0
      %1864 = vmatpush1.msra.mxu0 0.0
      %1865 = vmatprep.subr.mxu0 0.0
      %1866 = vmatpush1.msra.mxu0 0.0
      %1867 = vmatprep.subr.mxu0 0.0
      %1868 = vmatpush1.msra.mxu0 0.0
      %1869 = vmatprep.subr.mxu0 0.0
      %1870 = vmatpush1.msra.mxu0 0.0
      %1871 = vmatprep.subr.mxu0 0.0
      %1872 = vmatpush1.msra.mxu0 0.0
      %1873 = vmatprep.subr.mxu0 0.0
      %1874 = vmatpush1.msra.mxu0 0.0
      %1875 = vmatprep.subr.mxu0 0.0
      %1876 = vmatpush1.msra.mxu0 0.0
      %1877 = vmatprep.subr.mxu0 0.0
      %1878 = vmatpush1.msra.mxu0 0.0
      %1879 = vmatprep.subr.mxu0 0.0
      %1880 = vmatpush1.msra.mxu0 0.0
      %1881 = vmatprep.subr.mxu0 0.0
      %1882 = vmatpush1.msra.mxu0 0.0
      %1883 = vmatprep.subr.mxu0 0.0
      %1884 = vmatpush1.msra.mxu0 0.0
      %1885 = vmatprep.subr.mxu0 0.0
      %1886 = vmatpush1.msra.mxu0 0.0
      %1887 = vmatprep.subr.mxu0 0.0
      %1888 = vmatpush1.msra.mxu0 0.0
      %1889 = vmatprep.subr.mxu0 0.0
      %1890 = vmatpush1.msra.mxu0 0.0
      %1891 = vmatprep.subr.mxu0 0.0
      %1892 = vmatpush1.msra.mxu0 0.0
      %1893 = vmatprep.subr.mxu0 0.0
      %1894 = vmatpush1.msra.mxu0 0.0
      %1895 = vmatprep.subr.mxu0 0.0
      %1896 = vmatpush1.msra.mxu0 0.0
      %1897 = vmatprep.subr.mxu0 0.0
      %1898 = vmatpush1.msra.mxu0 0.0
      %1899 = vmatprep.subr.mxu0 0.0
      %1900 = vmatpush1.msra.mxu0 0.0
      %1901 = vmatprep.subr.mxu0 0.0
      %1902 = vmatpush1.msra.mxu0 0.0
      %1903 = vmatprep.subr.mxu0 0.0
      %1904 = vmatpush1.msra.mxu0 0.0
      %1905 = vmatprep.subr.mxu0 0.0
      %1906 = vmatpush1.msra.mxu0 0.0
      %1907 = vmatprep.subr.mxu0 0.0
      %1908 = vmatpush1.msra.mxu0 0.0
      %1909 = vmatprep.subr.mxu0 0.0
      %1910 = vmatpush1.msra.mxu0 0.0
      %1911 = vmatprep.subr.mxu0 0.0
      %1912 = vmatpush1.msra.mxu0 0.0
      %1913 = vmatprep.subr.mxu0 0.0
      %1914 = vmatpush1.msra.mxu0 0.0
      %1915 = vmatprep.subr.mxu0 0.0
      %1916 = vmatpush1.msra.mxu0 0.0
      %1917 = vmatprep.subr.mxu0 0.0
      %1918 = vmatpush1.msra.mxu0 0.0
      %1919 = vmatprep.subr.mxu0 0.0
      %1920 = vmatpush1.msra.mxu0 0.0
      %1921 = vmatprep.subr.mxu0 0.0
      %1922 = vmatpush1.msra.mxu0 0.0
      %1923 = vmatprep.subr.mxu0 0.0
      %1924 = vmatpush1.msra.mxu0 0.0
      %1925 = vmatprep.mubr.f32.mxu0 0.0
      %1926 = vmatmul.mubr.f32.gmra.mrb[0].mxu0 %v1357
      %v1927 = vpop.f32.mrb[0].mxu0
      %v1928 = vadd.f32 0.0, %v1927
      %v1929 = vpop.f32.mrb[0].mxu0
      %1930 = vmatprep.mubr.f32.mxu0 0.0
      %1931 = vmatmul.mubr.f32.gmra.mrb[0].mxu0 %v1359
      %v1932 = vpop.f32.mrb[0].mxu0
      %v1933 = vadd.f32 0.0, %v1932
      %v1934 = vpop.f32.mrb[0].mxu0
      %1935 = vmatprep.mubr.f32.mxu0 0.0
      %1936 = vmatmul.mubr.f32.gmra.mrb[0].mxu0 %v1361
      %v1937 = vpop.f32.mrb[0].mxu0
      %v1938 = vadd.f32 0.0, %v1937
      %v1939 = vpop.f32.mrb[0].mxu0
      %1940 = vmatprep.mubr.f32.mxu0 0.0
      %1941 = vmatmul.mubr.f32.gmra.mrb[0].mxu0 %v1363
      %v1942 = vpop.f32.mrb[0].mxu0
      %v1943 = vadd.f32 0.0, %v1942
      %v1944 = vpop.f32.mrb[0].mxu0
      %1945 = vmatprep.mubr.f32.mxu0 0.0
      %1946 = vmatmul.mubr.f32.gmra.mrb[0].mxu0 %v1365
      %v1947 = vpop.f32.mrb[0].mxu0
      %v1948 = vadd.f32 0.0, %v1947
      %v1949 = vpop.f32.mrb[0].mxu0
      %1950 = vmatprep.mubr.f32.mxu0 0.0
      %1951 = vmatmul.mubr.f32.gmra.mrb[0].mxu0 %v1367
      %v1952 = vpop.f32.mrb[0].mxu0
      %v1953 = vadd.f32 0.0, %v1952
      %v1954 = vpop.f32.mrb[0].mxu0
      %1955 = vmatprep.mubr.f32.mxu0 0.0
      %1956 = vmatmul.mubr.f32.gmra.mrb[0].mxu0 %v1369
      %v1957 = vpop.f32.mrb[0].mxu0
      %v1958 = vadd.f32 0.0, %v1957
      %v1959 = vpop.f32.mrb[0].mxu0
      %1960 = vmatprep.mubr.f32.mxu0 0.0
      %1961 = vmatmul.mubr.f32.gmra.mrb[0].mxu0 %v1371
      %v1962 = vpop.f32.mrb[0].mxu0
      %v1963 = vadd.f32 0.0, %v1962
      %v1964 = vpop.f32.mrb[0].mxu0
      %1965 = vmatprep.mubr.f32.mxu0 0.0
      %1966 = vmatmul.mubr.f32.gmra.mrb[0].mxu0 %v1373
      %v1967 = vpop.f32.mrb[0].mxu0
      %v1968 = vadd.f32 0.0, %v1967
      %v1969 = vpop.f32.mrb[0].mxu0
      %1970 = vmatprep.mubr.f32.mxu0 0.0
      %1971 = vmatmul.mubr.f32.gmra.mrb[0].mxu0 %v1375
      %v1972 = vpop.f32.mrb[0].mxu0
      %v1973 = vadd.f32 0.0, %v1972
      %v1974 = vpop.f32.mrb[0].mxu0
      %1975 = vmatprep.mubr.f32.mxu0 0.0
      %1976 = vmatmul.mubr.f32.gmra.mrb[0].mxu0 %v1377
      %v1977 = vpop.f32.mrb[0].mxu0
      %v1978 = vadd.f32 0.0, %v1977
      %v1979 = vpop.f32.mrb[0].mxu0
      %1980 = vmatprep.mubr.f32.mxu0 0.0
      %1981 = vmatmul.mubr.f32.gmra.mrb[0].mxu0 %v1379
      %v1982 = vpop.f32.mrb[0].mxu0
      %v1983 = vadd.f32 0.0, %v1982
      %v1984 = vpop.f32.mrb[0].mxu0
      %1985 = vmatprep.mubr.f32.mxu0 0.0
      %1986 = vmatmul.mubr.f32.gmra.mrb[0].mxu0 %v1381
      %v1987 = vpop.f32.mrb[0].mxu0
      %v1988 = vadd.f32 0.0, %v1987
      %v1989 = vpop.f32.mrb[0].mxu0
      %1990 = vmatprep.mubr.f32.mxu0 0.0
      %1991 = vmatmul.mubr.f32.gmra.mrb[0].mxu0 %v1383
      %v1992 = vpop.f32.mrb[0].mxu0
      %v1993 = vadd.f32 0.0, %v1992
      %v1994 = vpop.f32.mrb[0].mxu0
      %1995 = vmatprep.mubr.f32.mxu0 0.0
      %1996 = vmatmul.mubr.f32.gmra.mrb[0].mxu0 %v1854
      %v1997 = vpop.f32.mrb[0].mxu0
      %v1998 = vadd.f32 0.0, %v1997
      %v1999 = vpop.f32.mrb[0].mxu0
      %2000 = vmatprep.mubr.f32.mxu0 0.0
      %2001 = vmatmul.mubr.f32.gmra.mrb[0].mxu0 %v1856
      %v2002 = vpop.f32.mrb[0].mxu0
      %v2003 = vadd.f32 0.0, %v2002
      %v2004 = vpop.f32.mrb[0].mxu0
      %2005 = vdwg.mxu0
      %v2006 = vadd.f32 %v1831, %v1928
      %v2007 = vadd.f32 %v1832, %v1933
      %v2008 = vadd.f32 %v1833, %v1938
      %v2009 = vadd.f32 %v1834, %v1943
      %v2010 = vadd.f32 %v1835, %v1948
      %v2011 = vadd.f32 %v1836, %v1953
      %v2012 = vadd.f32 %v1837, %v1958
      %v2013 = vadd.f32 %v1838, %v1963
      %v2014 = vadd.f32 %v1839, %v1968
      %v2015 = vadd.f32 %v1840, %v1973
      %v2016 = vadd.f32 %v1841, %v1978
      %v2017 = vadd.f32 %v1842, %v1983
      %v2018 = vadd.f32 %v1843, %v1988
      %v2019 = vadd.f32 %v1844, %v1993
      %v2020 = vadd.f32 %v1845, %v1998
      %v2021 = vadd.f32 %v1846, %v2003
      %v2022 = vadd.f32 %v2006, %v1290
      %v2023 = vadd.f32 %v2007, %v1290
      %v2024 = vadd.f32 %v2008, %v1290
      %v2025 = vadd.f32 %v2009, %v1290
      %v2026 = vadd.f32 %v2010, %v1290
      %v2027 = vadd.f32 %v2011, %v1290
      %v2028 = vadd.f32 %v2012, %v1290
      %v2029 = vadd.f32 %v2013, %v1290
      %v2030 = vadd.f32 %v2014, %v1290
      %v2031 = vadd.f32 %v2015, %v1290
      %v2032 = vadd.f32 %v2016, %v1290
      %v2033 = vadd.f32 %v2017, %v1290
      %v2034 = vadd.f32 %v2018, %v1290
      %v2035 = vadd.f32 %v2019, %v1290
      %v2036 = vadd.f32 %v2020, %v1290
      %v2037 = vadd.f32 %v2021, %v1290
      %v2054 = vcombine.high %v1292, %v1292
      %v2056 = vunpack.c.l.s4 1966171168
      %v2057 = vunpack.c.0.s8 %v2056
      %v2058 = vlaneseq
      %v2059 = vshrl.u32 %v2058, 7
      %v2060 = vsub.s32 %v2057, %v2059
      %v2061 = vrot.slane %v1292, %v2060
      %v2063 = vunpack.c.l.s4 1966171168
      %v2064 = vunpack.c.0.s8 %v2063
      %v2065 = vlaneseq
      %v2066 = vshrl.u32 %v2065, 7
      %v2067 = vsub.s32 %v2064, %v2066
      %v2068 = vrot.slane %v2054, %v2067
      %v2069 = vcombine.high %v2061, %v2061
      %v2070 = vcombine.high %v2068, %v2068
      %v2072 = vunpack.c.l.s4 1966171168
      %v2073 = vunpack.c.0.s8 %v2072
      %v2074 = vlaneseq
      %v2075 = vshrl.u32 %v2074, 7
      %v2076 = vsub.s32 %v2073, %v2075
      %v2077 = vrot.slane %v2061, %v2076
      %v2079 = vunpack.c.l.s4 1966171168
      %v2080 = vunpack.c.0.s8 %v2079
      %v2081 = vlaneseq
      %v2082 = vshrl.u32 %v2081, 7
      %v2083 = vsub.s32 %v2080, %v2082
      %v2084 = vrot.slane %v2068, %v2083
      %v2086 = vunpack.c.l.s4 1966171168
      %v2087 = vunpack.c.0.s8 %v2086
      %v2088 = vlaneseq
      %v2089 = vshrl.u32 %v2088, 7
      %v2090 = vsub.s32 %v2087, %v2089
      %v2091 = vrot.slane %v2069, %v2090
      %v2093 = vunpack.c.l.s4 1966171168
      %v2094 = vunpack.c.0.s8 %v2093
      %v2095 = vlaneseq
      %v2096 = vshrl.u32 %v2095, 7
      %v2097 = vsub.s32 %v2094, %v2096
      %v2098 = vrot.slane %v2070, %v2097
      %v2099 = vcombine.high %v2077, %v2077
      %v2100 = vcombine.high %v2084, %v2084
      %v2101 = vcombine.high %v2091, %v2091
      %v2102 = vcombine.high %v2098, %v2098
      %v2103 = vcombine.high %v1293, %v1293
      %v2105 = vunpack.c.l.s4 1966171168
      %v2106 = vunpack.c.0.s8 %v2105
      %v2107 = vlaneseq
      %v2108 = vshrl.u32 %v2107, 7
      %v2109 = vsub.s32 %v2106, %v2108
      %v2110 = vrot.slane %v1293, %v2109
      %v2112 = vunpack.c.l.s4 1966171168
      %v2113 = vunpack.c.0.s8 %v2112
      %v2114 = vlaneseq
      %v2115 = vshrl.u32 %v2114, 7
      %v2116 = vsub.s32 %v2113, %v2115
      %v2117 = vrot.slane %v2103, %v2116
      %v2118 = vcombine.high %v2110, %v2110
      %v2119 = vcombine.high %v2117, %v2117
      %v2121 = vunpack.c.l.s4 1966171168
      %v2122 = vunpack.c.0.s8 %v2121
      %v2123 = vlaneseq
      %v2124 = vshrl.u32 %v2123, 7
      %v2125 = vsub.s32 %v2122, %v2124
      %v2126 = vrot.slane %v2110, %v2125
      %v2128 = vunpack.c.l.s4 1966171168
      %v2129 = vunpack.c.0.s8 %v2128
      %v2130 = vlaneseq
      %v2131 = vshrl.u32 %v2130, 7
      %v2132 = vsub.s32 %v2129, %v2131
      %v2133 = vrot.slane %v2117, %v2132
      %v2135 = vunpack.c.l.s4 1966171168
      %v2136 = vunpack.c.0.s8 %v2135
      %v2137 = vlaneseq
      %v2138 = vshrl.u32 %v2137, 7
      %v2139 = vsub.s32 %v2136, %v2138
      %v2140 = vrot.slane %v2118, %v2139
      %v2142 = vunpack.c.l.s4 1966171168
      %v2143 = vunpack.c.0.s8 %v2142
      %v2144 = vlaneseq
      %v2145 = vshrl.u32 %v2144, 7
      %v2146 = vsub.s32 %v2143, %v2145
      %v2147 = vrot.slane %v2119, %v2146
      %v2148 = vcombine.high %v2126, %v2126
      %v2149 = vcombine.high %v2133, %v2133
      %v2150 = vcombine.high %v2140, %v2140
      %v2151 = vcombine.high %v2147, %v2147
      %v2152 = vcombine.high %v1294, %v1294
      %v2154 = vunpack.c.l.s4 1966171168
      %v2155 = vunpack.c.0.s8 %v2154
      %v2156 = vlaneseq
      %v2157 = vshrl.u32 %v2156, 7
      %v2158 = vsub.s32 %v2155, %v2157
      %v2159 = vrot.slane %v1294, %v2158
      %v2161 = vunpack.c.l.s4 1966171168
      %v2162 = vunpack.c.0.s8 %v2161
      %v2163 = vlaneseq
      %v2164 = vshrl.u32 %v2163, 7
      %v2165 = vsub.s32 %v2162, %v2164
      %v2166 = vrot.slane %v2152, %v2165
      %v2167 = vcombine.high %v2159, %v2159
      %v2168 = vcombine.high %v2166, %v2166
      %v2170 = vunpack.c.l.s4 1966171168
      %v2171 = vunpack.c.0.s8 %v2170
      %v2172 = vlaneseq
      %v2173 = vshrl.u32 %v2172, 7
      %v2174 = vsub.s32 %v2171, %v2173
      %v2175 = vrot.slane %v2159, %v2174
      %v2177 = vunpack.c.l.s4 1966171168
      %v2178 = vunpack.c.0.s8 %v2177
      %v2179 = vlaneseq
      %v2180 = vshrl.u32 %v2179, 7
      %v2181 = vsub.s32 %v2178, %v2180
      %v2182 = vrot.slane %v2166, %v2181
      %v2184 = vunpack.c.l.s4 1966171168
      %v2185 = vunpack.c.0.s8 %v2184
      %v2186 = vlaneseq
      %v2187 = vshrl.u32 %v2186, 7
      %v2188 = vsub.s32 %v2185, %v2187
      %v2189 = vrot.slane %v2167, %v2188
      %v2191 = vunpack.c.l.s4 1966171168
      %v2192 = vunpack.c.0.s8 %v2191
      %v2193 = vlaneseq
      %v2194 = vshrl.u32 %v2193, 7
      %v2195 = vsub.s32 %v2192, %v2194
      %v2196 = vrot.slane %v2168, %v2195
      %v2197 = vcombine.high %v2175, %v2175
      %v2198 = vcombine.high %v2182, %v2182
      %v2199 = vcombine.high %v2189, %v2189
      %v2200 = vcombine.high %v2196, %v2196
      %v2201 = vcombine.high %v1295, %v1295
      %v2203 = vunpack.c.l.s4 1966171168
      %v2204 = vunpack.c.0.s8 %v2203
      %v2205 = vlaneseq
      %v2206 = vshrl.u32 %v2205, 7
      %v2207 = vsub.s32 %v2204, %v2206
      %v2208 = vrot.slane %v1295, %v2207
      %v2210 = vunpack.c.l.s4 1966171168
      %v2211 = vunpack.c.0.s8 %v2210
      %v2212 = vlaneseq
      %v2213 = vshrl.u32 %v2212, 7
      %v2214 = vsub.s32 %v2211, %v2213
      %v2215 = vrot.slane %v2201, %v2214
      %v2216 = vcombine.high %v2208, %v2208
      %v2217 = vcombine.high %v2215, %v2215
      %v2219 = vunpack.c.l.s4 1966171168
      %v2220 = vunpack.c.0.s8 %v2219
      %v2221 = vlaneseq
      %v2222 = vshrl.u32 %v2221, 7
      %v2223 = vsub.s32 %v2220, %v2222
      %v2224 = vrot.slane %v2208, %v2223
      %v2226 = vunpack.c.l.s4 1966171168
      %v2227 = vunpack.c.0.s8 %v2226
      %v2228 = vlaneseq
      %v2229 = vshrl.u32 %v2228, 7
      %v2230 = vsub.s32 %v2227, %v2229
      %v2231 = vrot.slane %v2215, %v2230
      %v2233 = vunpack.c.l.s4 1966171168
      %v2234 = vunpack.c.0.s8 %v2233
      %v2235 = vlaneseq
      %v2236 = vshrl.u32 %v2235, 7
      %v2237 = vsub.s32 %v2234, %v2236
      %v2238 = vrot.slane %v2216, %v2237
      %v2240 = vunpack.c.l.s4 1966171168
      %v2241 = vunpack.c.0.s8 %v2240
      %v2242 = vlaneseq
      %v2243 = vshrl.u32 %v2242, 7
      %v2244 = vsub.s32 %v2241, %v2243
      %v2245 = vrot.slane %v2217, %v2244
      %v2246 = vcombine.high %v2224, %v2224
      %v2247 = vcombine.high %v2231, %v2231
      %v2248 = vcombine.high %v2238, %v2238
      %v2249 = vcombine.high %v2245, %v2245
      %v2250 = vcombine.high %v1296, %v1296
      %v2252 = vunpack.c.l.s4 1966171168
      %v2253 = vunpack.c.0.s8 %v2252
      %v2254 = vlaneseq
      %v2255 = vshrl.u32 %v2254, 7
      %v2256 = vsub.s32 %v2253, %v2255
      %v2257 = vrot.slane %v1296, %v2256
      %v2259 = vunpack.c.l.s4 1966171168
      %v2260 = vunpack.c.0.s8 %v2259
      %v2261 = vlaneseq
      %v2262 = vshrl.u32 %v2261, 7
      %v2263 = vsub.s32 %v2260, %v2262
      %v2264 = vrot.slane %v2250, %v2263
      %v2265 = vcombine.high %v2257, %v2257
      %v2266 = vcombine.high %v2264, %v2264
      %v2268 = vunpack.c.l.s4 1966171168
      %v2269 = vunpack.c.0.s8 %v2268
      %v2270 = vlaneseq
      %v2271 = vshrl.u32 %v2270, 7
      %v2272 = vsub.s32 %v2269, %v2271
      %v2273 = vrot.slane %v2257, %v2272
      %v2275 = vunpack.c.l.s4 1966171168
      %v2276 = vunpack.c.0.s8 %v2275
      %v2277 = vlaneseq
      %v2278 = vshrl.u32 %v2277, 7
      %v2279 = vsub.s32 %v2276, %v2278
      %v2280 = vrot.slane %v2264, %v2279
      %v2282 = vunpack.c.l.s4 1966171168
      %v2283 = vunpack.c.0.s8 %v2282
      %v2284 = vlaneseq
      %v2285 = vshrl.u32 %v2284, 7
      %v2286 = vsub.s32 %v2283, %v2285
      %v2287 = vrot.slane %v2265, %v2286
      %v2289 = vunpack.c.l.s4 1966171168
      %v2290 = vunpack.c.0.s8 %v2289
      %v2291 = vlaneseq
      %v2292 = vshrl.u32 %v2291, 7
      %v2293 = vsub.s32 %v2290, %v2292
      %v2294 = vrot.slane %v2266, %v2293
      %v2295 = vcombine.high %v2273, %v2273
      %v2296 = vcombine.high %v2280, %v2280
      %v2297 = vcombine.high %v2287, %v2287
      %v2298 = vcombine.high %v2294, %v2294
      %v2299 = vcombine.high %v1297, %v1297
      %v2301 = vunpack.c.l.s4 1966171168
      %v2302 = vunpack.c.0.s8 %v2301
      %v2303 = vlaneseq
      %v2304 = vshrl.u32 %v2303, 7
      %v2305 = vsub.s32 %v2302, %v2304
      %v2306 = vrot.slane %v1297, %v2305
      %v2308 = vunpack.c.l.s4 1966171168
      %v2309 = vunpack.c.0.s8 %v2308
      %v2310 = vlaneseq
      %v2311 = vshrl.u32 %v2310, 7
      %v2312 = vsub.s32 %v2309, %v2311
      %v2313 = vrot.slane %v2299, %v2312
      %v2314 = vcombine.high %v2306, %v2306
      %v2315 = vcombine.high %v2313, %v2313
      %v2317 = vunpack.c.l.s4 1966171168
      %v2318 = vunpack.c.0.s8 %v2317
      %v2319 = vlaneseq
      %v2320 = vshrl.u32 %v2319, 7
      %v2321 = vsub.s32 %v2318, %v2320
      %v2322 = vrot.slane %v2306, %v2321
      %v2324 = vunpack.c.l.s4 1966171168
      %v2325 = vunpack.c.0.s8 %v2324
      %v2326 = vlaneseq
      %v2327 = vshrl.u32 %v2326, 7
      %v2328 = vsub.s32 %v2325, %v2327
      %v2329 = vrot.slane %v2313, %v2328
      %v2331 = vunpack.c.l.s4 1966171168
      %v2332 = vunpack.c.0.s8 %v2331
      %v2333 = vlaneseq
      %v2334 = vshrl.u32 %v2333, 7
      %v2335 = vsub.s32 %v2332, %v2334
      %v2336 = vrot.slane %v2314, %v2335
      %v2338 = vunpack.c.l.s4 1966171168
      %v2339 = vunpack.c.0.s8 %v2338
      %v2340 = vlaneseq
      %v2341 = vshrl.u32 %v2340, 7
      %v2342 = vsub.s32 %v2339, %v2341
      %v2343 = vrot.slane %v2315, %v2342
      %v2344 = vcombine.high %v2322, %v2322
      %v2345 = vcombine.high %v2329, %v2329
      %v2346 = vcombine.high %v2336, %v2336
      %v2347 = vcombine.high %v2343, %v2343
      %v2348 = vcombine.high %v1298, %v1298
      %v2350 = vunpack.c.l.s4 1966171168
      %v2351 = vunpack.c.0.s8 %v2350
      %v2352 = vlaneseq
      %v2353 = vshrl.u32 %v2352, 7
      %v2354 = vsub.s32 %v2351, %v2353
      %v2355 = vrot.slane %v1298, %v2354
      %v2357 = vunpack.c.l.s4 1966171168
      %v2358 = vunpack.c.0.s8 %v2357
      %v2359 = vlaneseq
      %v2360 = vshrl.u32 %v2359, 7
      %v2361 = vsub.s32 %v2358, %v2360
      %v2362 = vrot.slane %v2348, %v2361
      %v2363 = vcombine.high %v2355, %v2355
      %v2364 = vcombine.high %v2362, %v2362
      %v2366 = vunpack.c.l.s4 1966171168
      %v2367 = vunpack.c.0.s8 %v2366
      %v2368 = vlaneseq
      %v2369 = vshrl.u32 %v2368, 7
      %v2370 = vsub.s32 %v2367, %v2369
      %v2371 = vrot.slane %v2355, %v2370
      %v2373 = vunpack.c.l.s4 1966171168
      %v2374 = vunpack.c.0.s8 %v2373
      %v2375 = vlaneseq
      %v2376 = vshrl.u32 %v2375, 7
      %v2377 = vsub.s32 %v2374, %v2376
      %v2378 = vrot.slane %v2362, %v2377
      %v2380 = vunpack.c.l.s4 1966171168
      %v2381 = vunpack.c.0.s8 %v2380
      %v2382 = vlaneseq
      %v2383 = vshrl.u32 %v2382, 7
      %v2384 = vsub.s32 %v2381, %v2383
      %v2385 = vrot.slane %v2363, %v2384
      %v2387 = vunpack.c.l.s4 1966171168
      %v2388 = vunpack.c.0.s8 %v2387
      %v2389 = vlaneseq
      %v2390 = vshrl.u32 %v2389, 7
      %v2391 = vsub.s32 %v2388, %v2390
      %v2392 = vrot.slane %v2364, %v2391
      %v2393 = vcombine.high %v2371, %v2371
      %v2394 = vcombine.high %v2378, %v2378
      %v2395 = vcombine.high %v2385, %v2385
      %v2396 = vcombine.high %v2392, %v2392
      %v2397 = vcombine.high %v1299, %v1299
      %v2399 = vunpack.c.l.s4 1966171168
      %v2400 = vunpack.c.0.s8 %v2399
      %v2401 = vlaneseq
      %v2402 = vshrl.u32 %v2401, 7
      %v2403 = vsub.s32 %v2400, %v2402
      %v2404 = vrot.slane %v1299, %v2403
      %v2406 = vunpack.c.l.s4 1966171168
      %v2407 = vunpack.c.0.s8 %v2406
      %v2408 = vlaneseq
      %v2409 = vshrl.u32 %v2408, 7
      %v2410 = vsub.s32 %v2407, %v2409
      %v2411 = vrot.slane %v2397, %v2410
      %v2412 = vcombine.high %v2404, %v2404
      %v2413 = vcombine.high %v2411, %v2411
      %v2415 = vunpack.c.l.s4 1966171168
      %v2416 = vunpack.c.0.s8 %v2415
      %v2417 = vlaneseq
      %v2418 = vshrl.u32 %v2417, 7
      %v2419 = vsub.s32 %v2416, %v2418
      %v2420 = vrot.slane %v2404, %v2419
      %v2422 = vunpack.c.l.s4 1966171168
      %v2423 = vunpack.c.0.s8 %v2422
      %v2424 = vlaneseq
      %v2425 = vshrl.u32 %v2424, 7
      %v2426 = vsub.s32 %v2423, %v2425
      %v2427 = vrot.slane %v2411, %v2426
      %v2429 = vunpack.c.l.s4 1966171168
      %v2430 = vunpack.c.0.s8 %v2429
      %v2431 = vlaneseq
      %v2432 = vshrl.u32 %v2431, 7
      %v2433 = vsub.s32 %v2430, %v2432
      %v2434 = vrot.slane %v2412, %v2433
      %v2436 = vunpack.c.l.s4 1966171168
      %v2437 = vunpack.c.0.s8 %v2436
      %v2438 = vlaneseq
      %v2439 = vshrl.u32 %v2438, 7
      %v2440 = vsub.s32 %v2437, %v2439
      %v2441 = vrot.slane %v2413, %v2440
      %v2442 = vcombine.high %v2420, %v2420
      %v2443 = vcombine.high %v2427, %v2427
      %v2444 = vcombine.high %v2434, %v2434
      %v2445 = vcombine.high %v2441, %v2441
      %v2446 = vcombine.high %v1300, %v1300
      %v2448 = vunpack.c.l.s4 1966171168
      %v2449 = vunpack.c.0.s8 %v2448
      %v2450 = vlaneseq
      %v2451 = vshrl.u32 %v2450, 7
      %v2452 = vsub.s32 %v2449, %v2451
      %v2453 = vrot.slane %v1300, %v2452
      %v2455 = vunpack.c.l.s4 1966171168
      %v2456 = vunpack.c.0.s8 %v2455
      %v2457 = vlaneseq
      %v2458 = vshrl.u32 %v2457, 7
      %v2459 = vsub.s32 %v2456, %v2458
      %v2460 = vrot.slane %v2446, %v2459
      %v2461 = vcombine.high %v2453, %v2453
      %v2462 = vcombine.high %v2460, %v2460
      %v2464 = vunpack.c.l.s4 1966171168
      %v2465 = vunpack.c.0.s8 %v2464
      %v2466 = vlaneseq
      %v2467 = vshrl.u32 %v2466, 7
      %v2468 = vsub.s32 %v2465, %v2467
      %v2469 = vrot.slane %v2453, %v2468
      %v2471 = vunpack.c.l.s4 1966171168
      %v2472 = vunpack.c.0.s8 %v2471
      %v2473 = vlaneseq
      %v2474 = vshrl.u32 %v2473, 7
      %v2475 = vsub.s32 %v2472, %v2474
      %v2476 = vrot.slane %v2460, %v2475
      %v2478 = vunpack.c.l.s4 1966171168
      %v2479 = vunpack.c.0.s8 %v2478
      %v2480 = vlaneseq
      %v2481 = vshrl.u32 %v2480, 7
      %v2482 = vsub.s32 %v2479, %v2481
      %v2483 = vrot.slane %v2461, %v2482
      %v2485 = vunpack.c.l.s4 1966171168
      %v2486 = vunpack.c.0.s8 %v2485
      %v2487 = vlaneseq
      %v2488 = vshrl.u32 %v2487, 7
      %v2489 = vsub.s32 %v2486, %v2488
      %v2490 = vrot.slane %v2462, %v2489
      %v2491 = vcombine.high %v2469, %v2469
      %v2492 = vcombine.high %v2476, %v2476
      %v2493 = vcombine.high %v2483, %v2483
      %v2494 = vcombine.high %v2490, %v2490
      %v2495 = vcombine.high %v1301, %v1301
      %v2497 = vunpack.c.l.s4 1966171168
      %v2498 = vunpack.c.0.s8 %v2497
      %v2499 = vlaneseq
      %v2500 = vshrl.u32 %v2499, 7
      %v2501 = vsub.s32 %v2498, %v2500
      %v2502 = vrot.slane %v1301, %v2501
      %v2504 = vunpack.c.l.s4 1966171168
      %v2505 = vunpack.c.0.s8 %v2504
      %v2506 = vlaneseq
      %v2507 = vshrl.u32 %v2506, 7
      %v2508 = vsub.s32 %v2505, %v2507
      %v2509 = vrot.slane %v2495, %v2508
      %v2510 = vcombine.high %v2502, %v2502
      %v2511 = vcombine.high %v2509, %v2509
      %v2513 = vunpack.c.l.s4 1966171168
      %v2514 = vunpack.c.0.s8 %v2513
      %v2515 = vlaneseq
      %v2516 = vshrl.u32 %v2515, 7
      %v2517 = vsub.s32 %v2514, %v2516
      %v2518 = vrot.slane %v2502, %v2517
      %v2520 = vunpack.c.l.s4 1966171168
      %v2521 = vunpack.c.0.s8 %v2520
      %v2522 = vlaneseq
      %v2523 = vshrl.u32 %v2522, 7
      %v2524 = vsub.s32 %v2521, %v2523
      %v2525 = vrot.slane %v2509, %v2524
      %v2527 = vunpack.c.l.s4 1966171168
      %v2528 = vunpack.c.0.s8 %v2527
      %v2529 = vlaneseq
      %v2530 = vshrl.u32 %v2529, 7
      %v2531 = vsub.s32 %v2528, %v2530
      %v2532 = vrot.slane %v2510, %v2531
      %v2534 = vunpack.c.l.s4 1966171168
      %v2535 = vunpack.c.0.s8 %v2534
      %v2536 = vlaneseq
      %v2537 = vshrl.u32 %v2536, 7
      %v2538 = vsub.s32 %v2535, %v2537
      %v2539 = vrot.slane %v2511, %v2538
      %v2540 = vcombine.high %v2518, %v2518
      %v2541 = vcombine.high %v2525, %v2525
      %v2542 = vcombine.high %v2532, %v2532
      %v2543 = vcombine.high %v2539, %v2539
      %v2544 = vcombine.high %v1302, %v1302
      %v2546 = vunpack.c.l.s4 1966171168
      %v2547 = vunpack.c.0.s8 %v2546
      %v2548 = vlaneseq
      %v2549 = vshrl.u32 %v2548, 7
      %v2550 = vsub.s32 %v2547, %v2549
      %v2551 = vrot.slane %v1302, %v2550
      %v2553 = vunpack.c.l.s4 1966171168
      %v2554 = vunpack.c.0.s8 %v2553
      %v2555 = vlaneseq
      %v2556 = vshrl.u32 %v2555, 7
      %v2557 = vsub.s32 %v2554, %v2556
      %v2558 = vrot.slane %v2544, %v2557
      %v2559 = vcombine.high %v2551, %v2551
      %v2560 = vcombine.high %v2558, %v2558
      %v2562 = vunpack.c.l.s4 1966171168
      %v2563 = vunpack.c.0.s8 %v2562
      %v2564 = vlaneseq
      %v2565 = vshrl.u32 %v2564, 7
      %v2566 = vsub.s32 %v2563, %v2565
      %v2567 = vrot.slane %v2551, %v2566
      %v2569 = vunpack.c.l.s4 1966171168
      %v2570 = vunpack.c.0.s8 %v2569
      %v2571 = vlaneseq
      %v2572 = vshrl.u32 %v2571, 7
      %v2573 = vsub.s32 %v2570, %v2572
      %v2574 = vrot.slane %v2558, %v2573
      %v2576 = vunpack.c.l.s4 1966171168
      %v2577 = vunpack.c.0.s8 %v2576
      %v2578 = vlaneseq
      %v2579 = vshrl.u32 %v2578, 7
      %v2580 = vsub.s32 %v2577, %v2579
      %v2581 = vrot.slane %v2559, %v2580
      %v2583 = vunpack.c.l.s4 1966171168
      %v2584 = vunpack.c.0.s8 %v2583
      %v2585 = vlaneseq
      %v2586 = vshrl.u32 %v2585, 7
      %v2587 = vsub.s32 %v2584, %v2586
      %v2588 = vrot.slane %v2560, %v2587
      %v2589 = vcombine.high %v2567, %v2567
      %v2590 = vcombine.high %v2574, %v2574
      %v2591 = vcombine.high %v2581, %v2581
      %v2592 = vcombine.high %v2588, %v2588
      %v2593 = vcombine.high %v1303, %v1303
      %v2595 = vunpack.c.l.s4 1966171168
      %v2596 = vunpack.c.0.s8 %v2595
      %v2597 = vlaneseq
      %v2598 = vshrl.u32 %v2597, 7
      %v2599 = vsub.s32 %v2596, %v2598
      %v2600 = vrot.slane %v1303, %v2599
      %v2602 = vunpack.c.l.s4 1966171168
      %v2603 = vunpack.c.0.s8 %v2602
      %v2604 = vlaneseq
      %v2605 = vshrl.u32 %v2604, 7
      %v2606 = vsub.s32 %v2603, %v2605
      %v2607 = vrot.slane %v2593, %v2606
      %v2608 = vcombine.high %v2600, %v2600
      %v2609 = vcombine.high %v2607, %v2607
      %v2611 = vunpack.c.l.s4 1966171168
      %v2612 = vunpack.c.0.s8 %v2611
      %v2613 = vlaneseq
      %v2614 = vshrl.u32 %v2613, 7
      %v2615 = vsub.s32 %v2612, %v2614
      %v2616 = vrot.slane %v2600, %v2615
      %v2618 = vunpack.c.l.s4 1966171168
      %v2619 = vunpack.c.0.s8 %v2618
      %v2620 = vlaneseq
      %v2621 = vshrl.u32 %v2620, 7
      %v2622 = vsub.s32 %v2619, %v2621
      %v2623 = vrot.slane %v2607, %v2622
      %v2625 = vunpack.c.l.s4 1966171168
      %v2626 = vunpack.c.0.s8 %v2625
      %v2627 = vlaneseq
      %v2628 = vshrl.u32 %v2627, 7
      %v2629 = vsub.s32 %v2626, %v2628
      %v2630 = vrot.slane %v2608, %v2629
      %v2632 = vunpack.c.l.s4 1966171168
      %v2633 = vunpack.c.0.s8 %v2632
      %v2634 = vlaneseq
      %v2635 = vshrl.u32 %v2634, 7
      %v2636 = vsub.s32 %v2633, %v2635
      %v2637 = vrot.slane %v2609, %v2636
      %v2638 = vcombine.high %v2616, %v2616
      %v2639 = vcombine.high %v2623, %v2623
      %v2640 = vcombine.high %v2630, %v2630
      %v2641 = vcombine.high %v2637, %v2637
      %v2642 = vcombine.high %v1304, %v1304
      %v2644 = vunpack.c.l.s4 1966171168
      %v2645 = vunpack.c.0.s8 %v2644
      %v2646 = vlaneseq
      %v2647 = vshrl.u32 %v2646, 7
      %v2648 = vsub.s32 %v2645, %v2647
      %v2649 = vrot.slane %v1304, %v2648
      %v2651 = vunpack.c.l.s4 1966171168
      %v2652 = vunpack.c.0.s8 %v2651
      %v2653 = vlaneseq
      %v2654 = vshrl.u32 %v2653, 7
      %v2655 = vsub.s32 %v2652, %v2654
      %v2656 = vrot.slane %v2642, %v2655
      %v2657 = vcombine.high %v2649, %v2649
      %v2658 = vcombine.high %v2656, %v2656
      %v2660 = vunpack.c.l.s4 1966171168
      %v2661 = vunpack.c.0.s8 %v2660
      %v2662 = vlaneseq
      %v2663 = vshrl.u32 %v2662, 7
      %v2664 = vsub.s32 %v2661, %v2663
      %v2665 = vrot.slane %v2649, %v2664
      %v2667 = vunpack.c.l.s4 1966171168
      %v2668 = vunpack.c.0.s8 %v2667
      %v2669 = vlaneseq
      %v2670 = vshrl.u32 %v2669, 7
      %v2671 = vsub.s32 %v2668, %v2670
      %v2672 = vrot.slane %v2656, %v2671
      %v2674 = vunpack.c.l.s4 1966171168
      %v2675 = vunpack.c.0.s8 %v2674
      %v2676 = vlaneseq
      %v2677 = vshrl.u32 %v2676, 7
      %v2678 = vsub.s32 %v2675, %v2677
      %v2679 = vrot.slane %v2657, %v2678
      %v2681 = vunpack.c.l.s4 1966171168
      %v2682 = vunpack.c.0.s8 %v2681
      %v2683 = vlaneseq
      %v2684 = vshrl.u32 %v2683, 7
      %v2685 = vsub.s32 %v2682, %v2684
      %v2686 = vrot.slane %v2658, %v2685
      %v2687 = vcombine.high %v2665, %v2665
      %v2688 = vcombine.high %v2672, %v2672
      %v2689 = vcombine.high %v2679, %v2679
      %v2690 = vcombine.high %v2686, %v2686
      %v2691 = vcombine.high %v1305, %v1305
      %v2693 = vunpack.c.l.s4 1966171168
      %v2694 = vunpack.c.0.s8 %v2693
      %v2695 = vlaneseq
      %v2696 = vshrl.u32 %v2695, 7
      %v2697 = vsub.s32 %v2694, %v2696
      %v2698 = vrot.slane %v1305, %v2697
      %v2700 = vunpack.c.l.s4 1966171168
      %v2701 = vunpack.c.0.s8 %v2700
      %v2702 = vlaneseq
      %v2703 = vshrl.u32 %v2702, 7
      %v2704 = vsub.s32 %v2701, %v2703
      %v2705 = vrot.slane %v2691, %v2704
      %v2706 = vcombine.high %v2698, %v2698
      %v2707 = vcombine.high %v2705, %v2705
      %v2709 = vunpack.c.l.s4 1966171168
      %v2710 = vunpack.c.0.s8 %v2709
      %v2711 = vlaneseq
      %v2712 = vshrl.u32 %v2711, 7
      %v2713 = vsub.s32 %v2710, %v2712
      %v2714 = vrot.slane %v2698, %v2713
      %v2716 = vunpack.c.l.s4 1966171168
      %v2717 = vunpack.c.0.s8 %v2716
      %v2718 = vlaneseq
      %v2719 = vshrl.u32 %v2718, 7
      %v2720 = vsub.s32 %v2717, %v2719
      %v2721 = vrot.slane %v2705, %v2720
      %v2723 = vunpack.c.l.s4 1966171168
      %v2724 = vunpack.c.0.s8 %v2723
      %v2725 = vlaneseq
      %v2726 = vshrl.u32 %v2725, 7
      %v2727 = vsub.s32 %v2724, %v2726
      %v2728 = vrot.slane %v2706, %v2727
      %v2730 = vunpack.c.l.s4 1966171168
      %v2731 = vunpack.c.0.s8 %v2730
      %v2732 = vlaneseq
      %v2733 = vshrl.u32 %v2732, 7
      %v2734 = vsub.s32 %v2731, %v2733
      %v2735 = vrot.slane %v2707, %v2734
      %v2736 = vcombine.high %v2714, %v2714
      %v2737 = vcombine.high %v2721, %v2721
      %v2738 = vcombine.high %v2728, %v2728
      %v2739 = vcombine.high %v2735, %v2735
      %v2740 = vcombine.high %v1306, %v1306
      %v2742 = vunpack.c.l.s4 1966171168
      %v2743 = vunpack.c.0.s8 %v2742
      %v2744 = vlaneseq
      %v2745 = vshrl.u32 %v2744, 7
      %v2746 = vsub.s32 %v2743, %v2745
      %v2747 = vrot.slane %v1306, %v2746
      %v2749 = vunpack.c.l.s4 1966171168
      %v2750 = vunpack.c.0.s8 %v2749
      %v2751 = vlaneseq
      %v2752 = vshrl.u32 %v2751, 7
      %v2753 = vsub.s32 %v2750, %v2752
      %v2754 = vrot.slane %v2740, %v2753
      %v2755 = vcombine.high %v2747, %v2747
      %v2756 = vcombine.high %v2754, %v2754
      %v2758 = vunpack.c.l.s4 1966171168
      %v2759 = vunpack.c.0.s8 %v2758
      %v2760 = vlaneseq
      %v2761 = vshrl.u32 %v2760, 7
      %v2762 = vsub.s32 %v2759, %v2761
      %v2763 = vrot.slane %v2747, %v2762
      %v2765 = vunpack.c.l.s4 1966171168
      %v2766 = vunpack.c.0.s8 %v2765
      %v2767 = vlaneseq
      %v2768 = vshrl.u32 %v2767, 7
      %v2769 = vsub.s32 %v2766, %v2768
      %v2770 = vrot.slane %v2754, %v2769
      %v2772 = vunpack.c.l.s4 1966171168
      %v2773 = vunpack.c.0.s8 %v2772
      %v2774 = vlaneseq
      %v2775 = vshrl.u32 %v2774, 7
      %v2776 = vsub.s32 %v2773, %v2775
      %v2777 = vrot.slane %v2755, %v2776
      %v2779 = vunpack.c.l.s4 1966171168
      %v2780 = vunpack.c.0.s8 %v2779
      %v2781 = vlaneseq
      %v2782 = vshrl.u32 %v2781, 7
      %v2783 = vsub.s32 %v2780, %v2782
      %v2784 = vrot.slane %v2756, %v2783
      %v2785 = vcombine.high %v2763, %v2763
      %v2786 = vcombine.high %v2770, %v2770
      %v2787 = vcombine.high %v2777, %v2777
      %v2788 = vcombine.high %v2784, %v2784
      %v2789 = vcombine.high %v1307, %v1307
      %v2791 = vunpack.c.l.s4 1966171168
      %v2792 = vunpack.c.0.s8 %v2791
      %v2793 = vlaneseq
      %v2794 = vshrl.u32 %v2793, 7
      %v2795 = vsub.s32 %v2792, %v2794
      %v2796 = vrot.slane %v1307, %v2795
      %v2798 = vunpack.c.l.s4 1966171168
      %v2799 = vunpack.c.0.s8 %v2798
      %v2800 = vlaneseq
      %v2801 = vshrl.u32 %v2800, 7
      %v2802 = vsub.s32 %v2799, %v2801
      %v2803 = vrot.slane %v2789, %v2802
      %v2804 = vcombine.high %v2796, %v2796
      %v2805 = vcombine.high %v2803, %v2803
      %v2807 = vunpack.c.l.s4 1966171168
      %v2808 = vunpack.c.0.s8 %v2807
      %v2809 = vlaneseq
      %v2810 = vshrl.u32 %v2809, 7
      %v2811 = vsub.s32 %v2808, %v2810
      %v2812 = vrot.slane %v2796, %v2811
      %v2814 = vunpack.c.l.s4 1966171168
      %v2815 = vunpack.c.0.s8 %v2814
      %v2816 = vlaneseq
      %v2817 = vshrl.u32 %v2816, 7
      %v2818 = vsub.s32 %v2815, %v2817
      %v2819 = vrot.slane %v2803, %v2818
      %v2821 = vunpack.c.l.s4 1966171168
      %v2822 = vunpack.c.0.s8 %v2821
      %v2823 = vlaneseq
      %v2824 = vshrl.u32 %v2823, 7
      %v2825 = vsub.s32 %v2822, %v2824
      %v2826 = vrot.slane %v2804, %v2825
      %v2828 = vunpack.c.l.s4 1966171168
      %v2829 = vunpack.c.0.s8 %v2828
      %v2830 = vlaneseq
      %v2831 = vshrl.u32 %v2830, 7
      %v2832 = vsub.s32 %v2829, %v2831
      %v2833 = vrot.slane %v2805, %v2832
      %v2834 = vcombine.high %v2812, %v2812
      %v2835 = vcombine.high %v2819, %v2819
      %v2836 = vcombine.high %v2826, %v2826
      %v2837 = vcombine.high %v2833, %v2833
      %v2982 = vcombine.high %v2022, %v2022
      %v2984 = vunpack.c.l.s4 1966171168
      %v2985 = vunpack.c.0.s8 %v2984
      %v2986 = vlaneseq
      %v2987 = vshrl.u32 %v2986, 7
      %v2988 = vsub.s32 %v2985, %v2987
      %v2989 = vrot.slane %v2022, %v2988
      %v2991 = vunpack.c.l.s4 1966171168
      %v2992 = vunpack.c.0.s8 %v2991
      %v2993 = vlaneseq
      %v2994 = vshrl.u32 %v2993, 7
      %v2995 = vsub.s32 %v2992, %v2994
      %v2996 = vrot.slane %v2982, %v2995
      %v2997 = vcombine.high %v2989, %v2989
      %v2998 = vcombine.high %v2996, %v2996
      %v3000 = vunpack.c.l.s4 1966171168
      %v3001 = vunpack.c.0.s8 %v3000
      %v3002 = vlaneseq
      %v3003 = vshrl.u32 %v3002, 7
      %v3004 = vsub.s32 %v3001, %v3003
      %v3005 = vrot.slane %v2989, %v3004
      %v3007 = vunpack.c.l.s4 1966171168
      %v3008 = vunpack.c.0.s8 %v3007
      %v3009 = vlaneseq
      %v3010 = vshrl.u32 %v3009, 7
      %v3011 = vsub.s32 %v3008, %v3010
      %v3012 = vrot.slane %v2996, %v3011
      %v3014 = vunpack.c.l.s4 1966171168
      %v3015 = vunpack.c.0.s8 %v3014
      %v3016 = vlaneseq
      %v3017 = vshrl.u32 %v3016, 7
      %v3018 = vsub.s32 %v3015, %v3017
      %v3019 = vrot.slane %v2997, %v3018
      %v3021 = vunpack.c.l.s4 1966171168
      %v3022 = vunpack.c.0.s8 %v3021
      %v3023 = vlaneseq
      %v3024 = vshrl.u32 %v3023, 7
      %v3025 = vsub.s32 %v3022, %v3024
      %v3026 = vrot.slane %v2998, %v3025
      %v3027 = vcombine.high %v3005, %v3005
      %v3028 = vcombine.high %v3012, %v3012
      %v3029 = vcombine.high %v3019, %v3019
      %v3030 = vcombine.high %v3026, %v3026
      %v3031 = vcombine.high %v2023, %v2023
      %v3033 = vunpack.c.l.s4 1966171168
      %v3034 = vunpack.c.0.s8 %v3033
      %v3035 = vlaneseq
      %v3036 = vshrl.u32 %v3035, 7
      %v3037 = vsub.s32 %v3034, %v3036
      %v3038 = vrot.slane %v2023, %v3037
      %v3040 = vunpack.c.l.s4 1966171168
      %v3041 = vunpack.c.0.s8 %v3040
      %v3042 = vlaneseq
      %v3043 = vshrl.u32 %v3042, 7
      %v3044 = vsub.s32 %v3041, %v3043
      %v3045 = vrot.slane %v3031, %v3044
      %v3046 = vcombine.high %v3038, %v3038
      %v3047 = vcombine.high %v3045, %v3045
      %v3049 = vunpack.c.l.s4 1966171168
      %v3050 = vunpack.c.0.s8 %v3049
      %v3051 = vlaneseq
      %v3052 = vshrl.u32 %v3051, 7
      %v3053 = vsub.s32 %v3050, %v3052
      %v3054 = vrot.slane %v3038, %v3053
      %v3056 = vunpack.c.l.s4 1966171168
      %v3057 = vunpack.c.0.s8 %v3056
      %v3058 = vlaneseq
      %v3059 = vshrl.u32 %v3058, 7
      %v3060 = vsub.s32 %v3057, %v3059
      %v3061 = vrot.slane %v3045, %v3060
      %v3063 = vunpack.c.l.s4 1966171168
      %v3064 = vunpack.c.0.s8 %v3063
      %v3065 = vlaneseq
      %v3066 = vshrl.u32 %v3065, 7
      %v3067 = vsub.s32 %v3064, %v3066
      %v3068 = vrot.slane %v3046, %v3067
      %v3070 = vunpack.c.l.s4 1966171168
      %v3071 = vunpack.c.0.s8 %v3070
      %v3072 = vlaneseq
      %v3073 = vshrl.u32 %v3072, 7
      %v3074 = vsub.s32 %v3071, %v3073
      %v3075 = vrot.slane %v3047, %v3074
      %v3076 = vcombine.high %v3054, %v3054
      %v3077 = vcombine.high %v3061, %v3061
      %v3078 = vcombine.high %v3068, %v3068
      %v3079 = vcombine.high %v3075, %v3075
      %v3080 = vcombine.high %v2024, %v2024
      %v3082 = vunpack.c.l.s4 1966171168
      %v3083 = vunpack.c.0.s8 %v3082
      %v3084 = vlaneseq
      %v3085 = vshrl.u32 %v3084, 7
      %v3086 = vsub.s32 %v3083, %v3085
      %v3087 = vrot.slane %v2024, %v3086
      %v3089 = vunpack.c.l.s4 1966171168
      %v3090 = vunpack.c.0.s8 %v3089
      %v3091 = vlaneseq
      %v3092 = vshrl.u32 %v3091, 7
      %v3093 = vsub.s32 %v3090, %v3092
      %v3094 = vrot.slane %v3080, %v3093
      %v3095 = vcombine.high %v3087, %v3087
      %v3096 = vcombine.high %v3094, %v3094
      %v3098 = vunpack.c.l.s4 1966171168
      %v3099 = vunpack.c.0.s8 %v3098
      %v3100 = vlaneseq
      %v3101 = vshrl.u32 %v3100, 7
      %v3102 = vsub.s32 %v3099, %v3101
      %v3103 = vrot.slane %v3087, %v3102
      %v3105 = vunpack.c.l.s4 1966171168
      %v3106 = vunpack.c.0.s8 %v3105
      %v3107 = vlaneseq
      %v3108 = vshrl.u32 %v3107, 7
      %v3109 = vsub.s32 %v3106, %v3108
      %v3110 = vrot.slane %v3094, %v3109
      %v3112 = vunpack.c.l.s4 1966171168
      %v3113 = vunpack.c.0.s8 %v3112
      %v3114 = vlaneseq
      %v3115 = vshrl.u32 %v3114, 7
      %v3116 = vsub.s32 %v3113, %v3115
      %v3117 = vrot.slane %v3095, %v3116
      %v3119 = vunpack.c.l.s4 1966171168
      %v3120 = vunpack.c.0.s8 %v3119
      %v3121 = vlaneseq
      %v3122 = vshrl.u32 %v3121, 7
      %v3123 = vsub.s32 %v3120, %v3122
      %v3124 = vrot.slane %v3096, %v3123
      %v3125 = vcombine.high %v3103, %v3103
      %v3126 = vcombine.high %v3110, %v3110
      %v3127 = vcombine.high %v3117, %v3117
      %v3128 = vcombine.high %v3124, %v3124
      %v3129 = vcombine.high %v2025, %v2025
      %v3131 = vunpack.c.l.s4 1966171168
      %v3132 = vunpack.c.0.s8 %v3131
      %v3133 = vlaneseq
      %v3134 = vshrl.u32 %v3133, 7
      %v3135 = vsub.s32 %v3132, %v3134
      %v3136 = vrot.slane %v2025, %v3135
      %v3138 = vunpack.c.l.s4 1966171168
      %v3139 = vunpack.c.0.s8 %v3138
      %v3140 = vlaneseq
      %v3141 = vshrl.u32 %v3140, 7
      %v3142 = vsub.s32 %v3139, %v3141
      %v3143 = vrot.slane %v3129, %v3142
      %v3144 = vcombine.high %v3136, %v3136
      %v3145 = vcombine.high %v3143, %v3143
      %v3147 = vunpack.c.l.s4 1966171168
      %v3148 = vunpack.c.0.s8 %v3147
      %v3149 = vlaneseq
      %v3150 = vshrl.u32 %v3149, 7
      %v3151 = vsub.s32 %v3148, %v3150
      %v3152 = vrot.slane %v3136, %v3151
      %v3154 = vunpack.c.l.s4 1966171168
      %v3155 = vunpack.c.0.s8 %v3154
      %v3156 = vlaneseq
      %v3157 = vshrl.u32 %v3156, 7
      %v3158 = vsub.s32 %v3155, %v3157
      %v3159 = vrot.slane %v3143, %v3158
      %v3161 = vunpack.c.l.s4 1966171168
      %v3162 = vunpack.c.0.s8 %v3161
      %v3163 = vlaneseq
      %v3164 = vshrl.u32 %v3163, 7
      %v3165 = vsub.s32 %v3162, %v3164
      %v3166 = vrot.slane %v3144, %v3165
      %v3168 = vunpack.c.l.s4 1966171168
      %v3169 = vunpack.c.0.s8 %v3168
      %v3170 = vlaneseq
      %v3171 = vshrl.u32 %v3170, 7
      %v3172 = vsub.s32 %v3169, %v3171
      %v3173 = vrot.slane %v3145, %v3172
      %v3174 = vcombine.high %v3152, %v3152
      %v3175 = vcombine.high %v3159, %v3159
      %v3176 = vcombine.high %v3166, %v3166
      %v3177 = vcombine.high %v3173, %v3173
      %v3178 = vcombine.high %v2026, %v2026
      %v3180 = vunpack.c.l.s4 1966171168
      %v3181 = vunpack.c.0.s8 %v3180
      %v3182 = vlaneseq
      %v3183 = vshrl.u32 %v3182, 7
      %v3184 = vsub.s32 %v3181, %v3183
      %v3185 = vrot.slane %v2026, %v3184
      %v3187 = vunpack.c.l.s4 1966171168
      %v3188 = vunpack.c.0.s8 %v3187
      %v3189 = vlaneseq
      %v3190 = vshrl.u32 %v3189, 7
      %v3191 = vsub.s32 %v3188, %v3190
      %v3192 = vrot.slane %v3178, %v3191
      %v3193 = vcombine.high %v3185, %v3185
      %v3194 = vcombine.high %v3192, %v3192
      %v3196 = vunpack.c.l.s4 1966171168
      %v3197 = vunpack.c.0.s8 %v3196
      %v3198 = vlaneseq
      %v3199 = vshrl.u32 %v3198, 7
      %v3200 = vsub.s32 %v3197, %v3199
      %v3201 = vrot.slane %v3185, %v3200
      %v3203 = vunpack.c.l.s4 1966171168
      %v3204 = vunpack.c.0.s8 %v3203
      %v3205 = vlaneseq
      %v3206 = vshrl.u32 %v3205, 7
      %v3207 = vsub.s32 %v3204, %v3206
      %v3208 = vrot.slane %v3192, %v3207
      %v3210 = vunpack.c.l.s4 1966171168
      %v3211 = vunpack.c.0.s8 %v3210
      %v3212 = vlaneseq
      %v3213 = vshrl.u32 %v3212, 7
      %v3214 = vsub.s32 %v3211, %v3213
      %v3215 = vrot.slane %v3193, %v3214
      %v3217 = vunpack.c.l.s4 1966171168
      %v3218 = vunpack.c.0.s8 %v3217
      %v3219 = vlaneseq
      %v3220 = vshrl.u32 %v3219, 7
      %v3221 = vsub.s32 %v3218, %v3220
      %v3222 = vrot.slane %v3194, %v3221
      %v3223 = vcombine.high %v3201, %v3201
      %v3224 = vcombine.high %v3208, %v3208
      %v3225 = vcombine.high %v3215, %v3215
      %v3226 = vcombine.high %v3222, %v3222
      %v3227 = vcombine.high %v2027, %v2027
      %v3229 = vunpack.c.l.s4 1966171168
      %v3230 = vunpack.c.0.s8 %v3229
      %v3231 = vlaneseq
      %v3232 = vshrl.u32 %v3231, 7
      %v3233 = vsub.s32 %v3230, %v3232
      %v3234 = vrot.slane %v2027, %v3233
      %v3236 = vunpack.c.l.s4 1966171168
      %v3237 = vunpack.c.0.s8 %v3236
      %v3238 = vlaneseq
      %v3239 = vshrl.u32 %v3238, 7
      %v3240 = vsub.s32 %v3237, %v3239
      %v3241 = vrot.slane %v3227, %v3240
      %v3242 = vcombine.high %v3234, %v3234
      %v3243 = vcombine.high %v3241, %v3241
      %v3245 = vunpack.c.l.s4 1966171168
      %v3246 = vunpack.c.0.s8 %v3245
      %v3247 = vlaneseq
      %v3248 = vshrl.u32 %v3247, 7
      %v3249 = vsub.s32 %v3246, %v3248
      %v3250 = vrot.slane %v3234, %v3249
      %v3252 = vunpack.c.l.s4 1966171168
      %v3253 = vunpack.c.0.s8 %v3252
      %v3254 = vlaneseq
      %v3255 = vshrl.u32 %v3254, 7
      %v3256 = vsub.s32 %v3253, %v3255
      %v3257 = vrot.slane %v3241, %v3256
      %v3259 = vunpack.c.l.s4 1966171168
      %v3260 = vunpack.c.0.s8 %v3259
      %v3261 = vlaneseq
      %v3262 = vshrl.u32 %v3261, 7
      %v3263 = vsub.s32 %v3260, %v3262
      %v3264 = vrot.slane %v3242, %v3263
      %v3266 = vunpack.c.l.s4 1966171168
      %v3267 = vunpack.c.0.s8 %v3266
      %v3268 = vlaneseq
      %v3269 = vshrl.u32 %v3268, 7
      %v3270 = vsub.s32 %v3267, %v3269
      %v3271 = vrot.slane %v3243, %v3270
      %v3272 = vcombine.high %v3250, %v3250
      %v3273 = vcombine.high %v3257, %v3257
      %v3274 = vcombine.high %v3264, %v3264
      %v3275 = vcombine.high %v3271, %v3271
      %v3276 = vcombine.high %v2028, %v2028
      %v3278 = vunpack.c.l.s4 1966171168
      %v3279 = vunpack.c.0.s8 %v3278
      %v3280 = vlaneseq
      %v3281 = vshrl.u32 %v3280, 7
      %v3282 = vsub.s32 %v3279, %v3281
      %v3283 = vrot.slane %v2028, %v3282
      %v3285 = vunpack.c.l.s4 1966171168
      %v3286 = vunpack.c.0.s8 %v3285
      %v3287 = vlaneseq
      %v3288 = vshrl.u32 %v3287, 7
      %v3289 = vsub.s32 %v3286, %v3288
      %v3290 = vrot.slane %v3276, %v3289
      %v3291 = vcombine.high %v3283, %v3283
      %v3292 = vcombine.high %v3290, %v3290
      %v3294 = vunpack.c.l.s4 1966171168
      %v3295 = vunpack.c.0.s8 %v3294
      %v3296 = vlaneseq
      %v3297 = vshrl.u32 %v3296, 7
      %v3298 = vsub.s32 %v3295, %v3297
      %v3299 = vrot.slane %v3283, %v3298
      %v3301 = vunpack.c.l.s4 1966171168
      %v3302 = vunpack.c.0.s8 %v3301
      %v3303 = vlaneseq
      %v3304 = vshrl.u32 %v3303, 7
      %v3305 = vsub.s32 %v3302, %v3304
      %v3306 = vrot.slane %v3290, %v3305
      %v3308 = vunpack.c.l.s4 1966171168
      %v3309 = vunpack.c.0.s8 %v3308
      %v3310 = vlaneseq
      %v3311 = vshrl.u32 %v3310, 7
      %v3312 = vsub.s32 %v3309, %v3311
      %v3313 = vrot.slane %v3291, %v3312
      %v3315 = vunpack.c.l.s4 1966171168
      %v3316 = vunpack.c.0.s8 %v3315
      %v3317 = vlaneseq
      %v3318 = vshrl.u32 %v3317, 7
      %v3319 = vsub.s32 %v3316, %v3318
      %v3320 = vrot.slane %v3292, %v3319
      %v3321 = vcombine.high %v3299, %v3299
      %v3322 = vcombine.high %v3306, %v3306
      %v3323 = vcombine.high %v3313, %v3313
      %v3324 = vcombine.high %v3320, %v3320
      %v3325 = vcombine.high %v2029, %v2029
      %v3327 = vunpack.c.l.s4 1966171168
      %v3328 = vunpack.c.0.s8 %v3327
      %v3329 = vlaneseq
      %v3330 = vshrl.u32 %v3329, 7
      %v3331 = vsub.s32 %v3328, %v3330
      %v3332 = vrot.slane %v2029, %v3331
      %v3334 = vunpack.c.l.s4 1966171168
      %v3335 = vunpack.c.0.s8 %v3334
      %v3336 = vlaneseq
      %v3337 = vshrl.u32 %v3336, 7
      %v3338 = vsub.s32 %v3335, %v3337
      %v3339 = vrot.slane %v3325, %v3338
      %v3340 = vcombine.high %v3332, %v3332
      %v3341 = vcombine.high %v3339, %v3339
      %v3343 = vunpack.c.l.s4 1966171168
      %v3344 = vunpack.c.0.s8 %v3343
      %v3345 = vlaneseq
      %v3346 = vshrl.u32 %v3345, 7
      %v3347 = vsub.s32 %v3344, %v3346
      %v3348 = vrot.slane %v3332, %v3347
      %v3350 = vunpack.c.l.s4 1966171168
      %v3351 = vunpack.c.0.s8 %v3350
      %v3352 = vlaneseq
      %v3353 = vshrl.u32 %v3352, 7
      %v3354 = vsub.s32 %v3351, %v3353
      %v3355 = vrot.slane %v3339, %v3354
      %v3357 = vunpack.c.l.s4 1966171168
      %v3358 = vunpack.c.0.s8 %v3357
      %v3359 = vlaneseq
      %v3360 = vshrl.u32 %v3359, 7
      %v3361 = vsub.s32 %v3358, %v3360
      %v3362 = vrot.slane %v3340, %v3361
      %v3364 = vunpack.c.l.s4 1966171168
      %v3365 = vunpack.c.0.s8 %v3364
      %v3366 = vlaneseq
      %v3367 = vshrl.u32 %v3366, 7
      %v3368 = vsub.s32 %v3365, %v3367
      %v3369 = vrot.slane %v3341, %v3368
      %v3370 = vcombine.high %v3348, %v3348
      %v3371 = vcombine.high %v3355, %v3355
      %v3372 = vcombine.high %v3362, %v3362
      %v3373 = vcombine.high %v3369, %v3369
      %v3374 = vcombine.high %v2030, %v2030
      %v3376 = vunpack.c.l.s4 1966171168
      %v3377 = vunpack.c.0.s8 %v3376
      %v3378 = vlaneseq
      %v3379 = vshrl.u32 %v3378, 7
      %v3380 = vsub.s32 %v3377, %v3379
      %v3381 = vrot.slane %v2030, %v3380
      %v3383 = vunpack.c.l.s4 1966171168
      %v3384 = vunpack.c.0.s8 %v3383
      %v3385 = vlaneseq
      %v3386 = vshrl.u32 %v3385, 7
      %v3387 = vsub.s32 %v3384, %v3386
      %v3388 = vrot.slane %v3374, %v3387
      %v3389 = vcombine.high %v3381, %v3381
      %v3390 = vcombine.high %v3388, %v3388
      %v3392 = vunpack.c.l.s4 1966171168
      %v3393 = vunpack.c.0.s8 %v3392
      %v3394 = vlaneseq
      %v3395 = vshrl.u32 %v3394, 7
      %v3396 = vsub.s32 %v3393, %v3395
      %v3397 = vrot.slane %v3381, %v3396
      %v3399 = vunpack.c.l.s4 1966171168
      %v3400 = vunpack.c.0.s8 %v3399
      %v3401 = vlaneseq
      %v3402 = vshrl.u32 %v3401, 7
      %v3403 = vsub.s32 %v3400, %v3402
      %v3404 = vrot.slane %v3388, %v3403
      %v3406 = vunpack.c.l.s4 1966171168
      %v3407 = vunpack.c.0.s8 %v3406
      %v3408 = vlaneseq
      %v3409 = vshrl.u32 %v3408, 7
      %v3410 = vsub.s32 %v3407, %v3409
      %v3411 = vrot.slane %v3389, %v3410
      %v3413 = vunpack.c.l.s4 1966171168
      %v3414 = vunpack.c.0.s8 %v3413
      %v3415 = vlaneseq
      %v3416 = vshrl.u32 %v3415, 7
      %v3417 = vsub.s32 %v3414, %v3416
      %v3418 = vrot.slane %v3390, %v3417
      %v3419 = vcombine.high %v3397, %v3397
      %v3420 = vcombine.high %v3404, %v3404
      %v3421 = vcombine.high %v3411, %v3411
      %v3422 = vcombine.high %v3418, %v3418
      %v3423 = vcombine.high %v2031, %v2031
      %v3425 = vunpack.c.l.s4 1966171168
      %v3426 = vunpack.c.0.s8 %v3425
      %v3427 = vlaneseq
      %v3428 = vshrl.u32 %v3427, 7
      %v3429 = vsub.s32 %v3426, %v3428
      %v3430 = vrot.slane %v2031, %v3429
      %v3432 = vunpack.c.l.s4 1966171168
      %v3433 = vunpack.c.0.s8 %v3432
      %v3434 = vlaneseq
      %v3435 = vshrl.u32 %v3434, 7
      %v3436 = vsub.s32 %v3433, %v3435
      %v3437 = vrot.slane %v3423, %v3436
      %v3438 = vcombine.high %v3430, %v3430
      %v3439 = vcombine.high %v3437, %v3437
      %v3441 = vunpack.c.l.s4 1966171168
      %v3442 = vunpack.c.0.s8 %v3441
      %v3443 = vlaneseq
      %v3444 = vshrl.u32 %v3443, 7
      %v3445 = vsub.s32 %v3442, %v3444
      %v3446 = vrot.slane %v3430, %v3445
      %v3448 = vunpack.c.l.s4 1966171168
      %v3449 = vunpack.c.0.s8 %v3448
      %v3450 = vlaneseq
      %v3451 = vshrl.u32 %v3450, 7
      %v3452 = vsub.s32 %v3449, %v3451
      %v3453 = vrot.slane %v3437, %v3452
      %v3455 = vunpack.c.l.s4 1966171168
      %v3456 = vunpack.c.0.s8 %v3455
      %v3457 = vlaneseq
      %v3458 = vshrl.u32 %v3457, 7
      %v3459 = vsub.s32 %v3456, %v3458
      %v3460 = vrot.slane %v3438, %v3459
      %v3462 = vunpack.c.l.s4 1966171168
      %v3463 = vunpack.c.0.s8 %v3462
      %v3464 = vlaneseq
      %v3465 = vshrl.u32 %v3464, 7
      %v3466 = vsub.s32 %v3463, %v3465
      %v3467 = vrot.slane %v3439, %v3466
      %v3468 = vcombine.high %v3446, %v3446
      %v3469 = vcombine.high %v3453, %v3453
      %v3470 = vcombine.high %v3460, %v3460
      %v3471 = vcombine.high %v3467, %v3467
      %v3472 = vcombine.high %v2032, %v2032
      %v3474 = vunpack.c.l.s4 1966171168
      %v3475 = vunpack.c.0.s8 %v3474
      %v3476 = vlaneseq
      %v3477 = vshrl.u32 %v3476, 7
      %v3478 = vsub.s32 %v3475, %v3477
      %v3479 = vrot.slane %v2032, %v3478
      %v3481 = vunpack.c.l.s4 1966171168
      %v3482 = vunpack.c.0.s8 %v3481
      %v3483 = vlaneseq
      %v3484 = vshrl.u32 %v3483, 7
      %v3485 = vsub.s32 %v3482, %v3484
      %v3486 = vrot.slane %v3472, %v3485
      %v3487 = vcombine.high %v3479, %v3479
      %v3488 = vcombine.high %v3486, %v3486
      %v3490 = vunpack.c.l.s4 1966171168
      %v3491 = vunpack.c.0.s8 %v3490
      %v3492 = vlaneseq
      %v3493 = vshrl.u32 %v3492, 7
      %v3494 = vsub.s32 %v3491, %v3493
      %v3495 = vrot.slane %v3479, %v3494
      %v3497 = vunpack.c.l.s4 1966171168
      %v3498 = vunpack.c.0.s8 %v3497
      %v3499 = vlaneseq
      %v3500 = vshrl.u32 %v3499, 7
      %v3501 = vsub.s32 %v3498, %v3500
      %v3502 = vrot.slane %v3486, %v3501
      %v3504 = vunpack.c.l.s4 1966171168
      %v3505 = vunpack.c.0.s8 %v3504
      %v3506 = vlaneseq
      %v3507 = vshrl.u32 %v3506, 7
      %v3508 = vsub.s32 %v3505, %v3507
      %v3509 = vrot.slane %v3487, %v3508
      %v3511 = vunpack.c.l.s4 1966171168
      %v3512 = vunpack.c.0.s8 %v3511
      %v3513 = vlaneseq
      %v3514 = vshrl.u32 %v3513, 7
      %v3515 = vsub.s32 %v3512, %v3514
      %v3516 = vrot.slane %v3488, %v3515
      %v3517 = vcombine.high %v3495, %v3495
      %v3518 = vcombine.high %v3502, %v3502
      %v3519 = vcombine.high %v3509, %v3509
      %v3520 = vcombine.high %v3516, %v3516
      %v3521 = vcombine.high %v2033, %v2033
      %v3523 = vunpack.c.l.s4 1966171168
      %v3524 = vunpack.c.0.s8 %v3523
      %v3525 = vlaneseq
      %v3526 = vshrl.u32 %v3525, 7
      %v3527 = vsub.s32 %v3524, %v3526
      %v3528 = vrot.slane %v2033, %v3527
      %v3530 = vunpack.c.l.s4 1966171168
      %v3531 = vunpack.c.0.s8 %v3530
      %v3532 = vlaneseq
      %v3533 = vshrl.u32 %v3532, 7
      %v3534 = vsub.s32 %v3531, %v3533
      %v3535 = vrot.slane %v3521, %v3534
      %v3536 = vcombine.high %v3528, %v3528
      %v3537 = vcombine.high %v3535, %v3535
      %v3539 = vunpack.c.l.s4 1966171168
      %v3540 = vunpack.c.0.s8 %v3539
      %v3541 = vlaneseq
      %v3542 = vshrl.u32 %v3541, 7
      %v3543 = vsub.s32 %v3540, %v3542
      %v3544 = vrot.slane %v3528, %v3543
      %v3546 = vunpack.c.l.s4 1966171168
      %v3547 = vunpack.c.0.s8 %v3546
      %v3548 = vlaneseq
      %v3549 = vshrl.u32 %v3548, 7
      %v3550 = vsub.s32 %v3547, %v3549
      %v3551 = vrot.slane %v3535, %v3550
      %v3553 = vunpack.c.l.s4 1966171168
      %v3554 = vunpack.c.0.s8 %v3553
      %v3555 = vlaneseq
      %v3556 = vshrl.u32 %v3555, 7
      %v3557 = vsub.s32 %v3554, %v3556
      %v3558 = vrot.slane %v3536, %v3557
      %v3560 = vunpack.c.l.s4 1966171168
      %v3561 = vunpack.c.0.s8 %v3560
      %v3562 = vlaneseq
      %v3563 = vshrl.u32 %v3562, 7
      %v3564 = vsub.s32 %v3561, %v3563
      %v3565 = vrot.slane %v3537, %v3564
      %v3566 = vcombine.high %v3544, %v3544
      %v3567 = vcombine.high %v3551, %v3551
      %v3568 = vcombine.high %v3558, %v3558
      %v3569 = vcombine.high %v3565, %v3565
      %v3570 = vcombine.high %v2034, %v2034
      %v3572 = vunpack.c.l.s4 1966171168
      %v3573 = vunpack.c.0.s8 %v3572
      %v3574 = vlaneseq
      %v3575 = vshrl.u32 %v3574, 7
      %v3576 = vsub.s32 %v3573, %v3575
      %v3577 = vrot.slane %v2034, %v3576
      %v3579 = vunpack.c.l.s4 1966171168
      %v3580 = vunpack.c.0.s8 %v3579
      %v3581 = vlaneseq
      %v3582 = vshrl.u32 %v3581, 7
      %v3583 = vsub.s32 %v3580, %v3582
      %v3584 = vrot.slane %v3570, %v3583
      %v3585 = vcombine.high %v3577, %v3577
      %v3586 = vcombine.high %v3584, %v3584
      %v3588 = vunpack.c.l.s4 1966171168
      %v3589 = vunpack.c.0.s8 %v3588
      %v3590 = vlaneseq
      %v3591 = vshrl.u32 %v3590, 7
      %v3592 = vsub.s32 %v3589, %v3591
      %v3593 = vrot.slane %v3577, %v3592
      %v3595 = vunpack.c.l.s4 1966171168
      %v3596 = vunpack.c.0.s8 %v3595
      %v3597 = vlaneseq
      %v3598 = vshrl.u32 %v3597, 7
      %v3599 = vsub.s32 %v3596, %v3598
      %v3600 = vrot.slane %v3584, %v3599
      %v3602 = vunpack.c.l.s4 1966171168
      %v3603 = vunpack.c.0.s8 %v3602
      %v3604 = vlaneseq
      %v3605 = vshrl.u32 %v3604, 7
      %v3606 = vsub.s32 %v3603, %v3605
      %v3607 = vrot.slane %v3585, %v3606
      %v3609 = vunpack.c.l.s4 1966171168
      %v3610 = vunpack.c.0.s8 %v3609
      %v3611 = vlaneseq
      %v3612 = vshrl.u32 %v3611, 7
      %v3613 = vsub.s32 %v3610, %v3612
      %v3614 = vrot.slane %v3586, %v3613
      %v3615 = vcombine.high %v3593, %v3593
      %v3616 = vcombine.high %v3600, %v3600
      %v3617 = vcombine.high %v3607, %v3607
      %v3618 = vcombine.high %v3614, %v3614
      %v3619 = vcombine.high %v2035, %v2035
      %v3621 = vunpack.c.l.s4 1966171168
      %v3622 = vunpack.c.0.s8 %v3621
      %v3623 = vlaneseq
      %v3624 = vshrl.u32 %v3623, 7
      %v3625 = vsub.s32 %v3622, %v3624
      %v3626 = vrot.slane %v2035, %v3625
      %v3628 = vunpack.c.l.s4 1966171168
      %v3629 = vunpack.c.0.s8 %v3628
      %v3630 = vlaneseq
      %v3631 = vshrl.u32 %v3630, 7
      %v3632 = vsub.s32 %v3629, %v3631
      %v3633 = vrot.slane %v3619, %v3632
      %v3634 = vcombine.high %v3626, %v3626
      %v3635 = vcombine.high %v3633, %v3633
      %v3637 = vunpack.c.l.s4 1966171168
      %v3638 = vunpack.c.0.s8 %v3637
      %v3639 = vlaneseq
      %v3640 = vshrl.u32 %v3639, 7
      %v3641 = vsub.s32 %v3638, %v3640
      %v3642 = vrot.slane %v3626, %v3641
      %v3644 = vunpack.c.l.s4 1966171168
      %v3645 = vunpack.c.0.s8 %v3644
      %v3646 = vlaneseq
      %v3647 = vshrl.u32 %v3646, 7
      %v3648 = vsub.s32 %v3645, %v3647
      %v3649 = vrot.slane %v3633, %v3648
      %v3651 = vunpack.c.l.s4 1966171168
      %v3652 = vunpack.c.0.s8 %v3651
      %v3653 = vlaneseq
      %v3654 = vshrl.u32 %v3653, 7
      %v3655 = vsub.s32 %v3652, %v3654
      %v3656 = vrot.slane %v3634, %v3655
      %v3658 = vunpack.c.l.s4 1966171168
      %v3659 = vunpack.c.0.s8 %v3658
      %v3660 = vlaneseq
      %v3661 = vshrl.u32 %v3660, 7
      %v3662 = vsub.s32 %v3659, %v3661
      %v3663 = vrot.slane %v3635, %v3662
      %v3664 = vcombine.high %v3642, %v3642
      %v3665 = vcombine.high %v3649, %v3649
      %v3666 = vcombine.high %v3656, %v3656
      %v3667 = vcombine.high %v3663, %v3663
      %v3668 = vcombine.high %v2036, %v2036
      %v3670 = vunpack.c.l.s4 1966171168
      %v3671 = vunpack.c.0.s8 %v3670
      %v3672 = vlaneseq
      %v3673 = vshrl.u32 %v3672, 7
      %v3674 = vsub.s32 %v3671, %v3673
      %v3675 = vrot.slane %v2036, %v3674
      %v3677 = vunpack.c.l.s4 1966171168
      %v3678 = vunpack.c.0.s8 %v3677
      %v3679 = vlaneseq
      %v3680 = vshrl.u32 %v3679, 7
      %v3681 = vsub.s32 %v3678, %v3680
      %v3682 = vrot.slane %v3668, %v3681
      %v3683 = vcombine.high %v3675, %v3675
      %v3684 = vcombine.high %v3682, %v3682
      %v3686 = vunpack.c.l.s4 1966171168
      %v3687 = vunpack.c.0.s8 %v3686
      %v3688 = vlaneseq
      %v3689 = vshrl.u32 %v3688, 7
      %v3690 = vsub.s32 %v3687, %v3689
      %v3691 = vrot.slane %v3675, %v3690
      %v3693 = vunpack.c.l.s4 1966171168
      %v3694 = vunpack.c.0.s8 %v3693
      %v3695 = vlaneseq
      %v3696 = vshrl.u32 %v3695, 7
      %v3697 = vsub.s32 %v3694, %v3696
      %v3698 = vrot.slane %v3682, %v3697
      %v3700 = vunpack.c.l.s4 1966171168
      %v3701 = vunpack.c.0.s8 %v3700
      %v3702 = vlaneseq
      %v3703 = vshrl.u32 %v3702, 7
      %v3704 = vsub.s32 %v3701, %v3703
      %v3705 = vrot.slane %v3683, %v3704
      %v3707 = vunpack.c.l.s4 1966171168
      %v3708 = vunpack.c.0.s8 %v3707
      %v3709 = vlaneseq
      %v3710 = vshrl.u32 %v3709, 7
      %v3711 = vsub.s32 %v3708, %v3710
      %v3712 = vrot.slane %v3684, %v3711
      %v3713 = vcombine.high %v3691, %v3691
      %v3714 = vcombine.high %v3698, %v3698
      %v3715 = vcombine.high %v3705, %v3705
      %v3716 = vcombine.high %v3712, %v3712
      %v3717 = vcombine.high %v2037, %v2037
      %v3719 = vunpack.c.l.s4 1966171168
      %v3720 = vunpack.c.0.s8 %v3719
      %v3721 = vlaneseq
      %v3722 = vshrl.u32 %v3721, 7
      %v3723 = vsub.s32 %v3720, %v3722
      %v3724 = vrot.slane %v2037, %v3723
      %v3726 = vunpack.c.l.s4 1966171168
      %v3727 = vunpack.c.0.s8 %v3726
      %v3728 = vlaneseq
      %v3729 = vshrl.u32 %v3728, 7
      %v3730 = vsub.s32 %v3727, %v3729
      %v3731 = vrot.slane %v3717, %v3730
      %v3732 = vcombine.high %v3724, %v3724
      %v3733 = vcombine.high %v3731, %v3731
      %v3735 = vunpack.c.l.s4 1966171168
      %v3736 = vunpack.c.0.s8 %v3735
      %v3737 = vlaneseq
      %v3738 = vshrl.u32 %v3737, 7
      %v3739 = vsub.s32 %v3736, %v3738
      %v3740 = vrot.slane %v3724, %v3739
      %v3742 = vunpack.c.l.s4 1966171168
      %v3743 = vunpack.c.0.s8 %v3742
      %v3744 = vlaneseq
      %v3745 = vshrl.u32 %v3744, 7
      %v3746 = vsub.s32 %v3743, %v3745
      %v3747 = vrot.slane %v3731, %v3746
      %v3749 = vunpack.c.l.s4 1966171168
      %v3750 = vunpack.c.0.s8 %v3749
      %v3751 = vlaneseq
      %v3752 = vshrl.u32 %v3751, 7
      %v3753 = vsub.s32 %v3750, %v3752
      %v3754 = vrot.slane %v3732, %v3753
      %v3756 = vunpack.c.l.s4 1966171168
      %v3757 = vunpack.c.0.s8 %v3756
      %v3758 = vlaneseq
      %v3759 = vshrl.u32 %v3758, 7
      %v3760 = vsub.s32 %v3757, %v3759
      %v3761 = vrot.slane %v3733, %v3760
      %v3762 = vcombine.high %v3740, %v3740
      %v3763 = vcombine.high %v3747, %v3747
      %v3764 = vcombine.high %v3754, %v3754
      %v3765 = vcombine.high %v3761, %v3761
      %v3766 = vlaneseq
      %v3767 = vshrl.u32 %v3766, 7
      %v3768 = vsub.s32 0, %v3767
      %v3769 = vrot.slane %v3005, %v3768
      %v3770 = vlaneseq
      %v3771 = vshrl.u32 %v3770, 7
      %v3772 = vsub.s32 0, %v3771
      %v3773 = vrot.slane %v3019, %v3772
      %v3774 = vlaneseq
      %v3775 = vshrl.u32 %v3774, 7
      %v3776 = vsub.s32 0, %v3775
      %v3777 = vrot.slane %v3027, %v3776
      %v3778 = vlaneseq
      %v3779 = vshrl.u32 %v3778, 7
      %v3780 = vsub.s32 0, %v3779
      %v3781 = vrot.slane %v3029, %v3780
      %v3782 = vlaneseq
      %v3783 = vshrl.u32 %v3782, 7
      %v3784 = vsub.s32 0, %v3783
      %v3785 = vrot.slane %v3012, %v3784
      %v3786 = vlaneseq
      %v3787 = vshrl.u32 %v3786, 7
      %v3788 = vsub.s32 0, %v3787
      %v3789 = vrot.slane %v3026, %v3788
      %v3790 = vlaneseq
      %v3791 = vshrl.u32 %v3790, 7
      %v3792 = vsub.s32 0, %v3791
      %v3793 = vrot.slane %v3028, %v3792
      %v3794 = vlaneseq
      %v3795 = vshrl.u32 %v3794, 7
      %v3796 = vsub.s32 0, %v3795
      %v3797 = vrot.slane %v3030, %v3796
      %v3798 = vlaneseq
      %v3799 = vshrl.u32 %v3798, 7
      %v3800 = vsub.s32 0, %v3799
      %v3801 = vrot.slane %v3054, %v3800
      %v3802 = vlaneseq
      %v3803 = vshrl.u32 %v3802, 7
      %v3804 = vsub.s32 0, %v3803
      %v3805 = vrot.slane %v3068, %v3804
      %v3806 = vlaneseq
      %v3807 = vshrl.u32 %v3806, 7
      %v3808 = vsub.s32 0, %v3807
      %v3809 = vrot.slane %v3076, %v3808
      %v3810 = vlaneseq
      %v3811 = vshrl.u32 %v3810, 7
      %v3812 = vsub.s32 0, %v3811
      %v3813 = vrot.slane %v3078, %v3812
      %v3814 = vlaneseq
      %v3815 = vshrl.u32 %v3814, 7
      %v3816 = vsub.s32 0, %v3815
      %v3817 = vrot.slane %v3061, %v3816
      %v3818 = vlaneseq
      %v3819 = vshrl.u32 %v3818, 7
      %v3820 = vsub.s32 0, %v3819
      %v3821 = vrot.slane %v3075, %v3820
      %v3822 = vlaneseq
      %v3823 = vshrl.u32 %v3822, 7
      %v3824 = vsub.s32 0, %v3823
      %v3825 = vrot.slane %v3077, %v3824
      %v3826 = vlaneseq
      %v3827 = vshrl.u32 %v3826, 7
      %v3828 = vsub.s32 0, %v3827
      %v3829 = vrot.slane %v3079, %v3828
      %v3830 = vlaneseq
      %v3831 = vshrl.u32 %v3830, 7
      %v3832 = vsub.s32 0, %v3831
      %v3833 = vrot.slane %v3103, %v3832
      %v3834 = vlaneseq
      %v3835 = vshrl.u32 %v3834, 7
      %v3836 = vsub.s32 0, %v3835
      %v3837 = vrot.slane %v3117, %v3836
      %v3838 = vlaneseq
      %v3839 = vshrl.u32 %v3838, 7
      %v3840 = vsub.s32 0, %v3839
      %v3841 = vrot.slane %v3125, %v3840
      %v3842 = vlaneseq
      %v3843 = vshrl.u32 %v3842, 7
      %v3844 = vsub.s32 0, %v3843
      %v3845 = vrot.slane %v3127, %v3844
      %v3846 = vlaneseq
      %v3847 = vshrl.u32 %v3846, 7
      %v3848 = vsub.s32 0, %v3847
      %v3849 = vrot.slane %v3110, %v3848
      %v3850 = vlaneseq
      %v3851 = vshrl.u32 %v3850, 7
      %v3852 = vsub.s32 0, %v3851
      %v3853 = vrot.slane %v3124, %v3852
      %v3854 = vlaneseq
      %v3855 = vshrl.u32 %v3854, 7
      %v3856 = vsub.s32 0, %v3855
      %v3857 = vrot.slane %v3126, %v3856
      %v3858 = vlaneseq
      %v3859 = vshrl.u32 %v3858, 7
      %v3860 = vsub.s32 0, %v3859
      %v3861 = vrot.slane %v3128, %v3860
      %v3862 = vlaneseq
      %v3863 = vshrl.u32 %v3862, 7
      %v3864 = vsub.s32 0, %v3863
      %v3865 = vrot.slane %v3152, %v3864
      %v3866 = vlaneseq
      %v3867 = vshrl.u32 %v3866, 7
      %v3868 = vsub.s32 0, %v3867
      %v3869 = vrot.slane %v3166, %v3868
      %v3870 = vlaneseq
      %v3871 = vshrl.u32 %v3870, 7
      %v3872 = vsub.s32 0, %v3871
      %v3873 = vrot.slane %v3174, %v3872
      %v3874 = vlaneseq
      %v3875 = vshrl.u32 %v3874, 7
      %v3876 = vsub.s32 0, %v3875
      %v3877 = vrot.slane %v3176, %v3876
      %v3878 = vlaneseq
      %v3879 = vshrl.u32 %v3878, 7
      %v3880 = vsub.s32 0, %v3879
      %v3881 = vrot.slane %v3159, %v3880
      %v3882 = vlaneseq
      %v3883 = vshrl.u32 %v3882, 7
      %v3884 = vsub.s32 0, %v3883
      %v3885 = vrot.slane %v3173, %v3884
      %v3886 = vlaneseq
      %v3887 = vshrl.u32 %v3886, 7
      %v3888 = vsub.s32 0, %v3887
      %v3889 = vrot.slane %v3175, %v3888
      %v3890 = vlaneseq
      %v3891 = vshrl.u32 %v3890, 7
      %v3892 = vsub.s32 0, %v3891
      %v3893 = vrot.slane %v3177, %v3892
      %v3894 = vlaneseq
      %v3895 = vshrl.u32 %v3894, 7
      %v3896 = vsub.s32 0, %v3895
      %v3897 = vrot.slane %v3201, %v3896
      %v3898 = vlaneseq
      %v3899 = vshrl.u32 %v3898, 7
      %v3900 = vsub.s32 0, %v3899
      %v3901 = vrot.slane %v3215, %v3900
      %v3902 = vlaneseq
      %v3903 = vshrl.u32 %v3902, 7
      %v3904 = vsub.s32 0, %v3903
      %v3905 = vrot.slane %v3223, %v3904
      %v3906 = vlaneseq
      %v3907 = vshrl.u32 %v3906, 7
      %v3908 = vsub.s32 0, %v3907
      %v3909 = vrot.slane %v3225, %v3908
      %v3910 = vlaneseq
      %v3911 = vshrl.u32 %v3910, 7
      %v3912 = vsub.s32 0, %v3911
      %v3913 = vrot.slane %v3208, %v3912
      %v3914 = vlaneseq
      %v3915 = vshrl.u32 %v3914, 7
      %v3916 = vsub.s32 0, %v3915
      %v3917 = vrot.slane %v3222, %v3916
      %v3918 = vlaneseq
      %v3919 = vshrl.u32 %v3918, 7
      %v3920 = vsub.s32 0, %v3919
      %v3921 = vrot.slane %v3224, %v3920
      %v3922 = vlaneseq
      %v3923 = vshrl.u32 %v3922, 7
      %v3924 = vsub.s32 0, %v3923
      %v3925 = vrot.slane %v3226, %v3924
      %v3926 = vlaneseq
      %v3927 = vshrl.u32 %v3926, 7
      %v3928 = vsub.s32 0, %v3927
      %v3929 = vrot.slane %v3250, %v3928
      %v3930 = vlaneseq
      %v3931 = vshrl.u32 %v3930, 7
      %v3932 = vsub.s32 0, %v3931
      %v3933 = vrot.slane %v3264, %v3932
      %v3934 = vlaneseq
      %v3935 = vshrl.u32 %v3934, 7
      %v3936 = vsub.s32 0, %v3935
      %v3937 = vrot.slane %v3272, %v3936
      %v3938 = vlaneseq
      %v3939 = vshrl.u32 %v3938, 7
      %v3940 = vsub.s32 0, %v3939
      %v3941 = vrot.slane %v3274, %v3940
      %v3942 = vlaneseq
      %v3943 = vshrl.u32 %v3942, 7
      %v3944 = vsub.s32 0, %v3943
      %v3945 = vrot.slane %v3257, %v3944
      %v3946 = vlaneseq
      %v3947 = vshrl.u32 %v3946, 7
      %v3948 = vsub.s32 0, %v3947
      %v3949 = vrot.slane %v3271, %v3948
      %v3950 = vlaneseq
      %v3951 = vshrl.u32 %v3950, 7
      %v3952 = vsub.s32 0, %v3951
      %v3953 = vrot.slane %v3273, %v3952
      %v3954 = vlaneseq
      %v3955 = vshrl.u32 %v3954, 7
      %v3956 = vsub.s32 0, %v3955
      %v3957 = vrot.slane %v3275, %v3956
      %v3958 = vlaneseq
      %v3959 = vshrl.u32 %v3958, 7
      %v3960 = vsub.s32 0, %v3959
      %v3961 = vrot.slane %v3299, %v3960
      %v3962 = vlaneseq
      %v3963 = vshrl.u32 %v3962, 7
      %v3964 = vsub.s32 0, %v3963
      %v3965 = vrot.slane %v3313, %v3964
      %v3966 = vlaneseq
      %v3967 = vshrl.u32 %v3966, 7
      %v3968 = vsub.s32 0, %v3967
      %v3969 = vrot.slane %v3321, %v3968
      %v3970 = vlaneseq
      %v3971 = vshrl.u32 %v3970, 7
      %v3972 = vsub.s32 0, %v3971
      %v3973 = vrot.slane %v3323, %v3972
      %v3974 = vlaneseq
      %v3975 = vshrl.u32 %v3974, 7
      %v3976 = vsub.s32 0, %v3975
      %v3977 = vrot.slane %v3306, %v3976
      %v3978 = vlaneseq
      %v3979 = vshrl.u32 %v3978, 7
      %v3980 = vsub.s32 0, %v3979
      %v3981 = vrot.slane %v3320, %v3980
      %v3982 = vlaneseq
      %v3983 = vshrl.u32 %v3982, 7
      %v3984 = vsub.s32 0, %v3983
      %v3985 = vrot.slane %v3322, %v3984
      %v3986 = vlaneseq
      %v3987 = vshrl.u32 %v3986, 7
      %v3988 = vsub.s32 0, %v3987
      %v3989 = vrot.slane %v3324, %v3988
      %v3990 = vlaneseq
      %v3991 = vshrl.u32 %v3990, 7
      %v3992 = vsub.s32 0, %v3991
      %v3993 = vrot.slane %v3348, %v3992
      %v3994 = vlaneseq
      %v3995 = vshrl.u32 %v3994, 7
      %v3996 = vsub.s32 0, %v3995
      %v3997 = vrot.slane %v3362, %v3996
      %v3998 = vlaneseq
      %v3999 = vshrl.u32 %v3998, 7
      %v4000 = vsub.s32 0, %v3999
      %v4001 = vrot.slane %v3370, %v4000
      %v4002 = vlaneseq
      %v4003 = vshrl.u32 %v4002, 7
      %v4004 = vsub.s32 0, %v4003
      %v4005 = vrot.slane %v3372, %v4004
      %v4006 = vlaneseq
      %v4007 = vshrl.u32 %v4006, 7
      %v4008 = vsub.s32 0, %v4007
      %v4009 = vrot.slane %v3355, %v4008
      %v4010 = vlaneseq
      %v4011 = vshrl.u32 %v4010, 7
      %v4012 = vsub.s32 0, %v4011
      %v4013 = vrot.slane %v3369, %v4012
      %v4014 = vlaneseq
      %v4015 = vshrl.u32 %v4014, 7
      %v4016 = vsub.s32 0, %v4015
      %v4017 = vrot.slane %v3371, %v4016
      %v4018 = vlaneseq
      %v4019 = vshrl.u32 %v4018, 7
      %v4020 = vsub.s32 0, %v4019
      %v4021 = vrot.slane %v3373, %v4020
      %v4022 = vlaneseq
      %v4023 = vshrl.u32 %v4022, 7
      %v4024 = vsub.s32 0, %v4023
      %v4025 = vrot.slane %v3397, %v4024
      %v4026 = vlaneseq
      %v4027 = vshrl.u32 %v4026, 7
      %v4028 = vsub.s32 0, %v4027
      %v4029 = vrot.slane %v3411, %v4028
      %v4030 = vlaneseq
      %v4031 = vshrl.u32 %v4030, 7
      %v4032 = vsub.s32 0, %v4031
      %v4033 = vrot.slane %v3419, %v4032
      %v4034 = vlaneseq
      %v4035 = vshrl.u32 %v4034, 7
      %v4036 = vsub.s32 0, %v4035
      %v4037 = vrot.slane %v3421, %v4036
      %v4038 = vlaneseq
      %v4039 = vshrl.u32 %v4038, 7
      %v4040 = vsub.s32 0, %v4039
      %v4041 = vrot.slane %v3404, %v4040
      %v4042 = vlaneseq
      %v4043 = vshrl.u32 %v4042, 7
      %v4044 = vsub.s32 0, %v4043
      %v4045 = vrot.slane %v3418, %v4044
      %v4046 = vlaneseq
      %v4047 = vshrl.u32 %v4046, 7
      %v4048 = vsub.s32 0, %v4047
      %v4049 = vrot.slane %v3420, %v4048
      %v4050 = vlaneseq
      %v4051 = vshrl.u32 %v4050, 7
      %v4052 = vsub.s32 0, %v4051
      %v4053 = vrot.slane %v3422, %v4052
      %v4054 = vlaneseq
      %v4055 = vshrl.u32 %v4054, 7
      %v4056 = vsub.s32 0, %v4055
      %v4057 = vrot.slane %v3446, %v4056
      %v4058 = vlaneseq
      %v4059 = vshrl.u32 %v4058, 7
      %v4060 = vsub.s32 0, %v4059
      %v4061 = vrot.slane %v3460, %v4060
      %v4062 = vlaneseq
      %v4063 = vshrl.u32 %v4062, 7
      %v4064 = vsub.s32 0, %v4063
      %v4065 = vrot.slane %v3468, %v4064
      %v4066 = vlaneseq
      %v4067 = vshrl.u32 %v4066, 7
      %v4068 = vsub.s32 0, %v4067
      %v4069 = vrot.slane %v3470, %v4068
      %v4070 = vlaneseq
      %v4071 = vshrl.u32 %v4070, 7
      %v4072 = vsub.s32 0, %v4071
      %v4073 = vrot.slane %v3453, %v4072
      %v4074 = vlaneseq
      %v4075 = vshrl.u32 %v4074, 7
      %v4076 = vsub.s32 0, %v4075
      %v4077 = vrot.slane %v3467, %v4076
      %v4078 = vlaneseq
      %v4079 = vshrl.u32 %v4078, 7
      %v4080 = vsub.s32 0, %v4079
      %v4081 = vrot.slane %v3469, %v4080
      %v4082 = vlaneseq
      %v4083 = vshrl.u32 %v4082, 7
      %v4084 = vsub.s32 0, %v4083
      %v4085 = vrot.slane %v3471, %v4084
      %v4086 = vlaneseq
      %v4087 = vshrl.u32 %v4086, 7
      %v4088 = vsub.s32 0, %v4087
      %v4089 = vrot.slane %v3495, %v4088
      %v4090 = vlaneseq
      %v4091 = vshrl.u32 %v4090, 7
      %v4092 = vsub.s32 0, %v4091
      %v4093 = vrot.slane %v3509, %v4092
      %v4094 = vlaneseq
      %v4095 = vshrl.u32 %v4094, 7
      %v4096 = vsub.s32 0, %v4095
      %v4097 = vrot.slane %v3517, %v4096
      %v4098 = vlaneseq
      %v4099 = vshrl.u32 %v4098, 7
      %v4100 = vsub.s32 0, %v4099
      %v4101 = vrot.slane %v3519, %v4100
      %v4102 = vlaneseq
      %v4103 = vshrl.u32 %v4102, 7
      %v4104 = vsub.s32 0, %v4103
      %v4105 = vrot.slane %v3502, %v4104
      %v4106 = vlaneseq
      %v4107 = vshrl.u32 %v4106, 7
      %v4108 = vsub.s32 0, %v4107
      %v4109 = vrot.slane %v3516, %v4108
      %v4110 = vlaneseq
      %v4111 = vshrl.u32 %v4110, 7
      %v4112 = vsub.s32 0, %v4111
      %v4113 = vrot.slane %v3518, %v4112
      %v4114 = vlaneseq
      %v4115 = vshrl.u32 %v4114, 7
      %v4116 = vsub.s32 0, %v4115
      %v4117 = vrot.slane %v3520, %v4116
      %v4118 = vlaneseq
      %v4119 = vshrl.u32 %v4118, 7
      %v4120 = vsub.s32 0, %v4119
      %v4121 = vrot.slane %v3544, %v4120
      %v4122 = vlaneseq
      %v4123 = vshrl.u32 %v4122, 7
      %v4124 = vsub.s32 0, %v4123
      %v4125 = vrot.slane %v3558, %v4124
      %v4126 = vlaneseq
      %v4127 = vshrl.u32 %v4126, 7
      %v4128 = vsub.s32 0, %v4127
      %v4129 = vrot.slane %v3566, %v4128
      %v4130 = vlaneseq
      %v4131 = vshrl.u32 %v4130, 7
      %v4132 = vsub.s32 0, %v4131
      %v4133 = vrot.slane %v3568, %v4132
      %v4134 = vlaneseq
      %v4135 = vshrl.u32 %v4134, 7
      %v4136 = vsub.s32 0, %v4135
      %v4137 = vrot.slane %v3551, %v4136
      %v4138 = vlaneseq
      %v4139 = vshrl.u32 %v4138, 7
      %v4140 = vsub.s32 0, %v4139
      %v4141 = vrot.slane %v3565, %v4140
      %v4142 = vlaneseq
      %v4143 = vshrl.u32 %v4142, 7
      %v4144 = vsub.s32 0, %v4143
      %v4145 = vrot.slane %v3567, %v4144
      %v4146 = vlaneseq
      %v4147 = vshrl.u32 %v4146, 7
      %v4148 = vsub.s32 0, %v4147
      %v4149 = vrot.slane %v3569, %v4148
      %v4150 = vlaneseq
      %v4151 = vshrl.u32 %v4150, 7
      %v4152 = vsub.s32 0, %v4151
      %v4153 = vrot.slane %v3593, %v4152
      %v4154 = vlaneseq
      %v4155 = vshrl.u32 %v4154, 7
      %v4156 = vsub.s32 0, %v4155
      %v4157 = vrot.slane %v3607, %v4156
      %v4158 = vlaneseq
      %v4159 = vshrl.u32 %v4158, 7
      %v4160 = vsub.s32 0, %v4159
      %v4161 = vrot.slane %v3615, %v4160
      %v4162 = vlaneseq
      %v4163 = vshrl.u32 %v4162, 7
      %v4164 = vsub.s32 0, %v4163
      %v4165 = vrot.slane %v3617, %v4164
      %v4166 = vlaneseq
      %v4167 = vshrl.u32 %v4166, 7
      %v4168 = vsub.s32 0, %v4167
      %v4169 = vrot.slane %v3600, %v4168
      %v4170 = vlaneseq
      %v4171 = vshrl.u32 %v4170, 7
      %v4172 = vsub.s32 0, %v4171
      %v4173 = vrot.slane %v3614, %v4172
      %v4174 = vlaneseq
      %v4175 = vshrl.u32 %v4174, 7
      %v4176 = vsub.s32 0, %v4175
      %v4177 = vrot.slane %v3616, %v4176
      %v4178 = vlaneseq
      %v4179 = vshrl.u32 %v4178, 7
      %v4180 = vsub.s32 0, %v4179
      %v4181 = vrot.slane %v3618, %v4180
      %v4182 = vlaneseq
      %v4183 = vshrl.u32 %v4182, 7
      %v4184 = vsub.s32 0, %v4183
      %v4185 = vrot.slane %v3642, %v4184
      %v4186 = vlaneseq
      %v4187 = vshrl.u32 %v4186, 7
      %v4188 = vsub.s32 0, %v4187
      %v4189 = vrot.slane %v3656, %v4188
      %v4190 = vlaneseq
      %v4191 = vshrl.u32 %v4190, 7
      %v4192 = vsub.s32 0, %v4191
      %v4193 = vrot.slane %v3664, %v4192
      %v4194 = vlaneseq
      %v4195 = vshrl.u32 %v4194, 7
      %v4196 = vsub.s32 0, %v4195
      %v4197 = vrot.slane %v3666, %v4196
      %v4198 = vlaneseq
      %v4199 = vshrl.u32 %v4198, 7
      %v4200 = vsub.s32 0, %v4199
      %v4201 = vrot.slane %v3649, %v4200
      %v4202 = vlaneseq
      %v4203 = vshrl.u32 %v4202, 7
      %v4204 = vsub.s32 0, %v4203
      %v4205 = vrot.slane %v3663, %v4204
      %v4206 = vlaneseq
      %v4207 = vshrl.u32 %v4206, 7
      %v4208 = vsub.s32 0, %v4207
      %v4209 = vrot.slane %v3665, %v4208
      %v4210 = vlaneseq
      %v4211 = vshrl.u32 %v4210, 7
      %v4212 = vsub.s32 0, %v4211
      %v4213 = vrot.slane %v3667, %v4212
      %v4214 = vlaneseq
      %v4215 = vshrl.u32 %v4214, 7
      %v4216 = vsub.s32 0, %v4215
      %v4217 = vrot.slane %v3691, %v4216
      %v4218 = vlaneseq
      %v4219 = vshrl.u32 %v4218, 7
      %v4220 = vsub.s32 0, %v4219
      %v4221 = vrot.slane %v3705, %v4220
      %v4222 = vlaneseq
      %v4223 = vshrl.u32 %v4222, 7
      %v4224 = vsub.s32 0, %v4223
      %v4225 = vrot.slane %v3713, %v4224
      %v4226 = vlaneseq
      %v4227 = vshrl.u32 %v4226, 7
      %v4228 = vsub.s32 0, %v4227
      %v4229 = vrot.slane %v3715, %v4228
      %v4230 = vlaneseq
      %v4231 = vshrl.u32 %v4230, 7
      %v4232 = vsub.s32 0, %v4231
      %v4233 = vrot.slane %v3698, %v4232
      %v4234 = vlaneseq
      %v4235 = vshrl.u32 %v4234, 7
      %v4236 = vsub.s32 0, %v4235
      %v4237 = vrot.slane %v3712, %v4236
      %v4238 = vlaneseq
      %v4239 = vshrl.u32 %v4238, 7
      %v4240 = vsub.s32 0, %v4239
      %v4241 = vrot.slane %v3714, %v4240
      %v4242 = vlaneseq
      %v4243 = vshrl.u32 %v4242, 7
      %v4244 = vsub.s32 0, %v4243
      %v4245 = vrot.slane %v3716, %v4244
      %v4246 = vlaneseq
      %v4247 = vshrl.u32 %v4246, 7
      %v4248 = vsub.s32 0, %v4247
      %v4249 = vrot.slane %v3740, %v4248
      %v4250 = vlaneseq
      %v4251 = vshrl.u32 %v4250, 7
      %v4252 = vsub.s32 0, %v4251
      %v4253 = vrot.slane %v3754, %v4252
      %v4254 = vlaneseq
      %v4255 = vshrl.u32 %v4254, 7
      %v4256 = vsub.s32 0, %v4255
      %v4257 = vrot.slane %v3762, %v4256
      %v4258 = vlaneseq
      %v4259 = vshrl.u32 %v4258, 7
      %v4260 = vsub.s32 0, %v4259
      %v4261 = vrot.slane %v3764, %v4260
      %v4262 = vlaneseq
      %v4263 = vshrl.u32 %v4262, 7
      %v4264 = vsub.s32 0, %v4263
      %v4265 = vrot.slane %v3747, %v4264
      %v4266 = vlaneseq
      %v4267 = vshrl.u32 %v4266, 7
      %v4268 = vsub.s32 0, %v4267
      %v4269 = vrot.slane %v3761, %v4268
      %v4270 = vlaneseq
      %v4271 = vshrl.u32 %v4270, 7
      %v4272 = vsub.s32 0, %v4271
      %v4273 = vrot.slane %v3763, %v4272
      %v4274 = vlaneseq
      %v4275 = vshrl.u32 %v4274, 7
      %v4276 = vsub.s32 0, %v4275
      %v4277 = vrot.slane %v3765, %v4276
      %v4406 = vsel %vm445, %v2077, %v3769
      %v4407 = vsel %vm445, %v2091, %v3773
      %v4408 = vsel %vm445, %v2099, %v3777
      %v4409 = vsel %vm445, %v2101, %v3781
      %v4410 = vsel %vm445, %v2084, %v3785
      %v4411 = vsel %vm445, %v2098, %v3789
      %v4412 = vsel %vm445, %v2100, %v3793
      %v4413 = vsel %vm445, %v2102, %v3797
      %v4414 = vsel %vm445, %v2126, %v3801
      %v4415 = vsel %vm445, %v2140, %v3805
      %v4416 = vsel %vm445, %v2148, %v3809
      %v4417 = vsel %vm445, %v2150, %v3813
      %v4418 = vsel %vm445, %v2133, %v3817
      %v4419 = vsel %vm445, %v2147, %v3821
      %v4420 = vsel %vm445, %v2149, %v3825
      %v4421 = vsel %vm445, %v2151, %v3829
      %v4422 = vsel %vm445, %v2175, %v3833
      %v4423 = vsel %vm445, %v2189, %v3837
      %v4424 = vsel %vm445, %v2197, %v3841
      %v4425 = vsel %vm445, %v2199, %v3845
      %v4426 = vsel %vm445, %v2182, %v3849
      %v4427 = vsel %vm445, %v2196, %v3853
      %v4428 = vsel %vm445, %v2198, %v3857
      %v4429 = vsel %vm445, %v2200, %v3861
      %v4430 = vsel %vm445, %v2224, %v3865
      %v4431 = vsel %vm445, %v2238, %v3869
      %v4432 = vsel %vm445, %v2246, %v3873
      %v4433 = vsel %vm445, %v2248, %v3877
      %v4434 = vsel %vm445, %v2231, %v3881
      %v4435 = vsel %vm445, %v2245, %v3885
      %v4436 = vsel %vm445, %v2247, %v3889
      %v4437 = vsel %vm445, %v2249, %v3893
      %v4438 = vsel %vm445, %v2273, %v3897
      %v4439 = vsel %vm445, %v2287, %v3901
      %v4440 = vsel %vm445, %v2295, %v3905
      %v4441 = vsel %vm445, %v2297, %v3909
      %v4442 = vsel %vm445, %v2280, %v3913
      %v4443 = vsel %vm445, %v2294, %v3917
      %v4444 = vsel %vm445, %v2296, %v3921
      %v4445 = vsel %vm445, %v2298, %v3925
      %v4446 = vsel %vm445, %v2322, %v3929
      %v4447 = vsel %vm445, %v2336, %v3933
      %v4448 = vsel %vm445, %v2344, %v3937
      %v4449 = vsel %vm445, %v2346, %v3941
      %v4450 = vsel %vm445, %v2329, %v3945
      %v4451 = vsel %vm445, %v2343, %v3949
      %v4452 = vsel %vm445, %v2345, %v3953
      %v4453 = vsel %vm445, %v2347, %v3957
      %v4454 = vsel %vm445, %v2371, %v3961
      %v4455 = vsel %vm445, %v2385, %v3965
      %v4456 = vsel %vm445, %v2393, %v3969
      %v4457 = vsel %vm445, %v2395, %v3973
      %v4458 = vsel %vm445, %v2378, %v3977
      %v4459 = vsel %vm445, %v2392, %v3981
      %v4460 = vsel %vm445, %v2394, %v3985
      %v4461 = vsel %vm445, %v2396, %v3989
      %v4462 = vsel %vm445, %v2420, %v3993
      %v4463 = vsel %vm445, %v2434, %v3997
      %v4464 = vsel %vm445, %v2442, %v4001
      %v4465 = vsel %vm445, %v2444, %v4005
      %v4466 = vsel %vm445, %v2427, %v4009
      %v4467 = vsel %vm445, %v2441, %v4013
      %v4468 = vsel %vm445, %v2443, %v4017
      %v4469 = vsel %vm445, %v2445, %v4021
      %v4470 = vsel %vm445, %v2469, %v4025
      %v4471 = vsel %vm445, %v2483, %v4029
      %v4472 = vsel %vm445, %v2491, %v4033
      %v4473 = vsel %vm445, %v2493, %v4037
      %v4474 = vsel %vm445, %v2476, %v4041
      %v4475 = vsel %vm445, %v2490, %v4045
      %v4476 = vsel %vm445, %v2492, %v4049
      %v4477 = vsel %vm445, %v2494, %v4053
      %v4478 = vsel %vm445, %v2518, %v4057
      %v4479 = vsel %vm445, %v2532, %v4061
      %v4480 = vsel %vm445, %v2540, %v4065
      %v4481 = vsel %vm445, %v2542, %v4069
      %v4482 = vsel %vm445, %v2525, %v4073
      %v4483 = vsel %vm445, %v2539, %v4077
      %v4484 = vsel %vm445, %v2541, %v4081
      %v4485 = vsel %vm445, %v2543, %v4085
      %v4486 = vsel %vm445, %v2567, %v4089
      %v4487 = vsel %vm445, %v2581, %v4093
      %v4488 = vsel %vm445, %v2589, %v4097
      %v4489 = vsel %vm445, %v2591, %v4101
      %v4490 = vsel %vm445, %v2574, %v4105
      %v4491 = vsel %vm445, %v2588, %v4109
      %v4492 = vsel %vm445, %v2590, %v4113
      %v4493 = vsel %vm445, %v2592, %v4117
      %v4494 = vsel %vm445, %v2616, %v4121
      %v4495 = vsel %vm445, %v2630, %v4125
      %v4496 = vsel %vm445, %v2638, %v4129
      %v4497 = vsel %vm445, %v2640, %v4133
      %v4498 = vsel %vm445, %v2623, %v4137
      %v4499 = vsel %vm445, %v2637, %v4141
      %v4500 = vsel %vm445, %v2639, %v4145
      %v4501 = vsel %vm445, %v2641, %v4149
      %v4502 = vsel %vm445, %v2665, %v4153
      %v4503 = vsel %vm445, %v2679, %v4157
      %v4504 = vsel %vm445, %v2687, %v4161
      %v4505 = vsel %vm445, %v2689, %v4165
      %v4506 = vsel %vm445, %v2672, %v4169
      %v4507 = vsel %vm445, %v2686, %v4173
      %v4508 = vsel %vm445, %v2688, %v4177
      %v4509 = vsel %vm445, %v2690, %v4181
      %v4510 = vsel %vm445, %v2714, %v4185
      %v4511 = vsel %vm445, %v2728, %v4189
      %v4512 = vsel %vm445, %v2736, %v4193
      %v4513 = vsel %vm445, %v2738, %v4197
      %v4514 = vsel %vm445, %v2721, %v4201
      %v4515 = vsel %vm445, %v2735, %v4205
      %v4516 = vsel %vm445, %v2737, %v4209
      %v4517 = vsel %vm445, %v2739, %v4213
      %v4518 = vsel %vm445, %v2763, %v4217
      %v4519 = vsel %vm445, %v2777, %v4221
      %v4520 = vsel %vm445, %v2785, %v4225
      %v4521 = vsel %vm445, %v2787, %v4229
      %v4522 = vsel %vm445, %v2770, %v4233
      %v4523 = vsel %vm445, %v2784, %v4237
      %v4524 = vsel %vm445, %v2786, %v4241
      %v4525 = vsel %vm445, %v2788, %v4245
      %v4526 = vsel %vm445, %v2812, %v4249
      %v4527 = vsel %vm445, %v2826, %v4253
      %v4528 = vsel %vm445, %v2834, %v4257
      %v4529 = vsel %vm445, %v2836, %v4261
      %v4530 = vsel %vm445, %v2819, %v4265
      %v4531 = vsel %vm445, %v2833, %v4269
      %v4532 = vsel %vm445, %v2835, %v4273
      %v4533 = vsel %vm445, %v2837, %v4277
      %v4662 = vcombine.low %v4406, %v4407
      %v4663 = vcombine.low %v4408, %v4409
      %v4665 = vunpack.c.l.s4 1983009808
      %v4666 = vunpack.c.0.s8 %v4665
      %v4667 = vlaneseq
      %v4668 = vshrl.u32 %v4667, 7
      %v4669 = vsub.s32 %v4666, %v4668
      %v4670 = vrot.slane %v4662, %v4669
      %v4672 = vunpack.c.l.s4 1983009808
      %v4673 = vunpack.c.0.s8 %v4672
      %v4674 = vlaneseq
      %v4675 = vshrl.u32 %v4674, 7
      %v4676 = vsub.s32 %v4673, %v4675
      %v4677 = vrot.slane %v4663, %v4676
      %v4678 = vcombine.low %v4670, %v4677
      %v4679 = vcombine.low %v4410, %v4411
      %v4680 = vcombine.low %v4412, %v4413
      %v4682 = vunpack.c.l.s4 1983009808
      %v4683 = vunpack.c.0.s8 %v4682
      %v4684 = vlaneseq
      %v4685 = vshrl.u32 %v4684, 7
      %v4686 = vsub.s32 %v4683, %v4685
      %v4687 = vrot.slane %v4679, %v4686
      %v4689 = vunpack.c.l.s4 1983009808
      %v4690 = vunpack.c.0.s8 %v4689
      %v4691 = vlaneseq
      %v4692 = vshrl.u32 %v4691, 7
      %v4693 = vsub.s32 %v4690, %v4692
      %v4694 = vrot.slane %v4680, %v4693
      %v4695 = vcombine.low %v4687, %v4694
      %v4696 = vcombine.low %v4414, %v4415
      %v4697 = vcombine.low %v4416, %v4417
      %v4699 = vunpack.c.l.s4 1983009808
      %v4700 = vunpack.c.0.s8 %v4699
      %v4701 = vlaneseq
      %v4702 = vshrl.u32 %v4701, 7
      %v4703 = vsub.s32 %v4700, %v4702
      %v4704 = vrot.slane %v4696, %v4703
      %v4706 = vunpack.c.l.s4 1983009808
      %v4707 = vunpack.c.0.s8 %v4706
      %v4708 = vlaneseq
      %v4709 = vshrl.u32 %v4708, 7
      %v4710 = vsub.s32 %v4707, %v4709
      %v4711 = vrot.slane %v4697, %v4710
      %v4712 = vcombine.low %v4704, %v4711
      %v4713 = vcombine.low %v4418, %v4419
      %v4714 = vcombine.low %v4420, %v4421
      %v4716 = vunpack.c.l.s4 1983009808
      %v4717 = vunpack.c.0.s8 %v4716
      %v4718 = vlaneseq
      %v4719 = vshrl.u32 %v4718, 7
      %v4720 = vsub.s32 %v4717, %v4719
      %v4721 = vrot.slane %v4713, %v4720
      %v4723 = vunpack.c.l.s4 1983009808
      %v4724 = vunpack.c.0.s8 %v4723
      %v4725 = vlaneseq
      %v4726 = vshrl.u32 %v4725, 7
      %v4727 = vsub.s32 %v4724, %v4726
      %v4728 = vrot.slane %v4714, %v4727
      %v4729 = vcombine.low %v4721, %v4728
      %v4730 = vcombine.low %v4422, %v4423
      %v4731 = vcombine.low %v4424, %v4425
      %v4733 = vunpack.c.l.s4 1983009808
      %v4734 = vunpack.c.0.s8 %v4733
      %v4735 = vlaneseq
      %v4736 = vshrl.u32 %v4735, 7
      %v4737 = vsub.s32 %v4734, %v4736
      %v4738 = vrot.slane %v4730, %v4737
      %v4740 = vunpack.c.l.s4 1983009808
      %v4741 = vunpack.c.0.s8 %v4740
      %v4742 = vlaneseq
      %v4743 = vshrl.u32 %v4742, 7
      %v4744 = vsub.s32 %v4741, %v4743
      %v4745 = vrot.slane %v4731, %v4744
      %v4746 = vcombine.low %v4738, %v4745
      %v4747 = vcombine.low %v4426, %v4427
      %v4748 = vcombine.low %v4428, %v4429
      %v4750 = vunpack.c.l.s4 1983009808
      %v4751 = vunpack.c.0.s8 %v4750
      %v4752 = vlaneseq
      %v4753 = vshrl.u32 %v4752, 7
      %v4754 = vsub.s32 %v4751, %v4753
      %v4755 = vrot.slane %v4747, %v4754
      %v4757 = vunpack.c.l.s4 1983009808
      %v4758 = vunpack.c.0.s8 %v4757
      %v4759 = vlaneseq
      %v4760 = vshrl.u32 %v4759, 7
      %v4761 = vsub.s32 %v4758, %v4760
      %v4762 = vrot.slane %v4748, %v4761
      %v4763 = vcombine.low %v4755, %v4762
      %v4764 = vcombine.low %v4430, %v4431
      %v4765 = vcombine.low %v4432, %v4433
      %v4767 = vunpack.c.l.s4 1983009808
      %v4768 = vunpack.c.0.s8 %v4767
      %v4769 = vlaneseq
      %v4770 = vshrl.u32 %v4769, 7
      %v4771 = vsub.s32 %v4768, %v4770
      %v4772 = vrot.slane %v4764, %v4771
      %v4774 = vunpack.c.l.s4 1983009808
      %v4775 = vunpack.c.0.s8 %v4774
      %v4776 = vlaneseq
      %v4777 = vshrl.u32 %v4776, 7
      %v4778 = vsub.s32 %v4775, %v4777
      %v4779 = vrot.slane %v4765, %v4778
      %v4780 = vcombine.low %v4772, %v4779
      %v4781 = vcombine.low %v4434, %v4435
      %v4782 = vcombine.low %v4436, %v4437
      %v4784 = vunpack.c.l.s4 1983009808
      %v4785 = vunpack.c.0.s8 %v4784
      %v4786 = vlaneseq
      %v4787 = vshrl.u32 %v4786, 7
      %v4788 = vsub.s32 %v4785, %v4787
      %v4789 = vrot.slane %v4781, %v4788
      %v4791 = vunpack.c.l.s4 1983009808
      %v4792 = vunpack.c.0.s8 %v4791
      %v4793 = vlaneseq
      %v4794 = vshrl.u32 %v4793, 7
      %v4795 = vsub.s32 %v4792, %v4794
      %v4796 = vrot.slane %v4782, %v4795
      %v4797 = vcombine.low %v4789, %v4796
      %v4798 = vcombine.low %v4438, %v4439
      %v4799 = vcombine.low %v4440, %v4441
      %v4801 = vunpack.c.l.s4 1983009808
      %v4802 = vunpack.c.0.s8 %v4801
      %v4803 = vlaneseq
      %v4804 = vshrl.u32 %v4803, 7
      %v4805 = vsub.s32 %v4802, %v4804
      %v4806 = vrot.slane %v4798, %v4805
      %v4808 = vunpack.c.l.s4 1983009808
      %v4809 = vunpack.c.0.s8 %v4808
      %v4810 = vlaneseq
      %v4811 = vshrl.u32 %v4810, 7
      %v4812 = vsub.s32 %v4809, %v4811
      %v4813 = vrot.slane %v4799, %v4812
      %v4814 = vcombine.low %v4806, %v4813
      %v4815 = vcombine.low %v4442, %v4443
      %v4816 = vcombine.low %v4444, %v4445
      %v4818 = vunpack.c.l.s4 1983009808
      %v4819 = vunpack.c.0.s8 %v4818
      %v4820 = vlaneseq
      %v4821 = vshrl.u32 %v4820, 7
      %v4822 = vsub.s32 %v4819, %v4821
      %v4823 = vrot.slane %v4815, %v4822
      %v4825 = vunpack.c.l.s4 1983009808
      %v4826 = vunpack.c.0.s8 %v4825
      %v4827 = vlaneseq
      %v4828 = vshrl.u32 %v4827, 7
      %v4829 = vsub.s32 %v4826, %v4828
      %v4830 = vrot.slane %v4816, %v4829
      %v4831 = vcombine.low %v4823, %v4830
      %v4832 = vcombine.low %v4446, %v4447
      %v4833 = vcombine.low %v4448, %v4449
      %v4835 = vunpack.c.l.s4 1983009808
      %v4836 = vunpack.c.0.s8 %v4835
      %v4837 = vlaneseq
      %v4838 = vshrl.u32 %v4837, 7
      %v4839 = vsub.s32 %v4836, %v4838
      %v4840 = vrot.slane %v4832, %v4839
      %v4842 = vunpack.c.l.s4 1983009808
      %v4843 = vunpack.c.0.s8 %v4842
      %v4844 = vlaneseq
      %v4845 = vshrl.u32 %v4844, 7
      %v4846 = vsub.s32 %v4843, %v4845
      %v4847 = vrot.slane %v4833, %v4846
      %v4848 = vcombine.low %v4840, %v4847
      %v4849 = vcombine.low %v4450, %v4451
      %v4850 = vcombine.low %v4452, %v4453
      %v4852 = vunpack.c.l.s4 1983009808
      %v4853 = vunpack.c.0.s8 %v4852
      %v4854 = vlaneseq
      %v4855 = vshrl.u32 %v4854, 7
      %v4856 = vsub.s32 %v4853, %v4855
      %v4857 = vrot.slane %v4849, %v4856
      %v4859 = vunpack.c.l.s4 1983009808
      %v4860 = vunpack.c.0.s8 %v4859
      %v4861 = vlaneseq
      %v4862 = vshrl.u32 %v4861, 7
      %v4863 = vsub.s32 %v4860, %v4862
      %v4864 = vrot.slane %v4850, %v4863
      %v4865 = vcombine.low %v4857, %v4864
      %v4866 = vcombine.low %v4454, %v4455
      %v4867 = vcombine.low %v4456, %v4457
      %v4869 = vunpack.c.l.s4 1983009808
      %v4870 = vunpack.c.0.s8 %v4869
      %v4871 = vlaneseq
      %v4872 = vshrl.u32 %v4871, 7
      %v4873 = vsub.s32 %v4870, %v4872
      %v4874 = vrot.slane %v4866, %v4873
      %v4876 = vunpack.c.l.s4 1983009808
      %v4877 = vunpack.c.0.s8 %v4876
      %v4878 = vlaneseq
      %v4879 = vshrl.u32 %v4878, 7
      %v4880 = vsub.s32 %v4877, %v4879
      %v4881 = vrot.slane %v4867, %v4880
      %v4882 = vcombine.low %v4874, %v4881
      %v4883 = vcombine.low %v4458, %v4459
      %v4884 = vcombine.low %v4460, %v4461
      %v4886 = vunpack.c.l.s4 1983009808
      %v4887 = vunpack.c.0.s8 %v4886
      %v4888 = vlaneseq
      %v4889 = vshrl.u32 %v4888, 7
      %v4890 = vsub.s32 %v4887, %v4889
      %v4891 = vrot.slane %v4883, %v4890
      %v4893 = vunpack.c.l.s4 1983009808
      %v4894 = vunpack.c.0.s8 %v4893
      %v4895 = vlaneseq
      %v4896 = vshrl.u32 %v4895, 7
      %v4897 = vsub.s32 %v4894, %v4896
      %v4898 = vrot.slane %v4884, %v4897
      %v4899 = vcombine.low %v4891, %v4898
      %v4900 = vcombine.low %v4462, %v4463
      %v4901 = vcombine.low %v4464, %v4465
      %v4903 = vunpack.c.l.s4 1983009808
      %v4904 = vunpack.c.0.s8 %v4903
      %v4905 = vlaneseq
      %v4906 = vshrl.u32 %v4905, 7
      %v4907 = vsub.s32 %v4904, %v4906
      %v4908 = vrot.slane %v4900, %v4907
      %v4910 = vunpack.c.l.s4 1983009808
      %v4911 = vunpack.c.0.s8 %v4910
      %v4912 = vlaneseq
      %v4913 = vshrl.u32 %v4912, 7
      %v4914 = vsub.s32 %v4911, %v4913
      %v4915 = vrot.slane %v4901, %v4914
      %v4916 = vcombine.low %v4908, %v4915
      %v4917 = vcombine.low %v4466, %v4467
      %v4918 = vcombine.low %v4468, %v4469
      %v4920 = vunpack.c.l.s4 1983009808
      %v4921 = vunpack.c.0.s8 %v4920
      %v4922 = vlaneseq
      %v4923 = vshrl.u32 %v4922, 7
      %v4924 = vsub.s32 %v4921, %v4923
      %v4925 = vrot.slane %v4917, %v4924
      %v4927 = vunpack.c.l.s4 1983009808
      %v4928 = vunpack.c.0.s8 %v4927
      %v4929 = vlaneseq
      %v4930 = vshrl.u32 %v4929, 7
      %v4931 = vsub.s32 %v4928, %v4930
      %v4932 = vrot.slane %v4918, %v4931
      %v4933 = vcombine.low %v4925, %v4932
      %v4934 = vcombine.low %v4470, %v4471
      %v4935 = vcombine.low %v4472, %v4473
      %v4937 = vunpack.c.l.s4 1983009808
      %v4938 = vunpack.c.0.s8 %v4937
      %v4939 = vlaneseq
      %v4940 = vshrl.u32 %v4939, 7
      %v4941 = vsub.s32 %v4938, %v4940
      %v4942 = vrot.slane %v4934, %v4941
      %v4944 = vunpack.c.l.s4 1983009808
      %v4945 = vunpack.c.0.s8 %v4944
      %v4946 = vlaneseq
      %v4947 = vshrl.u32 %v4946, 7
      %v4948 = vsub.s32 %v4945, %v4947
      %v4949 = vrot.slane %v4935, %v4948
      %v4950 = vcombine.low %v4942, %v4949
      %v4951 = vcombine.low %v4474, %v4475
      %v4952 = vcombine.low %v4476, %v4477
      %v4954 = vunpack.c.l.s4 1983009808
      %v4955 = vunpack.c.0.s8 %v4954
      %v4956 = vlaneseq
      %v4957 = vshrl.u32 %v4956, 7
      %v4958 = vsub.s32 %v4955, %v4957
      %v4959 = vrot.slane %v4951, %v4958
      %v4961 = vunpack.c.l.s4 1983009808
      %v4962 = vunpack.c.0.s8 %v4961
      %v4963 = vlaneseq
      %v4964 = vshrl.u32 %v4963, 7
      %v4965 = vsub.s32 %v4962, %v4964
      %v4966 = vrot.slane %v4952, %v4965
      %v4967 = vcombine.low %v4959, %v4966
      %v4968 = vcombine.low %v4478, %v4479
      %v4969 = vcombine.low %v4480, %v4481
      %v4971 = vunpack.c.l.s4 1983009808
      %v4972 = vunpack.c.0.s8 %v4971
      %v4973 = vlaneseq
      %v4974 = vshrl.u32 %v4973, 7
      %v4975 = vsub.s32 %v4972, %v4974
      %v4976 = vrot.slane %v4968, %v4975
      %v4978 = vunpack.c.l.s4 1983009808
      %v4979 = vunpack.c.0.s8 %v4978
      %v4980 = vlaneseq
      %v4981 = vshrl.u32 %v4980, 7
      %v4982 = vsub.s32 %v4979, %v4981
      %v4983 = vrot.slane %v4969, %v4982
      %v4984 = vcombine.low %v4976, %v4983
      %v4985 = vcombine.low %v4482, %v4483
      %v4986 = vcombine.low %v4484, %v4485
      %v4988 = vunpack.c.l.s4 1983009808
      %v4989 = vunpack.c.0.s8 %v4988
      %v4990 = vlaneseq
      %v4991 = vshrl.u32 %v4990, 7
      %v4992 = vsub.s32 %v4989, %v4991
      %v4993 = vrot.slane %v4985, %v4992
      %v4995 = vunpack.c.l.s4 1983009808
      %v4996 = vunpack.c.0.s8 %v4995
      %v4997 = vlaneseq
      %v4998 = vshrl.u32 %v4997, 7
      %v4999 = vsub.s32 %v4996, %v4998
      %v5000 = vrot.slane %v4986, %v4999
      %v5001 = vcombine.low %v4993, %v5000
      %v5002 = vcombine.low %v4486, %v4487
      %v5003 = vcombine.low %v4488, %v4489
      %v5005 = vunpack.c.l.s4 1983009808
      %v5006 = vunpack.c.0.s8 %v5005
      %v5007 = vlaneseq
      %v5008 = vshrl.u32 %v5007, 7
      %v5009 = vsub.s32 %v5006, %v5008
      %v5010 = vrot.slane %v5002, %v5009
      %v5012 = vunpack.c.l.s4 1983009808
      %v5013 = vunpack.c.0.s8 %v5012
      %v5014 = vlaneseq
      %v5015 = vshrl.u32 %v5014, 7
      %v5016 = vsub.s32 %v5013, %v5015
      %v5017 = vrot.slane %v5003, %v5016
      %v5018 = vcombine.low %v5010, %v5017
      %v5019 = vcombine.low %v4490, %v4491
      %v5020 = vcombine.low %v4492, %v4493
      %v5022 = vunpack.c.l.s4 1983009808
      %v5023 = vunpack.c.0.s8 %v5022
      %v5024 = vlaneseq
      %v5025 = vshrl.u32 %v5024, 7
      %v5026 = vsub.s32 %v5023, %v5025
      %v5027 = vrot.slane %v5019, %v5026
      %v5029 = vunpack.c.l.s4 1983009808
      %v5030 = vunpack.c.0.s8 %v5029
      %v5031 = vlaneseq
      %v5032 = vshrl.u32 %v5031, 7
      %v5033 = vsub.s32 %v5030, %v5032
      %v5034 = vrot.slane %v5020, %v5033
      %v5035 = vcombine.low %v5027, %v5034
      %v5036 = vcombine.low %v4494, %v4495
      %v5037 = vcombine.low %v4496, %v4497
      %v5039 = vunpack.c.l.s4 1983009808
      %v5040 = vunpack.c.0.s8 %v5039
      %v5041 = vlaneseq
      %v5042 = vshrl.u32 %v5041, 7
      %v5043 = vsub.s32 %v5040, %v5042
      %v5044 = vrot.slane %v5036, %v5043
      %v5046 = vunpack.c.l.s4 1983009808
      %v5047 = vunpack.c.0.s8 %v5046
      %v5048 = vlaneseq
      %v5049 = vshrl.u32 %v5048, 7
      %v5050 = vsub.s32 %v5047, %v5049
      %v5051 = vrot.slane %v5037, %v5050
      %v5052 = vcombine.low %v5044, %v5051
      %v5053 = vcombine.low %v4498, %v4499
      %v5054 = vcombine.low %v4500, %v4501
      %v5056 = vunpack.c.l.s4 1983009808
      %v5057 = vunpack.c.0.s8 %v5056
      %v5058 = vlaneseq
      %v5059 = vshrl.u32 %v5058, 7
      %v5060 = vsub.s32 %v5057, %v5059
      %v5061 = vrot.slane %v5053, %v5060
      %v5063 = vunpack.c.l.s4 1983009808
      %v5064 = vunpack.c.0.s8 %v5063
      %v5065 = vlaneseq
      %v5066 = vshrl.u32 %v5065, 7
      %v5067 = vsub.s32 %v5064, %v5066
      %v5068 = vrot.slane %v5054, %v5067
      %v5069 = vcombine.low %v5061, %v5068
      %v5070 = vcombine.low %v4502, %v4503
      %v5071 = vcombine.low %v4504, %v4505
      %v5073 = vunpack.c.l.s4 1983009808
      %v5074 = vunpack.c.0.s8 %v5073
      %v5075 = vlaneseq
      %v5076 = vshrl.u32 %v5075, 7
      %v5077 = vsub.s32 %v5074, %v5076
      %v5078 = vrot.slane %v5070, %v5077
      %v5080 = vunpack.c.l.s4 1983009808
      %v5081 = vunpack.c.0.s8 %v5080
      %v5082 = vlaneseq
      %v5083 = vshrl.u32 %v5082, 7
      %v5084 = vsub.s32 %v5081, %v5083
      %v5085 = vrot.slane %v5071, %v5084
      %v5086 = vcombine.low %v5078, %v5085
      %v5087 = vcombine.low %v4506, %v4507
      %v5088 = vcombine.low %v4508, %v4509
      %v5090 = vunpack.c.l.s4 1983009808
      %v5091 = vunpack.c.0.s8 %v5090
      %v5092 = vlaneseq
      %v5093 = vshrl.u32 %v5092, 7
      %v5094 = vsub.s32 %v5091, %v5093
      %v5095 = vrot.slane %v5087, %v5094
      %v5097 = vunpack.c.l.s4 1983009808
      %v5098 = vunpack.c.0.s8 %v5097
      %v5099 = vlaneseq
      %v5100 = vshrl.u32 %v5099, 7
      %v5101 = vsub.s32 %v5098, %v5100
      %v5102 = vrot.slane %v5088, %v5101
      %v5103 = vcombine.low %v5095, %v5102
      %v5104 = vcombine.low %v4510, %v4511
      %v5105 = vcombine.low %v4512, %v4513
      %v5107 = vunpack.c.l.s4 1983009808
      %v5108 = vunpack.c.0.s8 %v5107
      %v5109 = vlaneseq
      %v5110 = vshrl.u32 %v5109, 7
      %v5111 = vsub.s32 %v5108, %v5110
      %v5112 = vrot.slane %v5104, %v5111
      %v5114 = vunpack.c.l.s4 1983009808
      %v5115 = vunpack.c.0.s8 %v5114
      %v5116 = vlaneseq
      %v5117 = vshrl.u32 %v5116, 7
      %v5118 = vsub.s32 %v5115, %v5117
      %v5119 = vrot.slane %v5105, %v5118
      %v5120 = vcombine.low %v5112, %v5119
      %v5121 = vcombine.low %v4514, %v4515
      %v5122 = vcombine.low %v4516, %v4517
      %v5124 = vunpack.c.l.s4 1983009808
      %v5125 = vunpack.c.0.s8 %v5124
      %v5126 = vlaneseq
      %v5127 = vshrl.u32 %v5126, 7
      %v5128 = vsub.s32 %v5125, %v5127
      %v5129 = vrot.slane %v5121, %v5128
      %v5131 = vunpack.c.l.s4 1983009808
      %v5132 = vunpack.c.0.s8 %v5131
      %v5133 = vlaneseq
      %v5134 = vshrl.u32 %v5133, 7
      %v5135 = vsub.s32 %v5132, %v5134
      %v5136 = vrot.slane %v5122, %v5135
      %v5137 = vcombine.low %v5129, %v5136
      %v5138 = vcombine.low %v4518, %v4519
      %v5139 = vcombine.low %v4520, %v4521
      %v5141 = vunpack.c.l.s4 1983009808
      %v5142 = vunpack.c.0.s8 %v5141
      %v5143 = vlaneseq
      %v5144 = vshrl.u32 %v5143, 7
      %v5145 = vsub.s32 %v5142, %v5144
      %v5146 = vrot.slane %v5138, %v5145
      %v5148 = vunpack.c.l.s4 1983009808
      %v5149 = vunpack.c.0.s8 %v5148
      %v5150 = vlaneseq
      %v5151 = vshrl.u32 %v5150, 7
      %v5152 = vsub.s32 %v5149, %v5151
      %v5153 = vrot.slane %v5139, %v5152
      %v5154 = vcombine.low %v5146, %v5153
      %v5155 = vcombine.low %v4522, %v4523
      %v5156 = vcombine.low %v4524, %v4525
      %v5158 = vunpack.c.l.s4 1983009808
      %v5159 = vunpack.c.0.s8 %v5158
      %v5160 = vlaneseq
      %v5161 = vshrl.u32 %v5160, 7
      %v5162 = vsub.s32 %v5159, %v5161
      %v5163 = vrot.slane %v5155, %v5162
      %v5165 = vunpack.c.l.s4 1983009808
      %v5166 = vunpack.c.0.s8 %v5165
      %v5167 = vlaneseq
      %v5168 = vshrl.u32 %v5167, 7
      %v5169 = vsub.s32 %v5166, %v5168
      %v5170 = vrot.slane %v5156, %v5169
      %v5171 = vcombine.low %v5163, %v5170
      %v5172 = vcombine.low %v4526, %v4527
      %v5173 = vcombine.low %v4528, %v4529
      %v5175 = vunpack.c.l.s4 1983009808
      %v5176 = vunpack.c.0.s8 %v5175
      %v5177 = vlaneseq
      %v5178 = vshrl.u32 %v5177, 7
      %v5179 = vsub.s32 %v5176, %v5178
      %v5180 = vrot.slane %v5172, %v5179
      %v5182 = vunpack.c.l.s4 1983009808
      %v5183 = vunpack.c.0.s8 %v5182
      %v5184 = vlaneseq
      %v5185 = vshrl.u32 %v5184, 7
      %v5186 = vsub.s32 %v5183, %v5185
      %v5187 = vrot.slane %v5173, %v5186
      %v5188 = vcombine.low %v5180, %v5187
      %v5189 = vcombine.low %v4530, %v4531
      %v5190 = vcombine.low %v4532, %v4533
      %v5192 = vunpack.c.l.s4 1983009808
      %v5193 = vunpack.c.0.s8 %v5192
      %v5194 = vlaneseq
      %v5195 = vshrl.u32 %v5194, 7
      %v5196 = vsub.s32 %v5193, %v5195
      %v5197 = vrot.slane %v5189, %v5196
      %v5199 = vunpack.c.l.s4 1983009808
      %v5200 = vunpack.c.0.s8 %v5199
      %v5201 = vlaneseq
      %v5202 = vshrl.u32 %v5201, 7
      %v5203 = vsub.s32 %v5200, %v5202
      %v5204 = vrot.slane %v5190, %v5203
      %v5205 = vcombine.low %v5197, %v5204
      %5238 = vst.msk [vmem:[%s391] sm:$0xff] %vm577, %v4678
      %5239 = vst.msk [vmem:[%s391 + $0x8] sm:$0xff] %vm577, %v4695
      %5240 = vst.msk [vmem:[%s391 + $0x10] sm:$0xff] %vm577, %v4712
      %5241 = vst.msk [vmem:[%s391 + $0x18] sm:$0xff] %vm577, %v4729
      %5242 = vst.msk [vmem:[%s391 + $0x40] sm:$0xff] %vm577, %v4746
      %5243 = vst.msk [vmem:[%s391 + $0x48] sm:$0xff] %vm577, %v4763
      %5244 = vst.msk [vmem:[%s391 + $0x50] sm:$0xff] %vm577, %v4780
      %5245 = vst.msk [vmem:[%s391 + $0x58] sm:$0xff] %vm577, %v4797
      %5246 = vst.msk [vmem:[%s391 + $0x80] sm:$0xff] %vm577, %v4814
      %5247 = vst.msk [vmem:[%s391 + $0x88] sm:$0xff] %vm577, %v4831
      %5248 = vst.msk [vmem:[%s391 + $0x90] sm:$0xff] %vm577, %v4848
      %5249 = vst.msk [vmem:[%s391 + $0x98] sm:$0xff] %vm577, %v4865
      %5250 = vst.msk [vmem:[%s391 + $0xc0] sm:$0xff] %vm577, %v4882
      %5251 = vst.msk [vmem:[%s391 + $0xc8] sm:$0xff] %vm577, %v4899
      %5252 = vst.msk [vmem:[%s391 + $0xd0] sm:$0xff] %vm577, %v4916
      %5253 = vst.msk [vmem:[%s391 + $0xd8] sm:$0xff] %vm577, %v4933
      %5254 = vst.msk [vmem:[%s391 + $0x100] sm:$0xff] %vm577, %v4950
      %5255 = vst.msk [vmem:[%s391 + $0x108] sm:$0xff] %vm577, %v4967
      %5256 = vst.msk [vmem:[%s391 + $0x110] sm:$0xff] %vm577, %v4984
      %5257 = vst.msk [vmem:[%s391 + $0x118] sm:$0xff] %vm577, %v5001
      %5258 = vst.msk [vmem:[%s391 + $0x140] sm:$0xff] %vm577, %v5018
      %5259 = vst.msk [vmem:[%s391 + $0x148] sm:$0xff] %vm577, %v5035
      %5260 = vst.msk [vmem:[%s391 + $0x150] sm:$0xff] %vm577, %v5052
      %5261 = vst.msk [vmem:[%s391 + $0x158] sm:$0xff] %vm577, %v5069
      %5262 = vst.msk [vmem:[%s391 + $0x180] sm:$0xff] %vm577, %v5086
      %5263 = vst.msk [vmem:[%s391 + $0x188] sm:$0xff] %vm577, %v5103
      %5264 = vst.msk [vmem:[%s391 + $0x190] sm:$0xff] %vm577, %v5120
      %5265 = vst.msk [vmem:[%s391 + $0x198] sm:$0xff] %vm577, %v5137
      %5266 = vst.msk [vmem:[%s391 + $0x1c0] sm:$0xff] %vm577, %v5154
      %5267 = vst.msk [vmem:[%s391 + $0x1c8] sm:$0xff] %vm577, %v5171
      %5268 = vst.msk [vmem:[%s391 + $0x1d0] sm:$0xff] %vm577, %v5188
      %5269 = vst.msk [vmem:[%s391 + $0x1d8] sm:$0xff] %vm577, %v5205
      %s5270 = scalar_lea.vmem %s3, 32
      %v5271 = vld [vmem:[%s5270] sm:$0xf]
      %s5272 = scalar_lea.vmem %s3, 36
      %v5273 = vld [vmem:[%s5272] sm:$0xf]
      %v5275 = vsel %vm610, %v5273, 0
      %5277 = vmatprep.subr.mxu0 0.0
      %5278 = vmatpush1.msra.mxu0 %v5275
      %5279 = vmatprep.subr.mxu0 0.0
      %5280 = vmatpush1.msra.mxu0 0.0
      %5281 = vmatprep.subr.mxu0 0.0
      %5282 = vmatpush1.msra.mxu0 0.0
      %5283 = vmatprep.subr.mxu0 0.0
      %5284 = vmatpush1.msra.mxu0 0.0
      %5285 = vmatprep.subr.mxu0 0.0
      %5286 = vmatpush1.msra.mxu0 0.0
      %5287 = vmatprep.subr.mxu0 0.0
      %5288 = vmatpush1.msra.mxu0 0.0
      %5289 = vmatprep.subr.mxu0 0.0
      %5290 = vmatpush1.msra.mxu0 0.0
      %5291 = vmatprep.subr.mxu0 0.0
      %5292 = vmatpush1.msra.mxu0 0.0
      %5293 = vmatprep.subr.mxu0 0.0
      %5294 = vmatpush1.msra.mxu0 0.0
      %5295 = vmatprep.subr.mxu0 0.0
      %5296 = vmatpush1.msra.mxu0 0.0
      %5297 = vmatprep.subr.mxu0 0.0
      %5298 = vmatpush1.msra.mxu0 0.0
      %5299 = vmatprep.subr.mxu0 0.0
      %5300 = vmatpush1.msra.mxu0 0.0
      %5301 = vmatprep.subr.mxu0 0.0
      %5302 = vmatpush1.msra.mxu0 0.0
      %5303 = vmatprep.subr.mxu0 0.0
      %5304 = vmatpush1.msra.mxu0 0.0
      %5305 = vmatprep.subr.mxu0 0.0
      %5306 = vmatpush1.msra.mxu0 0.0
      %5307 = vmatprep.subr.mxu0 0.0
      %5308 = vmatpush1.msra.mxu0 0.0
      %5309 = vmatprep.subr.mxu0 0.0
      %5310 = vmatpush1.msra.mxu0 0.0
      %5311 = vmatprep.subr.mxu0 0.0
      %5312 = vmatpush1.msra.mxu0 0.0
      %5313 = vmatprep.subr.mxu0 0.0
      %5314 = vmatpush1.msra.mxu0 0.0
      %5315 = vmatprep.subr.mxu0 0.0
      %5316 = vmatpush1.msra.mxu0 0.0
      %5317 = vmatprep.subr.mxu0 0.0
      %5318 = vmatpush1.msra.mxu0 0.0
      %5319 = vmatprep.subr.mxu0 0.0
      %5320 = vmatpush1.msra.mxu0 0.0
      %5321 = vmatprep.subr.mxu0 0.0
      %5322 = vmatpush1.msra.mxu0 0.0
      %5323 = vmatprep.subr.mxu0 0.0
      %5324 = vmatpush1.msra.mxu0 0.0
      %5325 = vmatprep.subr.mxu0 0.0
      %5326 = vmatpush1.msra.mxu0 0.0
      %5327 = vmatprep.subr.mxu0 0.0
      %5328 = vmatpush1.msra.mxu0 0.0
      %5329 = vmatprep.subr.mxu0 0.0
      %5330 = vmatpush1.msra.mxu0 0.0
      %5331 = vmatprep.subr.mxu0 0.0
      %5332 = vmatpush1.msra.mxu0 0.0
      %5333 = vmatprep.subr.mxu0 0.0
      %5334 = vmatpush1.msra.mxu0 0.0
      %5335 = vmatprep.subr.mxu0 0.0
      %5336 = vmatpush1.msra.mxu0 0.0
      %5337 = vmatprep.subr.mxu0 0.0
      %5338 = vmatpush1.msra.mxu0 0.0
      %5339 = vmatprep.subr.mxu0 0.0
      %5340 = vmatpush1.msra.mxu0 0.0
      %5341 = vmatprep.mubr.f32.mxu0 0.0
      %5342 = vmatmul.mubr.f32.gmra.mrb[0].mxu0 %v582
      %v5343 = vpop.f32.mrb[0].mxu0
      %v5344 = vadd.f32 0.0, %v5343
      %v5345 = vpop.f32.mrb[0].mxu0
      %5346 = vmatprep.mubr.f32.mxu0 0.0
      %5347 = vmatmul.mubr.f32.gmra.mrb[0].mxu0 %v584
      %v5348 = vpop.f32.mrb[0].mxu0
      %v5349 = vadd.f32 0.0, %v5348
      %v5350 = vpop.f32.mrb[0].mxu0
      %5351 = vmatprep.mubr.f32.mxu0 0.0
      %5352 = vmatmul.mubr.f32.gmra.mrb[0].mxu0 %v586
      %v5353 = vpop.f32.mrb[0].mxu0
      %v5354 = vadd.f32 0.0, %v5353
      %v5355 = vpop.f32.mrb[0].mxu0
      %5356 = vmatprep.mubr.f32.mxu0 0.0
      %5357 = vmatmul.mubr.f32.gmra.mrb[0].mxu0 %v588
      %v5358 = vpop.f32.mrb[0].mxu0
      %v5359 = vadd.f32 0.0, %v5358
      %v5360 = vpop.f32.mrb[0].mxu0
      %5361 = vmatprep.mubr.f32.mxu0 0.0
      %5362 = vmatmul.mubr.f32.gmra.mrb[0].mxu0 %v590
      %v5363 = vpop.f32.mrb[0].mxu0
      %v5364 = vadd.f32 0.0, %v5363
      %v5365 = vpop.f32.mrb[0].mxu0
      %5366 = vmatprep.mubr.f32.mxu0 0.0
      %5367 = vmatmul.mubr.f32.gmra.mrb[0].mxu0 %v592
      %v5368 = vpop.f32.mrb[0].mxu0
      %v5369 = vadd.f32 0.0, %v5368
      %v5370 = vpop.f32.mrb[0].mxu0
      %5371 = vmatprep.mubr.f32.mxu0 0.0
      %5372 = vmatmul.mubr.f32.gmra.mrb[0].mxu0 %v594
      %v5373 = vpop.f32.mrb[0].mxu0
      %v5374 = vadd.f32 0.0, %v5373
      %v5375 = vpop.f32.mrb[0].mxu0
      %5376 = vmatprep.mubr.f32.mxu0 0.0
      %5377 = vmatmul.mubr.f32.gmra.mrb[0].mxu0 %v596
      %v5378 = vpop.f32.mrb[0].mxu0
      %v5379 = vadd.f32 0.0, %v5378
      %v5380 = vpop.f32.mrb[0].mxu0
      %5381 = vmatprep.mubr.f32.mxu0 0.0
      %5382 = vmatmul.mubr.f32.gmra.mrb[0].mxu0 %v598
      %v5383 = vpop.f32.mrb[0].mxu0
      %v5384 = vadd.f32 0.0, %v5383
      %v5385 = vpop.f32.mrb[0].mxu0
      %5386 = vmatprep.mubr.f32.mxu0 0.0
      %5387 = vmatmul.mubr.f32.gmra.mrb[0].mxu0 %v600
      %v5388 = vpop.f32.mrb[0].mxu0
      %v5389 = vadd.f32 0.0, %v5388
      %v5390 = vpop.f32.mrb[0].mxu0
      %5391 = vmatprep.mubr.f32.mxu0 0.0
      %5392 = vmatmul.mubr.f32.gmra.mrb[0].mxu0 %v602
      %v5393 = vpop.f32.mrb[0].mxu0
      %v5394 = vadd.f32 0.0, %v5393
      %v5395 = vpop.f32.mrb[0].mxu0
      %5396 = vmatprep.mubr.f32.mxu0 0.0
      %5397 = vmatmul.mubr.f32.gmra.mrb[0].mxu0 %v604
      %v5398 = vpop.f32.mrb[0].mxu0
      %v5399 = vadd.f32 0.0, %v5398
      %v5400 = vpop.f32.mrb[0].mxu0
      %5401 = vmatprep.mubr.f32.mxu0 0.0
      %5402 = vmatmul.mubr.f32.gmra.mrb[0].mxu0 %v606
      %v5403 = vpop.f32.mrb[0].mxu0
      %v5404 = vadd.f32 0.0, %v5403
      %v5405 = vpop.f32.mrb[0].mxu0
      %5406 = vmatprep.mubr.f32.mxu0 0.0
      %5407 = vmatmul.mubr.f32.gmra.mrb[0].mxu0 %v608
      %v5408 = vpop.f32.mrb[0].mxu0
      %v5409 = vadd.f32 0.0, %v5408
      %v5410 = vpop.f32.mrb[0].mxu0
      %5411 = vmatprep.mubr.f32.mxu0 0.0
      %5412 = vmatmul.mubr.f32.gmra.mrb[0].mxu0 %v1118
      %v5413 = vpop.f32.mrb[0].mxu0
      %v5414 = vadd.f32 0.0, %v5413
      %v5415 = vpop.f32.mrb[0].mxu0
      %5416 = vmatprep.mubr.f32.mxu0 0.0
      %5417 = vmatmul.mubr.f32.gmra.mrb[0].mxu0 %v1120
      %v5418 = vpop.f32.mrb[0].mxu0
      %v5419 = vadd.f32 0.0, %v5418
      %v5420 = vpop.f32.mrb[0].mxu0
      %5421 = vdwg.mxu0
      %v5423 = vsel %vm610, %v5271, 0
      %5425 = vmatprep.subr.mxu0 0.0
      %5426 = vmatpush1.msra.mxu0 %v5423
      %5427 = vmatprep.subr.mxu0 0.0
      %5428 = vmatpush1.msra.mxu0 0.0
      %5429 = vmatprep.subr.mxu0 0.0
      %5430 = vmatpush1.msra.mxu0 0.0
      %5431 = vmatprep.subr.mxu0 0.0
      %5432 = vmatpush1.msra.mxu0 0.0
      %5433 = vmatprep.subr.mxu0 0.0
      %5434 = vmatpush1.msra.mxu0 0.0
      %5435 = vmatprep.subr.mxu0 0.0
      %5436 = vmatpush1.msra.mxu0 0.0
      %5437 = vmatprep.subr.mxu0 0.0
      %5438 = vmatpush1.msra.mxu0 0.0
      %5439 = vmatprep.subr.mxu0 0.0
      %5440 = vmatpush1.msra.mxu0 0.0
      %5441 = vmatprep.subr.mxu0 0.0
      %5442 = vmatpush1.msra.mxu0 0.0
      %5443 = vmatprep.subr.mxu0 0.0
      %5444 = vmatpush1.msra.mxu0 0.0
      %5445 = vmatprep.subr.mxu0 0.0
      %5446 = vmatpush1.msra.mxu0 0.0
      %5447 = vmatprep.subr.mxu0 0.0
      %5448 = vmatpush1.msra.mxu0 0.0
      %5449 = vmatprep.subr.mxu0 0.0
      %5450 = vmatpush1.msra.mxu0 0.0
      %5451 = vmatprep.subr.mxu0 0.0
      %5452 = vmatpush1.msra.mxu0 0.0
      %5453 = vmatprep.subr.mxu0 0.0
      %5454 = vmatpush1.msra.mxu0 0.0
      %5455 = vmatprep.subr.mxu0 0.0
      %5456 = vmatpush1.msra.mxu0 0.0
      %5457 = vmatprep.subr.mxu0 0.0
      %5458 = vmatpush1.msra.mxu0 0.0
      %5459 = vmatprep.subr.mxu0 0.0
      %5460 = vmatpush1.msra.mxu0 0.0
      %5461 = vmatprep.subr.mxu0 0.0
      %5462 = vmatpush1.msra.mxu0 0.0
      %5463 = vmatprep.subr.mxu0 0.0
      %5464 = vmatpush1.msra.mxu0 0.0
      %5465 = vmatprep.subr.mxu0 0.0
      %5466 = vmatpush1.msra.mxu0 0.0
      %5467 = vmatprep.subr.mxu0 0.0
      %5468 = vmatpush1.msra.mxu0 0.0
      %5469 = vmatprep.subr.mxu0 0.0
      %5470 = vmatpush1.msra.mxu0 0.0
      %5471 = vmatprep.subr.mxu0 0.0
      %5472 = vmatpush1.msra.mxu0 0.0
      %5473 = vmatprep.subr.mxu0 0.0
      %5474 = vmatpush1.msra.mxu0 0.0
      %5475 = vmatprep.subr.mxu0 0.0
      %5476 = vmatpush1.msra.mxu0 0.0
      %5477 = vmatprep.subr.mxu0 0.0
      %5478 = vmatpush1.msra.mxu0 0.0
      %5479 = vmatprep.subr.mxu0 0.0
      %5480 = vmatpush1.msra.mxu0 0.0
      %5481 = vmatprep.subr.mxu0 0.0
      %5482 = vmatpush1.msra.mxu0 0.0
      %5483 = vmatprep.subr.mxu0 0.0
      %5484 = vmatpush1.msra.mxu0 0.0
      %5485 = vmatprep.subr.mxu0 0.0
      %5486 = vmatpush1.msra.mxu0 0.0
      %5487 = vmatprep.subr.mxu0 0.0
      %5488 = vmatpush1.msra.mxu0 0.0
      %5489 = vmatprep.mubr.f32.mxu0 0.0
      %5490 = vmatmul.mubr.f32.gmra.mrb[0].mxu0 %v763
      %v5491 = vpop.f32.mrb[0].mxu0
      %v5492 = vadd.f32 %v5344, %v5491
      %v5493 = vpop.f32.mrb[0].mxu0
      %5494 = vmatprep.mubr.f32.mxu0 0.0
      %5495 = vmatmul.mubr.f32.gmra.mrb[0].mxu0 %v765
      %v5496 = vpop.f32.mrb[0].mxu0
      %v5497 = vadd.f32 %v5349, %v5496
      %v5498 = vpop.f32.mrb[0].mxu0
      %5499 = vmatprep.mubr.f32.mxu0 0.0
      %5500 = vmatmul.mubr.f32.gmra.mrb[0].mxu0 %v767
      %v5501 = vpop.f32.mrb[0].mxu0
      %v5502 = vadd.f32 %v5354, %v5501
      %v5503 = vpop.f32.mrb[0].mxu0
      %5504 = vmatprep.mubr.f32.mxu0 0.0
      %5505 = vmatmul.mubr.f32.gmra.mrb[0].mxu0 %v769
      %v5506 = vpop.f32.mrb[0].mxu0
      %v5507 = vadd.f32 %v5359, %v5506
      %v5508 = vpop.f32.mrb[0].mxu0
      %5509 = vmatprep.mubr.f32.mxu0 0.0
      %5510 = vmatmul.mubr.f32.gmra.mrb[0].mxu0 %v771
      %v5511 = vpop.f32.mrb[0].mxu0
      %v5512 = vadd.f32 %v5364, %v5511
      %v5513 = vpop.f32.mrb[0].mxu0
      %5514 = vmatprep.mubr.f32.mxu0 0.0
      %5515 = vmatmul.mubr.f32.gmra.mrb[0].mxu0 %v773
      %v5516 = vpop.f32.mrb[0].mxu0
      %v5517 = vadd.f32 %v5369, %v5516
      %v5518 = vpop.f32.mrb[0].mxu0
      %5519 = vmatprep.mubr.f32.mxu0 0.0
      %5520 = vmatmul.mubr.f32.gmra.mrb[0].mxu0 %v775
      %v5521 = vpop.f32.mrb[0].mxu0
      %v5522 = vadd.f32 %v5374, %v5521
      %v5523 = vpop.f32.mrb[0].mxu0
      %5524 = vmatprep.mubr.f32.mxu0 0.0
      %5525 = vmatmul.mubr.f32.gmra.mrb[0].mxu0 %v777
      %v5526 = vpop.f32.mrb[0].mxu0
      %v5527 = vadd.f32 %v5379, %v5526
      %v5528 = vpop.f32.mrb[0].mxu0
      %5529 = vmatprep.mubr.f32.mxu0 0.0
      %5530 = vmatmul.mubr.f32.gmra.mrb[0].mxu0 %v779
      %v5531 = vpop.f32.mrb[0].mxu0
      %v5532 = vadd.f32 %v5384, %v5531
      %v5533 = vpop.f32.mrb[0].mxu0
      %5534 = vmatprep.mubr.f32.mxu0 0.0
      %5535 = vmatmul.mubr.f32.gmra.mrb[0].mxu0 %v781
      %v5536 = vpop.f32.mrb[0].mxu0
      %v5537 = vadd.f32 %v5389, %v5536
      %v5538 = vpop.f32.mrb[0].mxu0
      %5539 = vmatprep.mubr.f32.mxu0 0.0
      %5540 = vmatmul.mubr.f32.gmra.mrb[0].mxu0 %v783
      %v5541 = vpop.f32.mrb[0].mxu0
      %v5542 = vadd.f32 %v5394, %v5541
      %v5543 = vpop.f32.mrb[0].mxu0
      %5544 = vmatprep.mubr.f32.mxu0 0.0
      %5545 = vmatmul.mubr.f32.gmra.mrb[0].mxu0 %v785
      %v5546 = vpop.f32.mrb[0].mxu0
      %v5547 = vadd.f32 %v5399, %v5546
      %v5548 = vpop.f32.mrb[0].mxu0
      %5549 = vmatprep.mubr.f32.mxu0 0.0
      %5550 = vmatmul.mubr.f32.gmra.mrb[0].mxu0 %v787
      %v5551 = vpop.f32.mrb[0].mxu0
      %v5552 = vadd.f32 %v5404, %v5551
      %v5553 = vpop.f32.mrb[0].mxu0
      %5554 = vmatprep.mubr.f32.mxu0 0.0
      %5555 = vmatmul.mubr.f32.gmra.mrb[0].mxu0 %v789
      %v5556 = vpop.f32.mrb[0].mxu0
      %v5557 = vadd.f32 %v5409, %v5556
      %v5558 = vpop.f32.mrb[0].mxu0
      %5559 = vmatprep.mubr.f32.mxu0 0.0
      %5560 = vmatmul.mubr.f32.gmra.mrb[0].mxu0 %v942
      %v5561 = vpop.f32.mrb[0].mxu0
      %v5562 = vadd.f32 %v5414, %v5561
      %v5563 = vpop.f32.mrb[0].mxu0
      %5564 = vmatprep.mubr.f32.mxu0 0.0
      %5565 = vmatmul.mubr.f32.gmra.mrb[0].mxu0 %v944
      %v5566 = vpop.f32.mrb[0].mxu0
      %v5567 = vadd.f32 %v5419, %v5566
      %v5568 = vpop.f32.mrb[0].mxu0
      %5569 = vdwg.mxu0
      %s5570 = scalar_lea.vmem %s3, 40
      %v5571 = vld [vmem:[%s5570] sm:$0xf]
      %v5573 = vsel %vm577, %v505, 0
      %v5575 = vsel %vm577, %v475, 0
      %v5578 = vsel %vm610, %v5571, 0
      %5580 = vmatprep.subr.mxu0 0.0
      %5581 = vmatpush1.msra.mxu0 %v5578
      %5582 = vmatprep.subr.mxu0 0.0
      %5583 = vmatpush1.msra.mxu0 0.0
      %5584 = vmatprep.subr.mxu0 0.0
      %5585 = vmatpush1.msra.mxu0 0.0
      %5586 = vmatprep.subr.mxu0 0.0
      %5587 = vmatpush1.msra.mxu0 0.0
      %5588 = vmatprep.subr.mxu0 0.0
      %5589 = vmatpush1.msra.mxu0 0.0
      %5590 = vmatprep.subr.mxu0 0.0
      %5591 = vmatpush1.msra.mxu0 0.0
      %5592 = vmatprep.subr.mxu0 0.0
      %5593 = vmatpush1.msra.mxu0 0.0
      %5594 = vmatprep.subr.mxu0 0.0
      %5595 = vmatpush1.msra.mxu0 0.0
      %5596 = vmatprep.subr.mxu0 0.0
      %5597 = vmatpush1.msra.mxu0 0.0
      %5598 = vmatprep.subr.mxu0 0.0
      %5599 = vmatpush1.msra.mxu0 0.0
      %5600 = vmatprep.subr.mxu0 0.0
      %5601 = vmatpush1.msra.mxu0 0.0
      %5602 = vmatprep.subr.mxu0 0.0
      %5603 = vmatpush1.msra.mxu0 0.0
      %5604 = vmatprep.subr.mxu0 0.0
      %5605 = vmatpush1.msra.mxu0 0.0
      %5606 = vmatprep.subr.mxu0 0.0
      %5607 = vmatpush1.msra.mxu0 0.0
      %5608 = vmatprep.subr.mxu0 0.0
      %5609 = vmatpush1.msra.mxu0 0.0
      %5610 = vmatprep.subr.mxu0 0.0
      %5611 = vmatpush1.msra.mxu0 0.0
      %5612 = vmatprep.subr.mxu0 0.0
      %5613 = vmatpush1.msra.mxu0 0.0
      %5614 = vmatprep.subr.mxu0 0.0
      %5615 = vmatpush1.msra.mxu0 0.0
      %5616 = vmatprep.subr.mxu0 0.0
      %5617 = vmatpush1.msra.mxu0 0.0
      %5618 = vmatprep.subr.mxu0 0.0
      %5619 = vmatpush1.msra.mxu0 0.0
      %5620 = vmatprep.subr.mxu0 0.0
      %5621 = vmatpush1.msra.mxu0 0.0
      %5622 = vmatprep.subr.mxu0 0.0
      %5623 = vmatpush1.msra.mxu0 0.0
      %5624 = vmatprep.subr.mxu0 0.0
      %5625 = vmatpush1.msra.mxu0 0.0
      %5626 = vmatprep.subr.mxu0 0.0
      %5627 = vmatpush1.msra.mxu0 0.0
      %5628 = vmatprep.subr.mxu0 0.0
      %5629 = vmatpush1.msra.mxu0 0.0
      %5630 = vmatprep.subr.mxu0 0.0
      %5631 = vmatpush1.msra.mxu0 0.0
      %5632 = vmatprep.subr.mxu0 0.0
      %5633 = vmatpush1.msra.mxu0 0.0
      %5634 = vmatprep.subr.mxu0 0.0
      %5635 = vmatpush1.msra.mxu0 0.0
      %5636 = vmatprep.subr.mxu0 0.0
      %5637 = vmatpush1.msra.mxu0 0.0
      %5638 = vmatprep.subr.mxu0 0.0
      %5639 = vmatpush1.msra.mxu0 0.0
      %5640 = vmatprep.subr.mxu0 0.0
      %5641 = vmatpush1.msra.mxu0 0.0
      %5642 = vmatprep.subr.mxu0 0.0
      %5643 = vmatpush1.msra.mxu0 0.0
      %5644 = vmatprep.mubr.f32.mxu0 0.0
      %5645 = vmatmul.mubr.f32.gmra.mrb[0].mxu0 %v767
      %v5646 = vpop.f32.mrb[0].mxu0
      %v5647 = vadd.f32 0.0, %v5646
      %v5648 = vpop.f32.mrb[0].mxu0
      %5649 = vmatprep.mubr.f32.mxu0 0.0
      %5650 = vmatmul.mubr.f32.gmra.mrb[0].mxu0 %v769
      %v5651 = vpop.f32.mrb[0].mxu0
      %v5652 = vadd.f32 0.0, %v5651
      %v5653 = vpop.f32.mrb[0].mxu0
      %5654 = vmatprep.mubr.f32.mxu0 0.0
      %5655 = vmatmul.mubr.f32.gmra.mrb[0].mxu0 %v771
      %v5656 = vpop.f32.mrb[0].mxu0
      %v5657 = vadd.f32 0.0, %v5656
      %v5658 = vpop.f32.mrb[0].mxu0
      %5659 = vmatprep.mubr.f32.mxu0 0.0
      %5660 = vmatmul.mubr.f32.gmra.mrb[0].mxu0 %v773
      %v5661 = vpop.f32.mrb[0].mxu0
      %v5662 = vadd.f32 0.0, %v5661
      %v5663 = vpop.f32.mrb[0].mxu0
      %5664 = vmatprep.mubr.f32.mxu0 0.0
      %5665 = vmatmul.mubr.f32.gmra.mrb[0].mxu0 %v775
      %v5666 = vpop.f32.mrb[0].mxu0
      %v5667 = vadd.f32 0.0, %v5666
      %v5668 = vpop.f32.mrb[0].mxu0
      %5669 = vmatprep.mubr.f32.mxu0 0.0
      %5670 = vmatmul.mubr.f32.gmra.mrb[0].mxu0 %v777
      %v5671 = vpop.f32.mrb[0].mxu0
      %v5672 = vadd.f32 0.0, %v5671
      %v5673 = vpop.f32.mrb[0].mxu0
      %5674 = vmatprep.mubr.f32.mxu0 0.0
      %5675 = vmatmul.mubr.f32.gmra.mrb[0].mxu0 %v779
      %v5676 = vpop.f32.mrb[0].mxu0
      %v5677 = vadd.f32 0.0, %v5676
      %v5678 = vpop.f32.mrb[0].mxu0
      %5679 = vmatprep.mubr.f32.mxu0 0.0
      %5680 = vmatmul.mubr.f32.gmra.mrb[0].mxu0 %v781
      %v5681 = vpop.f32.mrb[0].mxu0
      %v5682 = vadd.f32 0.0, %v5681
      %v5683 = vpop.f32.mrb[0].mxu0
      %5684 = vmatprep.mubr.f32.mxu0 0.0
      %5685 = vmatmul.mubr.f32.gmra.mrb[0].mxu0 %v783
      %v5686 = vpop.f32.mrb[0].mxu0
      %v5687 = vadd.f32 0.0, %v5686
      %v5688 = vpop.f32.mrb[0].mxu0
      %5689 = vmatprep.mubr.f32.mxu0 0.0
      %5690 = vmatmul.mubr.f32.gmra.mrb[0].mxu0 %v785
      %v5691 = vpop.f32.mrb[0].mxu0
      %v5692 = vadd.f32 0.0, %v5691
      %v5693 = vpop.f32.mrb[0].mxu0
      %5694 = vmatprep.mubr.f32.mxu0 0.0
      %5695 = vmatmul.mubr.f32.gmra.mrb[0].mxu0 %v787
      %v5696 = vpop.f32.mrb[0].mxu0
      %v5697 = vadd.f32 0.0, %v5696
      %v5698 = vpop.f32.mrb[0].mxu0
      %5699 = vmatprep.mubr.f32.mxu0 0.0
      %5700 = vmatmul.mubr.f32.gmra.mrb[0].mxu0 %v789
      %v5701 = vpop.f32.mrb[0].mxu0
      %v5702 = vadd.f32 0.0, %v5701
      %v5703 = vpop.f32.mrb[0].mxu0
      %5704 = vmatprep.mubr.f32.mxu0 0.0
      %5705 = vmatmul.mubr.f32.gmra.mrb[0].mxu0 %v942
      %v5706 = vpop.f32.mrb[0].mxu0
      %v5707 = vadd.f32 0.0, %v5706
      %v5708 = vpop.f32.mrb[0].mxu0
      %5709 = vmatprep.mubr.f32.mxu0 0.0
      %5710 = vmatmul.mubr.f32.gmra.mrb[0].mxu0 %v944
      %v5711 = vpop.f32.mrb[0].mxu0
      %v5712 = vadd.f32 0.0, %v5711
      %v5713 = vpop.f32.mrb[0].mxu0
      %5714 = vmatprep.mubr.f32.mxu0 0.0
      %5715 = vmatmul.mubr.f32.gmra.mrb[0].mxu0 %v5573
      %v5716 = vpop.f32.mrb[0].mxu0
      %v5717 = vadd.f32 0.0, %v5716
      %v5718 = vpop.f32.mrb[0].mxu0
      %5719 = vmatprep.mubr.f32.mxu0 0.0
      %5720 = vmatmul.mubr.f32.gmra.mrb[0].mxu0 %v5575
      %v5721 = vpop.f32.mrb[0].mxu0
      %v5722 = vadd.f32 0.0, %v5721
      %v5723 = vpop.f32.mrb[0].mxu0
      %5724 = vdwg.mxu0
      %v5725 = vadd.f32 %v5492, %v5647
      %v5726 = vadd.f32 %v5497, %v5652
      %v5727 = vadd.f32 %v5502, %v5657
      %v5728 = vadd.f32 %v5507, %v5662
      %v5729 = vadd.f32 %v5512, %v5667
      %v5730 = vadd.f32 %v5517, %v5672
      %v5731 = vadd.f32 %v5522, %v5677
      %v5732 = vadd.f32 %v5527, %v5682
      %v5733 = vadd.f32 %v5532, %v5687
      %v5734 = vadd.f32 %v5537, %v5692
      %v5735 = vadd.f32 %v5542, %v5697
      %v5736 = vadd.f32 %v5547, %v5702
      %v5737 = vadd.f32 %v5552, %v5707
      %v5738 = vadd.f32 %v5557, %v5712
      %v5739 = vadd.f32 %v5562, %v5717
      %v5740 = vadd.f32 %v5567, %v5722
      %v5742 = vrot.slane %v505, 1
      %v5743 = vrot.slane %v475, 1
      %v5744 = vsel %vm534, %v5742, %v5743
      %v5745 = vrot.slane %v515, 1
      %v5746 = vsel %vm534, %v5743, %v5745
      %s5747 = scalar_lea.vmem %s3, 44
      %v5748 = vld [vmem:[%s5747] sm:$0xf]
      %v5749 = vsel %vm577, %v5744, 0
      %v5751 = vsel %vm577, %v5746, 0
      %v5754 = vsel %vm610, %v5748, 0
      %5756 = vmatprep.subr.mxu0 0.0
      %5757 = vmatpush1.msra.mxu0 %v5754
      %5758 = vmatprep.subr.mxu0 0.0
      %5759 = vmatpush1.msra.mxu0 0.0
      %5760 = vmatprep.subr.mxu0 0.0
      %5761 = vmatpush1.msra.mxu0 0.0
      %5762 = vmatprep.subr.mxu0 0.0
      %5763 = vmatpush1.msra.mxu0 0.0
      %5764 = vmatprep.subr.mxu0 0.0
      %5765 = vmatpush1.msra.mxu0 0.0
      %5766 = vmatprep.subr.mxu0 0.0
      %5767 = vmatpush1.msra.mxu0 0.0
      %5768 = vmatprep.subr.mxu0 0.0
      %5769 = vmatpush1.msra.mxu0 0.0
      %5770 = vmatprep.subr.mxu0 0.0
      %5771 = vmatpush1.msra.mxu0 0.0
      %5772 = vmatprep.subr.mxu0 0.0
      %5773 = vmatpush1.msra.mxu0 0.0
      %5774 = vmatprep.subr.mxu0 0.0
      %5775 = vmatpush1.msra.mxu0 0.0
      %5776 = vmatprep.subr.mxu0 0.0
      %5777 = vmatpush1.msra.mxu0 0.0
      %5778 = vmatprep.subr.mxu0 0.0
      %5779 = vmatpush1.msra.mxu0 0.0
      %5780 = vmatprep.subr.mxu0 0.0
      %5781 = vmatpush1.msra.mxu0 0.0
      %5782 = vmatprep.subr.mxu0 0.0
      %5783 = vmatpush1.msra.mxu0 0.0
      %5784 = vmatprep.subr.mxu0 0.0
      %5785 = vmatpush1.msra.mxu0 0.0
      %5786 = vmatprep.subr.mxu0 0.0
      %5787 = vmatpush1.msra.mxu0 0.0
      %5788 = vmatprep.subr.mxu0 0.0
      %5789 = vmatpush1.msra.mxu0 0.0
      %5790 = vmatprep.subr.mxu0 0.0
      %5791 = vmatpush1.msra.mxu0 0.0
      %5792 = vmatprep.subr.mxu0 0.0
      %5793 = vmatpush1.msra.mxu0 0.0
      %5794 = vmatprep.subr.mxu0 0.0
      %5795 = vmatpush1.msra.mxu0 0.0
      %5796 = vmatprep.subr.mxu0 0.0
      %5797 = vmatpush1.msra.mxu0 0.0
      %5798 = vmatprep.subr.mxu0 0.0
      %5799 = vmatpush1.msra.mxu0 0.0
      %5800 = vmatprep.subr.mxu0 0.0
      %5801 = vmatpush1.msra.mxu0 0.0
      %5802 = vmatprep.subr.mxu0 0.0
      %5803 = vmatpush1.msra.mxu0 0.0
      %5804 = vmatprep.subr.mxu0 0.0
      %5805 = vmatpush1.msra.mxu0 0.0
      %5806 = vmatprep.subr.mxu0 0.0
      %5807 = vmatpush1.msra.mxu0 0.0
      %5808 = vmatprep.subr.mxu0 0.0
      %5809 = vmatpush1.msra.mxu0 0.0
      %5810 = vmatprep.subr.mxu0 0.0
      %5811 = vmatpush1.msra.mxu0 0.0
      %5812 = vmatprep.subr.mxu0 0.0
      %5813 = vmatpush1.msra.mxu0 0.0
      %5814 = vmatprep.subr.mxu0 0.0
      %5815 = vmatpush1.msra.mxu0 0.0
      %5816 = vmatprep.subr.mxu0 0.0
      %5817 = vmatpush1.msra.mxu0 0.0
      %5818 = vmatprep.subr.mxu0 0.0
      %5819 = vmatpush1.msra.mxu0 0.0
      %5820 = vmatprep.mubr.f32.mxu0 0.0
      %5821 = vmatmul.mubr.f32.gmra.mrb[0].mxu0 %v586
      %v5822 = vpop.f32.mrb[0].mxu0
      %v5823 = vadd.f32 0.0, %v5822
      %v5824 = vpop.f32.mrb[0].mxu0
      %5825 = vmatprep.mubr.f32.mxu0 0.0
      %5826 = vmatmul.mubr.f32.gmra.mrb[0].mxu0 %v588
      %v5827 = vpop.f32.mrb[0].mxu0
      %v5828 = vadd.f32 0.0, %v5827
      %v5829 = vpop.f32.mrb[0].mxu0
      %5830 = vmatprep.mubr.f32.mxu0 0.0
      %5831 = vmatmul.mubr.f32.gmra.mrb[0].mxu0 %v590
      %v5832 = vpop.f32.mrb[0].mxu0
      %v5833 = vadd.f32 0.0, %v5832
      %v5834 = vpop.f32.mrb[0].mxu0
      %5835 = vmatprep.mubr.f32.mxu0 0.0
      %5836 = vmatmul.mubr.f32.gmra.mrb[0].mxu0 %v592
      %v5837 = vpop.f32.mrb[0].mxu0
      %v5838 = vadd.f32 0.0, %v5837
      %v5839 = vpop.f32.mrb[0].mxu0
      %5840 = vmatprep.mubr.f32.mxu0 0.0
      %5841 = vmatmul.mubr.f32.gmra.mrb[0].mxu0 %v594
      %v5842 = vpop.f32.mrb[0].mxu0
      %v5843 = vadd.f32 0.0, %v5842
      %v5844 = vpop.f32.mrb[0].mxu0
      %5845 = vmatprep.mubr.f32.mxu0 0.0
      %5846 = vmatmul.mubr.f32.gmra.mrb[0].mxu0 %v596
      %v5847 = vpop.f32.mrb[0].mxu0
      %v5848 = vadd.f32 0.0, %v5847
      %v5849 = vpop.f32.mrb[0].mxu0
      %5850 = vmatprep.mubr.f32.mxu0 0.0
      %5851 = vmatmul.mubr.f32.gmra.mrb[0].mxu0 %v598
      %v5852 = vpop.f32.mrb[0].mxu0
      %v5853 = vadd.f32 0.0, %v5852
      %v5854 = vpop.f32.mrb[0].mxu0
      %5855 = vmatprep.mubr.f32.mxu0 0.0
      %5856 = vmatmul.mubr.f32.gmra.mrb[0].mxu0 %v600
      %v5857 = vpop.f32.mrb[0].mxu0
      %v5858 = vadd.f32 0.0, %v5857
      %v5859 = vpop.f32.mrb[0].mxu0
      %5860 = vmatprep.mubr.f32.mxu0 0.0
      %5861 = vmatmul.mubr.f32.gmra.mrb[0].mxu0 %v602
      %v5862 = vpop.f32.mrb[0].mxu0
      %v5863 = vadd.f32 0.0, %v5862
      %v5864 = vpop.f32.mrb[0].mxu0
      %5865 = vmatprep.mubr.f32.mxu0 0.0
      %5866 = vmatmul.mubr.f32.gmra.mrb[0].mxu0 %v604
      %v5867 = vpop.f32.mrb[0].mxu0
      %v5868 = vadd.f32 0.0, %v5867
      %v5869 = vpop.f32.mrb[0].mxu0
      %5870 = vmatprep.mubr.f32.mxu0 0.0
      %5871 = vmatmul.mubr.f32.gmra.mrb[0].mxu0 %v606
      %v5872 = vpop.f32.mrb[0].mxu0
      %v5873 = vadd.f32 0.0, %v5872
      %v5874 = vpop.f32.mrb[0].mxu0
      %5875 = vmatprep.mubr.f32.mxu0 0.0
      %5876 = vmatmul.mubr.f32.gmra.mrb[0].mxu0 %v608
      %v5877 = vpop.f32.mrb[0].mxu0
      %v5878 = vadd.f32 0.0, %v5877
      %v5879 = vpop.f32.mrb[0].mxu0
      %5880 = vmatprep.mubr.f32.mxu0 0.0
      %5881 = vmatmul.mubr.f32.gmra.mrb[0].mxu0 %v1118
      %v5882 = vpop.f32.mrb[0].mxu0
      %v5883 = vadd.f32 0.0, %v5882
      %v5884 = vpop.f32.mrb[0].mxu0
      %5885 = vmatprep.mubr.f32.mxu0 0.0
      %5886 = vmatmul.mubr.f32.gmra.mrb[0].mxu0 %v1120
      %v5887 = vpop.f32.mrb[0].mxu0
      %v5888 = vadd.f32 0.0, %v5887
      %v5889 = vpop.f32.mrb[0].mxu0
      %5890 = vmatprep.mubr.f32.mxu0 0.0
      %5891 = vmatmul.mubr.f32.gmra.mrb[0].mxu0 %v5749
      %v5892 = vpop.f32.mrb[0].mxu0
      %v5893 = vadd.f32 0.0, %v5892
      %v5894 = vpop.f32.mrb[0].mxu0
      %5895 = vmatprep.mubr.f32.mxu0 0.0
      %5896 = vmatmul.mubr.f32.gmra.mrb[0].mxu0 %v5751
      %v5897 = vpop.f32.mrb[0].mxu0
      %v5898 = vadd.f32 0.0, %v5897
      %v5899 = vpop.f32.mrb[0].mxu0
      %5900 = vdwg.mxu0
      %v5901 = vadd.f32 %v5725, %v5823
      %v5902 = vadd.f32 %v5726, %v5828
      %v5903 = vadd.f32 %v5727, %v5833
      %v5904 = vadd.f32 %v5728, %v5838
      %v5905 = vadd.f32 %v5729, %v5843
      %v5906 = vadd.f32 %v5730, %v5848
      %v5907 = vadd.f32 %v5731, %v5853
      %v5908 = vadd.f32 %v5732, %v5858
      %v5909 = vadd.f32 %v5733, %v5863
      %v5910 = vadd.f32 %v5734, %v5868
      %v5911 = vadd.f32 %v5735, %v5873
      %v5912 = vadd.f32 %v5736, %v5878
      %v5913 = vadd.f32 %v5737, %v5883
      %v5914 = vadd.f32 %v5738, %v5888
      %v5915 = vadd.f32 %v5739, %v5893
      %v5916 = vadd.f32 %v5740, %v5898
      %v5917 = vadd.f32 %v5901, %v1290
      %v5918 = vadd.f32 %v5902, %v1290
      %v5919 = vadd.f32 %v5903, %v1290
      %v5920 = vadd.f32 %v5904, %v1290
      %v5921 = vadd.f32 %v5905, %v1290
      %v5922 = vadd.f32 %v5906, %v1290
      %v5923 = vadd.f32 %v5907, %v1290
      %v5924 = vadd.f32 %v5908, %v1290
      %v5925 = vadd.f32 %v5909, %v1290
      %v5926 = vadd.f32 %v5910, %v1290
      %v5927 = vadd.f32 %v5911, %v1290
      %v5928 = vadd.f32 %v5912, %v1290
      %v5929 = vadd.f32 %v5913, %v1290
      %v5930 = vadd.f32 %v5914, %v1290
      %v5931 = vadd.f32 %v5915, %v1290
      %v5932 = vadd.f32 %v5916, %v1290
      %s5933 = scalar_lea.vmem %s3, 48
      %v5934 = vld [vmem:[%s5933] sm:$0xf]
      %s5935 = scalar_lea.vmem %s3, 52
      %v5936 = vld [vmem:[%s5935] sm:$0xf]
      %v5938 = vsel %vm610, %v5936, 0
      %5940 = vmatprep.subr.mxu0 0.0
      %5941 = vmatpush1.msra.mxu0 %v5938
      %5942 = vmatprep.subr.mxu0 0.0
      %5943 = vmatpush1.msra.mxu0 0.0
      %5944 = vmatprep.subr.mxu0 0.0
      %5945 = vmatpush1.msra.mxu0 0.0
      %5946 = vmatprep.subr.mxu0 0.0
      %5947 = vmatpush1.msra.mxu0 0.0
      %5948 = vmatprep.subr.mxu0 0.0
      %5949 = vmatpush1.msra.mxu0 0.0
      %5950 = vmatprep.subr.mxu0 0.0
      %5951 = vmatpush1.msra.mxu0 0.0
      %5952 = vmatprep.subr.mxu0 0.0
      %5953 = vmatpush1.msra.mxu0 0.0
      %5954 = vmatprep.subr.mxu0 0.0
      %5955 = vmatpush1.msra.mxu0 0.0
      %5956 = vmatprep.subr.mxu0 0.0
      %5957 = vmatpush1.msra.mxu0 0.0
      %5958 = vmatprep.subr.mxu0 0.0
      %5959 = vmatpush1.msra.mxu0 0.0
      %5960 = vmatprep.subr.mxu0 0.0
      %5961 = vmatpush1.msra.mxu0 0.0
      %5962 = vmatprep.subr.mxu0 0.0
      %5963 = vmatpush1.msra.mxu0 0.0
      %5964 = vmatprep.subr.mxu0 0.0
      %5965 = vmatpush1.msra.mxu0 0.0
      %5966 = vmatprep.subr.mxu0 0.0
      %5967 = vmatpush1.msra.mxu0 0.0
      %5968 = vmatprep.subr.mxu0 0.0
      %5969 = vmatpush1.msra.mxu0 0.0
      %5970 = vmatprep.subr.mxu0 0.0
      %5971 = vmatpush1.msra.mxu0 0.0
      %5972 = vmatprep.subr.mxu0 0.0
      %5973 = vmatpush1.msra.mxu0 0.0
      %5974 = vmatprep.subr.mxu0 0.0
      %5975 = vmatpush1.msra.mxu0 0.0
      %5976 = vmatprep.subr.mxu0 0.0
      %5977 = vmatpush1.msra.mxu0 0.0
      %5978 = vmatprep.subr.mxu0 0.0
      %5979 = vmatpush1.msra.mxu0 0.0
      %5980 = vmatprep.subr.mxu0 0.0
      %5981 = vmatpush1.msra.mxu0 0.0
      %5982 = vmatprep.subr.mxu0 0.0
      %5983 = vmatpush1.msra.mxu0 0.0
      %5984 = vmatprep.subr.mxu0 0.0
      %5985 = vmatpush1.msra.mxu0 0.0
      %5986 = vmatprep.subr.mxu0 0.0
      %5987 = vmatpush1.msra.mxu0 0.0
      %5988 = vmatprep.subr.mxu0 0.0
      %5989 = vmatpush1.msra.mxu0 0.0
      %5990 = vmatprep.subr.mxu0 0.0
      %5991 = vmatpush1.msra.mxu0 0.0
      %5992 = vmatprep.subr.mxu0 0.0
      %5993 = vmatpush1.msra.mxu0 0.0
      %5994 = vmatprep.subr.mxu0 0.0
      %5995 = vmatpush1.msra.mxu0 0.0
      %5996 = vmatprep.subr.mxu0 0.0
      %5997 = vmatpush1.msra.mxu0 0.0
      %5998 = vmatprep.subr.mxu0 0.0
      %5999 = vmatpush1.msra.mxu0 0.0
      %6000 = vmatprep.subr.mxu0 0.0
      %6001 = vmatpush1.msra.mxu0 0.0
      %6002 = vmatprep.subr.mxu0 0.0
      %6003 = vmatpush1.msra.mxu0 0.0
      %6004 = vmatprep.mubr.f32.mxu0 0.0
      %6005 = vmatmul.mubr.f32.gmra.mrb[0].mxu0 %v1357
      %v6006 = vpop.f32.mrb[0].mxu0
      %v6007 = vadd.f32 0.0, %v6006
      %v6008 = vpop.f32.mrb[0].mxu0
      %6009 = vmatprep.mubr.f32.mxu0 0.0
      %6010 = vmatmul.mubr.f32.gmra.mrb[0].mxu0 %v1359
      %v6011 = vpop.f32.mrb[0].mxu0
      %v6012 = vadd.f32 0.0, %v6011
      %v6013 = vpop.f32.mrb[0].mxu0
      %6014 = vmatprep.mubr.f32.mxu0 0.0
      %6015 = vmatmul.mubr.f32.gmra.mrb[0].mxu0 %v1361
      %v6016 = vpop.f32.mrb[0].mxu0
      %v6017 = vadd.f32 0.0, %v6016
      %v6018 = vpop.f32.mrb[0].mxu0
      %6019 = vmatprep.mubr.f32.mxu0 0.0
      %6020 = vmatmul.mubr.f32.gmra.mrb[0].mxu0 %v1363
      %v6021 = vpop.f32.mrb[0].mxu0
      %v6022 = vadd.f32 0.0, %v6021
      %v6023 = vpop.f32.mrb[0].mxu0
      %6024 = vmatprep.mubr.f32.mxu0 0.0
      %6025 = vmatmul.mubr.f32.gmra.mrb[0].mxu0 %v1365
      %v6026 = vpop.f32.mrb[0].mxu0
      %v6027 = vadd.f32 0.0, %v6026
      %v6028 = vpop.f32.mrb[0].mxu0
      %6029 = vmatprep.mubr.f32.mxu0 0.0
      %6030 = vmatmul.mubr.f32.gmra.mrb[0].mxu0 %v1367
      %v6031 = vpop.f32.mrb[0].mxu0
      %v6032 = vadd.f32 0.0, %v6031
      %v6033 = vpop.f32.mrb[0].mxu0
      %6034 = vmatprep.mubr.f32.mxu0 0.0
      %6035 = vmatmul.mubr.f32.gmra.mrb[0].mxu0 %v1369
      %v6036 = vpop.f32.mrb[0].mxu0
      %v6037 = vadd.f32 0.0, %v6036
      %v6038 = vpop.f32.mrb[0].mxu0
      %6039 = vmatprep.mubr.f32.mxu0 0.0
      %6040 = vmatmul.mubr.f32.gmra.mrb[0].mxu0 %v1371
      %v6041 = vpop.f32.mrb[0].mxu0
      %v6042 = vadd.f32 0.0, %v6041
      %v6043 = vpop.f32.mrb[0].mxu0
      %6044 = vmatprep.mubr.f32.mxu0 0.0
      %6045 = vmatmul.mubr.f32.gmra.mrb[0].mxu0 %v1373
      %v6046 = vpop.f32.mrb[0].mxu0
      %v6047 = vadd.f32 0.0, %v6046
      %v6048 = vpop.f32.mrb[0].mxu0
      %6049 = vmatprep.mubr.f32.mxu0 0.0
      %6050 = vmatmul.mubr.f32.gmra.mrb[0].mxu0 %v1375
      %v6051 = vpop.f32.mrb[0].mxu0
      %v6052 = vadd.f32 0.0, %v6051
      %v6053 = vpop.f32.mrb[0].mxu0
      %6054 = vmatprep.mubr.f32.mxu0 0.0
      %6055 = vmatmul.mubr.f32.gmra.mrb[0].mxu0 %v1377
      %v6056 = vpop.f32.mrb[0].mxu0
      %v6057 = vadd.f32 0.0, %v6056
      %v6058 = vpop.f32.mrb[0].mxu0
      %6059 = vmatprep.mubr.f32.mxu0 0.0
      %6060 = vmatmul.mubr.f32.gmra.mrb[0].mxu0 %v1379
      %v6061 = vpop.f32.mrb[0].mxu0
      %v6062 = vadd.f32 0.0, %v6061
      %v6063 = vpop.f32.mrb[0].mxu0
      %6064 = vmatprep.mubr.f32.mxu0 0.0
      %6065 = vmatmul.mubr.f32.gmra.mrb[0].mxu0 %v1381
      %v6066 = vpop.f32.mrb[0].mxu0
      %v6067 = vadd.f32 0.0, %v6066
      %v6068 = vpop.f32.mrb[0].mxu0
      %6069 = vmatprep.mubr.f32.mxu0 0.0
      %6070 = vmatmul.mubr.f32.gmra.mrb[0].mxu0 %v1383
      %v6071 = vpop.f32.mrb[0].mxu0
      %v6072 = vadd.f32 0.0, %v6071
      %v6073 = vpop.f32.mrb[0].mxu0
      %6074 = vmatprep.mubr.f32.mxu0 0.0
      %6075 = vmatmul.mubr.f32.gmra.mrb[0].mxu0 %v1854
      %v6076 = vpop.f32.mrb[0].mxu0
      %v6077 = vadd.f32 0.0, %v6076
      %v6078 = vpop.f32.mrb[0].mxu0
      %6079 = vmatprep.mubr.f32.mxu0 0.0
      %6080 = vmatmul.mubr.f32.gmra.mrb[0].mxu0 %v1856
      %v6081 = vpop.f32.mrb[0].mxu0
      %v6082 = vadd.f32 0.0, %v6081
      %v6083 = vpop.f32.mrb[0].mxu0
      %6084 = vdwg.mxu0
      %v6086 = vsel %vm610, %v5934, 0
      %6088 = vmatprep.subr.mxu0 0.0
      %6089 = vmatpush1.msra.mxu0 %v6086
      %6090 = vmatprep.subr.mxu0 0.0
      %6091 = vmatpush1.msra.mxu0 0.0
      %6092 = vmatprep.subr.mxu0 0.0
      %6093 = vmatpush1.msra.mxu0 0.0
      %6094 = vmatprep.subr.mxu0 0.0
      %6095 = vmatpush1.msra.mxu0 0.0
      %6096 = vmatprep.subr.mxu0 0.0
      %6097 = vmatpush1.msra.mxu0 0.0
      %6098 = vmatprep.subr.mxu0 0.0
      %6099 = vmatpush1.msra.mxu0 0.0
      %6100 = vmatprep.subr.mxu0 0.0
      %6101 = vmatpush1.msra.mxu0 0.0
      %6102 = vmatprep.subr.mxu0 0.0
      %6103 = vmatpush1.msra.mxu0 0.0
      %6104 = vmatprep.subr.mxu0 0.0
      %6105 = vmatpush1.msra.mxu0 0.0
      %6106 = vmatprep.subr.mxu0 0.0
      %6107 = vmatpush1.msra.mxu0 0.0
      %6108 = vmatprep.subr.mxu0 0.0
      %6109 = vmatpush1.msra.mxu0 0.0
      %6110 = vmatprep.subr.mxu0 0.0
      %6111 = vmatpush1.msra.mxu0 0.0
      %6112 = vmatprep.subr.mxu0 0.0
      %6113 = vmatpush1.msra.mxu0 0.0
      %6114 = vmatprep.subr.mxu0 0.0
      %6115 = vmatpush1.msra.mxu0 0.0
      %6116 = vmatprep.subr.mxu0 0.0
      %6117 = vmatpush1.msra.mxu0 0.0
      %6118 = vmatprep.subr.mxu0 0.0
      %6119 = vmatpush1.msra.mxu0 0.0
      %6120 = vmatprep.subr.mxu0 0.0
      %6121 = vmatpush1.msra.mxu0 0.0
      %6122 = vmatprep.subr.mxu0 0.0
      %6123 = vmatpush1.msra.mxu0 0.0
      %6124 = vmatprep.subr.mxu0 0.0
      %6125 = vmatpush1.msra.mxu0 0.0
      %6126 = vmatprep.subr.mxu0 0.0
      %6127 = vmatpush1.msra.mxu0 0.0
      %6128 = vmatprep.subr.mxu0 0.0
      %6129 = vmatpush1.msra.mxu0 0.0
      %6130 = vmatprep.subr.mxu0 0.0
      %6131 = vmatpush1.msra.mxu0 0.0
      %6132 = vmatprep.subr.mxu0 0.0
      %6133 = vmatpush1.msra.mxu0 0.0
      %6134 = vmatprep.subr.mxu0 0.0
      %6135 = vmatpush1.msra.mxu0 0.0
      %6136 = vmatprep.subr.mxu0 0.0
      %6137 = vmatpush1.msra.mxu0 0.0
      %6138 = vmatprep.subr.mxu0 0.0
      %6139 = vmatpush1.msra.mxu0 0.0
      %6140 = vmatprep.subr.mxu0 0.0
      %6141 = vmatpush1.msra.mxu0 0.0
      %6142 = vmatprep.subr.mxu0 0.0
      %6143 = vmatpush1.msra.mxu0 0.0
      %6144 = vmatprep.subr.mxu0 0.0
      %6145 = vmatpush1.msra.mxu0 0.0
      %6146 = vmatprep.subr.mxu0 0.0
      %6147 = vmatpush1.msra.mxu0 0.0
      %6148 = vmatprep.subr.mxu0 0.0
      %6149 = vmatpush1.msra.mxu0 0.0
      %6150 = vmatprep.subr.mxu0 0.0
      %6151 = vmatpush1.msra.mxu0 0.0
      %6152 = vmatprep.mubr.f32.mxu0 0.0
      %6153 = vmatmul.mubr.f32.gmra.mrb[0].mxu0 %v582
      %v6154 = vpop.f32.mrb[0].mxu0
      %v6155 = vadd.f32 %v6007, %v6154
      %v6156 = vpop.f32.mrb[0].mxu0
      %6157 = vmatprep.mubr.f32.mxu0 0.0
      %6158 = vmatmul.mubr.f32.gmra.mrb[0].mxu0 %v584
      %v6159 = vpop.f32.mrb[0].mxu0
      %v6160 = vadd.f32 %v6012, %v6159
      %v6161 = vpop.f32.mrb[0].mxu0
      %6162 = vmatprep.mubr.f32.mxu0 0.0
      %6163 = vmatmul.mubr.f32.gmra.mrb[0].mxu0 %v586
      %v6164 = vpop.f32.mrb[0].mxu0
      %v6165 = vadd.f32 %v6017, %v6164
      %v6166 = vpop.f32.mrb[0].mxu0
      %6167 = vmatprep.mubr.f32.mxu0 0.0
      %6168 = vmatmul.mubr.f32.gmra.mrb[0].mxu0 %v588
      %v6169 = vpop.f32.mrb[0].mxu0
      %v6170 = vadd.f32 %v6022, %v6169
      %v6171 = vpop.f32.mrb[0].mxu0
      %6172 = vmatprep.mubr.f32.mxu0 0.0
      %6173 = vmatmul.mubr.f32.gmra.mrb[0].mxu0 %v590
      %v6174 = vpop.f32.mrb[0].mxu0
      %v6175 = vadd.f32 %v6027, %v6174
      %v6176 = vpop.f32.mrb[0].mxu0
      %6177 = vmatprep.mubr.f32.mxu0 0.0
      %6178 = vmatmul.mubr.f32.gmra.mrb[0].mxu0 %v592
      %v6179 = vpop.f32.mrb[0].mxu0
      %v6180 = vadd.f32 %v6032, %v6179
      %v6181 = vpop.f32.mrb[0].mxu0
      %6182 = vmatprep.mubr.f32.mxu0 0.0
      %6183 = vmatmul.mubr.f32.gmra.mrb[0].mxu0 %v594
      %v6184 = vpop.f32.mrb[0].mxu0
      %v6185 = vadd.f32 %v6037, %v6184
      %v6186 = vpop.f32.mrb[0].mxu0
      %6187 = vmatprep.mubr.f32.mxu0 0.0
      %6188 = vmatmul.mubr.f32.gmra.mrb[0].mxu0 %v596
      %v6189 = vpop.f32.mrb[0].mxu0
      %v6190 = vadd.f32 %v6042, %v6189
      %v6191 = vpop.f32.mrb[0].mxu0
      %6192 = vmatprep.mubr.f32.mxu0 0.0
      %6193 = vmatmul.mubr.f32.gmra.mrb[0].mxu0 %v598
      %v6194 = vpop.f32.mrb[0].mxu0
      %v6195 = vadd.f32 %v6047, %v6194
      %v6196 = vpop.f32.mrb[0].mxu0
      %6197 = vmatprep.mubr.f32.mxu0 0.0
      %6198 = vmatmul.mubr.f32.gmra.mrb[0].mxu0 %v600
      %v6199 = vpop.f32.mrb[0].mxu0
      %v6200 = vadd.f32 %v6052, %v6199
      %v6201 = vpop.f32.mrb[0].mxu0
      %6202 = vmatprep.mubr.f32.mxu0 0.0
      %6203 = vmatmul.mubr.f32.gmra.mrb[0].mxu0 %v602
      %v6204 = vpop.f32.mrb[0].mxu0
      %v6205 = vadd.f32 %v6057, %v6204
      %v6206 = vpop.f32.mrb[0].mxu0
      %6207 = vmatprep.mubr.f32.mxu0 0.0
      %6208 = vmatmul.mubr.f32.gmra.mrb[0].mxu0 %v604
      %v6209 = vpop.f32.mrb[0].mxu0
      %v6210 = vadd.f32 %v6062, %v6209
      %v6211 = vpop.f32.mrb[0].mxu0
      %6212 = vmatprep.mubr.f32.mxu0 0.0
      %6213 = vmatmul.mubr.f32.gmra.mrb[0].mxu0 %v606
      %v6214 = vpop.f32.mrb[0].mxu0
      %v6215 = vadd.f32 %v6067, %v6214
      %v6216 = vpop.f32.mrb[0].mxu0
      %6217 = vmatprep.mubr.f32.mxu0 0.0
      %6218 = vmatmul.mubr.f32.gmra.mrb[0].mxu0 %v608
      %v6219 = vpop.f32.mrb[0].mxu0
      %v6220 = vadd.f32 %v6072, %v6219
      %v6221 = vpop.f32.mrb[0].mxu0
      %6222 = vmatprep.mubr.f32.mxu0 0.0
      %6223 = vmatmul.mubr.f32.gmra.mrb[0].mxu0 %v1118
      %v6224 = vpop.f32.mrb[0].mxu0
      %v6225 = vadd.f32 %v6077, %v6224
      %v6226 = vpop.f32.mrb[0].mxu0
      %6227 = vmatprep.mubr.f32.mxu0 0.0
      %6228 = vmatmul.mubr.f32.gmra.mrb[0].mxu0 %v1120
      %v6229 = vpop.f32.mrb[0].mxu0
      %v6230 = vadd.f32 %v6082, %v6229
      %v6231 = vpop.f32.mrb[0].mxu0
      %6232 = vdwg.mxu0
      %s6233 = scalar_lea.vmem %s3, 56
      %v6234 = vld [vmem:[%s6233] sm:$0xf]
      %v6236 = vsel %vm610, %v6234, 0
      %6238 = vmatprep.subr.mxu0 0.0
      %6239 = vmatpush1.msra.mxu0 %v6236
      %6240 = vmatprep.subr.mxu0 0.0
      %6241 = vmatpush1.msra.mxu0 0.0
      %6242 = vmatprep.subr.mxu0 0.0
      %6243 = vmatpush1.msra.mxu0 0.0
      %6244 = vmatprep.subr.mxu0 0.0
      %6245 = vmatpush1.msra.mxu0 0.0
      %6246 = vmatprep.subr.mxu0 0.0
      %6247 = vmatpush1.msra.mxu0 0.0
      %6248 = vmatprep.subr.mxu0 0.0
      %6249 = vmatpush1.msra.mxu0 0.0
      %6250 = vmatprep.subr.mxu0 0.0
      %6251 = vmatpush1.msra.mxu0 0.0
      %6252 = vmatprep.subr.mxu0 0.0
      %6253 = vmatpush1.msra.mxu0 0.0
      %6254 = vmatprep.subr.mxu0 0.0
      %6255 = vmatpush1.msra.mxu0 0.0
      %6256 = vmatprep.subr.mxu0 0.0
      %6257 = vmatpush1.msra.mxu0 0.0
      %6258 = vmatprep.subr.mxu0 0.0
      %6259 = vmatpush1.msra.mxu0 0.0
      %6260 = vmatprep.subr.mxu0 0.0
      %6261 = vmatpush1.msra.mxu0 0.0
      %6262 = vmatprep.subr.mxu0 0.0
      %6263 = vmatpush1.msra.mxu0 0.0
      %6264 = vmatprep.subr.mxu0 0.0
      %6265 = vmatpush1.msra.mxu0 0.0
      %6266 = vmatprep.subr.mxu0 0.0
      %6267 = vmatpush1.msra.mxu0 0.0
      %6268 = vmatprep.subr.mxu0 0.0
      %6269 = vmatpush1.msra.mxu0 0.0
      %6270 = vmatprep.subr.mxu0 0.0
      %6271 = vmatpush1.msra.mxu0 0.0
      %6272 = vmatprep.subr.mxu0 0.0
      %6273 = vmatpush1.msra.mxu0 0.0
      %6274 = vmatprep.subr.mxu0 0.0
      %6275 = vmatpush1.msra.mxu0 0.0
      %6276 = vmatprep.subr.mxu0 0.0
      %6277 = vmatpush1.msra.mxu0 0.0
      %6278 = vmatprep.subr.mxu0 0.0
      %6279 = vmatpush1.msra.mxu0 0.0
      %6280 = vmatprep.subr.mxu0 0.0
      %6281 = vmatpush1.msra.mxu0 0.0
      %6282 = vmatprep.subr.mxu0 0.0
      %6283 = vmatpush1.msra.mxu0 0.0
      %6284 = vmatprep.subr.mxu0 0.0
      %6285 = vmatpush1.msra.mxu0 0.0
      %6286 = vmatprep.subr.mxu0 0.0
      %6287 = vmatpush1.msra.mxu0 0.0
      %6288 = vmatprep.subr.mxu0 0.0
      %6289 = vmatpush1.msra.mxu0 0.0
      %6290 = vmatprep.subr.mxu0 0.0
      %6291 = vmatpush1.msra.mxu0 0.0
      %6292 = vmatprep.subr.mxu0 0.0
      %6293 = vmatpush1.msra.mxu0 0.0
      %6294 = vmatprep.subr.mxu0 0.0
      %6295 = vmatpush1.msra.mxu0 0.0
      %6296 = vmatprep.subr.mxu0 0.0
      %6297 = vmatpush1.msra.mxu0 0.0
      %6298 = vmatprep.subr.mxu0 0.0
      %6299 = vmatpush1.msra.mxu0 0.0
      %6300 = vmatprep.subr.mxu0 0.0
      %6301 = vmatpush1.msra.mxu0 0.0
      %6302 = vmatprep.mubr.f32.mxu0 0.0
      %6303 = vmatmul.mubr.f32.gmra.mrb[0].mxu0 %v586
      %v6304 = vpop.f32.mrb[0].mxu0
      %v6305 = vadd.f32 0.0, %v6304
      %v6306 = vpop.f32.mrb[0].mxu0
      %6307 = vmatprep.mubr.f32.mxu0 0.0
      %6308 = vmatmul.mubr.f32.gmra.mrb[0].mxu0 %v588
      %v6309 = vpop.f32.mrb[0].mxu0
      %v6310 = vadd.f32 0.0, %v6309
      %v6311 = vpop.f32.mrb[0].mxu0
      %6312 = vmatprep.mubr.f32.mxu0 0.0
      %6313 = vmatmul.mubr.f32.gmra.mrb[0].mxu0 %v590
      %v6314 = vpop.f32.mrb[0].mxu0
      %v6315 = vadd.f32 0.0, %v6314
      %v6316 = vpop.f32.mrb[0].mxu0
      %6317 = vmatprep.mubr.f32.mxu0 0.0
      %6318 = vmatmul.mubr.f32.gmra.mrb[0].mxu0 %v592
      %v6319 = vpop.f32.mrb[0].mxu0
      %v6320 = vadd.f32 0.0, %v6319
      %v6321 = vpop.f32.mrb[0].mxu0
      %6322 = vmatprep.mubr.f32.mxu0 0.0
      %6323 = vmatmul.mubr.f32.gmra.mrb[0].mxu0 %v594
      %v6324 = vpop.f32.mrb[0].mxu0
      %v6325 = vadd.f32 0.0, %v6324
      %v6326 = vpop.f32.mrb[0].mxu0
      %6327 = vmatprep.mubr.f32.mxu0 0.0
      %6328 = vmatmul.mubr.f32.gmra.mrb[0].mxu0 %v596
      %v6329 = vpop.f32.mrb[0].mxu0
      %v6330 = vadd.f32 0.0, %v6329
      %v6331 = vpop.f32.mrb[0].mxu0
      %6332 = vmatprep.mubr.f32.mxu0 0.0
      %6333 = vmatmul.mubr.f32.gmra.mrb[0].mxu0 %v598
      %v6334 = vpop.f32.mrb[0].mxu0
      %v6335 = vadd.f32 0.0, %v6334
      %v6336 = vpop.f32.mrb[0].mxu0
      %6337 = vmatprep.mubr.f32.mxu0 0.0
      %6338 = vmatmul.mubr.f32.gmra.mrb[0].mxu0 %v600
      %v6339 = vpop.f32.mrb[0].mxu0
      %v6340 = vadd.f32 0.0, %v6339
      %v6341 = vpop.f32.mrb[0].mxu0
      %6342 = vmatprep.mubr.f32.mxu0 0.0
      %6343 = vmatmul.mubr.f32.gmra.mrb[0].mxu0 %v602
      %v6344 = vpop.f32.mrb[0].mxu0
      %v6345 = vadd.f32 0.0, %v6344
      %v6346 = vpop.f32.mrb[0].mxu0
      %6347 = vmatprep.mubr.f32.mxu0 0.0
      %6348 = vmatmul.mubr.f32.gmra.mrb[0].mxu0 %v604
      %v6349 = vpop.f32.mrb[0].mxu0
      %v6350 = vadd.f32 0.0, %v6349
      %v6351 = vpop.f32.mrb[0].mxu0
      %6352 = vmatprep.mubr.f32.mxu0 0.0
      %6353 = vmatmul.mubr.f32.gmra.mrb[0].mxu0 %v606
      %v6354 = vpop.f32.mrb[0].mxu0
      %v6355 = vadd.f32 0.0, %v6354
      %v6356 = vpop.f32.mrb[0].mxu0
      %6357 = vmatprep.mubr.f32.mxu0 0.0
      %6358 = vmatmul.mubr.f32.gmra.mrb[0].mxu0 %v608
      %v6359 = vpop.f32.mrb[0].mxu0
      %v6360 = vadd.f32 0.0, %v6359
      %v6361 = vpop.f32.mrb[0].mxu0
      %6362 = vmatprep.mubr.f32.mxu0 0.0
      %6363 = vmatmul.mubr.f32.gmra.mrb[0].mxu0 %v1118
      %v6364 = vpop.f32.mrb[0].mxu0
      %v6365 = vadd.f32 0.0, %v6364
      %v6366 = vpop.f32.mrb[0].mxu0
      %6367 = vmatprep.mubr.f32.mxu0 0.0
      %6368 = vmatmul.mubr.f32.gmra.mrb[0].mxu0 %v1120
      %v6369 = vpop.f32.mrb[0].mxu0
      %v6370 = vadd.f32 0.0, %v6369
      %v6371 = vpop.f32.mrb[0].mxu0
      %6372 = vmatprep.mubr.f32.mxu0 0.0
      %6373 = vmatmul.mubr.f32.gmra.mrb[0].mxu0 %v5749
      %v6374 = vpop.f32.mrb[0].mxu0
      %v6375 = vadd.f32 0.0, %v6374
      %v6376 = vpop.f32.mrb[0].mxu0
      %6377 = vmatprep.mubr.f32.mxu0 0.0
      %6378 = vmatmul.mubr.f32.gmra.mrb[0].mxu0 %v5751
      %v6379 = vpop.f32.mrb[0].mxu0
      %v6380 = vadd.f32 0.0, %v6379
      %v6381 = vpop.f32.mrb[0].mxu0
      %6382 = vdwg.mxu0
      %v6383 = vadd.f32 %v6155, %v6305
      %v6384 = vadd.f32 %v6160, %v6310
      %v6385 = vadd.f32 %v6165, %v6315
      %v6386 = vadd.f32 %v6170, %v6320
      %v6387 = vadd.f32 %v6175, %v6325
      %v6388 = vadd.f32 %v6180, %v6330
      %v6389 = vadd.f32 %v6185, %v6335
      %v6390 = vadd.f32 %v6190, %v6340
      %v6391 = vadd.f32 %v6195, %v6345
      %v6392 = vadd.f32 %v6200, %v6350
      %v6393 = vadd.f32 %v6205, %v6355
      %v6394 = vadd.f32 %v6210, %v6360
      %v6395 = vadd.f32 %v6215, %v6365
      %v6396 = vadd.f32 %v6220, %v6370
      %v6397 = vadd.f32 %v6225, %v6375
      %v6398 = vadd.f32 %v6230, %v6380
      %v6399 = vrot.slane %v505, 2
      %v6400 = vrot.slane %v475, 2
      %v6401 = vsel %vm1310, %v6399, %v6400
      %v6402 = vrot.slane %v515, 2
      %v6403 = vsel %vm1310, %v6400, %v6402
      %s6404 = scalar_lea.vmem %s3, 60
      %v6405 = vld [vmem:[%s6404] sm:$0xf]
      %v6406 = vsel %vm577, %v6401, 0
      %v6408 = vsel %vm577, %v6403, 0
      %v6411 = vsel %vm610, %v6405, 0
      %6413 = vmatprep.subr.mxu0 0.0
      %6414 = vmatpush1.msra.mxu0 %v6411
      %6415 = vmatprep.subr.mxu0 0.0
      %6416 = vmatpush1.msra.mxu0 0.0
      %6417 = vmatprep.subr.mxu0 0.0
      %6418 = vmatpush1.msra.mxu0 0.0
      %6419 = vmatprep.subr.mxu0 0.0
      %6420 = vmatpush1.msra.mxu0 0.0
      %6421 = vmatprep.subr.mxu0 0.0
      %6422 = vmatpush1.msra.mxu0 0.0
      %6423 = vmatprep.subr.mxu0 0.0
      %6424 = vmatpush1.msra.mxu0 0.0
      %6425 = vmatprep.subr.mxu0 0.0
      %6426 = vmatpush1.msra.mxu0 0.0
      %6427 = vmatprep.subr.mxu0 0.0
      %6428 = vmatpush1.msra.mxu0 0.0
      %6429 = vmatprep.subr.mxu0 0.0
      %6430 = vmatpush1.msra.mxu0 0.0
      %6431 = vmatprep.subr.mxu0 0.0
      %6432 = vmatpush1.msra.mxu0 0.0
      %6433 = vmatprep.subr.mxu0 0.0
      %6434 = vmatpush1.msra.mxu0 0.0
      %6435 = vmatprep.subr.mxu0 0.0
      %6436 = vmatpush1.msra.mxu0 0.0
      %6437 = vmatprep.subr.mxu0 0.0
      %6438 = vmatpush1.msra.mxu0 0.0
      %6439 = vmatprep.subr.mxu0 0.0
      %6440 = vmatpush1.msra.mxu0 0.0
      %6441 = vmatprep.subr.mxu0 0.0
      %6442 = vmatpush1.msra.mxu0 0.0
      %6443 = vmatprep.subr.mxu0 0.0
      %6444 = vmatpush1.msra.mxu0 0.0
      %6445 = vmatprep.subr.mxu0 0.0
      %6446 = vmatpush1.msra.mxu0 0.0
      %6447 = vmatprep.subr.mxu0 0.0
      %6448 = vmatpush1.msra.mxu0 0.0
      %6449 = vmatprep.subr.mxu0 0.0
      %6450 = vmatpush1.msra.mxu0 0.0
      %6451 = vmatprep.subr.mxu0 0.0
      %6452 = vmatpush1.msra.mxu0 0.0
      %6453 = vmatprep.subr.mxu0 0.0
      %6454 = vmatpush1.msra.mxu0 0.0
      %6455 = vmatprep.subr.mxu0 0.0
      %6456 = vmatpush1.msra.mxu0 0.0
      %6457 = vmatprep.subr.mxu0 0.0
      %6458 = vmatpush1.msra.mxu0 0.0
      %6459 = vmatprep.subr.mxu0 0.0
      %6460 = vmatpush1.msra.mxu0 0.0
      %6461 = vmatprep.subr.mxu0 0.0
      %6462 = vmatpush1.msra.mxu0 0.0
      %6463 = vmatprep.subr.mxu0 0.0
      %6464 = vmatpush1.msra.mxu0 0.0
      %6465 = vmatprep.subr.mxu0 0.0
      %6466 = vmatpush1.msra.mxu0 0.0
      %6467 = vmatprep.subr.mxu0 0.0
      %6468 = vmatpush1.msra.mxu0 0.0
      %6469 = vmatprep.subr.mxu0 0.0
      %6470 = vmatpush1.msra.mxu0 0.0
      %6471 = vmatprep.subr.mxu0 0.0
      %6472 = vmatpush1.msra.mxu0 0.0
      %6473 = vmatprep.subr.mxu0 0.0
      %6474 = vmatpush1.msra.mxu0 0.0
      %6475 = vmatprep.subr.mxu0 0.0
      %6476 = vmatpush1.msra.mxu0 0.0
      %6477 = vmatprep.mubr.f32.mxu0 0.0
      %6478 = vmatmul.mubr.f32.gmra.mrb[0].mxu0 %v1361
      %v6479 = vpop.f32.mrb[0].mxu0
      %v6480 = vadd.f32 0.0, %v6479
      %v6481 = vpop.f32.mrb[0].mxu0
      %6482 = vmatprep.mubr.f32.mxu0 0.0
      %6483 = vmatmul.mubr.f32.gmra.mrb[0].mxu0 %v1363
      %v6484 = vpop.f32.mrb[0].mxu0
      %v6485 = vadd.f32 0.0, %v6484
      %v6486 = vpop.f32.mrb[0].mxu0
      %6487 = vmatprep.mubr.f32.mxu0 0.0
      %6488 = vmatmul.mubr.f32.gmra.mrb[0].mxu0 %v1365
      %v6489 = vpop.f32.mrb[0].mxu0
      %v6490 = vadd.f32 0.0, %v6489
      %v6491 = vpop.f32.mrb[0].mxu0
      %6492 = vmatprep.mubr.f32.mxu0 0.0
      %6493 = vmatmul.mubr.f32.gmra.mrb[0].mxu0 %v1367
      %v6494 = vpop.f32.mrb[0].mxu0
      %v6495 = vadd.f32 0.0, %v6494
      %v6496 = vpop.f32.mrb[0].mxu0
      %6497 = vmatprep.mubr.f32.mxu0 0.0
      %6498 = vmatmul.mubr.f32.gmra.mrb[0].mxu0 %v1369
      %v6499 = vpop.f32.mrb[0].mxu0
      %v6500 = vadd.f32 0.0, %v6499
      %v6501 = vpop.f32.mrb[0].mxu0
      %6502 = vmatprep.mubr.f32.mxu0 0.0
      %6503 = vmatmul.mubr.f32.gmra.mrb[0].mxu0 %v1371
      %v6504 = vpop.f32.mrb[0].mxu0
      %v6505 = vadd.f32 0.0, %v6504
      %v6506 = vpop.f32.mrb[0].mxu0
      %6507 = vmatprep.mubr.f32.mxu0 0.0
      %6508 = vmatmul.mubr.f32.gmra.mrb[0].mxu0 %v1373
      %v6509 = vpop.f32.mrb[0].mxu0
      %v6510 = vadd.f32 0.0, %v6509
      %v6511 = vpop.f32.mrb[0].mxu0
      %6512 = vmatprep.mubr.f32.mxu0 0.0
      %6513 = vmatmul.mubr.f32.gmra.mrb[0].mxu0 %v1375
      %v6514 = vpop.f32.mrb[0].mxu0
      %v6515 = vadd.f32 0.0, %v6514
      %v6516 = vpop.f32.mrb[0].mxu0
      %6517 = vmatprep.mubr.f32.mxu0 0.0
      %6518 = vmatmul.mubr.f32.gmra.mrb[0].mxu0 %v1377
      %v6519 = vpop.f32.mrb[0].mxu0
      %v6520 = vadd.f32 0.0, %v6519
      %v6521 = vpop.f32.mrb[0].mxu0
      %6522 = vmatprep.mubr.f32.mxu0 0.0
      %6523 = vmatmul.mubr.f32.gmra.mrb[0].mxu0 %v1379
      %v6524 = vpop.f32.mrb[0].mxu0
      %v6525 = vadd.f32 0.0, %v6524
      %v6526 = vpop.f32.mrb[0].mxu0
      %6527 = vmatprep.mubr.f32.mxu0 0.0
      %6528 = vmatmul.mubr.f32.gmra.mrb[0].mxu0 %v1381
      %v6529 = vpop.f32.mrb[0].mxu0
      %v6530 = vadd.f32 0.0, %v6529
      %v6531 = vpop.f32.mrb[0].mxu0
      %6532 = vmatprep.mubr.f32.mxu0 0.0
      %6533 = vmatmul.mubr.f32.gmra.mrb[0].mxu0 %v1383
      %v6534 = vpop.f32.mrb[0].mxu0
      %v6535 = vadd.f32 0.0, %v6534
      %v6536 = vpop.f32.mrb[0].mxu0
      %6537 = vmatprep.mubr.f32.mxu0 0.0
      %6538 = vmatmul.mubr.f32.gmra.mrb[0].mxu0 %v1854
      %v6539 = vpop.f32.mrb[0].mxu0
      %v6540 = vadd.f32 0.0, %v6539
      %v6541 = vpop.f32.mrb[0].mxu0
      %6542 = vmatprep.mubr.f32.mxu0 0.0
      %6543 = vmatmul.mubr.f32.gmra.mrb[0].mxu0 %v1856
      %v6544 = vpop.f32.mrb[0].mxu0
      %v6545 = vadd.f32 0.0, %v6544
      %v6546 = vpop.f32.mrb[0].mxu0
      %6547 = vmatprep.mubr.f32.mxu0 0.0
      %6548 = vmatmul.mubr.f32.gmra.mrb[0].mxu0 %v6406
      %v6549 = vpop.f32.mrb[0].mxu0
      %v6550 = vadd.f32 0.0, %v6549
      %v6551 = vpop.f32.mrb[0].mxu0
      %6552 = vmatprep.mubr.f32.mxu0 0.0
      %6553 = vmatmul.mubr.f32.gmra.mrb[0].mxu0 %v6408
      %v6554 = vpop.f32.mrb[0].mxu0
      %v6555 = vadd.f32 0.0, %v6554
      %v6556 = vpop.f32.mrb[0].mxu0
      %6557 = vdwg.mxu0
      %v6558 = vadd.f32 %v6383, %v6480
      %v6559 = vadd.f32 %v6384, %v6485
      %v6560 = vadd.f32 %v6385, %v6490
      %v6561 = vadd.f32 %v6386, %v6495
      %v6562 = vadd.f32 %v6387, %v6500
      %v6563 = vadd.f32 %v6388, %v6505
      %v6564 = vadd.f32 %v6389, %v6510
      %v6565 = vadd.f32 %v6390, %v6515
      %v6566 = vadd.f32 %v6391, %v6520
      %v6567 = vadd.f32 %v6392, %v6525
      %v6568 = vadd.f32 %v6393, %v6530
      %v6569 = vadd.f32 %v6394, %v6535
      %v6570 = vadd.f32 %v6395, %v6540
      %v6571 = vadd.f32 %v6396, %v6545
      %v6572 = vadd.f32 %v6397, %v6550
      %v6573 = vadd.f32 %v6398, %v6555
      %v6574 = vadd.f32 %v6558, %v1290
      %v6575 = vadd.f32 %v6559, %v1290
      %v6576 = vadd.f32 %v6560, %v1290
      %v6577 = vadd.f32 %v6561, %v1290
      %v6578 = vadd.f32 %v6562, %v1290
      %v6579 = vadd.f32 %v6563, %v1290
      %v6580 = vadd.f32 %v6564, %v1290
      %v6581 = vadd.f32 %v6565, %v1290
      %v6582 = vadd.f32 %v6566, %v1290
      %v6583 = vadd.f32 %v6567, %v1290
      %v6584 = vadd.f32 %v6568, %v1290
      %v6585 = vadd.f32 %v6569, %v1290
      %v6586 = vadd.f32 %v6570, %v1290
      %v6587 = vadd.f32 %v6571, %v1290
      %v6588 = vadd.f32 %v6572, %v1290
      %v6589 = vadd.f32 %v6573, %v1290
      %v6606 = vcombine.high %v5917, %v5917
      %v6608 = vunpack.c.l.s4 1966171168
      %v6609 = vunpack.c.0.s8 %v6608
      %v6610 = vlaneseq
      %v6611 = vshrl.u32 %v6610, 7
      %v6612 = vsub.s32 %v6609, %v6611
      %v6613 = vrot.slane %v5917, %v6612
      %v6615 = vunpack.c.l.s4 1966171168
      %v6616 = vunpack.c.0.s8 %v6615
      %v6617 = vlaneseq
      %v6618 = vshrl.u32 %v6617, 7
      %v6619 = vsub.s32 %v6616, %v6618
      %v6620 = vrot.slane %v6606, %v6619
      %v6621 = vcombine.high %v6613, %v6613
      %v6622 = vcombine.high %v6620, %v6620
      %v6624 = vunpack.c.l.s4 1966171168
      %v6625 = vunpack.c.0.s8 %v6624
      %v6626 = vlaneseq
      %v6627 = vshrl.u32 %v6626, 7
      %v6628 = vsub.s32 %v6625, %v6627
      %v6629 = vrot.slane %v6613, %v6628
      %v6631 = vunpack.c.l.s4 1966171168
      %v6632 = vunpack.c.0.s8 %v6631
      %v6633 = vlaneseq
      %v6634 = vshrl.u32 %v6633, 7
      %v6635 = vsub.s32 %v6632, %v6634
      %v6636 = vrot.slane %v6620, %v6635
      %v6638 = vunpack.c.l.s4 1966171168
      %v6639 = vunpack.c.0.s8 %v6638
      %v6640 = vlaneseq
      %v6641 = vshrl.u32 %v6640, 7
      %v6642 = vsub.s32 %v6639, %v6641
      %v6643 = vrot.slane %v6621, %v6642
      %v6645 = vunpack.c.l.s4 1966171168
      %v6646 = vunpack.c.0.s8 %v6645
      %v6647 = vlaneseq
      %v6648 = vshrl.u32 %v6647, 7
      %v6649 = vsub.s32 %v6646, %v6648
      %v6650 = vrot.slane %v6622, %v6649
      %v6651 = vcombine.high %v6629, %v6629
      %v6652 = vcombine.high %v6636, %v6636
      %v6653 = vcombine.high %v6643, %v6643
      %v6654 = vcombine.high %v6650, %v6650
      %v6655 = vcombine.high %v5918, %v5918
      %v6657 = vunpack.c.l.s4 1966171168
      %v6658 = vunpack.c.0.s8 %v6657
      %v6659 = vlaneseq
      %v6660 = vshrl.u32 %v6659, 7
      %v6661 = vsub.s32 %v6658, %v6660
      %v6662 = vrot.slane %v5918, %v6661
      %v6664 = vunpack.c.l.s4 1966171168
      %v6665 = vunpack.c.0.s8 %v6664
      %v6666 = vlaneseq
      %v6667 = vshrl.u32 %v6666, 7
      %v6668 = vsub.s32 %v6665, %v6667
      %v6669 = vrot.slane %v6655, %v6668
      %v6670 = vcombine.high %v6662, %v6662
      %v6671 = vcombine.high %v6669, %v6669
      %v6673 = vunpack.c.l.s4 1966171168
      %v6674 = vunpack.c.0.s8 %v6673
      %v6675 = vlaneseq
      %v6676 = vshrl.u32 %v6675, 7
      %v6677 = vsub.s32 %v6674, %v6676
      %v6678 = vrot.slane %v6662, %v6677
      %v6680 = vunpack.c.l.s4 1966171168
      %v6681 = vunpack.c.0.s8 %v6680
      %v6682 = vlaneseq
      %v6683 = vshrl.u32 %v6682, 7
      %v6684 = vsub.s32 %v6681, %v6683
      %v6685 = vrot.slane %v6669, %v6684
      %v6687 = vunpack.c.l.s4 1966171168
      %v6688 = vunpack.c.0.s8 %v6687
      %v6689 = vlaneseq
      %v6690 = vshrl.u32 %v6689, 7
      %v6691 = vsub.s32 %v6688, %v6690
      %v6692 = vrot.slane %v6670, %v6691
      %v6694 = vunpack.c.l.s4 1966171168
      %v6695 = vunpack.c.0.s8 %v6694
      %v6696 = vlaneseq
      %v6697 = vshrl.u32 %v6696, 7
      %v6698 = vsub.s32 %v6695, %v6697
      %v6699 = vrot.slane %v6671, %v6698
      %v6700 = vcombine.high %v6678, %v6678
      %v6701 = vcombine.high %v6685, %v6685
      %v6702 = vcombine.high %v6692, %v6692
      %v6703 = vcombine.high %v6699, %v6699
      %v6704 = vcombine.high %v5919, %v5919
      %v6706 = vunpack.c.l.s4 1966171168
      %v6707 = vunpack.c.0.s8 %v6706
      %v6708 = vlaneseq
      %v6709 = vshrl.u32 %v6708, 7
      %v6710 = vsub.s32 %v6707, %v6709
      %v6711 = vrot.slane %v5919, %v6710
      %v6713 = vunpack.c.l.s4 1966171168
      %v6714 = vunpack.c.0.s8 %v6713
      %v6715 = vlaneseq
      %v6716 = vshrl.u32 %v6715, 7
      %v6717 = vsub.s32 %v6714, %v6716
      %v6718 = vrot.slane %v6704, %v6717
      %v6719 = vcombine.high %v6711, %v6711
      %v6720 = vcombine.high %v6718, %v6718
      %v6722 = vunpack.c.l.s4 1966171168
      %v6723 = vunpack.c.0.s8 %v6722
      %v6724 = vlaneseq
      %v6725 = vshrl.u32 %v6724, 7
      %v6726 = vsub.s32 %v6723, %v6725
      %v6727 = vrot.slane %v6711, %v6726
      %v6729 = vunpack.c.l.s4 1966171168
      %v6730 = vunpack.c.0.s8 %v6729
      %v6731 = vlaneseq
      %v6732 = vshrl.u32 %v6731, 7
      %v6733 = vsub.s32 %v6730, %v6732
      %v6734 = vrot.slane %v6718, %v6733
      %v6736 = vunpack.c.l.s4 1966171168
      %v6737 = vunpack.c.0.s8 %v6736
      %v6738 = vlaneseq
      %v6739 = vshrl.u32 %v6738, 7
      %v6740 = vsub.s32 %v6737, %v6739
      %v6741 = vrot.slane %v6719, %v6740
      %v6743 = vunpack.c.l.s4 1966171168
      %v6744 = vunpack.c.0.s8 %v6743
      %v6745 = vlaneseq
      %v6746 = vshrl.u32 %v6745, 7
      %v6747 = vsub.s32 %v6744, %v6746
      %v6748 = vrot.slane %v6720, %v6747
      %v6749 = vcombine.high %v6727, %v6727
      %v6750 = vcombine.high %v6734, %v6734
      %v6751 = vcombine.high %v6741, %v6741
      %v6752 = vcombine.high %v6748, %v6748
      %v6753 = vcombine.high %v5920, %v5920
      %v6755 = vunpack.c.l.s4 1966171168
      %v6756 = vunpack.c.0.s8 %v6755
      %v6757 = vlaneseq
      %v6758 = vshrl.u32 %v6757, 7
      %v6759 = vsub.s32 %v6756, %v6758
      %v6760 = vrot.slane %v5920, %v6759
      %v6762 = vunpack.c.l.s4 1966171168
      %v6763 = vunpack.c.0.s8 %v6762
      %v6764 = vlaneseq
      %v6765 = vshrl.u32 %v6764, 7
      %v6766 = vsub.s32 %v6763, %v6765
      %v6767 = vrot.slane %v6753, %v6766
      %v6768 = vcombine.high %v6760, %v6760
      %v6769 = vcombine.high %v6767, %v6767
      %v6771 = vunpack.c.l.s4 1966171168
      %v6772 = vunpack.c.0.s8 %v6771
      %v6773 = vlaneseq
      %v6774 = vshrl.u32 %v6773, 7
      %v6775 = vsub.s32 %v6772, %v6774
      %v6776 = vrot.slane %v6760, %v6775
      %v6778 = vunpack.c.l.s4 1966171168
      %v6779 = vunpack.c.0.s8 %v6778
      %v6780 = vlaneseq
      %v6781 = vshrl.u32 %v6780, 7
      %v6782 = vsub.s32 %v6779, %v6781
      %v6783 = vrot.slane %v6767, %v6782
      %v6785 = vunpack.c.l.s4 1966171168
      %v6786 = vunpack.c.0.s8 %v6785
      %v6787 = vlaneseq
      %v6788 = vshrl.u32 %v6787, 7
      %v6789 = vsub.s32 %v6786, %v6788
      %v6790 = vrot.slane %v6768, %v6789
      %v6792 = vunpack.c.l.s4 1966171168
      %v6793 = vunpack.c.0.s8 %v6792
      %v6794 = vlaneseq
      %v6795 = vshrl.u32 %v6794, 7
      %v6796 = vsub.s32 %v6793, %v6795
      %v6797 = vrot.slane %v6769, %v6796
      %v6798 = vcombine.high %v6776, %v6776
      %v6799 = vcombine.high %v6783, %v6783
      %v6800 = vcombine.high %v6790, %v6790
      %v6801 = vcombine.high %v6797, %v6797
      %v6802 = vcombine.high %v5921, %v5921
      %v6804 = vunpack.c.l.s4 1966171168
      %v6805 = vunpack.c.0.s8 %v6804
      %v6806 = vlaneseq
      %v6807 = vshrl.u32 %v6806, 7
      %v6808 = vsub.s32 %v6805, %v6807
      %v6809 = vrot.slane %v5921, %v6808
      %v6811 = vunpack.c.l.s4 1966171168
      %v6812 = vunpack.c.0.s8 %v6811
      %v6813 = vlaneseq
      %v6814 = vshrl.u32 %v6813, 7
      %v6815 = vsub.s32 %v6812, %v6814
      %v6816 = vrot.slane %v6802, %v6815
      %v6817 = vcombine.high %v6809, %v6809
      %v6818 = vcombine.high %v6816, %v6816
      %v6820 = vunpack.c.l.s4 1966171168
      %v6821 = vunpack.c.0.s8 %v6820
      %v6822 = vlaneseq
      %v6823 = vshrl.u32 %v6822, 7
      %v6824 = vsub.s32 %v6821, %v6823
      %v6825 = vrot.slane %v6809, %v6824
      %v6827 = vunpack.c.l.s4 1966171168
      %v6828 = vunpack.c.0.s8 %v6827
      %v6829 = vlaneseq
      %v6830 = vshrl.u32 %v6829, 7
      %v6831 = vsub.s32 %v6828, %v6830
      %v6832 = vrot.slane %v6816, %v6831
      %v6834 = vunpack.c.l.s4 1966171168
      %v6835 = vunpack.c.0.s8 %v6834
      %v6836 = vlaneseq
      %v6837 = vshrl.u32 %v6836, 7
      %v6838 = vsub.s32 %v6835, %v6837
      %v6839 = vrot.slane %v6817, %v6838
      %v6841 = vunpack.c.l.s4 1966171168
      %v6842 = vunpack.c.0.s8 %v6841
      %v6843 = vlaneseq
      %v6844 = vshrl.u32 %v6843, 7
      %v6845 = vsub.s32 %v6842, %v6844
      %v6846 = vrot.slane %v6818, %v6845
      %v6847 = vcombine.high %v6825, %v6825
      %v6848 = vcombine.high %v6832, %v6832
      %v6849 = vcombine.high %v6839, %v6839
      %v6850 = vcombine.high %v6846, %v6846
      %v6851 = vcombine.high %v5922, %v5922
      %v6853 = vunpack.c.l.s4 1966171168
      %v6854 = vunpack.c.0.s8 %v6853
      %v6855 = vlaneseq
      %v6856 = vshrl.u32 %v6855, 7
      %v6857 = vsub.s32 %v6854, %v6856
      %v6858 = vrot.slane %v5922, %v6857
      %v6860 = vunpack.c.l.s4 1966171168
      %v6861 = vunpack.c.0.s8 %v6860
      %v6862 = vlaneseq
      %v6863 = vshrl.u32 %v6862, 7
      %v6864 = vsub.s32 %v6861, %v6863
      %v6865 = vrot.slane %v6851, %v6864
      %v6866 = vcombine.high %v6858, %v6858
      %v6867 = vcombine.high %v6865, %v6865
      %v6869 = vunpack.c.l.s4 1966171168
      %v6870 = vunpack.c.0.s8 %v6869
      %v6871 = vlaneseq
      %v6872 = vshrl.u32 %v6871, 7
      %v6873 = vsub.s32 %v6870, %v6872
      %v6874 = vrot.slane %v6858, %v6873
      %v6876 = vunpack.c.l.s4 1966171168
      %v6877 = vunpack.c.0.s8 %v6876
      %v6878 = vlaneseq
      %v6879 = vshrl.u32 %v6878, 7
      %v6880 = vsub.s32 %v6877, %v6879
      %v6881 = vrot.slane %v6865, %v6880
      %v6883 = vunpack.c.l.s4 1966171168
      %v6884 = vunpack.c.0.s8 %v6883
      %v6885 = vlaneseq
      %v6886 = vshrl.u32 %v6885, 7
      %v6887 = vsub.s32 %v6884, %v6886
      %v6888 = vrot.slane %v6866, %v6887
      %v6890 = vunpack.c.l.s4 1966171168
      %v6891 = vunpack.c.0.s8 %v6890
      %v6892 = vlaneseq
      %v6893 = vshrl.u32 %v6892, 7
      %v6894 = vsub.s32 %v6891, %v6893
      %v6895 = vrot.slane %v6867, %v6894
      %v6896 = vcombine.high %v6874, %v6874
      %v6897 = vcombine.high %v6881, %v6881
      %v6898 = vcombine.high %v6888, %v6888
      %v6899 = vcombine.high %v6895, %v6895
      %v6900 = vcombine.high %v5923, %v5923
      %v6902 = vunpack.c.l.s4 1966171168
      %v6903 = vunpack.c.0.s8 %v6902
      %v6904 = vlaneseq
      %v6905 = vshrl.u32 %v6904, 7
      %v6906 = vsub.s32 %v6903, %v6905
      %v6907 = vrot.slane %v5923, %v6906
      %v6909 = vunpack.c.l.s4 1966171168
      %v6910 = vunpack.c.0.s8 %v6909
      %v6911 = vlaneseq
      %v6912 = vshrl.u32 %v6911, 7
      %v6913 = vsub.s32 %v6910, %v6912
      %v6914 = vrot.slane %v6900, %v6913
      %v6915 = vcombine.high %v6907, %v6907
      %v6916 = vcombine.high %v6914, %v6914
      %v6918 = vunpack.c.l.s4 1966171168
      %v6919 = vunpack.c.0.s8 %v6918
      %v6920 = vlaneseq
      %v6921 = vshrl.u32 %v6920, 7
      %v6922 = vsub.s32 %v6919, %v6921
      %v6923 = vrot.slane %v6907, %v6922
      %v6925 = vunpack.c.l.s4 1966171168
      %v6926 = vunpack.c.0.s8 %v6925
      %v6927 = vlaneseq
      %v6928 = vshrl.u32 %v6927, 7
      %v6929 = vsub.s32 %v6926, %v6928
      %v6930 = vrot.slane %v6914, %v6929
      %v6932 = vunpack.c.l.s4 1966171168
      %v6933 = vunpack.c.0.s8 %v6932
      %v6934 = vlaneseq
      %v6935 = vshrl.u32 %v6934, 7
      %v6936 = vsub.s32 %v6933, %v6935
      %v6937 = vrot.slane %v6915, %v6936
      %v6939 = vunpack.c.l.s4 1966171168
      %v6940 = vunpack.c.0.s8 %v6939
      %v6941 = vlaneseq
      %v6942 = vshrl.u32 %v6941, 7
      %v6943 = vsub.s32 %v6940, %v6942
      %v6944 = vrot.slane %v6916, %v6943
      %v6945 = vcombine.high %v6923, %v6923
      %v6946 = vcombine.high %v6930, %v6930
      %v6947 = vcombine.high %v6937, %v6937
      %v6948 = vcombine.high %v6944, %v6944
      %v6949 = vcombine.high %v5924, %v5924
      %v6951 = vunpack.c.l.s4 1966171168
      %v6952 = vunpack.c.0.s8 %v6951
      %v6953 = vlaneseq
      %v6954 = vshrl.u32 %v6953, 7
      %v6955 = vsub.s32 %v6952, %v6954
      %v6956 = vrot.slane %v5924, %v6955
      %v6958 = vunpack.c.l.s4 1966171168
      %v6959 = vunpack.c.0.s8 %v6958
      %v6960 = vlaneseq
      %v6961 = vshrl.u32 %v6960, 7
      %v6962 = vsub.s32 %v6959, %v6961
      %v6963 = vrot.slane %v6949, %v6962
      %v6964 = vcombine.high %v6956, %v6956
      %v6965 = vcombine.high %v6963, %v6963
      %v6967 = vunpack.c.l.s4 1966171168
      %v6968 = vunpack.c.0.s8 %v6967
      %v6969 = vlaneseq
      %v6970 = vshrl.u32 %v6969, 7
      %v6971 = vsub.s32 %v6968, %v6970
      %v6972 = vrot.slane %v6956, %v6971
      %v6974 = vunpack.c.l.s4 1966171168
      %v6975 = vunpack.c.0.s8 %v6974
      %v6976 = vlaneseq
      %v6977 = vshrl.u32 %v6976, 7
      %v6978 = vsub.s32 %v6975, %v6977
      %v6979 = vrot.slane %v6963, %v6978
      %v6981 = vunpack.c.l.s4 1966171168
      %v6982 = vunpack.c.0.s8 %v6981
      %v6983 = vlaneseq
      %v6984 = vshrl.u32 %v6983, 7
      %v6985 = vsub.s32 %v6982, %v6984
      %v6986 = vrot.slane %v6964, %v6985
      %v6988 = vunpack.c.l.s4 1966171168
      %v6989 = vunpack.c.0.s8 %v6988
      %v6990 = vlaneseq
      %v6991 = vshrl.u32 %v6990, 7
      %v6992 = vsub.s32 %v6989, %v6991
      %v6993 = vrot.slane %v6965, %v6992
      %v6994 = vcombine.high %v6972, %v6972
      %v6995 = vcombine.high %v6979, %v6979
      %v6996 = vcombine.high %v6986, %v6986
      %v6997 = vcombine.high %v6993, %v6993
      %v6998 = vcombine.high %v5925, %v5925
      %v7000 = vunpack.c.l.s4 1966171168
      %v7001 = vunpack.c.0.s8 %v7000
      %v7002 = vlaneseq
      %v7003 = vshrl.u32 %v7002, 7
      %v7004 = vsub.s32 %v7001, %v7003
      %v7005 = vrot.slane %v5925, %v7004
      %v7007 = vunpack.c.l.s4 1966171168
      %v7008 = vunpack.c.0.s8 %v7007
      %v7009 = vlaneseq
      %v7010 = vshrl.u32 %v7009, 7
      %v7011 = vsub.s32 %v7008, %v7010
      %v7012 = vrot.slane %v6998, %v7011
      %v7013 = vcombine.high %v7005, %v7005
      %v7014 = vcombine.high %v7012, %v7012
      %v7016 = vunpack.c.l.s4 1966171168
      %v7017 = vunpack.c.0.s8 %v7016
      %v7018 = vlaneseq
      %v7019 = vshrl.u32 %v7018, 7
      %v7020 = vsub.s32 %v7017, %v7019
      %v7021 = vrot.slane %v7005, %v7020
      %v7023 = vunpack.c.l.s4 1966171168
      %v7024 = vunpack.c.0.s8 %v7023
      %v7025 = vlaneseq
      %v7026 = vshrl.u32 %v7025, 7
      %v7027 = vsub.s32 %v7024, %v7026
      %v7028 = vrot.slane %v7012, %v7027
      %v7030 = vunpack.c.l.s4 1966171168
      %v7031 = vunpack.c.0.s8 %v7030
      %v7032 = vlaneseq
      %v7033 = vshrl.u32 %v7032, 7
      %v7034 = vsub.s32 %v7031, %v7033
      %v7035 = vrot.slane %v7013, %v7034
      %v7037 = vunpack.c.l.s4 1966171168
      %v7038 = vunpack.c.0.s8 %v7037
      %v7039 = vlaneseq
      %v7040 = vshrl.u32 %v7039, 7
      %v7041 = vsub.s32 %v7038, %v7040
      %v7042 = vrot.slane %v7014, %v7041
      %v7043 = vcombine.high %v7021, %v7021
      %v7044 = vcombine.high %v7028, %v7028
      %v7045 = vcombine.high %v7035, %v7035
      %v7046 = vcombine.high %v7042, %v7042
      %v7047 = vcombine.high %v5926, %v5926
      %v7049 = vunpack.c.l.s4 1966171168
      %v7050 = vunpack.c.0.s8 %v7049
      %v7051 = vlaneseq
      %v7052 = vshrl.u32 %v7051, 7
      %v7053 = vsub.s32 %v7050, %v7052
      %v7054 = vrot.slane %v5926, %v7053
      %v7056 = vunpack.c.l.s4 1966171168
      %v7057 = vunpack.c.0.s8 %v7056
      %v7058 = vlaneseq
      %v7059 = vshrl.u32 %v7058, 7
      %v7060 = vsub.s32 %v7057, %v7059
      %v7061 = vrot.slane %v7047, %v7060
      %v7062 = vcombine.high %v7054, %v7054
      %v7063 = vcombine.high %v7061, %v7061
      %v7065 = vunpack.c.l.s4 1966171168
      %v7066 = vunpack.c.0.s8 %v7065
      %v7067 = vlaneseq
      %v7068 = vshrl.u32 %v7067, 7
      %v7069 = vsub.s32 %v7066, %v7068
      %v7070 = vrot.slane %v7054, %v7069
      %v7072 = vunpack.c.l.s4 1966171168
      %v7073 = vunpack.c.0.s8 %v7072
      %v7074 = vlaneseq
      %v7075 = vshrl.u32 %v7074, 7
      %v7076 = vsub.s32 %v7073, %v7075
      %v7077 = vrot.slane %v7061, %v7076
      %v7079 = vunpack.c.l.s4 1966171168
      %v7080 = vunpack.c.0.s8 %v7079
      %v7081 = vlaneseq
      %v7082 = vshrl.u32 %v7081, 7
      %v7083 = vsub.s32 %v7080, %v7082
      %v7084 = vrot.slane %v7062, %v7083
      %v7086 = vunpack.c.l.s4 1966171168
      %v7087 = vunpack.c.0.s8 %v7086
      %v7088 = vlaneseq
      %v7089 = vshrl.u32 %v7088, 7
      %v7090 = vsub.s32 %v7087, %v7089
      %v7091 = vrot.slane %v7063, %v7090
      %v7092 = vcombine.high %v7070, %v7070
      %v7093 = vcombine.high %v7077, %v7077
      %v7094 = vcombine.high %v7084, %v7084
      %v7095 = vcombine.high %v7091, %v7091
      %v7096 = vcombine.high %v5927, %v5927
      %v7098 = vunpack.c.l.s4 1966171168
      %v7099 = vunpack.c.0.s8 %v7098
      %v7100 = vlaneseq
      %v7101 = vshrl.u32 %v7100, 7
      %v7102 = vsub.s32 %v7099, %v7101
      %v7103 = vrot.slane %v5927, %v7102
      %v7105 = vunpack.c.l.s4 1966171168
      %v7106 = vunpack.c.0.s8 %v7105
      %v7107 = vlaneseq
      %v7108 = vshrl.u32 %v7107, 7
      %v7109 = vsub.s32 %v7106, %v7108
      %v7110 = vrot.slane %v7096, %v7109
      %v7111 = vcombine.high %v7103, %v7103
      %v7112 = vcombine.high %v7110, %v7110
      %v7114 = vunpack.c.l.s4 1966171168
      %v7115 = vunpack.c.0.s8 %v7114
      %v7116 = vlaneseq
      %v7117 = vshrl.u32 %v7116, 7
      %v7118 = vsub.s32 %v7115, %v7117
      %v7119 = vrot.slane %v7103, %v7118
      %v7121 = vunpack.c.l.s4 1966171168
      %v7122 = vunpack.c.0.s8 %v7121
      %v7123 = vlaneseq
      %v7124 = vshrl.u32 %v7123, 7
      %v7125 = vsub.s32 %v7122, %v7124
      %v7126 = vrot.slane %v7110, %v7125
      %v7128 = vunpack.c.l.s4 1966171168
      %v7129 = vunpack.c.0.s8 %v7128
      %v7130 = vlaneseq
      %v7131 = vshrl.u32 %v7130, 7
      %v7132 = vsub.s32 %v7129, %v7131
      %v7133 = vrot.slane %v7111, %v7132
      %v7135 = vunpack.c.l.s4 1966171168
      %v7136 = vunpack.c.0.s8 %v7135
      %v7137 = vlaneseq
      %v7138 = vshrl.u32 %v7137, 7
      %v7139 = vsub.s32 %v7136, %v7138
      %v7140 = vrot.slane %v7112, %v7139
      %v7141 = vcombine.high %v7119, %v7119
      %v7142 = vcombine.high %v7126, %v7126
      %v7143 = vcombine.high %v7133, %v7133
      %v7144 = vcombine.high %v7140, %v7140
      %v7145 = vcombine.high %v5928, %v5928
      %v7147 = vunpack.c.l.s4 1966171168
      %v7148 = vunpack.c.0.s8 %v7147
      %v7149 = vlaneseq
      %v7150 = vshrl.u32 %v7149, 7
      %v7151 = vsub.s32 %v7148, %v7150
      %v7152 = vrot.slane %v5928, %v7151
      %v7154 = vunpack.c.l.s4 1966171168
      %v7155 = vunpack.c.0.s8 %v7154
      %v7156 = vlaneseq
      %v7157 = vshrl.u32 %v7156, 7
      %v7158 = vsub.s32 %v7155, %v7157
      %v7159 = vrot.slane %v7145, %v7158
      %v7160 = vcombine.high %v7152, %v7152
      %v7161 = vcombine.high %v7159, %v7159
      %v7163 = vunpack.c.l.s4 1966171168
      %v7164 = vunpack.c.0.s8 %v7163
      %v7165 = vlaneseq
      %v7166 = vshrl.u32 %v7165, 7
      %v7167 = vsub.s32 %v7164, %v7166
      %v7168 = vrot.slane %v7152, %v7167
      %v7170 = vunpack.c.l.s4 1966171168
      %v7171 = vunpack.c.0.s8 %v7170
      %v7172 = vlaneseq
      %v7173 = vshrl.u32 %v7172, 7
      %v7174 = vsub.s32 %v7171, %v7173
      %v7175 = vrot.slane %v7159, %v7174
      %v7177 = vunpack.c.l.s4 1966171168
      %v7178 = vunpack.c.0.s8 %v7177
      %v7179 = vlaneseq
      %v7180 = vshrl.u32 %v7179, 7
      %v7181 = vsub.s32 %v7178, %v7180
      %v7182 = vrot.slane %v7160, %v7181
      %v7184 = vunpack.c.l.s4 1966171168
      %v7185 = vunpack.c.0.s8 %v7184
      %v7186 = vlaneseq
      %v7187 = vshrl.u32 %v7186, 7
      %v7188 = vsub.s32 %v7185, %v7187
      %v7189 = vrot.slane %v7161, %v7188
      %v7190 = vcombine.high %v7168, %v7168
      %v7191 = vcombine.high %v7175, %v7175
      %v7192 = vcombine.high %v7182, %v7182
      %v7193 = vcombine.high %v7189, %v7189
      %v7194 = vcombine.high %v5929, %v5929
      %v7196 = vunpack.c.l.s4 1966171168
      %v7197 = vunpack.c.0.s8 %v7196
      %v7198 = vlaneseq
      %v7199 = vshrl.u32 %v7198, 7
      %v7200 = vsub.s32 %v7197, %v7199
      %v7201 = vrot.slane %v5929, %v7200
      %v7203 = vunpack.c.l.s4 1966171168
      %v7204 = vunpack.c.0.s8 %v7203
      %v7205 = vlaneseq
      %v7206 = vshrl.u32 %v7205, 7
      %v7207 = vsub.s32 %v7204, %v7206
      %v7208 = vrot.slane %v7194, %v7207
      %v7209 = vcombine.high %v7201, %v7201
      %v7210 = vcombine.high %v7208, %v7208
      %v7212 = vunpack.c.l.s4 1966171168
      %v7213 = vunpack.c.0.s8 %v7212
      %v7214 = vlaneseq
      %v7215 = vshrl.u32 %v7214, 7
      %v7216 = vsub.s32 %v7213, %v7215
      %v7217 = vrot.slane %v7201, %v7216
      %v7219 = vunpack.c.l.s4 1966171168
      %v7220 = vunpack.c.0.s8 %v7219
      %v7221 = vlaneseq
      %v7222 = vshrl.u32 %v7221, 7
      %v7223 = vsub.s32 %v7220, %v7222
      %v7224 = vrot.slane %v7208, %v7223
      %v7226 = vunpack.c.l.s4 1966171168
      %v7227 = vunpack.c.0.s8 %v7226
      %v7228 = vlaneseq
      %v7229 = vshrl.u32 %v7228, 7
      %v7230 = vsub.s32 %v7227, %v7229
      %v7231 = vrot.slane %v7209, %v7230
      %v7233 = vunpack.c.l.s4 1966171168
      %v7234 = vunpack.c.0.s8 %v7233
      %v7235 = vlaneseq
      %v7236 = vshrl.u32 %v7235, 7
      %v7237 = vsub.s32 %v7234, %v7236
      %v7238 = vrot.slane %v7210, %v7237
      %v7239 = vcombine.high %v7217, %v7217
      %v7240 = vcombine.high %v7224, %v7224
      %v7241 = vcombine.high %v7231, %v7231
      %v7242 = vcombine.high %v7238, %v7238
      %v7243 = vcombine.high %v5930, %v5930
      %v7245 = vunpack.c.l.s4 1966171168
      %v7246 = vunpack.c.0.s8 %v7245
      %v7247 = vlaneseq
      %v7248 = vshrl.u32 %v7247, 7
      %v7249 = vsub.s32 %v7246, %v7248
      %v7250 = vrot.slane %v5930, %v7249
      %v7252 = vunpack.c.l.s4 1966171168
      %v7253 = vunpack.c.0.s8 %v7252
      %v7254 = vlaneseq
      %v7255 = vshrl.u32 %v7254, 7
      %v7256 = vsub.s32 %v7253, %v7255
      %v7257 = vrot.slane %v7243, %v7256
      %v7258 = vcombine.high %v7250, %v7250
      %v7259 = vcombine.high %v7257, %v7257
      %v7261 = vunpack.c.l.s4 1966171168
      %v7262 = vunpack.c.0.s8 %v7261
      %v7263 = vlaneseq
      %v7264 = vshrl.u32 %v7263, 7
      %v7265 = vsub.s32 %v7262, %v7264
      %v7266 = vrot.slane %v7250, %v7265
      %v7268 = vunpack.c.l.s4 1966171168
      %v7269 = vunpack.c.0.s8 %v7268
      %v7270 = vlaneseq
      %v7271 = vshrl.u32 %v7270, 7
      %v7272 = vsub.s32 %v7269, %v7271
      %v7273 = vrot.slane %v7257, %v7272
      %v7275 = vunpack.c.l.s4 1966171168
      %v7276 = vunpack.c.0.s8 %v7275
      %v7277 = vlaneseq
      %v7278 = vshrl.u32 %v7277, 7
      %v7279 = vsub.s32 %v7276, %v7278
      %v7280 = vrot.slane %v7258, %v7279
      %v7282 = vunpack.c.l.s4 1966171168
      %v7283 = vunpack.c.0.s8 %v7282
      %v7284 = vlaneseq
      %v7285 = vshrl.u32 %v7284, 7
      %v7286 = vsub.s32 %v7283, %v7285
      %v7287 = vrot.slane %v7259, %v7286
      %v7288 = vcombine.high %v7266, %v7266
      %v7289 = vcombine.high %v7273, %v7273
      %v7290 = vcombine.high %v7280, %v7280
      %v7291 = vcombine.high %v7287, %v7287
      %v7292 = vcombine.high %v5931, %v5931
      %v7294 = vunpack.c.l.s4 1966171168
      %v7295 = vunpack.c.0.s8 %v7294
      %v7296 = vlaneseq
      %v7297 = vshrl.u32 %v7296, 7
      %v7298 = vsub.s32 %v7295, %v7297
      %v7299 = vrot.slane %v5931, %v7298
      %v7301 = vunpack.c.l.s4 1966171168
      %v7302 = vunpack.c.0.s8 %v7301
      %v7303 = vlaneseq
      %v7304 = vshrl.u32 %v7303, 7
      %v7305 = vsub.s32 %v7302, %v7304
      %v7306 = vrot.slane %v7292, %v7305
      %v7307 = vcombine.high %v7299, %v7299
      %v7308 = vcombine.high %v7306, %v7306
      %v7310 = vunpack.c.l.s4 1966171168
      %v7311 = vunpack.c.0.s8 %v7310
      %v7312 = vlaneseq
      %v7313 = vshrl.u32 %v7312, 7
      %v7314 = vsub.s32 %v7311, %v7313
      %v7315 = vrot.slane %v7299, %v7314
      %v7317 = vunpack.c.l.s4 1966171168
      %v7318 = vunpack.c.0.s8 %v7317
      %v7319 = vlaneseq
      %v7320 = vshrl.u32 %v7319, 7
      %v7321 = vsub.s32 %v7318, %v7320
      %v7322 = vrot.slane %v7306, %v7321
      %v7324 = vunpack.c.l.s4 1966171168
      %v7325 = vunpack.c.0.s8 %v7324
      %v7326 = vlaneseq
      %v7327 = vshrl.u32 %v7326, 7
      %v7328 = vsub.s32 %v7325, %v7327
      %v7329 = vrot.slane %v7307, %v7328
      %v7331 = vunpack.c.l.s4 1966171168
      %v7332 = vunpack.c.0.s8 %v7331
      %v7333 = vlaneseq
      %v7334 = vshrl.u32 %v7333, 7
      %v7335 = vsub.s32 %v7332, %v7334
      %v7336 = vrot.slane %v7308, %v7335
      %v7337 = vcombine.high %v7315, %v7315
      %v7338 = vcombine.high %v7322, %v7322
      %v7339 = vcombine.high %v7329, %v7329
      %v7340 = vcombine.high %v7336, %v7336
      %v7341 = vcombine.high %v5932, %v5932
      %v7343 = vunpack.c.l.s4 1966171168
      %v7344 = vunpack.c.0.s8 %v7343
      %v7345 = vlaneseq
      %v7346 = vshrl.u32 %v7345, 7
      %v7347 = vsub.s32 %v7344, %v7346
      %v7348 = vrot.slane %v5932, %v7347
      %v7350 = vunpack.c.l.s4 1966171168
      %v7351 = vunpack.c.0.s8 %v7350
      %v7352 = vlaneseq
      %v7353 = vshrl.u32 %v7352, 7
      %v7354 = vsub.s32 %v7351, %v7353
      %v7355 = vrot.slane %v7341, %v7354
      %v7356 = vcombine.high %v7348, %v7348
      %v7357 = vcombine.high %v7355, %v7355
      %v7359 = vunpack.c.l.s4 1966171168
      %v7360 = vunpack.c.0.s8 %v7359
      %v7361 = vlaneseq
      %v7362 = vshrl.u32 %v7361, 7
      %v7363 = vsub.s32 %v7360, %v7362
      %v7364 = vrot.slane %v7348, %v7363
      %v7366 = vunpack.c.l.s4 1966171168
      %v7367 = vunpack.c.0.s8 %v7366
      %v7368 = vlaneseq
      %v7369 = vshrl.u32 %v7368, 7
      %v7370 = vsub.s32 %v7367, %v7369
      %v7371 = vrot.slane %v7355, %v7370
      %v7373 = vunpack.c.l.s4 1966171168
      %v7374 = vunpack.c.0.s8 %v7373
      %v7375 = vlaneseq
      %v7376 = vshrl.u32 %v7375, 7
      %v7377 = vsub.s32 %v7374, %v7376
      %v7378 = vrot.slane %v7356, %v7377
      %v7380 = vunpack.c.l.s4 1966171168
      %v7381 = vunpack.c.0.s8 %v7380
      %v7382 = vlaneseq
      %v7383 = vshrl.u32 %v7382, 7
      %v7384 = vsub.s32 %v7381, %v7383
      %v7385 = vrot.slane %v7357, %v7384
      %v7386 = vcombine.high %v7364, %v7364
      %v7387 = vcombine.high %v7371, %v7371
      %v7388 = vcombine.high %v7378, %v7378
      %v7389 = vcombine.high %v7385, %v7385
      %v7534 = vcombine.high %v6574, %v6574
      %v7536 = vunpack.c.l.s4 1966171168
      %v7537 = vunpack.c.0.s8 %v7536
      %v7538 = vlaneseq
      %v7539 = vshrl.u32 %v7538, 7
      %v7540 = vsub.s32 %v7537, %v7539
      %v7541 = vrot.slane %v6574, %v7540
      %v7543 = vunpack.c.l.s4 1966171168
      %v7544 = vunpack.c.0.s8 %v7543
      %v7545 = vlaneseq
      %v7546 = vshrl.u32 %v7545, 7
      %v7547 = vsub.s32 %v7544, %v7546
      %v7548 = vrot.slane %v7534, %v7547
      %v7549 = vcombine.high %v7541, %v7541
      %v7550 = vcombine.high %v7548, %v7548
      %v7552 = vunpack.c.l.s4 1966171168
      %v7553 = vunpack.c.0.s8 %v7552
      %v7554 = vlaneseq
      %v7555 = vshrl.u32 %v7554, 7
      %v7556 = vsub.s32 %v7553, %v7555
      %v7557 = vrot.slane %v7541, %v7556
      %v7559 = vunpack.c.l.s4 1966171168
      %v7560 = vunpack.c.0.s8 %v7559
      %v7561 = vlaneseq
      %v7562 = vshrl.u32 %v7561, 7
      %v7563 = vsub.s32 %v7560, %v7562
      %v7564 = vrot.slane %v7548, %v7563
      %v7566 = vunpack.c.l.s4 1966171168
      %v7567 = vunpack.c.0.s8 %v7566
      %v7568 = vlaneseq
      %v7569 = vshrl.u32 %v7568, 7
      %v7570 = vsub.s32 %v7567, %v7569
      %v7571 = vrot.slane %v7549, %v7570
      %v7573 = vunpack.c.l.s4 1966171168
      %v7574 = vunpack.c.0.s8 %v7573
      %v7575 = vlaneseq
      %v7576 = vshrl.u32 %v7575, 7
      %v7577 = vsub.s32 %v7574, %v7576
      %v7578 = vrot.slane %v7550, %v7577
      %v7579 = vcombine.high %v7557, %v7557
      %v7580 = vcombine.high %v7564, %v7564
      %v7581 = vcombine.high %v7571, %v7571
      %v7582 = vcombine.high %v7578, %v7578
      %v7583 = vcombine.high %v6575, %v6575
      %v7585 = vunpack.c.l.s4 1966171168
      %v7586 = vunpack.c.0.s8 %v7585
      %v7587 = vlaneseq
      %v7588 = vshrl.u32 %v7587, 7
      %v7589 = vsub.s32 %v7586, %v7588
      %v7590 = vrot.slane %v6575, %v7589
      %v7592 = vunpack.c.l.s4 1966171168
      %v7593 = vunpack.c.0.s8 %v7592
      %v7594 = vlaneseq
      %v7595 = vshrl.u32 %v7594, 7
      %v7596 = vsub.s32 %v7593, %v7595
      %v7597 = vrot.slane %v7583, %v7596
      %v7598 = vcombine.high %v7590, %v7590
      %v7599 = vcombine.high %v7597, %v7597
      %v7601 = vunpack.c.l.s4 1966171168
      %v7602 = vunpack.c.0.s8 %v7601
      %v7603 = vlaneseq
      %v7604 = vshrl.u32 %v7603, 7
      %v7605 = vsub.s32 %v7602, %v7604
      %v7606 = vrot.slane %v7590, %v7605
      %v7608 = vunpack.c.l.s4 1966171168
      %v7609 = vunpack.c.0.s8 %v7608
      %v7610 = vlaneseq
      %v7611 = vshrl.u32 %v7610, 7
      %v7612 = vsub.s32 %v7609, %v7611
      %v7613 = vrot.slane %v7597, %v7612
      %v7615 = vunpack.c.l.s4 1966171168
      %v7616 = vunpack.c.0.s8 %v7615
      %v7617 = vlaneseq
      %v7618 = vshrl.u32 %v7617, 7
      %v7619 = vsub.s32 %v7616, %v7618
      %v7620 = vrot.slane %v7598, %v7619
      %v7622 = vunpack.c.l.s4 1966171168
      %v7623 = vunpack.c.0.s8 %v7622
      %v7624 = vlaneseq
      %v7625 = vshrl.u32 %v7624, 7
      %v7626 = vsub.s32 %v7623, %v7625
      %v7627 = vrot.slane %v7599, %v7626
      %v7628 = vcombine.high %v7606, %v7606
      %v7629 = vcombine.high %v7613, %v7613
      %v7630 = vcombine.high %v7620, %v7620
      %v7631 = vcombine.high %v7627, %v7627
      %v7632 = vcombine.high %v6576, %v6576
      %v7634 = vunpack.c.l.s4 1966171168
      %v7635 = vunpack.c.0.s8 %v7634
      %v7636 = vlaneseq
      %v7637 = vshrl.u32 %v7636, 7
      %v7638 = vsub.s32 %v7635, %v7637
      %v7639 = vrot.slane %v6576, %v7638
      %v7641 = vunpack.c.l.s4 1966171168
      %v7642 = vunpack.c.0.s8 %v7641
      %v7643 = vlaneseq
      %v7644 = vshrl.u32 %v7643, 7
      %v7645 = vsub.s32 %v7642, %v7644
      %v7646 = vrot.slane %v7632, %v7645
      %v7647 = vcombine.high %v7639, %v7639
      %v7648 = vcombine.high %v7646, %v7646
      %v7650 = vunpack.c.l.s4 1966171168
      %v7651 = vunpack.c.0.s8 %v7650
      %v7652 = vlaneseq
      %v7653 = vshrl.u32 %v7652, 7
      %v7654 = vsub.s32 %v7651, %v7653
      %v7655 = vrot.slane %v7639, %v7654
      %v7657 = vunpack.c.l.s4 1966171168
      %v7658 = vunpack.c.0.s8 %v7657
      %v7659 = vlaneseq
      %v7660 = vshrl.u32 %v7659, 7
      %v7661 = vsub.s32 %v7658, %v7660
      %v7662 = vrot.slane %v7646, %v7661
      %v7664 = vunpack.c.l.s4 1966171168
      %v7665 = vunpack.c.0.s8 %v7664
      %v7666 = vlaneseq
      %v7667 = vshrl.u32 %v7666, 7
      %v7668 = vsub.s32 %v7665, %v7667
      %v7669 = vrot.slane %v7647, %v7668
      %v7671 = vunpack.c.l.s4 1966171168
      %v7672 = vunpack.c.0.s8 %v7671
      %v7673 = vlaneseq
      %v7674 = vshrl.u32 %v7673, 7
      %v7675 = vsub.s32 %v7672, %v7674
      %v7676 = vrot.slane %v7648, %v7675
      %v7677 = vcombine.high %v7655, %v7655
      %v7678 = vcombine.high %v7662, %v7662
      %v7679 = vcombine.high %v7669, %v7669
      %v7680 = vcombine.high %v7676, %v7676
      %v7681 = vcombine.high %v6577, %v6577
      %v7683 = vunpack.c.l.s4 1966171168
      %v7684 = vunpack.c.0.s8 %v7683
      %v7685 = vlaneseq
      %v7686 = vshrl.u32 %v7685, 7
      %v7687 = vsub.s32 %v7684, %v7686
      %v7688 = vrot.slane %v6577, %v7687
      %v7690 = vunpack.c.l.s4 1966171168
      %v7691 = vunpack.c.0.s8 %v7690
      %v7692 = vlaneseq
      %v7693 = vshrl.u32 %v7692, 7
      %v7694 = vsub.s32 %v7691, %v7693
      %v7695 = vrot.slane %v7681, %v7694
      %v7696 = vcombine.high %v7688, %v7688
      %v7697 = vcombine.high %v7695, %v7695
      %v7699 = vunpack.c.l.s4 1966171168
      %v7700 = vunpack.c.0.s8 %v7699
      %v7701 = vlaneseq
      %v7702 = vshrl.u32 %v7701, 7
      %v7703 = vsub.s32 %v7700, %v7702
      %v7704 = vrot.slane %v7688, %v7703
      %v7706 = vunpack.c.l.s4 1966171168
      %v7707 = vunpack.c.0.s8 %v7706
      %v7708 = vlaneseq
      %v7709 = vshrl.u32 %v7708, 7
      %v7710 = vsub.s32 %v7707, %v7709
      %v7711 = vrot.slane %v7695, %v7710
      %v7713 = vunpack.c.l.s4 1966171168
      %v7714 = vunpack.c.0.s8 %v7713
      %v7715 = vlaneseq
      %v7716 = vshrl.u32 %v7715, 7
      %v7717 = vsub.s32 %v7714, %v7716
      %v7718 = vrot.slane %v7696, %v7717
      %v7720 = vunpack.c.l.s4 1966171168
      %v7721 = vunpack.c.0.s8 %v7720
      %v7722 = vlaneseq
      %v7723 = vshrl.u32 %v7722, 7
      %v7724 = vsub.s32 %v7721, %v7723
      %v7725 = vrot.slane %v7697, %v7724
      %v7726 = vcombine.high %v7704, %v7704
      %v7727 = vcombine.high %v7711, %v7711
      %v7728 = vcombine.high %v7718, %v7718
      %v7729 = vcombine.high %v7725, %v7725
      %v7730 = vcombine.high %v6578, %v6578
      %v7732 = vunpack.c.l.s4 1966171168
      %v7733 = vunpack.c.0.s8 %v7732
      %v7734 = vlaneseq
      %v7735 = vshrl.u32 %v7734, 7
      %v7736 = vsub.s32 %v7733, %v7735
      %v7737 = vrot.slane %v6578, %v7736
      %v7739 = vunpack.c.l.s4 1966171168
      %v7740 = vunpack.c.0.s8 %v7739
      %v7741 = vlaneseq
      %v7742 = vshrl.u32 %v7741, 7
      %v7743 = vsub.s32 %v7740, %v7742
      %v7744 = vrot.slane %v7730, %v7743
      %v7745 = vcombine.high %v7737, %v7737
      %v7746 = vcombine.high %v7744, %v7744
      %v7748 = vunpack.c.l.s4 1966171168
      %v7749 = vunpack.c.0.s8 %v7748
      %v7750 = vlaneseq
      %v7751 = vshrl.u32 %v7750, 7
      %v7752 = vsub.s32 %v7749, %v7751
      %v7753 = vrot.slane %v7737, %v7752
      %v7755 = vunpack.c.l.s4 1966171168
      %v7756 = vunpack.c.0.s8 %v7755
      %v7757 = vlaneseq
      %v7758 = vshrl.u32 %v7757, 7
      %v7759 = vsub.s32 %v7756, %v7758
      %v7760 = vrot.slane %v7744, %v7759
      %v7762 = vunpack.c.l.s4 1966171168
      %v7763 = vunpack.c.0.s8 %v7762
      %v7764 = vlaneseq
      %v7765 = vshrl.u32 %v7764, 7
      %v7766 = vsub.s32 %v7763, %v7765
      %v7767 = vrot.slane %v7745, %v7766
      %v7769 = vunpack.c.l.s4 1966171168
      %v7770 = vunpack.c.0.s8 %v7769
      %v7771 = vlaneseq
      %v7772 = vshrl.u32 %v7771, 7
      %v7773 = vsub.s32 %v7770, %v7772
      %v7774 = vrot.slane %v7746, %v7773
      %v7775 = vcombine.high %v7753, %v7753
      %v7776 = vcombine.high %v7760, %v7760
      %v7777 = vcombine.high %v7767, %v7767
      %v7778 = vcombine.high %v7774, %v7774
      %v7779 = vcombine.high %v6579, %v6579
      %v7781 = vunpack.c.l.s4 1966171168
      %v7782 = vunpack.c.0.s8 %v7781
      %v7783 = vlaneseq
      %v7784 = vshrl.u32 %v7783, 7
      %v7785 = vsub.s32 %v7782, %v7784
      %v7786 = vrot.slane %v6579, %v7785
      %v7788 = vunpack.c.l.s4 1966171168
      %v7789 = vunpack.c.0.s8 %v7788
      %v7790 = vlaneseq
      %v7791 = vshrl.u32 %v7790, 7
      %v7792 = vsub.s32 %v7789, %v7791
      %v7793 = vrot.slane %v7779, %v7792
      %v7794 = vcombine.high %v7786, %v7786
      %v7795 = vcombine.high %v7793, %v7793
      %v7797 = vunpack.c.l.s4 1966171168
      %v7798 = vunpack.c.0.s8 %v7797
      %v7799 = vlaneseq
      %v7800 = vshrl.u32 %v7799, 7
      %v7801 = vsub.s32 %v7798, %v7800
      %v7802 = vrot.slane %v7786, %v7801
      %v7804 = vunpack.c.l.s4 1966171168
      %v7805 = vunpack.c.0.s8 %v7804
      %v7806 = vlaneseq
      %v7807 = vshrl.u32 %v7806, 7
      %v7808 = vsub.s32 %v7805, %v7807
      %v7809 = vrot.slane %v7793, %v7808
      %v7811 = vunpack.c.l.s4 1966171168
      %v7812 = vunpack.c.0.s8 %v7811
      %v7813 = vlaneseq
      %v7814 = vshrl.u32 %v7813, 7
      %v7815 = vsub.s32 %v7812, %v7814
      %v7816 = vrot.slane %v7794, %v7815
      %v7818 = vunpack.c.l.s4 1966171168
      %v7819 = vunpack.c.0.s8 %v7818
      %v7820 = vlaneseq
      %v7821 = vshrl.u32 %v7820, 7
      %v7822 = vsub.s32 %v7819, %v7821
      %v7823 = vrot.slane %v7795, %v7822
      %v7824 = vcombine.high %v7802, %v7802
      %v7825 = vcombine.high %v7809, %v7809
      %v7826 = vcombine.high %v7816, %v7816
      %v7827 = vcombine.high %v7823, %v7823
      %v7828 = vcombine.high %v6580, %v6580
      %v7830 = vunpack.c.l.s4 1966171168
      %v7831 = vunpack.c.0.s8 %v7830
      %v7832 = vlaneseq
      %v7833 = vshrl.u32 %v7832, 7
      %v7834 = vsub.s32 %v7831, %v7833
      %v7835 = vrot.slane %v6580, %v7834
      %v7837 = vunpack.c.l.s4 1966171168
      %v7838 = vunpack.c.0.s8 %v7837
      %v7839 = vlaneseq
      %v7840 = vshrl.u32 %v7839, 7
      %v7841 = vsub.s32 %v7838, %v7840
      %v7842 = vrot.slane %v7828, %v7841
      %v7843 = vcombine.high %v7835, %v7835
      %v7844 = vcombine.high %v7842, %v7842
      %v7846 = vunpack.c.l.s4 1966171168
      %v7847 = vunpack.c.0.s8 %v7846
      %v7848 = vlaneseq
      %v7849 = vshrl.u32 %v7848, 7
      %v7850 = vsub.s32 %v7847, %v7849
      %v7851 = vrot.slane %v7835, %v7850
      %v7853 = vunpack.c.l.s4 1966171168
      %v7854 = vunpack.c.0.s8 %v7853
      %v7855 = vlaneseq
      %v7856 = vshrl.u32 %v7855, 7
      %v7857 = vsub.s32 %v7854, %v7856
      %v7858 = vrot.slane %v7842, %v7857
      %v7860 = vunpack.c.l.s4 1966171168
      %v7861 = vunpack.c.0.s8 %v7860
      %v7862 = vlaneseq
      %v7863 = vshrl.u32 %v7862, 7
      %v7864 = vsub.s32 %v7861, %v7863
      %v7865 = vrot.slane %v7843, %v7864
      %v7867 = vunpack.c.l.s4 1966171168
      %v7868 = vunpack.c.0.s8 %v7867
      %v7869 = vlaneseq
      %v7870 = vshrl.u32 %v7869, 7
      %v7871 = vsub.s32 %v7868, %v7870
      %v7872 = vrot.slane %v7844, %v7871
      %v7873 = vcombine.high %v7851, %v7851
      %v7874 = vcombine.high %v7858, %v7858
      %v7875 = vcombine.high %v7865, %v7865
      %v7876 = vcombine.high %v7872, %v7872
      %v7877 = vcombine.high %v6581, %v6581
      %v7879 = vunpack.c.l.s4 1966171168
      %v7880 = vunpack.c.0.s8 %v7879
      %v7881 = vlaneseq
      %v7882 = vshrl.u32 %v7881, 7
      %v7883 = vsub.s32 %v7880, %v7882
      %v7884 = vrot.slane %v6581, %v7883
      %v7886 = vunpack.c.l.s4 1966171168
      %v7887 = vunpack.c.0.s8 %v7886
      %v7888 = vlaneseq
      %v7889 = vshrl.u32 %v7888, 7
      %v7890 = vsub.s32 %v7887, %v7889
      %v7891 = vrot.slane %v7877, %v7890
      %v7892 = vcombine.high %v7884, %v7884
      %v7893 = vcombine.high %v7891, %v7891
      %v7895 = vunpack.c.l.s4 1966171168
      %v7896 = vunpack.c.0.s8 %v7895
      %v7897 = vlaneseq
      %v7898 = vshrl.u32 %v7897, 7
      %v7899 = vsub.s32 %v7896, %v7898
      %v7900 = vrot.slane %v7884, %v7899
      %v7902 = vunpack.c.l.s4 1966171168
      %v7903 = vunpack.c.0.s8 %v7902
      %v7904 = vlaneseq
      %v7905 = vshrl.u32 %v7904, 7
      %v7906 = vsub.s32 %v7903, %v7905
      %v7907 = vrot.slane %v7891, %v7906
      %v7909 = vunpack.c.l.s4 1966171168
      %v7910 = vunpack.c.0.s8 %v7909
      %v7911 = vlaneseq
      %v7912 = vshrl.u32 %v7911, 7
      %v7913 = vsub.s32 %v7910, %v7912
      %v7914 = vrot.slane %v7892, %v7913
      %v7916 = vunpack.c.l.s4 1966171168
      %v7917 = vunpack.c.0.s8 %v7916
      %v7918 = vlaneseq
      %v7919 = vshrl.u32 %v7918, 7
      %v7920 = vsub.s32 %v7917, %v7919
      %v7921 = vrot.slane %v7893, %v7920
      %v7922 = vcombine.high %v7900, %v7900
      %v7923 = vcombine.high %v7907, %v7907
      %v7924 = vcombine.high %v7914, %v7914
      %v7925 = vcombine.high %v7921, %v7921
      %v7926 = vcombine.high %v6582, %v6582
      %v7928 = vunpack.c.l.s4 1966171168
      %v7929 = vunpack.c.0.s8 %v7928
      %v7930 = vlaneseq
      %v7931 = vshrl.u32 %v7930, 7
      %v7932 = vsub.s32 %v7929, %v7931
      %v7933 = vrot.slane %v6582, %v7932
      %v7935 = vunpack.c.l.s4 1966171168
      %v7936 = vunpack.c.0.s8 %v7935
      %v7937 = vlaneseq
      %v7938 = vshrl.u32 %v7937, 7
      %v7939 = vsub.s32 %v7936, %v7938
      %v7940 = vrot.slane %v7926, %v7939
      %v7941 = vcombine.high %v7933, %v7933
      %v7942 = vcombine.high %v7940, %v7940
      %v7944 = vunpack.c.l.s4 1966171168
      %v7945 = vunpack.c.0.s8 %v7944
      %v7946 = vlaneseq
      %v7947 = vshrl.u32 %v7946, 7
      %v7948 = vsub.s32 %v7945, %v7947
      %v7949 = vrot.slane %v7933, %v7948
      %v7951 = vunpack.c.l.s4 1966171168
      %v7952 = vunpack.c.0.s8 %v7951
      %v7953 = vlaneseq
      %v7954 = vshrl.u32 %v7953, 7
      %v7955 = vsub.s32 %v7952, %v7954
      %v7956 = vrot.slane %v7940, %v7955
      %v7958 = vunpack.c.l.s4 1966171168
      %v7959 = vunpack.c.0.s8 %v7958
      %v7960 = vlaneseq
      %v7961 = vshrl.u32 %v7960, 7
      %v7962 = vsub.s32 %v7959, %v7961
      %v7963 = vrot.slane %v7941, %v7962
      %v7965 = vunpack.c.l.s4 1966171168
      %v7966 = vunpack.c.0.s8 %v7965
      %v7967 = vlaneseq
      %v7968 = vshrl.u32 %v7967, 7
      %v7969 = vsub.s32 %v7966, %v7968
      %v7970 = vrot.slane %v7942, %v7969
      %v7971 = vcombine.high %v7949, %v7949
      %v7972 = vcombine.high %v7956, %v7956
      %v7973 = vcombine.high %v7963, %v7963
      %v7974 = vcombine.high %v7970, %v7970
      %v7975 = vcombine.high %v6583, %v6583
      %v7977 = vunpack.c.l.s4 1966171168
      %v7978 = vunpack.c.0.s8 %v7977
      %v7979 = vlaneseq
      %v7980 = vshrl.u32 %v7979, 7
      %v7981 = vsub.s32 %v7978, %v7980
      %v7982 = vrot.slane %v6583, %v7981
      %v7984 = vunpack.c.l.s4 1966171168
      %v7985 = vunpack.c.0.s8 %v7984
      %v7986 = vlaneseq
      %v7987 = vshrl.u32 %v7986, 7
      %v7988 = vsub.s32 %v7985, %v7987
      %v7989 = vrot.slane %v7975, %v7988
      %v7990 = vcombine.high %v7982, %v7982
      %v7991 = vcombine.high %v7989, %v7989
      %v7993 = vunpack.c.l.s4 1966171168
      %v7994 = vunpack.c.0.s8 %v7993
      %v7995 = vlaneseq
      %v7996 = vshrl.u32 %v7995, 7
      %v7997 = vsub.s32 %v7994, %v7996
      %v7998 = vrot.slane %v7982, %v7997
      %v8000 = vunpack.c.l.s4 1966171168
      %v8001 = vunpack.c.0.s8 %v8000
      %v8002 = vlaneseq
      %v8003 = vshrl.u32 %v8002, 7
      %v8004 = vsub.s32 %v8001, %v8003
      %v8005 = vrot.slane %v7989, %v8004
      %v8007 = vunpack.c.l.s4 1966171168
      %v8008 = vunpack.c.0.s8 %v8007
      %v8009 = vlaneseq
      %v8010 = vshrl.u32 %v8009, 7
      %v8011 = vsub.s32 %v8008, %v8010
      %v8012 = vrot.slane %v7990, %v8011
      %v8014 = vunpack.c.l.s4 1966171168
      %v8015 = vunpack.c.0.s8 %v8014
      %v8016 = vlaneseq
      %v8017 = vshrl.u32 %v8016, 7
      %v8018 = vsub.s32 %v8015, %v8017
      %v8019 = vrot.slane %v7991, %v8018
      %v8020 = vcombine.high %v7998, %v7998
      %v8021 = vcombine.high %v8005, %v8005
      %v8022 = vcombine.high %v8012, %v8012
      %v8023 = vcombine.high %v8019, %v8019
      %v8024 = vcombine.high %v6584, %v6584
      %v8026 = vunpack.c.l.s4 1966171168
      %v8027 = vunpack.c.0.s8 %v8026
      %v8028 = vlaneseq
      %v8029 = vshrl.u32 %v8028, 7
      %v8030 = vsub.s32 %v8027, %v8029
      %v8031 = vrot.slane %v6584, %v8030
      %v8033 = vunpack.c.l.s4 1966171168
      %v8034 = vunpack.c.0.s8 %v8033
      %v8035 = vlaneseq
      %v8036 = vshrl.u32 %v8035, 7
      %v8037 = vsub.s32 %v8034, %v8036
      %v8038 = vrot.slane %v8024, %v8037
      %v8039 = vcombine.high %v8031, %v8031
      %v8040 = vcombine.high %v8038, %v8038
      %v8042 = vunpack.c.l.s4 1966171168
      %v8043 = vunpack.c.0.s8 %v8042
      %v8044 = vlaneseq
      %v8045 = vshrl.u32 %v8044, 7
      %v8046 = vsub.s32 %v8043, %v8045
      %v8047 = vrot.slane %v8031, %v8046
      %v8049 = vunpack.c.l.s4 1966171168
      %v8050 = vunpack.c.0.s8 %v8049
      %v8051 = vlaneseq
      %v8052 = vshrl.u32 %v8051, 7
      %v8053 = vsub.s32 %v8050, %v8052
      %v8054 = vrot.slane %v8038, %v8053
      %v8056 = vunpack.c.l.s4 1966171168
      %v8057 = vunpack.c.0.s8 %v8056
      %v8058 = vlaneseq
      %v8059 = vshrl.u32 %v8058, 7
      %v8060 = vsub.s32 %v8057, %v8059
      %v8061 = vrot.slane %v8039, %v8060
      %v8063 = vunpack.c.l.s4 1966171168
      %v8064 = vunpack.c.0.s8 %v8063
      %v8065 = vlaneseq
      %v8066 = vshrl.u32 %v8065, 7
      %v8067 = vsub.s32 %v8064, %v8066
      %v8068 = vrot.slane %v8040, %v8067
      %v8069 = vcombine.high %v8047, %v8047
      %v8070 = vcombine.high %v8054, %v8054
      %v8071 = vcombine.high %v8061, %v8061
      %v8072 = vcombine.high %v8068, %v8068
      %v8073 = vcombine.high %v6585, %v6585
      %v8075 = vunpack.c.l.s4 1966171168
      %v8076 = vunpack.c.0.s8 %v8075
      %v8077 = vlaneseq
      %v8078 = vshrl.u32 %v8077, 7
      %v8079 = vsub.s32 %v8076, %v8078
      %v8080 = vrot.slane %v6585, %v8079
      %v8082 = vunpack.c.l.s4 1966171168
      %v8083 = vunpack.c.0.s8 %v8082
      %v8084 = vlaneseq
      %v8085 = vshrl.u32 %v8084, 7
      %v8086 = vsub.s32 %v8083, %v8085
      %v8087 = vrot.slane %v8073, %v8086
      %v8088 = vcombine.high %v8080, %v8080
      %v8089 = vcombine.high %v8087, %v8087
      %v8091 = vunpack.c.l.s4 1966171168
      %v8092 = vunpack.c.0.s8 %v8091
      %v8093 = vlaneseq
      %v8094 = vshrl.u32 %v8093, 7
      %v8095 = vsub.s32 %v8092, %v8094
      %v8096 = vrot.slane %v8080, %v8095
      %v8098 = vunpack.c.l.s4 1966171168
      %v8099 = vunpack.c.0.s8 %v8098
      %v8100 = vlaneseq
      %v8101 = vshrl.u32 %v8100, 7
      %v8102 = vsub.s32 %v8099, %v8101
      %v8103 = vrot.slane %v8087, %v8102
      %v8105 = vunpack.c.l.s4 1966171168
      %v8106 = vunpack.c.0.s8 %v8105
      %v8107 = vlaneseq
      %v8108 = vshrl.u32 %v8107, 7
      %v8109 = vsub.s32 %v8106, %v8108
      %v8110 = vrot.slane %v8088, %v8109
      %v8112 = vunpack.c.l.s4 1966171168
      %v8113 = vunpack.c.0.s8 %v8112
      %v8114 = vlaneseq
      %v8115 = vshrl.u32 %v8114, 7
      %v8116 = vsub.s32 %v8113, %v8115
      %v8117 = vrot.slane %v8089, %v8116
      %v8118 = vcombine.high %v8096, %v8096
      %v8119 = vcombine.high %v8103, %v8103
      %v8120 = vcombine.high %v8110, %v8110
      %v8121 = vcombine.high %v8117, %v8117
      %v8122 = vcombine.high %v6586, %v6586
      %v8124 = vunpack.c.l.s4 1966171168
      %v8125 = vunpack.c.0.s8 %v8124
      %v8126 = vlaneseq
      %v8127 = vshrl.u32 %v8126, 7
      %v8128 = vsub.s32 %v8125, %v8127
      %v8129 = vrot.slane %v6586, %v8128
      %v8131 = vunpack.c.l.s4 1966171168
      %v8132 = vunpack.c.0.s8 %v8131
      %v8133 = vlaneseq
      %v8134 = vshrl.u32 %v8133, 7
      %v8135 = vsub.s32 %v8132, %v8134
      %v8136 = vrot.slane %v8122, %v8135
      %v8137 = vcombine.high %v8129, %v8129
      %v8138 = vcombine.high %v8136, %v8136
      %v8140 = vunpack.c.l.s4 1966171168
      %v8141 = vunpack.c.0.s8 %v8140
      %v8142 = vlaneseq
      %v8143 = vshrl.u32 %v8142, 7
      %v8144 = vsub.s32 %v8141, %v8143
      %v8145 = vrot.slane %v8129, %v8144
      %v8147 = vunpack.c.l.s4 1966171168
      %v8148 = vunpack.c.0.s8 %v8147
      %v8149 = vlaneseq
      %v8150 = vshrl.u32 %v8149, 7
      %v8151 = vsub.s32 %v8148, %v8150
      %v8152 = vrot.slane %v8136, %v8151
      %v8154 = vunpack.c.l.s4 1966171168
      %v8155 = vunpack.c.0.s8 %v8154
      %v8156 = vlaneseq
      %v8157 = vshrl.u32 %v8156, 7
      %v8158 = vsub.s32 %v8155, %v8157
      %v8159 = vrot.slane %v8137, %v8158
      %v8161 = vunpack.c.l.s4 1966171168
      %v8162 = vunpack.c.0.s8 %v8161
      %v8163 = vlaneseq
      %v8164 = vshrl.u32 %v8163, 7
      %v8165 = vsub.s32 %v8162, %v8164
      %v8166 = vrot.slane %v8138, %v8165
      %v8167 = vcombine.high %v8145, %v8145
      %v8168 = vcombine.high %v8152, %v8152
      %v8169 = vcombine.high %v8159, %v8159
      %v8170 = vcombine.high %v8166, %v8166
      %v8171 = vcombine.high %v6587, %v6587
      %v8173 = vunpack.c.l.s4 1966171168
      %v8174 = vunpack.c.0.s8 %v8173
      %v8175 = vlaneseq
      %v8176 = vshrl.u32 %v8175, 7
      %v8177 = vsub.s32 %v8174, %v8176
      %v8178 = vrot.slane %v6587, %v8177
      %v8180 = vunpack.c.l.s4 1966171168
      %v8181 = vunpack.c.0.s8 %v8180
      %v8182 = vlaneseq
      %v8183 = vshrl.u32 %v8182, 7
      %v8184 = vsub.s32 %v8181, %v8183
      %v8185 = vrot.slane %v8171, %v8184
      %v8186 = vcombine.high %v8178, %v8178
      %v8187 = vcombine.high %v8185, %v8185
      %v8189 = vunpack.c.l.s4 1966171168
      %v8190 = vunpack.c.0.s8 %v8189
      %v8191 = vlaneseq
      %v8192 = vshrl.u32 %v8191, 7
      %v8193 = vsub.s32 %v8190, %v8192
      %v8194 = vrot.slane %v8178, %v8193
      %v8196 = vunpack.c.l.s4 1966171168
      %v8197 = vunpack.c.0.s8 %v8196
      %v8198 = vlaneseq
      %v8199 = vshrl.u32 %v8198, 7
      %v8200 = vsub.s32 %v8197, %v8199
      %v8201 = vrot.slane %v8185, %v8200
      %v8203 = vunpack.c.l.s4 1966171168
      %v8204 = vunpack.c.0.s8 %v8203
      %v8205 = vlaneseq
      %v8206 = vshrl.u32 %v8205, 7
      %v8207 = vsub.s32 %v8204, %v8206
      %v8208 = vrot.slane %v8186, %v8207
      %v8210 = vunpack.c.l.s4 1966171168
      %v8211 = vunpack.c.0.s8 %v8210
      %v8212 = vlaneseq
      %v8213 = vshrl.u32 %v8212, 7
      %v8214 = vsub.s32 %v8211, %v8213
      %v8215 = vrot.slane %v8187, %v8214
      %v8216 = vcombine.high %v8194, %v8194
      %v8217 = vcombine.high %v8201, %v8201
      %v8218 = vcombine.high %v8208, %v8208
      %v8219 = vcombine.high %v8215, %v8215
      %v8220 = vcombine.high %v6588, %v6588
      %v8222 = vunpack.c.l.s4 1966171168
      %v8223 = vunpack.c.0.s8 %v8222
      %v8224 = vlaneseq
      %v8225 = vshrl.u32 %v8224, 7
      %v8226 = vsub.s32 %v8223, %v8225
      %v8227 = vrot.slane %v6588, %v8226
      %v8229 = vunpack.c.l.s4 1966171168
      %v8230 = vunpack.c.0.s8 %v8229
      %v8231 = vlaneseq
      %v8232 = vshrl.u32 %v8231, 7
      %v8233 = vsub.s32 %v8230, %v8232
      %v8234 = vrot.slane %v8220, %v8233
      %v8235 = vcombine.high %v8227, %v8227
      %v8236 = vcombine.high %v8234, %v8234
      %v8238 = vunpack.c.l.s4 1966171168
      %v8239 = vunpack.c.0.s8 %v8238
      %v8240 = vlaneseq
      %v8241 = vshrl.u32 %v8240, 7
      %v8242 = vsub.s32 %v8239, %v8241
      %v8243 = vrot.slane %v8227, %v8242
      %v8245 = vunpack.c.l.s4 1966171168
      %v8246 = vunpack.c.0.s8 %v8245
      %v8247 = vlaneseq
      %v8248 = vshrl.u32 %v8247, 7
      %v8249 = vsub.s32 %v8246, %v8248
      %v8250 = vrot.slane %v8234, %v8249
      %v8252 = vunpack.c.l.s4 1966171168
      %v8253 = vunpack.c.0.s8 %v8252
      %v8254 = vlaneseq
      %v8255 = vshrl.u32 %v8254, 7
      %v8256 = vsub.s32 %v8253, %v8255
      %v8257 = vrot.slane %v8235, %v8256
      %v8259 = vunpack.c.l.s4 1966171168
      %v8260 = vunpack.c.0.s8 %v8259
      %v8261 = vlaneseq
      %v8262 = vshrl.u32 %v8261, 7
      %v8263 = vsub.s32 %v8260, %v8262
      %v8264 = vrot.slane %v8236, %v8263
      %v8265 = vcombine.high %v8243, %v8243
      %v8266 = vcombine.high %v8250, %v8250
      %v8267 = vcombine.high %v8257, %v8257
      %v8268 = vcombine.high %v8264, %v8264
      %v8269 = vcombine.high %v6589, %v6589
      %v8271 = vunpack.c.l.s4 1966171168
      %v8272 = vunpack.c.0.s8 %v8271
      %v8273 = vlaneseq
      %v8274 = vshrl.u32 %v8273, 7
      %v8275 = vsub.s32 %v8272, %v8274
      %v8276 = vrot.slane %v6589, %v8275
      %v8278 = vunpack.c.l.s4 1966171168
      %v8279 = vunpack.c.0.s8 %v8278
      %v8280 = vlaneseq
      %v8281 = vshrl.u32 %v8280, 7
      %v8282 = vsub.s32 %v8279, %v8281
      %v8283 = vrot.slane %v8269, %v8282
      %v8284 = vcombine.high %v8276, %v8276
      %v8285 = vcombine.high %v8283, %v8283
      %v8287 = vunpack.c.l.s4 1966171168
      %v8288 = vunpack.c.0.s8 %v8287
      %v8289 = vlaneseq
      %v8290 = vshrl.u32 %v8289, 7
      %v8291 = vsub.s32 %v8288, %v8290
      %v8292 = vrot.slane %v8276, %v8291
      %v8294 = vunpack.c.l.s4 1966171168
      %v8295 = vunpack.c.0.s8 %v8294
      %v8296 = vlaneseq
      %v8297 = vshrl.u32 %v8296, 7
      %v8298 = vsub.s32 %v8295, %v8297
      %v8299 = vrot.slane %v8283, %v8298
      %v8301 = vunpack.c.l.s4 1966171168
      %v8302 = vunpack.c.0.s8 %v8301
      %v8303 = vlaneseq
      %v8304 = vshrl.u32 %v8303, 7
      %v8305 = vsub.s32 %v8302, %v8304
      %v8306 = vrot.slane %v8284, %v8305
      %v8308 = vunpack.c.l.s4 1966171168
      %v8309 = vunpack.c.0.s8 %v8308
      %v8310 = vlaneseq
      %v8311 = vshrl.u32 %v8310, 7
      %v8312 = vsub.s32 %v8309, %v8311
      %v8313 = vrot.slane %v8285, %v8312
      %v8314 = vcombine.high %v8292, %v8292
      %v8315 = vcombine.high %v8299, %v8299
      %v8316 = vcombine.high %v8306, %v8306
      %v8317 = vcombine.high %v8313, %v8313
      %v8318 = vlaneseq
      %v8319 = vshrl.u32 %v8318, 7
      %v8320 = vsub.s32 0, %v8319
      %v8321 = vrot.slane %v7557, %v8320
      %v8322 = vlaneseq
      %v8323 = vshrl.u32 %v8322, 7
      %v8324 = vsub.s32 0, %v8323
      %v8325 = vrot.slane %v7571, %v8324
      %v8326 = vlaneseq
      %v8327 = vshrl.u32 %v8326, 7
      %v8328 = vsub.s32 0, %v8327
      %v8329 = vrot.slane %v7579, %v8328
      %v8330 = vlaneseq
      %v8331 = vshrl.u32 %v8330, 7
      %v8332 = vsub.s32 0, %v8331
      %v8333 = vrot.slane %v7581, %v8332
      %v8334 = vlaneseq
      %v8335 = vshrl.u32 %v8334, 7
      %v8336 = vsub.s32 0, %v8335
      %v8337 = vrot.slane %v7564, %v8336
      %v8338 = vlaneseq
      %v8339 = vshrl.u32 %v8338, 7
      %v8340 = vsub.s32 0, %v8339
      %v8341 = vrot.slane %v7578, %v8340
      %v8342 = vlaneseq
      %v8343 = vshrl.u32 %v8342, 7
      %v8344 = vsub.s32 0, %v8343
      %v8345 = vrot.slane %v7580, %v8344
      %v8346 = vlaneseq
      %v8347 = vshrl.u32 %v8346, 7
      %v8348 = vsub.s32 0, %v8347
      %v8349 = vrot.slane %v7582, %v8348
      %v8350 = vlaneseq
      %v8351 = vshrl.u32 %v8350, 7
      %v8352 = vsub.s32 0, %v8351
      %v8353 = vrot.slane %v7606, %v8352
      %v8354 = vlaneseq
      %v8355 = vshrl.u32 %v8354, 7
      %v8356 = vsub.s32 0, %v8355
      %v8357 = vrot.slane %v7620, %v8356
      %v8358 = vlaneseq
      %v8359 = vshrl.u32 %v8358, 7
      %v8360 = vsub.s32 0, %v8359
      %v8361 = vrot.slane %v7628, %v8360
      %v8362 = vlaneseq
      %v8363 = vshrl.u32 %v8362, 7
      %v8364 = vsub.s32 0, %v8363
      %v8365 = vrot.slane %v7630, %v8364
      %v8366 = vlaneseq
      %v8367 = vshrl.u32 %v8366, 7
      %v8368 = vsub.s32 0, %v8367
      %v8369 = vrot.slane %v7613, %v8368
      %v8370 = vlaneseq
      %v8371 = vshrl.u32 %v8370, 7
      %v8372 = vsub.s32 0, %v8371
      %v8373 = vrot.slane %v7627, %v8372
      %v8374 = vlaneseq
      %v8375 = vshrl.u32 %v8374, 7
      %v8376 = vsub.s32 0, %v8375
      %v8377 = vrot.slane %v7629, %v8376
      %v8378 = vlaneseq
      %v8379 = vshrl.u32 %v8378, 7
      %v8380 = vsub.s32 0, %v8379
      %v8381 = vrot.slane %v7631, %v8380
      %v8382 = vlaneseq
      %v8383 = vshrl.u32 %v8382, 7
      %v8384 = vsub.s32 0, %v8383
      %v8385 = vrot.slane %v7655, %v8384
      %v8386 = vlaneseq
      %v8387 = vshrl.u32 %v8386, 7
      %v8388 = vsub.s32 0, %v8387
      %v8389 = vrot.slane %v7669, %v8388
      %v8390 = vlaneseq
      %v8391 = vshrl.u32 %v8390, 7
      %v8392 = vsub.s32 0, %v8391
      %v8393 = vrot.slane %v7677, %v8392
      %v8394 = vlaneseq
      %v8395 = vshrl.u32 %v8394, 7
      %v8396 = vsub.s32 0, %v8395
      %v8397 = vrot.slane %v7679, %v8396
      %v8398 = vlaneseq
      %v8399 = vshrl.u32 %v8398, 7
      %v8400 = vsub.s32 0, %v8399
      %v8401 = vrot.slane %v7662, %v8400
      %v8402 = vlaneseq
      %v8403 = vshrl.u32 %v8402, 7
      %v8404 = vsub.s32 0, %v8403
      %v8405 = vrot.slane %v7676, %v8404
      %v8406 = vlaneseq
      %v8407 = vshrl.u32 %v8406, 7
      %v8408 = vsub.s32 0, %v8407
      %v8409 = vrot.slane %v7678, %v8408
      %v8410 = vlaneseq
      %v8411 = vshrl.u32 %v8410, 7
      %v8412 = vsub.s32 0, %v8411
      %v8413 = vrot.slane %v7680, %v8412
      %v8414 = vlaneseq
      %v8415 = vshrl.u32 %v8414, 7
      %v8416 = vsub.s32 0, %v8415
      %v8417 = vrot.slane %v7704, %v8416
      %v8418 = vlaneseq
      %v8419 = vshrl.u32 %v8418, 7
      %v8420 = vsub.s32 0, %v8419
      %v8421 = vrot.slane %v7718, %v8420
      %v8422 = vlaneseq
      %v8423 = vshrl.u32 %v8422, 7
      %v8424 = vsub.s32 0, %v8423
      %v8425 = vrot.slane %v7726, %v8424
      %v8426 = vlaneseq
      %v8427 = vshrl.u32 %v8426, 7
      %v8428 = vsub.s32 0, %v8427
      %v8429 = vrot.slane %v7728, %v8428
      %v8430 = vlaneseq
      %v8431 = vshrl.u32 %v8430, 7
      %v8432 = vsub.s32 0, %v8431
      %v8433 = vrot.slane %v7711, %v8432
      %v8434 = vlaneseq
      %v8435 = vshrl.u32 %v8434, 7
      %v8436 = vsub.s32 0, %v8435
      %v8437 = vrot.slane %v7725, %v8436
      %v8438 = vlaneseq
      %v8439 = vshrl.u32 %v8438, 7
      %v8440 = vsub.s32 0, %v8439
      %v8441 = vrot.slane %v7727, %v8440
      %v8442 = vlaneseq
      %v8443 = vshrl.u32 %v8442, 7
      %v8444 = vsub.s32 0, %v8443
      %v8445 = vrot.slane %v7729, %v8444
      %v8446 = vlaneseq
      %v8447 = vshrl.u32 %v8446, 7
      %v8448 = vsub.s32 0, %v8447
      %v8449 = vrot.slane %v7753, %v8448
      %v8450 = vlaneseq
      %v8451 = vshrl.u32 %v8450, 7
      %v8452 = vsub.s32 0, %v8451
      %v8453 = vrot.slane %v7767, %v8452
      %v8454 = vlaneseq
      %v8455 = vshrl.u32 %v8454, 7
      %v8456 = vsub.s32 0, %v8455
      %v8457 = vrot.slane %v7775, %v8456
      %v8458 = vlaneseq
      %v8459 = vshrl.u32 %v8458, 7
      %v8460 = vsub.s32 0, %v8459
      %v8461 = vrot.slane %v7777, %v8460
      %v8462 = vlaneseq
      %v8463 = vshrl.u32 %v8462, 7
      %v8464 = vsub.s32 0, %v8463
      %v8465 = vrot.slane %v7760, %v8464
      %v8466 = vlaneseq
      %v8467 = vshrl.u32 %v8466, 7
      %v8468 = vsub.s32 0, %v8467
      %v8469 = vrot.slane %v7774, %v8468
      %v8470 = vlaneseq
      %v8471 = vshrl.u32 %v8470, 7
      %v8472 = vsub.s32 0, %v8471
      %v8473 = vrot.slane %v7776, %v8472
      %v8474 = vlaneseq
      %v8475 = vshrl.u32 %v8474, 7
      %v8476 = vsub.s32 0, %v8475
      %v8477 = vrot.slane %v7778, %v8476
      %v8478 = vlaneseq
      %v8479 = vshrl.u32 %v8478, 7
      %v8480 = vsub.s32 0, %v8479
      %v8481 = vrot.slane %v7802, %v8480
      %v8482 = vlaneseq
      %v8483 = vshrl.u32 %v8482, 7
      %v8484 = vsub.s32 0, %v8483
      %v8485 = vrot.slane %v7816, %v8484
      %v8486 = vlaneseq
      %v8487 = vshrl.u32 %v8486, 7
      %v8488 = vsub.s32 0, %v8487
      %v8489 = vrot.slane %v7824, %v8488
      %v8490 = vlaneseq
      %v8491 = vshrl.u32 %v8490, 7
      %v8492 = vsub.s32 0, %v8491
      %v8493 = vrot.slane %v7826, %v8492
      %v8494 = vlaneseq
      %v8495 = vshrl.u32 %v8494, 7
      %v8496 = vsub.s32 0, %v8495
      %v8497 = vrot.slane %v7809, %v8496
      %v8498 = vlaneseq
      %v8499 = vshrl.u32 %v8498, 7
      %v8500 = vsub.s32 0, %v8499
      %v8501 = vrot.slane %v7823, %v8500
      %v8502 = vlaneseq
      %v8503 = vshrl.u32 %v8502, 7
      %v8504 = vsub.s32 0, %v8503
      %v8505 = vrot.slane %v7825, %v8504
      %v8506 = vlaneseq
      %v8507 = vshrl.u32 %v8506, 7
      %v8508 = vsub.s32 0, %v8507
      %v8509 = vrot.slane %v7827, %v8508
      %v8510 = vlaneseq
      %v8511 = vshrl.u32 %v8510, 7
      %v8512 = vsub.s32 0, %v8511
      %v8513 = vrot.slane %v7851, %v8512
      %v8514 = vlaneseq
      %v8515 = vshrl.u32 %v8514, 7
      %v8516 = vsub.s32 0, %v8515
      %v8517 = vrot.slane %v7865, %v8516
      %v8518 = vlaneseq
      %v8519 = vshrl.u32 %v8518, 7
      %v8520 = vsub.s32 0, %v8519
      %v8521 = vrot.slane %v7873, %v8520
      %v8522 = vlaneseq
      %v8523 = vshrl.u32 %v8522, 7
      %v8524 = vsub.s32 0, %v8523
      %v8525 = vrot.slane %v7875, %v8524
      %v8526 = vlaneseq
      %v8527 = vshrl.u32 %v8526, 7
      %v8528 = vsub.s32 0, %v8527
      %v8529 = vrot.slane %v7858, %v8528
      %v8530 = vlaneseq
      %v8531 = vshrl.u32 %v8530, 7
      %v8532 = vsub.s32 0, %v8531
      %v8533 = vrot.slane %v7872, %v8532
      %v8534 = vlaneseq
      %v8535 = vshrl.u32 %v8534, 7
      %v8536 = vsub.s32 0, %v8535
      %v8537 = vrot.slane %v7874, %v8536
      %v8538 = vlaneseq
      %v8539 = vshrl.u32 %v8538, 7
      %v8540 = vsub.s32 0, %v8539
      %v8541 = vrot.slane %v7876, %v8540
      %v8542 = vlaneseq
      %v8543 = vshrl.u32 %v8542, 7
      %v8544 = vsub.s32 0, %v8543
      %v8545 = vrot.slane %v7900, %v8544
      %v8546 = vlaneseq
      %v8547 = vshrl.u32 %v8546, 7
      %v8548 = vsub.s32 0, %v8547
      %v8549 = vrot.slane %v7914, %v8548
      %v8550 = vlaneseq
      %v8551 = vshrl.u32 %v8550, 7
      %v8552 = vsub.s32 0, %v8551
      %v8553 = vrot.slane %v7922, %v8552
      %v8554 = vlaneseq
      %v8555 = vshrl.u32 %v8554, 7
      %v8556 = vsub.s32 0, %v8555
      %v8557 = vrot.slane %v7924, %v8556
      %v8558 = vlaneseq
      %v8559 = vshrl.u32 %v8558, 7
      %v8560 = vsub.s32 0, %v8559
      %v8561 = vrot.slane %v7907, %v8560
      %v8562 = vlaneseq
      %v8563 = vshrl.u32 %v8562, 7
      %v8564 = vsub.s32 0, %v8563
      %v8565 = vrot.slane %v7921, %v8564
      %v8566 = vlaneseq
      %v8567 = vshrl.u32 %v8566, 7
      %v8568 = vsub.s32 0, %v8567
      %v8569 = vrot.slane %v7923, %v8568
      %v8570 = vlaneseq
      %v8571 = vshrl.u32 %v8570, 7
      %v8572 = vsub.s32 0, %v8571
      %v8573 = vrot.slane %v7925, %v8572
      %v8574 = vlaneseq
      %v8575 = vshrl.u32 %v8574, 7
      %v8576 = vsub.s32 0, %v8575
      %v8577 = vrot.slane %v7949, %v8576
      %v8578 = vlaneseq
      %v8579 = vshrl.u32 %v8578, 7
      %v8580 = vsub.s32 0, %v8579
      %v8581 = vrot.slane %v7963, %v8580
      %v8582 = vlaneseq
      %v8583 = vshrl.u32 %v8582, 7
      %v8584 = vsub.s32 0, %v8583
      %v8585 = vrot.slane %v7971, %v8584
      %v8586 = vlaneseq
      %v8587 = vshrl.u32 %v8586, 7
      %v8588 = vsub.s32 0, %v8587
      %v8589 = vrot.slane %v7973, %v8588
      %v8590 = vlaneseq
      %v8591 = vshrl.u32 %v8590, 7
      %v8592 = vsub.s32 0, %v8591
      %v8593 = vrot.slane %v7956, %v8592
      %v8594 = vlaneseq
      %v8595 = vshrl.u32 %v8594, 7
      %v8596 = vsub.s32 0, %v8595
      %v8597 = vrot.slane %v7970, %v8596
      %v8598 = vlaneseq
      %v8599 = vshrl.u32 %v8598, 7
      %v8600 = vsub.s32 0, %v8599
      %v8601 = vrot.slane %v7972, %v8600
      %v8602 = vlaneseq
      %v8603 = vshrl.u32 %v8602, 7
      %v8604 = vsub.s32 0, %v8603
      %v8605 = vrot.slane %v7974, %v8604
      %v8606 = vlaneseq
      %v8607 = vshrl.u32 %v8606, 7
      %v8608 = vsub.s32 0, %v8607
      %v8609 = vrot.slane %v7998, %v8608
      %v8610 = vlaneseq
      %v8611 = vshrl.u32 %v8610, 7
      %v8612 = vsub.s32 0, %v8611
      %v8613 = vrot.slane %v8012, %v8612
      %v8614 = vlaneseq
      %v8615 = vshrl.u32 %v8614, 7
      %v8616 = vsub.s32 0, %v8615
      %v8617 = vrot.slane %v8020, %v8616
      %v8618 = vlaneseq
      %v8619 = vshrl.u32 %v8618, 7
      %v8620 = vsub.s32 0, %v8619
      %v8621 = vrot.slane %v8022, %v8620
      %v8622 = vlaneseq
      %v8623 = vshrl.u32 %v8622, 7
      %v8624 = vsub.s32 0, %v8623
      %v8625 = vrot.slane %v8005, %v8624
      %v8626 = vlaneseq
      %v8627 = vshrl.u32 %v8626, 7
      %v8628 = vsub.s32 0, %v8627
      %v8629 = vrot.slane %v8019, %v8628
      %v8630 = vlaneseq
      %v8631 = vshrl.u32 %v8630, 7
      %v8632 = vsub.s32 0, %v8631
      %v8633 = vrot.slane %v8021, %v8632
      %v8634 = vlaneseq
      %v8635 = vshrl.u32 %v8634, 7
      %v8636 = vsub.s32 0, %v8635
      %v8637 = vrot.slane %v8023, %v8636
      %v8638 = vlaneseq
      %v8639 = vshrl.u32 %v8638, 7
      %v8640 = vsub.s32 0, %v8639
      %v8641 = vrot.slane %v8047, %v8640
      %v8642 = vlaneseq
      %v8643 = vshrl.u32 %v8642, 7
      %v8644 = vsub.s32 0, %v8643
      %v8645 = vrot.slane %v8061, %v8644
      %v8646 = vlaneseq
      %v8647 = vshrl.u32 %v8646, 7
      %v8648 = vsub.s32 0, %v8647
      %v8649 = vrot.slane %v8069, %v8648
      %v8650 = vlaneseq
      %v8651 = vshrl.u32 %v8650, 7
      %v8652 = vsub.s32 0, %v8651
      %v8653 = vrot.slane %v8071, %v8652
      %v8654 = vlaneseq
      %v8655 = vshrl.u32 %v8654, 7
      %v8656 = vsub.s32 0, %v8655
      %v8657 = vrot.slane %v8054, %v8656
      %v8658 = vlaneseq
      %v8659 = vshrl.u32 %v8658, 7
      %v8660 = vsub.s32 0, %v8659
      %v8661 = vrot.slane %v8068, %v8660
      %v8662 = vlaneseq
      %v8663 = vshrl.u32 %v8662, 7
      %v8664 = vsub.s32 0, %v8663
      %v8665 = vrot.slane %v8070, %v8664
      %v8666 = vlaneseq
      %v8667 = vshrl.u32 %v8666, 7
      %v8668 = vsub.s32 0, %v8667
      %v8669 = vrot.slane %v8072, %v8668
      %v8670 = vlaneseq
      %v8671 = vshrl.u32 %v8670, 7
      %v8672 = vsub.s32 0, %v8671
      %v8673 = vrot.slane %v8096, %v8672
      %v8674 = vlaneseq
      %v8675 = vshrl.u32 %v8674, 7
      %v8676 = vsub.s32 0, %v8675
      %v8677 = vrot.slane %v8110, %v8676
      %v8678 = vlaneseq
      %v8679 = vshrl.u32 %v8678, 7
      %v8680 = vsub.s32 0, %v8679
      %v8681 = vrot.slane %v8118, %v8680
      %v8682 = vlaneseq
      %v8683 = vshrl.u32 %v8682, 7
      %v8684 = vsub.s32 0, %v8683
      %v8685 = vrot.slane %v8120, %v8684
      %v8686 = vlaneseq
      %v8687 = vshrl.u32 %v8686, 7
      %v8688 = vsub.s32 0, %v8687
      %v8689 = vrot.slane %v8103, %v8688
      %v8690 = vlaneseq
      %v8691 = vshrl.u32 %v8690, 7
      %v8692 = vsub.s32 0, %v8691
      %v8693 = vrot.slane %v8117, %v8692
      %v8694 = vlaneseq
      %v8695 = vshrl.u32 %v8694, 7
      %v8696 = vsub.s32 0, %v8695
      %v8697 = vrot.slane %v8119, %v8696
      %v8698 = vlaneseq
      %v8699 = vshrl.u32 %v8698, 7
      %v8700 = vsub.s32 0, %v8699
      %v8701 = vrot.slane %v8121, %v8700
      %v8702 = vlaneseq
      %v8703 = vshrl.u32 %v8702, 7
      %v8704 = vsub.s32 0, %v8703
      %v8705 = vrot.slane %v8145, %v8704
      %v8706 = vlaneseq
      %v8707 = vshrl.u32 %v8706, 7
      %v8708 = vsub.s32 0, %v8707
      %v8709 = vrot.slane %v8159, %v8708
      %v8710 = vlaneseq
      %v8711 = vshrl.u32 %v8710, 7
      %v8712 = vsub.s32 0, %v8711
      %v8713 = vrot.slane %v8167, %v8712
      %v8714 = vlaneseq
      %v8715 = vshrl.u32 %v8714, 7
      %v8716 = vsub.s32 0, %v8715
      %v8717 = vrot.slane %v8169, %v8716
      %v8718 = vlaneseq
      %v8719 = vshrl.u32 %v8718, 7
      %v8720 = vsub.s32 0, %v8719
      %v8721 = vrot.slane %v8152, %v8720
      %v8722 = vlaneseq
      %v8723 = vshrl.u32 %v8722, 7
      %v8724 = vsub.s32 0, %v8723
      %v8725 = vrot.slane %v8166, %v8724
      %v8726 = vlaneseq
      %v8727 = vshrl.u32 %v8726, 7
      %v8728 = vsub.s32 0, %v8727
      %v8729 = vrot.slane %v8168, %v8728
      %v8730 = vlaneseq
      %v8731 = vshrl.u32 %v8730, 7
      %v8732 = vsub.s32 0, %v8731
      %v8733 = vrot.slane %v8170, %v8732
      %v8734 = vlaneseq
      %v8735 = vshrl.u32 %v8734, 7
      %v8736 = vsub.s32 0, %v8735
      %v8737 = vrot.slane %v8194, %v8736
      %v8738 = vlaneseq
      %v8739 = vshrl.u32 %v8738, 7
      %v8740 = vsub.s32 0, %v8739
      %v8741 = vrot.slane %v8208, %v8740
      %v8742 = vlaneseq
      %v8743 = vshrl.u32 %v8742, 7
      %v8744 = vsub.s32 0, %v8743
      %v8745 = vrot.slane %v8216, %v8744
      %v8746 = vlaneseq
      %v8747 = vshrl.u32 %v8746, 7
      %v8748 = vsub.s32 0, %v8747
      %v8749 = vrot.slane %v8218, %v8748
      %v8750 = vlaneseq
      %v8751 = vshrl.u32 %v8750, 7
      %v8752 = vsub.s32 0, %v8751
      %v8753 = vrot.slane %v8201, %v8752
      %v8754 = vlaneseq
      %v8755 = vshrl.u32 %v8754, 7
      %v8756 = vsub.s32 0, %v8755
      %v8757 = vrot.slane %v8215, %v8756
      %v8758 = vlaneseq
      %v8759 = vshrl.u32 %v8758, 7
      %v8760 = vsub.s32 0, %v8759
      %v8761 = vrot.slane %v8217, %v8760
      %v8762 = vlaneseq
      %v8763 = vshrl.u32 %v8762, 7
      %v8764 = vsub.s32 0, %v8763
      %v8765 = vrot.slane %v8219, %v8764
      %v8766 = vlaneseq
      %v8767 = vshrl.u32 %v8766, 7
      %v8768 = vsub.s32 0, %v8767
      %v8769 = vrot.slane %v8243, %v8768
      %v8770 = vlaneseq
      %v8771 = vshrl.u32 %v8770, 7
      %v8772 = vsub.s32 0, %v8771
      %v8773 = vrot.slane %v8257, %v8772
      %v8774 = vlaneseq
      %v8775 = vshrl.u32 %v8774, 7
      %v8776 = vsub.s32 0, %v8775
      %v8777 = vrot.slane %v8265, %v8776
      %v8778 = vlaneseq
      %v8779 = vshrl.u32 %v8778, 7
      %v8780 = vsub.s32 0, %v8779
      %v8781 = vrot.slane %v8267, %v8780
      %v8782 = vlaneseq
      %v8783 = vshrl.u32 %v8782, 7
      %v8784 = vsub.s32 0, %v8783
      %v8785 = vrot.slane %v8250, %v8784
      %v8786 = vlaneseq
      %v8787 = vshrl.u32 %v8786, 7
      %v8788 = vsub.s32 0, %v8787
      %v8789 = vrot.slane %v8264, %v8788
      %v8790 = vlaneseq
      %v8791 = vshrl.u32 %v8790, 7
      %v8792 = vsub.s32 0, %v8791
      %v8793 = vrot.slane %v8266, %v8792
      %v8794 = vlaneseq
      %v8795 = vshrl.u32 %v8794, 7
      %v8796 = vsub.s32 0, %v8795
      %v8797 = vrot.slane %v8268, %v8796
      %v8798 = vlaneseq
      %v8799 = vshrl.u32 %v8798, 7
      %v8800 = vsub.s32 0, %v8799
      %v8801 = vrot.slane %v8292, %v8800
      %v8802 = vlaneseq
      %v8803 = vshrl.u32 %v8802, 7
      %v8804 = vsub.s32 0, %v8803
      %v8805 = vrot.slane %v8306, %v8804
      %v8806 = vlaneseq
      %v8807 = vshrl.u32 %v8806, 7
      %v8808 = vsub.s32 0, %v8807
      %v8809 = vrot.slane %v8314, %v8808
      %v8810 = vlaneseq
      %v8811 = vshrl.u32 %v8810, 7
      %v8812 = vsub.s32 0, %v8811
      %v8813 = vrot.slane %v8316, %v8812
      %v8814 = vlaneseq
      %v8815 = vshrl.u32 %v8814, 7
      %v8816 = vsub.s32 0, %v8815
      %v8817 = vrot.slane %v8299, %v8816
      %v8818 = vlaneseq
      %v8819 = vshrl.u32 %v8818, 7
      %v8820 = vsub.s32 0, %v8819
      %v8821 = vrot.slane %v8313, %v8820
      %v8822 = vlaneseq
      %v8823 = vshrl.u32 %v8822, 7
      %v8824 = vsub.s32 0, %v8823
      %v8825 = vrot.slane %v8315, %v8824
      %v8826 = vlaneseq
      %v8827 = vshrl.u32 %v8826, 7
      %v8828 = vsub.s32 0, %v8827
      %v8829 = vrot.slane %v8317, %v8828
      %v8958 = vsel %vm445, %v6629, %v8321
      %v8959 = vsel %vm445, %v6643, %v8325
      %v8960 = vsel %vm445, %v6651, %v8329
      %v8961 = vsel %vm445, %v6653, %v8333
      %v8962 = vsel %vm445, %v6636, %v8337
      %v8963 = vsel %vm445, %v6650, %v8341
      %v8964 = vsel %vm445, %v6652, %v8345
      %v8965 = vsel %vm445, %v6654, %v8349
      %v8966 = vsel %vm445, %v6678, %v8353
      %v8967 = vsel %vm445, %v6692, %v8357
      %v8968 = vsel %vm445, %v6700, %v8361
      %v8969 = vsel %vm445, %v6702, %v8365
      %v8970 = vsel %vm445, %v6685, %v8369
      %v8971 = vsel %vm445, %v6699, %v8373
      %v8972 = vsel %vm445, %v6701, %v8377
      %v8973 = vsel %vm445, %v6703, %v8381
      %v8974 = vsel %vm445, %v6727, %v8385
      %v8975 = vsel %vm445, %v6741, %v8389
      %v8976 = vsel %vm445, %v6749, %v8393
      %v8977 = vsel %vm445, %v6751, %v8397
      %v8978 = vsel %vm445, %v6734, %v8401
      %v8979 = vsel %vm445, %v6748, %v8405
      %v8980 = vsel %vm445, %v6750, %v8409
      %v8981 = vsel %vm445, %v6752, %v8413
      %v8982 = vsel %vm445, %v6776, %v8417
      %v8983 = vsel %vm445, %v6790, %v8421
      %v8984 = vsel %vm445, %v6798, %v8425
      %v8985 = vsel %vm445, %v6800, %v8429
      %v8986 = vsel %vm445, %v6783, %v8433
      %v8987 = vsel %vm445, %v6797, %v8437
      %v8988 = vsel %vm445, %v6799, %v8441
      %v8989 = vsel %vm445, %v6801, %v8445
      %v8990 = vsel %vm445, %v6825, %v8449
      %v8991 = vsel %vm445, %v6839, %v8453
      %v8992 = vsel %vm445, %v6847, %v8457
      %v8993 = vsel %vm445, %v6849, %v8461
      %v8994 = vsel %vm445, %v6832, %v8465
      %v8995 = vsel %vm445, %v6846, %v8469
      %v8996 = vsel %vm445, %v6848, %v8473
      %v8997 = vsel %vm445, %v6850, %v8477
      %v8998 = vsel %vm445, %v6874, %v8481
      %v8999 = vsel %vm445, %v6888, %v8485
      %v9000 = vsel %vm445, %v6896, %v8489
      %v9001 = vsel %vm445, %v6898, %v8493
      %v9002 = vsel %vm445, %v6881, %v8497
      %v9003 = vsel %vm445, %v6895, %v8501
      %v9004 = vsel %vm445, %v6897, %v8505
      %v9005 = vsel %vm445, %v6899, %v8509
      %v9006 = vsel %vm445, %v6923, %v8513
      %v9007 = vsel %vm445, %v6937, %v8517
      %v9008 = vsel %vm445, %v6945, %v8521
      %v9009 = vsel %vm445, %v6947, %v8525
      %v9010 = vsel %vm445, %v6930, %v8529
      %v9011 = vsel %vm445, %v6944, %v8533
      %v9012 = vsel %vm445, %v6946, %v8537
      %v9013 = vsel %vm445, %v6948, %v8541
      %v9014 = vsel %vm445, %v6972, %v8545
      %v9015 = vsel %vm445, %v6986, %v8549
      %v9016 = vsel %vm445, %v6994, %v8553
      %v9017 = vsel %vm445, %v6996, %v8557
      %v9018 = vsel %vm445, %v6979, %v8561
      %v9019 = vsel %vm445, %v6993, %v8565
      %v9020 = vsel %vm445, %v6995, %v8569
      %v9021 = vsel %vm445, %v6997, %v8573
      %v9022 = vsel %vm445, %v7021, %v8577
      %v9023 = vsel %vm445, %v7035, %v8581
      %v9024 = vsel %vm445, %v7043, %v8585
      %v9025 = vsel %vm445, %v7045, %v8589
      %v9026 = vsel %vm445, %v7028, %v8593
      %v9027 = vsel %vm445, %v7042, %v8597
      %v9028 = vsel %vm445, %v7044, %v8601
      %v9029 = vsel %vm445, %v7046, %v8605
      %v9030 = vsel %vm445, %v7070, %v8609
      %v9031 = vsel %vm445, %v7084, %v8613
      %v9032 = vsel %vm445, %v7092, %v8617
      %v9033 = vsel %vm445, %v7094, %v8621
      %v9034 = vsel %vm445, %v7077, %v8625
      %v9035 = vsel %vm445, %v7091, %v8629
      %v9036 = vsel %vm445, %v7093, %v8633
      %v9037 = vsel %vm445, %v7095, %v8637
      %v9038 = vsel %vm445, %v7119, %v8641
      %v9039 = vsel %vm445, %v7133, %v8645
      %v9040 = vsel %vm445, %v7141, %v8649
      %v9041 = vsel %vm445, %v7143, %v8653
      %v9042 = vsel %vm445, %v7126, %v8657
      %v9043 = vsel %vm445, %v7140, %v8661
      %v9044 = vsel %vm445, %v7142, %v8665
      %v9045 = vsel %vm445, %v7144, %v8669
      %v9046 = vsel %vm445, %v7168, %v8673
      %v9047 = vsel %vm445, %v7182, %v8677
      %v9048 = vsel %vm445, %v7190, %v8681
      %v9049 = vsel %vm445, %v7192, %v8685
      %v9050 = vsel %vm445, %v7175, %v8689
      %v9051 = vsel %vm445, %v7189, %v8693
      %v9052 = vsel %vm445, %v7191, %v8697
      %v9053 = vsel %vm445, %v7193, %v8701
      %v9054 = vsel %vm445, %v7217, %v8705
      %v9055 = vsel %vm445, %v7231, %v8709
      %v9056 = vsel %vm445, %v7239, %v8713
      %v9057 = vsel %vm445, %v7241, %v8717
      %v9058 = vsel %vm445, %v7224, %v8721
      %v9059 = vsel %vm445, %v7238, %v8725
      %v9060 = vsel %vm445, %v7240, %v8729
      %v9061 = vsel %vm445, %v7242, %v8733
      %v9062 = vsel %vm445, %v7266, %v8737
      %v9063 = vsel %vm445, %v7280, %v8741
      %v9064 = vsel %vm445, %v7288, %v8745
      %v9065 = vsel %vm445, %v7290, %v8749
      %v9066 = vsel %vm445, %v7273, %v8753
      %v9067 = vsel %vm445, %v7287, %v8757
      %v9068 = vsel %vm445, %v7289, %v8761
      %v9069 = vsel %vm445, %v7291, %v8765
      %v9070 = vsel %vm445, %v7315, %v8769
      %v9071 = vsel %vm445, %v7329, %v8773
      %v9072 = vsel %vm445, %v7337, %v8777
      %v9073 = vsel %vm445, %v7339, %v8781
      %v9074 = vsel %vm445, %v7322, %v8785
      %v9075 = vsel %vm445, %v7336, %v8789
      %v9076 = vsel %vm445, %v7338, %v8793
      %v9077 = vsel %vm445, %v7340, %v8797
      %v9078 = vsel %vm445, %v7364, %v8801
      %v9079 = vsel %vm445, %v7378, %v8805
      %v9080 = vsel %vm445, %v7386, %v8809
      %v9081 = vsel %vm445, %v7388, %v8813
      %v9082 = vsel %vm445, %v7371, %v8817
      %v9083 = vsel %vm445, %v7385, %v8821
      %v9084 = vsel %vm445, %v7387, %v8825
      %v9085 = vsel %vm445, %v7389, %v8829
      %v9214 = vcombine.low %v8958, %v8959
      %v9215 = vcombine.low %v8960, %v8961
      %v9217 = vunpack.c.l.s4 1983009808
      %v9218 = vunpack.c.0.s8 %v9217
      %v9219 = vlaneseq
      %v9220 = vshrl.u32 %v9219, 7
      %v9221 = vsub.s32 %v9218, %v9220
      %v9222 = vrot.slane %v9214, %v9221
      %v9224 = vunpack.c.l.s4 1983009808
      %v9225 = vunpack.c.0.s8 %v9224
      %v9226 = vlaneseq
      %v9227 = vshrl.u32 %v9226, 7
      %v9228 = vsub.s32 %v9225, %v9227
      %v9229 = vrot.slane %v9215, %v9228
      %v9230 = vcombine.low %v9222, %v9229
      %v9231 = vcombine.low %v8962, %v8963
      %v9232 = vcombine.low %v8964, %v8965
      %v9234 = vunpack.c.l.s4 1983009808
      %v9235 = vunpack.c.0.s8 %v9234
      %v9236 = vlaneseq
      %v9237 = vshrl.u32 %v9236, 7
      %v9238 = vsub.s32 %v9235, %v9237
      %v9239 = vrot.slane %v9231, %v9238
      %v9241 = vunpack.c.l.s4 1983009808
      %v9242 = vunpack.c.0.s8 %v9241
      %v9243 = vlaneseq
      %v9244 = vshrl.u32 %v9243, 7
      %v9245 = vsub.s32 %v9242, %v9244
      %v9246 = vrot.slane %v9232, %v9245
      %v9247 = vcombine.low %v9239, %v9246
      %v9248 = vcombine.low %v8966, %v8967
      %v9249 = vcombine.low %v8968, %v8969
      %v9251 = vunpack.c.l.s4 1983009808
      %v9252 = vunpack.c.0.s8 %v9251
      %v9253 = vlaneseq
      %v9254 = vshrl.u32 %v9253, 7
      %v9255 = vsub.s32 %v9252, %v9254
      %v9256 = vrot.slane %v9248, %v9255
      %v9258 = vunpack.c.l.s4 1983009808
      %v9259 = vunpack.c.0.s8 %v9258
      %v9260 = vlaneseq
      %v9261 = vshrl.u32 %v9260, 7
      %v9262 = vsub.s32 %v9259, %v9261
      %v9263 = vrot.slane %v9249, %v9262
      %v9264 = vcombine.low %v9256, %v9263
      %v9265 = vcombine.low %v8970, %v8971
      %v9266 = vcombine.low %v8972, %v8973
      %v9268 = vunpack.c.l.s4 1983009808
      %v9269 = vunpack.c.0.s8 %v9268
      %v9270 = vlaneseq
      %v9271 = vshrl.u32 %v9270, 7
      %v9272 = vsub.s32 %v9269, %v9271
      %v9273 = vrot.slane %v9265, %v9272
      %v9275 = vunpack.c.l.s4 1983009808
      %v9276 = vunpack.c.0.s8 %v9275
      %v9277 = vlaneseq
      %v9278 = vshrl.u32 %v9277, 7
      %v9279 = vsub.s32 %v9276, %v9278
      %v9280 = vrot.slane %v9266, %v9279
      %v9281 = vcombine.low %v9273, %v9280
      %v9282 = vcombine.low %v8974, %v8975
      %v9283 = vcombine.low %v8976, %v8977
      %v9285 = vunpack.c.l.s4 1983009808
      %v9286 = vunpack.c.0.s8 %v9285
      %v9287 = vlaneseq
      %v9288 = vshrl.u32 %v9287, 7
      %v9289 = vsub.s32 %v9286, %v9288
      %v9290 = vrot.slane %v9282, %v9289
      %v9292 = vunpack.c.l.s4 1983009808
      %v9293 = vunpack.c.0.s8 %v9292
      %v9294 = vlaneseq
      %v9295 = vshrl.u32 %v9294, 7
      %v9296 = vsub.s32 %v9293, %v9295
      %v9297 = vrot.slane %v9283, %v9296
      %v9298 = vcombine.low %v9290, %v9297
      %v9299 = vcombine.low %v8978, %v8979
      %v9300 = vcombine.low %v8980, %v8981
      %v9302 = vunpack.c.l.s4 1983009808
      %v9303 = vunpack.c.0.s8 %v9302
      %v9304 = vlaneseq
      %v9305 = vshrl.u32 %v9304, 7
      %v9306 = vsub.s32 %v9303, %v9305
      %v9307 = vrot.slane %v9299, %v9306
      %v9309 = vunpack.c.l.s4 1983009808
      %v9310 = vunpack.c.0.s8 %v9309
      %v9311 = vlaneseq
      %v9312 = vshrl.u32 %v9311, 7
      %v9313 = vsub.s32 %v9310, %v9312
      %v9314 = vrot.slane %v9300, %v9313
      %v9315 = vcombine.low %v9307, %v9314
      %v9316 = vcombine.low %v8982, %v8983
      %v9317 = vcombine.low %v8984, %v8985
      %v9319 = vunpack.c.l.s4 1983009808
      %v9320 = vunpack.c.0.s8 %v9319
      %v9321 = vlaneseq
      %v9322 = vshrl.u32 %v9321, 7
      %v9323 = vsub.s32 %v9320, %v9322
      %v9324 = vrot.slane %v9316, %v9323
      %v9326 = vunpack.c.l.s4 1983009808
      %v9327 = vunpack.c.0.s8 %v9326
      %v9328 = vlaneseq
      %v9329 = vshrl.u32 %v9328, 7
      %v9330 = vsub.s32 %v9327, %v9329
      %v9331 = vrot.slane %v9317, %v9330
      %v9332 = vcombine.low %v9324, %v9331
      %v9333 = vcombine.low %v8986, %v8987
      %v9334 = vcombine.low %v8988, %v8989
      %v9336 = vunpack.c.l.s4 1983009808
      %v9337 = vunpack.c.0.s8 %v9336
      %v9338 = vlaneseq
      %v9339 = vshrl.u32 %v9338, 7
      %v9340 = vsub.s32 %v9337, %v9339
      %v9341 = vrot.slane %v9333, %v9340
      %v9343 = vunpack.c.l.s4 1983009808
      %v9344 = vunpack.c.0.s8 %v9343
      %v9345 = vlaneseq
      %v9346 = vshrl.u32 %v9345, 7
      %v9347 = vsub.s32 %v9344, %v9346
      %v9348 = vrot.slane %v9334, %v9347
      %v9349 = vcombine.low %v9341, %v9348
      %v9350 = vcombine.low %v8990, %v8991
      %v9351 = vcombine.low %v8992, %v8993
      %v9353 = vunpack.c.l.s4 1983009808
      %v9354 = vunpack.c.0.s8 %v9353
      %v9355 = vlaneseq
      %v9356 = vshrl.u32 %v9355, 7
      %v9357 = vsub.s32 %v9354, %v9356
      %v9358 = vrot.slane %v9350, %v9357
      %v9360 = vunpack.c.l.s4 1983009808
      %v9361 = vunpack.c.0.s8 %v9360
      %v9362 = vlaneseq
      %v9363 = vshrl.u32 %v9362, 7
      %v9364 = vsub.s32 %v9361, %v9363
      %v9365 = vrot.slane %v9351, %v9364
      %v9366 = vcombine.low %v9358, %v9365
      %v9367 = vcombine.low %v8994, %v8995
      %v9368 = vcombine.low %v8996, %v8997
      %v9370 = vunpack.c.l.s4 1983009808
      %v9371 = vunpack.c.0.s8 %v9370
      %v9372 = vlaneseq
      %v9373 = vshrl.u32 %v9372, 7
      %v9374 = vsub.s32 %v9371, %v9373
      %v9375 = vrot.slane %v9367, %v9374
      %v9377 = vunpack.c.l.s4 1983009808
      %v9378 = vunpack.c.0.s8 %v9377
      %v9379 = vlaneseq
      %v9380 = vshrl.u32 %v9379, 7
      %v9381 = vsub.s32 %v9378, %v9380
      %v9382 = vrot.slane %v9368, %v9381
      %v9383 = vcombine.low %v9375, %v9382
      %v9384 = vcombine.low %v8998, %v8999
      %v9385 = vcombine.low %v9000, %v9001
      %v9387 = vunpack.c.l.s4 1983009808
      %v9388 = vunpack.c.0.s8 %v9387
      %v9389 = vlaneseq
      %v9390 = vshrl.u32 %v9389, 7
      %v9391 = vsub.s32 %v9388, %v9390
      %v9392 = vrot.slane %v9384, %v9391
      %v9394 = vunpack.c.l.s4 1983009808
      %v9395 = vunpack.c.0.s8 %v9394
      %v9396 = vlaneseq
      %v9397 = vshrl.u32 %v9396, 7
      %v9398 = vsub.s32 %v9395, %v9397
      %v9399 = vrot.slane %v9385, %v9398
      %v9400 = vcombine.low %v9392, %v9399
      %v9401 = vcombine.low %v9002, %v9003
      %v9402 = vcombine.low %v9004, %v9005
      %v9404 = vunpack.c.l.s4 1983009808
      %v9405 = vunpack.c.0.s8 %v9404
      %v9406 = vlaneseq
      %v9407 = vshrl.u32 %v9406, 7
      %v9408 = vsub.s32 %v9405, %v9407
      %v9409 = vrot.slane %v9401, %v9408
      %v9411 = vunpack.c.l.s4 1983009808
      %v9412 = vunpack.c.0.s8 %v9411
      %v9413 = vlaneseq
      %v9414 = vshrl.u32 %v9413, 7
      %v9415 = vsub.s32 %v9412, %v9414
      %v9416 = vrot.slane %v9402, %v9415
      %v9417 = vcombine.low %v9409, %v9416
      %v9418 = vcombine.low %v9006, %v9007
      %v9419 = vcombine.low %v9008, %v9009
      %v9421 = vunpack.c.l.s4 1983009808
      %v9422 = vunpack.c.0.s8 %v9421
      %v9423 = vlaneseq
      %v9424 = vshrl.u32 %v9423, 7
      %v9425 = vsub.s32 %v9422, %v9424
      %v9426 = vrot.slane %v9418, %v9425
      %v9428 = vunpack.c.l.s4 1983009808
      %v9429 = vunpack.c.0.s8 %v9428
      %v9430 = vlaneseq
      %v9431 = vshrl.u32 %v9430, 7
      %v9432 = vsub.s32 %v9429, %v9431
      %v9433 = vrot.slane %v9419, %v9432
      %v9434 = vcombine.low %v9426, %v9433
      %v9435 = vcombine.low %v9010, %v9011
      %v9436 = vcombine.low %v9012, %v9013
      %v9438 = vunpack.c.l.s4 1983009808
      %v9439 = vunpack.c.0.s8 %v9438
      %v9440 = vlaneseq
      %v9441 = vshrl.u32 %v9440, 7
      %v9442 = vsub.s32 %v9439, %v9441
      %v9443 = vrot.slane %v9435, %v9442
      %v9445 = vunpack.c.l.s4 1983009808
      %v9446 = vunpack.c.0.s8 %v9445
      %v9447 = vlaneseq
      %v9448 = vshrl.u32 %v9447, 7
      %v9449 = vsub.s32 %v9446, %v9448
      %v9450 = vrot.slane %v9436, %v9449
      %v9451 = vcombine.low %v9443, %v9450
      %v9452 = vcombine.low %v9014, %v9015
      %v9453 = vcombine.low %v9016, %v9017
      %v9455 = vunpack.c.l.s4 1983009808
      %v9456 = vunpack.c.0.s8 %v9455
      %v9457 = vlaneseq
      %v9458 = vshrl.u32 %v9457, 7
      %v9459 = vsub.s32 %v9456, %v9458
      %v9460 = vrot.slane %v9452, %v9459
      %v9462 = vunpack.c.l.s4 1983009808
      %v9463 = vunpack.c.0.s8 %v9462
      %v9464 = vlaneseq
      %v9465 = vshrl.u32 %v9464, 7
      %v9466 = vsub.s32 %v9463, %v9465
      %v9467 = vrot.slane %v9453, %v9466
      %v9468 = vcombine.low %v9460, %v9467
      %v9469 = vcombine.low %v9018, %v9019
      %v9470 = vcombine.low %v9020, %v9021
      %v9472 = vunpack.c.l.s4 1983009808
      %v9473 = vunpack.c.0.s8 %v9472
      %v9474 = vlaneseq
      %v9475 = vshrl.u32 %v9474, 7
      %v9476 = vsub.s32 %v9473, %v9475
      %v9477 = vrot.slane %v9469, %v9476
      %v9479 = vunpack.c.l.s4 1983009808
      %v9480 = vunpack.c.0.s8 %v9479
      %v9481 = vlaneseq
      %v9482 = vshrl.u32 %v9481, 7
      %v9483 = vsub.s32 %v9480, %v9482
      %v9484 = vrot.slane %v9470, %v9483
      %v9485 = vcombine.low %v9477, %v9484
      %v9486 = vcombine.low %v9022, %v9023
      %v9487 = vcombine.low %v9024, %v9025
      %v9489 = vunpack.c.l.s4 1983009808
      %v9490 = vunpack.c.0.s8 %v9489
      %v9491 = vlaneseq
      %v9492 = vshrl.u32 %v9491, 7
      %v9493 = vsub.s32 %v9490, %v9492
      %v9494 = vrot.slane %v9486, %v9493
      %v9496 = vunpack.c.l.s4 1983009808
      %v9497 = vunpack.c.0.s8 %v9496
      %v9498 = vlaneseq
      %v9499 = vshrl.u32 %v9498, 7
      %v9500 = vsub.s32 %v9497, %v9499
      %v9501 = vrot.slane %v9487, %v9500
      %v9502 = vcombine.low %v9494, %v9501
      %v9503 = vcombine.low %v9026, %v9027
      %v9504 = vcombine.low %v9028, %v9029
      %v9506 = vunpack.c.l.s4 1983009808
      %v9507 = vunpack.c.0.s8 %v9506
      %v9508 = vlaneseq
      %v9509 = vshrl.u32 %v9508, 7
      %v9510 = vsub.s32 %v9507, %v9509
      %v9511 = vrot.slane %v9503, %v9510
      %v9513 = vunpack.c.l.s4 1983009808
      %v9514 = vunpack.c.0.s8 %v9513
      %v9515 = vlaneseq
      %v9516 = vshrl.u32 %v9515, 7
      %v9517 = vsub.s32 %v9514, %v9516
      %v9518 = vrot.slane %v9504, %v9517
      %v9519 = vcombine.low %v9511, %v9518
      %v9520 = vcombine.low %v9030, %v9031
      %v9521 = vcombine.low %v9032, %v9033
      %v9523 = vunpack.c.l.s4 1983009808
      %v9524 = vunpack.c.0.s8 %v9523
      %v9525 = vlaneseq
      %v9526 = vshrl.u32 %v9525, 7
      %v9527 = vsub.s32 %v9524, %v9526
      %v9528 = vrot.slane %v9520, %v9527
      %v9530 = vunpack.c.l.s4 1983009808
      %v9531 = vunpack.c.0.s8 %v9530
      %v9532 = vlaneseq
      %v9533 = vshrl.u32 %v9532, 7
      %v9534 = vsub.s32 %v9531, %v9533
      %v9535 = vrot.slane %v9521, %v9534
      %v9536 = vcombine.low %v9528, %v9535
      %v9537 = vcombine.low %v9034, %v9035
      %v9538 = vcombine.low %v9036, %v9037
      %v9540 = vunpack.c.l.s4 1983009808
      %v9541 = vunpack.c.0.s8 %v9540
      %v9542 = vlaneseq
      %v9543 = vshrl.u32 %v9542, 7
      %v9544 = vsub.s32 %v9541, %v9543
      %v9545 = vrot.slane %v9537, %v9544
      %v9547 = vunpack.c.l.s4 1983009808
      %v9548 = vunpack.c.0.s8 %v9547
      %v9549 = vlaneseq
      %v9550 = vshrl.u32 %v9549, 7
      %v9551 = vsub.s32 %v9548, %v9550
      %v9552 = vrot.slane %v9538, %v9551
      %v9553 = vcombine.low %v9545, %v9552
      %v9554 = vcombine.low %v9038, %v9039
      %v9555 = vcombine.low %v9040, %v9041
      %v9557 = vunpack.c.l.s4 1983009808
      %v9558 = vunpack.c.0.s8 %v9557
      %v9559 = vlaneseq
      %v9560 = vshrl.u32 %v9559, 7
      %v9561 = vsub.s32 %v9558, %v9560
      %v9562 = vrot.slane %v9554, %v9561
      %v9564 = vunpack.c.l.s4 1983009808
      %v9565 = vunpack.c.0.s8 %v9564
      %v9566 = vlaneseq
      %v9567 = vshrl.u32 %v9566, 7
      %v9568 = vsub.s32 %v9565, %v9567
      %v9569 = vrot.slane %v9555, %v9568
      %v9570 = vcombine.low %v9562, %v9569
      %v9571 = vcombine.low %v9042, %v9043
      %v9572 = vcombine.low %v9044, %v9045
      %v9574 = vunpack.c.l.s4 1983009808
      %v9575 = vunpack.c.0.s8 %v9574
      %v9576 = vlaneseq
      %v9577 = vshrl.u32 %v9576, 7
      %v9578 = vsub.s32 %v9575, %v9577
      %v9579 = vrot.slane %v9571, %v9578
      %v9581 = vunpack.c.l.s4 1983009808
      %v9582 = vunpack.c.0.s8 %v9581
      %v9583 = vlaneseq
      %v9584 = vshrl.u32 %v9583, 7
      %v9585 = vsub.s32 %v9582, %v9584
      %v9586 = vrot.slane %v9572, %v9585
      %v9587 = vcombine.low %v9579, %v9586
      %v9588 = vcombine.low %v9046, %v9047
      %v9589 = vcombine.low %v9048, %v9049
      %v9591 = vunpack.c.l.s4 1983009808
      %v9592 = vunpack.c.0.s8 %v9591
      %v9593 = vlaneseq
      %v9594 = vshrl.u32 %v9593, 7
      %v9595 = vsub.s32 %v9592, %v9594
      %v9596 = vrot.slane %v9588, %v9595
      %v9598 = vunpack.c.l.s4 1983009808
      %v9599 = vunpack.c.0.s8 %v9598
      %v9600 = vlaneseq
      %v9601 = vshrl.u32 %v9600, 7
      %v9602 = vsub.s32 %v9599, %v9601
      %v9603 = vrot.slane %v9589, %v9602
      %v9604 = vcombine.low %v9596, %v9603
      %v9605 = vcombine.low %v9050, %v9051
      %v9606 = vcombine.low %v9052, %v9053
      %v9608 = vunpack.c.l.s4 1983009808
      %v9609 = vunpack.c.0.s8 %v9608
      %v9610 = vlaneseq
      %v9611 = vshrl.u32 %v9610, 7
      %v9612 = vsub.s32 %v9609, %v9611
      %v9613 = vrot.slane %v9605, %v9612
      %v9615 = vunpack.c.l.s4 1983009808
      %v9616 = vunpack.c.0.s8 %v9615
      %v9617 = vlaneseq
      %v9618 = vshrl.u32 %v9617, 7
      %v9619 = vsub.s32 %v9616, %v9618
      %v9620 = vrot.slane %v9606, %v9619
      %v9621 = vcombine.low %v9613, %v9620
      %v9622 = vcombine.low %v9054, %v9055
      %v9623 = vcombine.low %v9056, %v9057
      %v9625 = vunpack.c.l.s4 1983009808
      %v9626 = vunpack.c.0.s8 %v9625
      %v9627 = vlaneseq
      %v9628 = vshrl.u32 %v9627, 7
      %v9629 = vsub.s32 %v9626, %v9628
      %v9630 = vrot.slane %v9622, %v9629
      %v9632 = vunpack.c.l.s4 1983009808
      %v9633 = vunpack.c.0.s8 %v9632
      %v9634 = vlaneseq
      %v9635 = vshrl.u32 %v9634, 7
      %v9636 = vsub.s32 %v9633, %v9635
      %v9637 = vrot.slane %v9623, %v9636
      %v9638 = vcombine.low %v9630, %v9637
      %v9639 = vcombine.low %v9058, %v9059
      %v9640 = vcombine.low %v9060, %v9061
      %v9642 = vunpack.c.l.s4 1983009808
      %v9643 = vunpack.c.0.s8 %v9642
      %v9644 = vlaneseq
      %v9645 = vshrl.u32 %v9644, 7
      %v9646 = vsub.s32 %v9643, %v9645
      %v9647 = vrot.slane %v9639, %v9646
      %v9649 = vunpack.c.l.s4 1983009808
      %v9650 = vunpack.c.0.s8 %v9649
      %v9651 = vlaneseq
      %v9652 = vshrl.u32 %v9651, 7
      %v9653 = vsub.s32 %v9650, %v9652
      %v9654 = vrot.slane %v9640, %v9653
      %v9655 = vcombine.low %v9647, %v9654
      %v9656 = vcombine.low %v9062, %v9063
      %v9657 = vcombine.low %v9064, %v9065
      %v9659 = vunpack.c.l.s4 1983009808
      %v9660 = vunpack.c.0.s8 %v9659
      %v9661 = vlaneseq
      %v9662 = vshrl.u32 %v9661, 7
      %v9663 = vsub.s32 %v9660, %v9662
      %v9664 = vrot.slane %v9656, %v9663
      %v9666 = vunpack.c.l.s4 1983009808
      %v9667 = vunpack.c.0.s8 %v9666
      %v9668 = vlaneseq
      %v9669 = vshrl.u32 %v9668, 7
      %v9670 = vsub.s32 %v9667, %v9669
      %v9671 = vrot.slane %v9657, %v9670
      %v9672 = vcombine.low %v9664, %v9671
      %v9673 = vcombine.low %v9066, %v9067
      %v9674 = vcombine.low %v9068, %v9069
      %v9676 = vunpack.c.l.s4 1983009808
      %v9677 = vunpack.c.0.s8 %v9676
      %v9678 = vlaneseq
      %v9679 = vshrl.u32 %v9678, 7
      %v9680 = vsub.s32 %v9677, %v9679
      %v9681 = vrot.slane %v9673, %v9680
      %v9683 = vunpack.c.l.s4 1983009808
      %v9684 = vunpack.c.0.s8 %v9683
      %v9685 = vlaneseq
      %v9686 = vshrl.u32 %v9685, 7
      %v9687 = vsub.s32 %v9684, %v9686
      %v9688 = vrot.slane %v9674, %v9687
      %v9689 = vcombine.low %v9681, %v9688
      %v9690 = vcombine.low %v9070, %v9071
      %v9691 = vcombine.low %v9072, %v9073
      %v9693 = vunpack.c.l.s4 1983009808
      %v9694 = vunpack.c.0.s8 %v9693
      %v9695 = vlaneseq
      %v9696 = vshrl.u32 %v9695, 7
      %v9697 = vsub.s32 %v9694, %v9696
      %v9698 = vrot.slane %v9690, %v9697
      %v9700 = vunpack.c.l.s4 1983009808
      %v9701 = vunpack.c.0.s8 %v9700
      %v9702 = vlaneseq
      %v9703 = vshrl.u32 %v9702, 7
      %v9704 = vsub.s32 %v9701, %v9703
      %v9705 = vrot.slane %v9691, %v9704
      %v9706 = vcombine.low %v9698, %v9705
      %v9707 = vcombine.low %v9074, %v9075
      %v9708 = vcombine.low %v9076, %v9077
      %v9710 = vunpack.c.l.s4 1983009808
      %v9711 = vunpack.c.0.s8 %v9710
      %v9712 = vlaneseq
      %v9713 = vshrl.u32 %v9712, 7
      %v9714 = vsub.s32 %v9711, %v9713
      %v9715 = vrot.slane %v9707, %v9714
      %v9717 = vunpack.c.l.s4 1983009808
      %v9718 = vunpack.c.0.s8 %v9717
      %v9719 = vlaneseq
      %v9720 = vshrl.u32 %v9719, 7
      %v9721 = vsub.s32 %v9718, %v9720
      %v9722 = vrot.slane %v9708, %v9721
      %v9723 = vcombine.low %v9715, %v9722
      %v9724 = vcombine.low %v9078, %v9079
      %v9725 = vcombine.low %v9080, %v9081
      %v9727 = vunpack.c.l.s4 1983009808
      %v9728 = vunpack.c.0.s8 %v9727
      %v9729 = vlaneseq
      %v9730 = vshrl.u32 %v9729, 7
      %v9731 = vsub.s32 %v9728, %v9730
      %v9732 = vrot.slane %v9724, %v9731
      %v9734 = vunpack.c.l.s4 1983009808
      %v9735 = vunpack.c.0.s8 %v9734
      %v9736 = vlaneseq
      %v9737 = vshrl.u32 %v9736, 7
      %v9738 = vsub.s32 %v9735, %v9737
      %v9739 = vrot.slane %v9725, %v9738
      %v9740 = vcombine.low %v9732, %v9739
      %v9741 = vcombine.low %v9082, %v9083
      %v9742 = vcombine.low %v9084, %v9085
      %v9744 = vunpack.c.l.s4 1983009808
      %v9745 = vunpack.c.0.s8 %v9744
      %v9746 = vlaneseq
      %v9747 = vshrl.u32 %v9746, 7
      %v9748 = vsub.s32 %v9745, %v9747
      %v9749 = vrot.slane %v9741, %v9748
      %v9751 = vunpack.c.l.s4 1983009808
      %v9752 = vunpack.c.0.s8 %v9751
      %v9753 = vlaneseq
      %v9754 = vshrl.u32 %v9753, 7
      %v9755 = vsub.s32 %v9752, %v9754
      %v9756 = vrot.slane %v9742, %v9755
      %v9757 = vcombine.low %v9749, %v9756
      %s9790 = scalar_lea.vmem %s391, 32
      %9791 = vst.msk [vmem:[%s9790] sm:$0xff] %vm577, %v9230
      %9792 = vst.msk [vmem:[%s9790 + $0x8] sm:$0xff] %vm577, %v9247
      %9793 = vst.msk [vmem:[%s9790 + $0x10] sm:$0xff] %vm577, %v9264
      %9794 = vst.msk [vmem:[%s9790 + $0x18] sm:$0xff] %vm577, %v9281
      %9795 = vst.msk [vmem:[%s9790 + $0x40] sm:$0xff] %vm577, %v9298
      %9796 = vst.msk [vmem:[%s9790 + $0x48] sm:$0xff] %vm577, %v9315
      %9797 = vst.msk [vmem:[%s9790 + $0x50] sm:$0xff] %vm577, %v9332
      %9798 = vst.msk [vmem:[%s9790 + $0x58] sm:$0xff] %vm577, %v9349
      %9799 = vst.msk [vmem:[%s9790 + $0x80] sm:$0xff] %vm577, %v9366
      %9800 = vst.msk [vmem:[%s9790 + $0x88] sm:$0xff] %vm577, %v9383
      %9801 = vst.msk [vmem:[%s9790 + $0x90] sm:$0xff] %vm577, %v9400
      %9802 = vst.msk [vmem:[%s9790 + $0x98] sm:$0xff] %vm577, %v9417
      %9803 = vst.msk [vmem:[%s9790 + $0xc0] sm:$0xff] %vm577, %v9434
      %9804 = vst.msk [vmem:[%s9790 + $0xc8] sm:$0xff] %vm577, %v9451
      %9805 = vst.msk [vmem:[%s9790 + $0xd0] sm:$0xff] %vm577, %v9468
      %9806 = vst.msk [vmem:[%s9790 + $0xd8] sm:$0xff] %vm577, %v9485
      %9807 = vst.msk [vmem:[%s9790 + $0x100] sm:$0xff] %vm577, %v9502
      %9808 = vst.msk [vmem:[%s9790 + $0x108] sm:$0xff] %vm577, %v9519
      %9809 = vst.msk [vmem:[%s9790 + $0x110] sm:$0xff] %vm577, %v9536
      %9810 = vst.msk [vmem:[%s9790 + $0x118] sm:$0xff] %vm577, %v9553
      %9811 = vst.msk [vmem:[%s9790 + $0x140] sm:$0xff] %vm577, %v9570
      %9812 = vst.msk [vmem:[%s9790 + $0x148] sm:$0xff] %vm577, %v9587
      %9813 = vst.msk [vmem:[%s9790 + $0x150] sm:$0xff] %vm577, %v9604
      %9814 = vst.msk [vmem:[%s9790 + $0x158] sm:$0xff] %vm577, %v9621
      %9815 = vst.msk [vmem:[%s9790 + $0x180] sm:$0xff] %vm577, %v9638
      %9816 = vst.msk [vmem:[%s9790 + $0x188] sm:$0xff] %vm577, %v9655
      %9817 = vst.msk [vmem:[%s9790 + $0x190] sm:$0xff] %vm577, %v9672
      %9818 = vst.msk [vmem:[%s9790 + $0x198] sm:$0xff] %vm577, %v9689
      %9819 = vst.msk [vmem:[%s9790 + $0x1c0] sm:$0xff] %vm577, %v9706
      %9820 = vst.msk [vmem:[%s9790 + $0x1c8] sm:$0xff] %vm577, %v9723
      %9821 = vst.msk [vmem:[%s9790 + $0x1d0] sm:$0xff] %vm577, %v9740
      %9822 = vst.msk [vmem:[%s9790 + $0x1d8] sm:$0xff] %vm577, %v9757
      %s9823 = smul.u32 8, %s21
      %p9824 = scmp.lt.s32.totalorder %s20, 1
      %s9825 = scalar_select %p9824, %s20, 1
      %p9826 = scmp.lt.s32.totalorder %s9823, 15
      %s9827 = scalar_select %p9826, %s9823, 15
      %s9828 = smul.addr %s9827, 8
      %s9829 = smul.addr %s9825, 128
      %s9830 = sadd.s32 %s9828, %s9829
      %s9831 = smul.addr %s9830, 8
      %s9832 = scalar_lea.vmem %s5, %s9831
      // Predicated region
      $region41: #{tpu_custom_call.1} parent=39 // pred_check
        %p9833 = pneg %p190
      $region42: #{tpu_custom_call.1} parent=39 // pred_check_branch
        %9835 = sbr.rel (%p9833) target = $region44
      $region43: #{tpu_custom_call.1} parent=39 // pred_region
        %s9836 = smul.u32 8, %s21
      $region44: #{tpu_custom_call.1} parent=39 // pred_fallthru
        _
    $region40: #{tpu_custom_call.1} parent=5 // pred_fallthru
      _
    %p9837 = scmp.le.s32.totalorder 2, %s11
    // Predicated region
    $region45: #{tpu_custom_call.1} parent=5 // pred_check
      %p9838 = pneg %p9837
    $region46: #{tpu_custom_call.1} parent=5 // pred_check_branch
      %9840 = sbr.rel (%p9838) target = $region48
    $region47: #{tpu_custom_call.1} parent=5 // pred_region
      %s9841 = ssub.s32 %s11, 2
      // Predicated region
      $region49: #{tpu_custom_call.1} parent=47 // pred_check
        %p9842 = pneg %p196
      $region50: #{tpu_custom_call.1} parent=47 // pred_check_branch
        %9844 = sbr.rel (%p9842) target = $region52
      $region51: #{tpu_custom_call.1} parent=47 // pred_region
        %s9845 = smul.u32 8, %s23
        %p9846 = scmp.lt.s32.totalorder %s22, 1
        %s9847 = scalar_select %p9846, %s22, 1
        %p9848 = scmp.lt.s32.totalorder %s9845, 15
        %s9849 = scalar_select %p9848, %s9845, 15
        %s9850 = smul.addr %s9849, 8
        %s9851 = smul.addr %s9847, 128
        %s9852 = sadd.s32 %s9850, %s9851
        %s9853 = smul.addr %s9852, 8
        %s9854 = scalar_lea.vmem %s5, %s9853
      $region52: #{tpu_custom_call.1} parent=47 // pred_fallthru
        _
    $region48: #{tpu_custom_call.1} parent=5 // pred_fallthru
      _
  $region6: #{tpu_custom_call.1} parent=0 // loop_footer
    %s15 = sadd.s32 1, %s11
  $region7: #{tpu_custom_call.1} parent=0 // loop_footer_branch
    %10 = sbr.rel target = $region3
  $region8: #{tpu_custom_call.1} parent=0 // loop_exit
    _

</llo_original>
